<compile_context>
chip_gen: v7x
topology: tpu7x:2x2x1
jax: 0.10.0
libtpu: 0.0.40
codegen_flags: <defaults>
</compile_context>

<pallas_src>
import functools

import jax
import jax.numpy as jnp
from jax.experimental import pallas as pl
from jax.experimental.pallas import tpu as pltpu

RATIO = 4     # channel-attention reduction ratio
EPS = 1e-5    # BatchNorm eps


# ----------------------------------------------------------------------------------------
# Fused BasicBlock kernel.  One grid step == one batch element (grid is "parallel").
# ----------------------------------------------------------------------------------------
def basic_block_kernel(*refs, stride, has_proj):
    n_planes = 4 if stride == 2 else 1
    i = 0
    plane_refs = refs[i:i + n_planes]; i += n_planes
    w1_ref, b1_ref = refs[i:i + 2]; i += 2            # bn scale already folded into w
    w2_ref, b2_ref = refs[i:i + 2]; i += 2
    if has_proj:
        wsc_ref, bsc_ref = refs[i:i + 2]; i += 2
    ca1w1_ref, ca1w2_ref, ca2w1_ref, ca2w2_ref = refs[i:i + 4]; i += 4
    sa1_ref, sa2_ref, alpha_ref, beta_ref = refs[i:i + 4]; i += 4
    o_ref = refs[i]; i += 1
    xpad_ref, patch1_ref, h1pad_ref, patch2_ref, sapad_ref = refs[i:i + 5]

    _, Ho, Wo, Co = o_ref.shape
    Cin = plane_refs[0].shape[-1]
    HW = Ho * Wo
    f32 = jnp.float32

    # ---- in-kernel zero padding of the input plane(s) (no host-side jnp.pad) ----
    xpad_ref[...] = jnp.zeros(xpad_ref.shape, xpad_ref.dtype)
    for p in range(n_planes):
        xpad_ref[p, 1:Ho + 1, 1:Wo + 1, :] = plane_refs[p][0]

    # ---- conv1 (3x3, stride handled via parity planes): im2col + one MXU matmul ----
    def conv1_window(dy, dx):
        if stride == 1:
            return xpad_ref[0, dy:dy + Ho, dx:dx + Wo, :]
        # stride 2: tap (dy, dx) reads x[2i+dy-1, 2j+dx-1]  ==  a contiguous window of
        # parity plane ((dy+1)%2, (dx+1)%2), zero-padded by one row/col on the left/top.
        p = ((dy + 1) % 2) * 2 + ((dx + 1) % 2)
        ry = 0 if dy == 0 else 1
        rx = 0 if dx == 0 else 1
        return xpad_ref[p, ry:ry + Ho, rx:rx + Wo, :]

    for dy in range(3):
        for dx in range(3):
            t = dy * 3 + dx
            patch1_ref[:, t * Cin:(t + 1) * Cin] = conv1_window(dy, dx).reshape(HW, Cin)
    h = jnp.dot(patch1_ref[...], w1_ref[...], preferred_element_type=f32)   # K = 9*Cin
    h = jnp.maximum(h + b1_ref[...], 0.0)                                   # bn1(+relu)

    # ---- conv2 (3x3, stride 1): im2col + one MXU matmul, then bn2 bias ----
    h1pad_ref[...] = jnp.zeros(h1pad_ref.shape, h1pad_ref.dtype)
    h1pad_ref[1:Ho + 1, 1:Wo + 1, :] = h.reshape(Ho, Wo, Co).astype(h1pad_ref.dtype)
    for dy in range(3):
        for dx in range(3):
            t = dy * 3 + dx
            patch2_ref[:, t * Co:(t + 1) * Co] = (
                h1pad_ref[dy:dy + Ho, dx:dx + Wo, :].reshape(HW, Co))
    out = jnp.dot(patch2_ref[...], w2_ref[...], preferred_element_type=f32)  # K = 9*Co
    out = out + b2_ref[...]                                                  # (HW, Co) f32

    # ---- attention helpers ----
    def channel_att(o2d, wa_ref, wb_ref):
        # CBAM channel attention: shared MLP on global avg & max pools -> (1, 1, Co)
        avg = jnp.mean(o2d, axis=0, keepdims=True)
        mx = jnp.max(o2d, axis=0, keepdims=True)

        def mlp(v):
            hh = jnp.maximum(jnp.dot(v, wa_ref[...], preferred_element_type=f32), 0.0)
            return jnp.dot(hh, wb_ref[...], preferred_element_type=f32)

        return jax.nn.sigmoid(mlp(avg) + mlp(mx)).reshape(1, 1, Co)

    def spatial_att(o3d, sak_ref):
        # CBAM spatial attention: direct 7x7 conv (49 shifted MACs) over lane-dense
        # 2-D (Ho, Wo) channel-mean / channel-max maps (much better VPU lane use than
        # (Ho, Wo, 1) maps).  One reshape to (Ho, Wo, 1) at the end.
        avg = jnp.mean(o3d, axis=-1)                                 # (Ho, Wo)
        mx = jnp.max(o3d, axis=-1)
        sapad_ref[...] = jnp.zeros(sapad_ref.shape, sapad_ref.dtype)
        sapad_ref[0, 3:3 + Ho, 3:3 + Wo] = avg
        sapad_ref[1, 3:3 + Ho, 3:3 + Wo] = mx
        logit = jnp.zeros((Ho, Wo), f32)
        for dy in range(7):
            for dx in range(7):
                k = dy * 7 + dx
                logit = logit + (sak_ref[0, k] * sapad_ref[0, dy:dy + Ho, dx:dx + Wo]
                                 + sak_ref[1, k] * sapad_ref[1, dy:dy + Ho, dx:dx + Wo])
        return jax.nn.sigmoid(logit).reshape(Ho, Wo, 1)              # (Ho, Wo, 1)

    # ---- stage 1:  out *= a0 + a1*ca1 + a2*sa1   (factored gate) ----
    out3 = out.reshape(Ho, Wo, Co)
    ca1 = channel_att(out, ca1w1_ref, ca1w2_ref)
    sa1 = spatial_att(out3, sa1_ref)
    out3 = out3 * (alpha_ref[0] + alpha_ref[1] * ca1 + alpha_ref[2] * sa1)

    # ---- stage 2:  out *= b0 + b1*ca2 + b2*sa2 ----
    ca2 = channel_att(out3.reshape(HW, Co), ca2w1_ref, ca2w2_ref)
    sa2 = spatial_att(out3, sa2_ref)
    out3 = out3 * (beta_ref[0] + beta_ref[1] * ca2 + beta_ref[2] * sa2)

    # ---- shortcut + residual add + relu ----
    if has_proj:
        # stride==2: plane (0,0) is exactly x[::2, ::2]; stride==1: plane 0 is x itself.
        xs = plane_refs[0][0].reshape(HW, Cin)
        res = jnp.dot(xs, wsc_ref[...], preferred_element_type=f32) + bsc_ref[...]
    else:
        res = plane_refs[0][0].reshape(HW, Cin).astype(f32)          # identity (Cin == Co)
    out3 = jnp.maximum(out3 + res.reshape(Ho, Wo, Co), 0.0)
    o_ref[...] = out3.reshape(1, Ho, Wo, Co).astype(o_ref.dtype)


# ----------------------------------------------------------------------------------------
# Parameter setup / glue
# ----------------------------------------------------------------------------------------
def fold_bn(gamma, beta_, mean, var):
    scale = gamma / jnp.sqrt(var + EPS)
    bias = beta_ - mean * scale
    return scale.reshape(1, -1).astype(jnp.float32), bias.reshape(1, -1).astype(jnp.float32)


def init_params(key, in_planes, planes, stride):
    ks = jax.random.split(key, 12)
    p = {}
    p["w1"] = 0.1 * jax.random.normal(ks[0], (3, 3, in_planes, planes), jnp.float32)
    p["w2"] = 0.1 * jax.random.normal(ks[1], (3, 3, planes, planes), jnp.float32)

    def bn(k):
        k1, k2, k3 = jax.random.split(k, 3)
        gamma = 1.0 + 0.1 * jax.random.normal(k1, (planes,), jnp.float32)
        beta_ = 0.1 * jax.random.normal(k2, (planes,), jnp.float32)
        mean = 0.1 * jax.random.normal(k3, (planes,), jnp.float32)
        var = jnp.ones((planes,), jnp.float32)
        return fold_bn(gamma, beta_, mean, var)

    p["bn1"] = bn(ks[2])
    p["bn2"] = bn(ks[3])
    cr = max(planes // RATIO, 1)
    p["ca1_w1"] = 0.2 * jax.random.normal(ks[4], (planes, cr), jnp.float32)
    p["ca1_w2"] = 0.2 * jax.random.normal(ks[5], (cr, planes), jnp.float32)
    p["ca2_w1"] = 0.2 * jax.random.normal(ks[6], (planes, cr), jnp.float32)
    p["ca2_w2"] = 0.2 * jax.random.normal(ks[7], (cr, planes), jnp.float32)
    p["sa1_k"] = 0.1 * jax.random.normal(ks[8], (2, 7, 7), jnp.float32)   # [avg, max] chans
    p["sa2_k"] = 0.1 * jax.random.normal(ks[9], (2, 7, 7), jnp.float32)
    if stride != 1 or in_planes != planes:
        p["wsc"] = 0.1 * jax.random.normal(ks[10], (in_planes, planes), jnp.float32)
        p["bnsc"] = bn(ks[11])
    return p


def basic_block_forward(x, params, alpha, beta, *, stride, planes):
    """x: (B, H, W, Cin) float32, NHWC.  Returns (B, H//stride, W//stride, planes) f32."""
    B, H, W, Cin = x.shape
    Co = planes
    if stride not in (1, 2):
        raise NotImplementedError("only stride 1 or 2")
    if stride == 2 and (H % 2 or W % 2):
        raise ValueError("stride-2 path assumes even spatial dims")
    Ho, Wo = H // stride, W // stride
    HW = Ho * Wo
    has_proj = "wsc" in params

    # bf16 activations / conv weights for the MXU; accumulation stays f32 in-kernel.
    xb = x.astype(jnp.bfloat16)
    if stride == 2:
        # 4 spatial parity planes -> the strided conv is computed directly (no 4x waste).
        planes_in = [xb[:, py::2, px::2, :] for py in (0, 1) for px in (0, 1)]
    else:
        planes_in = [xb]
    n_planes = len(planes_in)

    # Fold BN scales into the conv / shortcut weights (bias applied in-kernel).
    (s1, b1), (s2, b2) = params["bn1"], params["bn2"]
    w1f = (params["w1"].reshape(9 * Cin, Co) * s1).astype(jnp.bfloat16)
    w2f = (params["w2"].reshape(9 * Co, Co) * s2).astype(jnp.bfloat16)
    vmem_inputs = [w1f, b1, w2f, b2]
    if has_proj:
        ssc, bsc = params["bnsc"]
        wscf = (params["wsc"] * ssc).astype(jnp.bfloat16)
        vmem_inputs += [wscf, bsc]
    vmem_inputs += [params["ca1_w1"], params["ca1_w2"], params["ca2_w1"], params["ca2_w2"]]
    smem_inputs = [params["sa1_k"].reshape(2, 49), params["sa2_k"].reshape(2, 49),
                   alpha.astype(jnp.float32), beta.astype(jnp.float32)]

    in_specs = (
        [pl.BlockSpec((1,) + planes_in[0].shape[1:], lambda b: (b, 0, 0, 0))] * n_planes
        + [pl.BlockSpec(a.shape, lambda b, n=a.ndim: (0,) * n) for a in vmem_inputs]
        + [pl.BlockSpec(memory_space=pltpu.MemorySpace.SMEM)] * len(smem_inputs))

    xpad_shape = (4, Ho + 1, Wo + 1, Cin) if stride == 2 else (1, H + 2, W + 2, Cin)
    scratch_shapes = [
        pltpu.VMEM(xpad_shape, jnp.bfloat16),             # zero-padded input plane(s)
        pltpu.VMEM((HW, 9 * Cin), jnp.bfloat16),          # conv1 im2col patches
        pltpu.VMEM((Ho + 2, Wo + 2, Co), jnp.bfloat16),   # zero-padded conv1 output
        pltpu.VMEM((HW, 9 * Co), jnp.bfloat16),           # conv2 im2col patches
        pltpu.VMEM((2, Ho + 6, Wo + 6), jnp.float32),     # zero-padded [ch-mean, ch-max]
    ]

    kernel = functools.partial(basic_block_kernel, stride=stride, has_proj=has_proj)
    return pl.pallas_call(
        kernel,
        out_shape=jax.ShapeDtypeStruct((B, Ho, Wo, Co), jnp.float32),
        grid=(B,),
        in_specs=in_specs,
        out_specs=pl.BlockSpec((1, Ho, Wo, Co), lambda b: (b, 0, 0, 0)),
        scratch_shapes=scratch_shapes,
        compiler_params=pltpu.CompilerParams(dimension_semantics=("parallel",)),
    )(*planes_in, *vmem_inputs, *smem_inputs)


# ----------------------------------------------------------------------------------------
# Pure-JAX reference (independent implementation for numerical validation)
# ----------------------------------------------------------------------------------------
def reference_forward(x, params, alpha, beta, *, stride):
    def conv(inp, w, s, pad):
        return jax.lax.conv_general_dilated(
            inp, w, window_strides=(s, s), padding=((pad, pad), (pad, pad)),
            dimension_numbers=("NHWC", "HWIO", "NHWC"),
            precision=jax.lax.Precision.HIGHEST)

    def bn(o, sb):
        s, b = sb
        return o * s.reshape(1, 1, 1, -1) + b.reshape(1, 1, 1, -1)

    def channel_att(o, wa, wb):
        avg = jnp.mean(o, axis=(1, 2))
        mx = jnp.max(o, axis=(1, 2))
        mlp = lambda v: jnp.maximum(v @ wa, 0.0) @ wb
        return jax.nn.sigmoid(mlp(avg) + mlp(mx))[:, None, None, :]

    def spatial_att(o, k2):
        m = jnp.concatenate([jnp.mean(o, axis=-1, keepdims=True),
                             jnp.max(o, axis=-1, keepdims=True)], axis=-1)
        w = jnp.transpose(k2, (1, 2, 0))[:, :, :, None]          # (7,7,2,1) HWIO
        return jax.nn.sigmoid(conv(m, w, 1, 3))

    out = jnp.maximum(bn(conv(x, params["w1"], stride, 1), params["bn1"]), 0.0)
    out = bn(conv(out, params["w2"], 1, 1), params["bn2"])
    out = (out * alpha[0]
           + out * channel_att(out, params["ca1_w1"], params["ca1_w2"]) * alpha[1]
           + out * spatial_att(out, params["sa1_k"]) * alpha[2])
    out = (out * beta[0]
           + out * channel_att(out, params["ca2_w1"], params["ca2_w2"]) * beta[1]
           + out * spatial_att(out, params["sa2_k"]) * beta[2])
    if "wsc" in params:
        res = bn(x[:, ::stride, ::stride, :] @ params["wsc"], params["bnsc"])
    else:
        res = x
    return jnp.maximum(out + res, 0.0)


if __name__ == "__main__":
    key = jax.random.PRNGKey(0)
    k_x1, k_p1, k_x2, k_p2 = jax.random.split(key, 4)

    alpha = jnp.array([0.5, 0.3, 0.2], jnp.float32)
    beta = jnp.array([0.4, 0.4, 0.2], jnp.float32)

    def rel_err(a, b):
        return float(jnp.max(jnp.abs(a - b)) / (jnp.max(jnp.abs(b)) + 1e-6))

    # Config A: stride-2 block with 1x1-conv + BN projection shortcut.
    B, H, W, cin, cout, stride = 2, 16, 16, 8, 16, 2
    x = jax.random.normal(k_x1, (B, H, W, cin), jnp.float32)
    params = init_params(k_p1, cin, cout, stride)
    fwd = jax.jit(functools.partial(basic_block_forward, stride=stride, planes=cout))
    y = fwd(x, params, alpha, beta)
    jax.block_until_ready(y)
    y_ref = reference_forward(x, params, alpha, beta, stride=stride)
    assert y.shape == (B, H // stride, W // stride, cout)
    assert bool(jnp.all(jnp.isfinite(y)))
    assert rel_err(y, y_ref) < 5e-2, rel_err(y, y_ref)

    # Config B: stride-1 block with identity shortcut.
    B2, H2, W2, c2 = 2, 16, 16, 16
    x2 = jax.random.normal(k_x2, (B2, H2, W2, c2), jnp.float32)
    params2 = init_params(k_p2, c2, c2, 1)
    fwd2 = jax.jit(functools.partial(basic_block_forward, stride=1, planes=c2))
    y2 = fwd2(x2, params2, alpha, beta)
    jax.block_until_ready(y2)
    y2_ref = reference_forward(x2, params2, alpha, beta, stride=1)
    assert y2.shape == (B2, H2, W2, c2)
    assert bool(jnp.all(jnp.isfinite(y2)))
    assert rel_err(y2, y2_ref) < 5e-2, rel_err(y2, y2_ref)

    print("KERNEL_OK")
</pallas_src>

<mosaic_0001>
module attributes {stable_mosaic.version = 11 : i64} {
  func.func @basic_block_kernel(%arg0: i32, %arg1: memref<1x8x8x8xbf16, #tpu.memory_space<vmem>>, %arg2: memref<1x8x8x8xbf16, #tpu.memory_space<vmem>>, %arg3: memref<1x8x8x8xbf16, #tpu.memory_space<vmem>>, %arg4: memref<1x8x8x8xbf16, #tpu.memory_space<vmem>>, %arg5: memref<72x16xbf16, #tpu.memory_space<vmem>>, %arg6: memref<1x16xf32, #tpu.memory_space<vmem>>, %arg7: memref<144x16xbf16, #tpu.memory_space<vmem>>, %arg8: memref<1x16xf32, #tpu.memory_space<vmem>>, %arg9: memref<8x16xbf16, #tpu.memory_space<vmem>>, %arg10: memref<1x16xf32, #tpu.memory_space<vmem>>, %arg11: memref<16x4xf32, #tpu.memory_space<vmem>>, %arg12: memref<4x16xf32, #tpu.memory_space<vmem>>, %arg13: memref<16x4xf32, #tpu.memory_space<vmem>>, %arg14: memref<4x16xf32, #tpu.memory_space<vmem>>, %arg15: memref<2x49xf32, #tpu.memory_space<smem>>, %arg16: memref<2x49xf32, #tpu.memory_space<smem>>, %arg17: memref<3xf32, #tpu.memory_space<smem>>, %arg18: memref<3xf32, #tpu.memory_space<smem>>, %arg19: memref<1x8x8x16xf32, #tpu.memory_space<vmem>>, %arg20: memref<4x9x9x8xbf16, #tpu.memory_space<vmem>>, %arg21: memref<64x72xbf16, #tpu.memory_space<vmem>>, %arg22: memref<10x10x16xbf16, #tpu.memory_space<vmem>>, %arg23: memref<64x144xbf16, #tpu.memory_space<vmem>>, %arg24: memref<2x14x14xf32, #tpu.memory_space<vmem>>) attributes {dimension_semantics = [#tpu.dimension_semantics<parallel>], iteration_bounds = array<i64: 2>, scalar_prefetch = 0 : i64, scratch_operands = 5 : i64, tpu.core_type = #tpu.core_type<tc>, window_params = [{transform_indices = @transform_0, window_bounds = array<i64: 1, 8, 8, 8>}, {transform_indices = @transform_1, window_bounds = array<i64: 1, 8, 8, 8>}, {transform_indices = @transform_2, window_bounds = array<i64: 1, 8, 8, 8>}, {transform_indices = @transform_3, window_bounds = array<i64: 1, 8, 8, 8>}, {pipeline_mode = #tpu.pipeline_mode<synchronous>, transform_indices = @transform_4, window_bounds = array<i64: 72, 16>}, {pipeline_mode = #tpu.pipeline_mode<synchronous>, transform_indices = @transform_5, window_bounds = array<i64: 1, 16>}, {pipeline_mode = #tpu.pipeline_mode<synchronous>, transform_indices = @transform_6, window_bounds = array<i64: 144, 16>}, {pipeline_mode = #tpu.pipeline_mode<synchronous>, transform_indices = @transform_7, window_bounds = array<i64: 1, 16>}, {pipeline_mode = #tpu.pipeline_mode<synchronous>, transform_indices = @transform_8, window_bounds = array<i64: 8, 16>}, {pipeline_mode = #tpu.pipeline_mode<synchronous>, transform_indices = @transform_9, window_bounds = array<i64: 1, 16>}, {pipeline_mode = #tpu.pipeline_mode<synchronous>, transform_indices = @transform_10, window_bounds = array<i64: 16, 4>}, {pipeline_mode = #tpu.pipeline_mode<synchronous>, transform_indices = @transform_11, window_bounds = array<i64: 4, 16>}, {pipeline_mode = #tpu.pipeline_mode<synchronous>, transform_indices = @transform_12, window_bounds = array<i64: 16, 4>}, {pipeline_mode = #tpu.pipeline_mode<synchronous>, transform_indices = @transform_13, window_bounds = array<i64: 4, 16>}, {transform_indices = @transform_14, window_bounds = array<i64: 2, 49>}, {transform_indices = @transform_15, window_bounds = array<i64: 2, 49>}, {transform_indices = @transform_16, window_bounds = array<i64: 3>}, {transform_indices = @transform_17, window_bounds = array<i64: 3>}, {transform_indices = @transform_18, window_bounds = array<i64: 1, 8, 8, 16>}]} {
    %cst = arith.constant 0.000000e+00 : bf16
    %0 = vector.broadcast %cst : bf16 to vector<4x9x9x8xbf16>
    %c0 = arith.constant 0 : index
    %c0_0 = arith.constant 0 : index
    %c0_1 = arith.constant 0 : index
    %c0_2 = arith.constant 0 : index
    %1 = vector.load %arg20[%c0, %c0_0, %c0_1, %c0_2] : memref<4x9x9x8xbf16, #tpu.memory_space<vmem>>, vector<4x9x9x8xbf16>
    tpu.vector_store %arg20[%c0, %c0_0, %c0_1, %c0_2], %0 {strides = array<i32>} : memref<4x9x9x8xbf16, #tpu.memory_space<vmem>>, vector<4x9x9x8xbf16>,
    %c0_3 = arith.constant 0 : index
    %c0_4 = arith.constant 0 : index
    %c0_5 = arith.constant 0 : index
    %c0_6 = arith.constant 0 : index
    %2 = vector.load %arg1[%c0_3, %c0_4, %c0_5, %c0_6] : memref<1x8x8x8xbf16, #tpu.memory_space<vmem>>, vector<1x8x8x8xbf16>
    %3 = vector.shape_cast %2 : vector<1x8x8x8xbf16> to vector<8x8x8xbf16>
    %c0_7 = arith.constant 0 : index
    %c1 = arith.constant 1 : index
    %c1_8 = arith.constant 1 : index
    %c0_9 = arith.constant 0 : index
    %4 = vector.load %arg20[%c0_7, %c1, %c1_8, %c0_9] : memref<4x9x9x8xbf16, #tpu.memory_space<vmem>>, vector<1x8x8x8xbf16>
    %5 = vector.shape_cast %4 : vector<1x8x8x8xbf16> to vector<8x8x8xbf16>
    %6 = vector.shape_cast %3 : vector<8x8x8xbf16> to vector<1x8x8x8xbf16>
    tpu.vector_store %arg20[%c0_7, %c1, %c1_8, %c0_9], %6 {strides = array<i32>} : memref<4x9x9x8xbf16, #tpu.memory_space<vmem>>, vector<1x8x8x8xbf16>,
    %c0_10 = arith.constant 0 : index
    %c0_11 = arith.constant 0 : index
    %c0_12 = arith.constant 0 : index
    %c0_13 = arith.constant 0 : index
    %7 = vector.load %arg2[%c0_10, %c0_11, %c0_12, %c0_13] : memref<1x8x8x8xbf16, #tpu.memory_space<vmem>>, vector<1x8x8x8xbf16>
    %8 = vector.shape_cast %7 : vector<1x8x8x8xbf16> to vector<8x8x8xbf16>
    %c1_14 = arith.constant 1 : index
    %c1_15 = arith.constant 1 : index
    %c1_16 = arith.constant 1 : index
    %c0_17 = arith.constant 0 : index
    %9 = vector.load %arg20[%c1_14, %c1_15, %c1_16, %c0_17] : memref<4x9x9x8xbf16, #tpu.memory_space<vmem>>, vector<1x8x8x8xbf16>
    %10 = vector.shape_cast %9 : vector<1x8x8x8xbf16> to vector<8x8x8xbf16>
    %11 = vector.shape_cast %8 : vector<8x8x8xbf16> to vector<1x8x8x8xbf16>
    tpu.vector_store %arg20[%c1_14, %c1_15, %c1_16, %c0_17], %11 {strides = array<i32>} : memref<4x9x9x8xbf16, #tpu.memory_space<vmem>>, vector<1x8x8x8xbf16>,
    %c0_18 = arith.constant 0 : index
    %c0_19 = arith.constant 0 : index
    %c0_20 = arith.constant 0 : index
    %c0_21 = arith.constant 0 : index
    %12 = vector.load %arg3[%c0_18, %c0_19, %c0_20, %c0_21] : memref<1x8x8x8xbf16, #tpu.memory_space<vmem>>, vector<1x8x8x8xbf16>
    %13 = vector.shape_cast %12 : vector<1x8x8x8xbf16> to vector<8x8x8xbf16>
    %c2 = arith.constant 2 : index
    %c1_22 = arith.constant 1 : index
    %c1_23 = arith.constant 1 : index
    %c0_24 = arith.constant 0 : index
    %14 = vector.load %arg20[%c2, %c1_22, %c1_23, %c0_24] : memref<4x9x9x8xbf16, #tpu.memory_space<vmem>>, vector<1x8x8x8xbf16>
    %15 = vector.shape_cast %14 : vector<1x8x8x8xbf16> to vector<8x8x8xbf16>
    %16 = vector.shape_cast %13 : vector<8x8x8xbf16> to vector<1x8x8x8xbf16>
    tpu.vector_store %arg20[%c2, %c1_22, %c1_23, %c0_24], %16 {strides = array<i32>} : memref<4x9x9x8xbf16, #tpu.memory_space<vmem>>, vector<1x8x8x8xbf16>,
    %c0_25 = arith.constant 0 : index
    %c0_26 = arith.constant 0 : index
    %c0_27 = arith.constant 0 : index
    %c0_28 = arith.constant 0 : index
    %17 = vector.load %arg4[%c0_25, %c0_26, %c0_27, %c0_28] : memref<1x8x8x8xbf16, #tpu.memory_space<vmem>>, vector<1x8x8x8xbf16>
    %18 = vector.shape_cast %17 : vector<1x8x8x8xbf16> to vector<8x8x8xbf16>
    %c3 = arith.constant 3 : index
    %c1_29 = arith.constant 1 : index
    %c1_30 = arith.constant 1 : index
    %c0_31 = arith.constant 0 : index
    %19 = vector.load %arg20[%c3, %c1_29, %c1_30, %c0_31] : memref<4x9x9x8xbf16, #tpu.memory_space<vmem>>, vector<1x8x8x8xbf16>
    %20 = vector.shape_cast %19 : vector<1x8x8x8xbf16> to vector<8x8x8xbf16>
    %21 = vector.shape_cast %18 : vector<8x8x8xbf16> to vector<1x8x8x8xbf16>
    tpu.vector_store %arg20[%c3, %c1_29, %c1_30, %c0_31], %21 {strides = array<i32>} : memref<4x9x9x8xbf16, #tpu.memory_space<vmem>>, vector<1x8x8x8xbf16>,
    %c3_32 = arith.constant 3 : index
    %c0_33 = arith.constant 0 : index
    %c0_34 = arith.constant 0 : index
    %c0_35 = arith.constant 0 : index
    %22 = vector.load %arg20[%c3_32, %c0_33, %c0_34, %c0_35] : memref<4x9x9x8xbf16, #tpu.memory_space<vmem>>, vector<1x8x8x8xbf16>
    %23 = vector.shape_cast %22 : vector<1x8x8x8xbf16> to vector<8x8x8xbf16>
    %24 = vector.shape_cast %23 : vector<8x8x8xbf16> to vector<64x8xbf16>
    %c0_36 = arith.constant 0 : index
    %c0_37 = arith.constant 0 : index
    %25 = vector.load %arg21[%c0_36, %c0_37] : memref<64x72xbf16, #tpu.memory_space<vmem>>, vector<64x8xbf16>
    tpu.vector_store %arg21[%c0_36, %c0_37], %24 {strides = array<i32>} : memref<64x72xbf16, #tpu.memory_space<vmem>>, vector<64x8xbf16>,
    %c2_38 = arith.constant 2 : index
    %c0_39 = arith.constant 0 : index
    %c1_40 = arith.constant 1 : index
    %c0_41 = arith.constant 0 : index
    %26 = vector.load %arg20[%c2_38, %c0_39, %c1_40, %c0_41] : memref<4x9x9x8xbf16, #tpu.memory_space<vmem>>, vector<1x8x8x8xbf16>
    %27 = vector.shape_cast %26 : vector<1x8x8x8xbf16> to vector<8x8x8xbf16>
    %28 = vector.shape_cast %27 : vector<8x8x8xbf16> to vector<64x8xbf16>
    %c0_42 = arith.constant 0 : index
    %c8 = arith.constant 8 : index
    %29 = vector.load %arg21[%c0_42, %c8] : memref<64x72xbf16, #tpu.memory_space<vmem>>, vector<64x8xbf16>
    tpu.vector_store %arg21[%c0_42, %c8], %28 {strides = array<i32>} : memref<64x72xbf16, #tpu.memory_space<vmem>>, vector<64x8xbf16>,
    %c3_43 = arith.constant 3 : index
    %c0_44 = arith.constant 0 : index
    %c1_45 = arith.constant 1 : index
    %c0_46 = arith.constant 0 : index
    %30 = vector.load %arg20[%c3_43, %c0_44, %c1_45, %c0_46] : memref<4x9x9x8xbf16, #tpu.memory_space<vmem>>, vector<1x8x8x8xbf16>
    %31 = vector.shape_cast %30 : vector<1x8x8x8xbf16> to vector<8x8x8xbf16>
    %32 = vector.shape_cast %31 : vector<8x8x8xbf16> to vector<64x8xbf16>
    %c0_47 = arith.constant 0 : index
    %c16 = arith.constant 16 : index
    %33 = vector.load %arg21[%c0_47, %c16] : memref<64x72xbf16, #tpu.memory_space<vmem>>, vector<64x8xbf16>
    tpu.vector_store %arg21[%c0_47, %c16], %32 {strides = array<i32>} : memref<64x72xbf16, #tpu.memory_space<vmem>>, vector<64x8xbf16>,
    %c1_48 = arith.constant 1 : index
    %c1_49 = arith.constant 1 : index
    %c0_50 = arith.constant 0 : index
    %c0_51 = arith.constant 0 : index
    %34 = vector.load %arg20[%c1_48, %c1_49, %c0_50, %c0_51] : memref<4x9x9x8xbf16, #tpu.memory_space<vmem>>, vector<1x8x8x8xbf16>
    %35 = vector.shape_cast %34 : vector<1x8x8x8xbf16> to vector<8x8x8xbf16>
    %36 = vector.shape_cast %35 : vector<8x8x8xbf16> to vector<64x8xbf16>
    %c0_52 = arith.constant 0 : index
    %c24 = arith.constant 24 : index
    %37 = vector.load %arg21[%c0_52, %c24] : memref<64x72xbf16, #tpu.memory_space<vmem>>, vector<64x8xbf16>
    tpu.vector_store %arg21[%c0_52, %c24], %36 {strides = array<i32>} : memref<64x72xbf16, #tpu.memory_space<vmem>>, vector<64x8xbf16>,
    %c0_53 = arith.constant 0 : index
    %c1_54 = arith.constant 1 : index
    %c1_55 = arith.constant 1 : index
    %c0_56 = arith.constant 0 : index
    %38 = vector.load %arg20[%c0_53, %c1_54, %c1_55, %c0_56] : memref<4x9x9x8xbf16, #tpu.memory_space<vmem>>, vector<1x8x8x8xbf16>
    %39 = vector.shape_cast %38 : vector<1x8x8x8xbf16> to vector<8x8x8xbf16>
    %40 = vector.shape_cast %39 : vector<8x8x8xbf16> to vector<64x8xbf16>
    %c0_57 = arith.constant 0 : index
    %c32 = arith.constant 32 : index
    %41 = vector.load %arg21[%c0_57, %c32] : memref<64x72xbf16, #tpu.memory_space<vmem>>, vector<64x8xbf16>
    tpu.vector_store %arg21[%c0_57, %c32], %40 {strides = array<i32>} : memref<64x72xbf16, #tpu.memory_space<vmem>>, vector<64x8xbf16>,
    %c1_58 = arith.constant 1 : index
    %c1_59 = arith.constant 1 : index
    %c1_60 = arith.constant 1 : index
    %c0_61 = arith.constant 0 : index
    %42 = vector.load %arg20[%c1_58, %c1_59, %c1_60, %c0_61] : memref<4x9x9x8xbf16, #tpu.memory_space<vmem>>, vector<1x8x8x8xbf16>
    %43 = vector.shape_cast %42 : vector<1x8x8x8xbf16> to vector<8x8x8xbf16>
    %44 = vector.shape_cast %43 : vector<8x8x8xbf16> to vector<64x8xbf16>
    %c0_62 = arith.constant 0 : index
    %c40 = arith.constant 40 : index
    %45 = vector.load %arg21[%c0_62, %c40] : memref<64x72xbf16, #tpu.memory_space<vmem>>, vector<64x8xbf16>
    tpu.vector_store %arg21[%c0_62, %c40], %44 {strides = array<i32>} : memref<64x72xbf16, #tpu.memory_space<vmem>>, vector<64x8xbf16>,
    %c3_63 = arith.constant 3 : index
    %c1_64 = arith.constant 1 : index
    %c0_65 = arith.constant 0 : index
    %c0_66 = arith.constant 0 : index
    %46 = vector.load %arg20[%c3_63, %c1_64, %c0_65, %c0_66] : memref<4x9x9x8xbf16, #tpu.memory_space<vmem>>, vector<1x8x8x8xbf16>
    %47 = vector.shape_cast %46 : vector<1x8x8x8xbf16> to vector<8x8x8xbf16>
    %48 = vector.shape_cast %47 : vector<8x8x8xbf16> to vector<64x8xbf16>
    %c0_67 = arith.constant 0 : index
    %c48 = arith.constant 48 : index
    %49 = vector.load %arg21[%c0_67, %c48] : memref<64x72xbf16, #tpu.memory_space<vmem>>, vector<64x8xbf16>
    tpu.vector_store %arg21[%c0_67, %c48], %48 {strides = array<i32>} : memref<64x72xbf16, #tpu.memory_space<vmem>>, vector<64x8xbf16>,
    %c2_68 = arith.constant 2 : index
    %c1_69 = arith.constant 1 : index
    %c1_70 = arith.constant 1 : index
    %c0_71 = arith.constant 0 : index
    %50 = vector.load %arg20[%c2_68, %c1_69, %c1_70, %c0_71] : memref<4x9x9x8xbf16, #tpu.memory_space<vmem>>, vector<1x8x8x8xbf16>
    %51 = vector.shape_cast %50 : vector<1x8x8x8xbf16> to vector<8x8x8xbf16>
    %52 = vector.shape_cast %51 : vector<8x8x8xbf16> to vector<64x8xbf16>
    %c0_72 = arith.constant 0 : index
    %c56 = arith.constant 56 : index
    %53 = vector.load %arg21[%c0_72, %c56] : memref<64x72xbf16, #tpu.memory_space<vmem>>, vector<64x8xbf16>
    tpu.vector_store %arg21[%c0_72, %c56], %52 {strides = array<i32>} : memref<64x72xbf16, #tpu.memory_space<vmem>>, vector<64x8xbf16>,
    %c3_73 = arith.constant 3 : index
    %c1_74 = arith.constant 1 : index
    %c1_75 = arith.constant 1 : index
    %c0_76 = arith.constant 0 : index
    %54 = vector.load %arg20[%c3_73, %c1_74, %c1_75, %c0_76] : memref<4x9x9x8xbf16, #tpu.memory_space<vmem>>, vector<1x8x8x8xbf16>
    %55 = vector.shape_cast %54 : vector<1x8x8x8xbf16> to vector<8x8x8xbf16>
    %56 = vector.shape_cast %55 : vector<8x8x8xbf16> to vector<64x8xbf16>
    %c0_77 = arith.constant 0 : index
    %c64 = arith.constant 64 : index
    %57 = vector.load %arg21[%c0_77, %c64] : memref<64x72xbf16, #tpu.memory_space<vmem>>, vector<64x8xbf16>
    tpu.vector_store %arg21[%c0_77, %c64], %56 {strides = array<i32>} : memref<64x72xbf16, #tpu.memory_space<vmem>>, vector<64x8xbf16>,
    %c0_78 = arith.constant 0 : index
    %c0_79 = arith.constant 0 : index
    %58 = vector.load %arg21[%c0_78, %c0_79] : memref<64x72xbf16, #tpu.memory_space<vmem>>, vector<64x72xbf16>
    %c0_80 = arith.constant 0 : index
    %c0_81 = arith.constant 0 : index
    %59 = vector.load %arg5[%c0_80, %c0_81] : memref<72x16xbf16, #tpu.memory_space<vmem>>, vector<72x16xbf16>
    %cst_82 = arith.constant dense<0.000000e+00> : vector<64x16xf32>
    %60 = tpu.matmul %58, %59, %cst_82 {dimension_numbers = #tpu.dot_dimension_numbers<[1], [0], [0], [1], [0, 0, 1, 1], [], []>} : vector<64x72xbf16>, vector<72x16xbf16>, vector<64x16xf32> -> vector<64x16xf32>
    %c0_83 = arith.constant 0 : index
    %c0_84 = arith.constant 0 : index
    %61 = vector.load %arg6[%c0_83, %c0_84] : memref<1x16xf32, #tpu.memory_space<vmem>>, vector<1x16xf32>
    %62 = vector.broadcast %61 : vector<1x16xf32> to vector<64x16xf32>
    %63 = arith.addf %60, %62 : vector<64x16xf32>
    %cst_85 = arith.constant 0.000000e+00 : f32
    %64 = vector.broadcast %cst_85 : f32 to vector<64x16xf32>
    %65 = arith.maximumf %63, %64 : vector<64x16xf32>
    %cst_86 = arith.constant 0.000000e+00 : bf16
    %66 = vector.broadcast %cst_86 : bf16 to vector<10x10x16xbf16>
    %c0_87 = arith.constant 0 : index
    %c0_88 = arith.constant 0 : index
    %c0_89 = arith.constant 0 : index
    %67 = vector.load %arg22[%c0_87, %c0_88, %c0_89] : memref<10x10x16xbf16, #tpu.memory_space<vmem>>, vector<10x10x16xbf16>
    tpu.vector_store %arg22[%c0_87, %c0_88, %c0_89], %66 {strides = array<i32>} : memref<10x10x16xbf16, #tpu.memory_space<vmem>>, vector<10x10x16xbf16>,
    %68 = vector.shape_cast %65 : vector<64x16xf32> to vector<8x8x16xf32>
    %69 = arith.truncf %68 : vector<8x8x16xf32> to vector<8x8x16xbf16>
    %c1_90 = arith.constant 1 : index
    %c1_91 = arith.constant 1 : index
    %c0_92 = arith.constant 0 : index
    %70 = vector.load %arg22[%c1_90, %c1_91, %c0_92] : memref<10x10x16xbf16, #tpu.memory_space<vmem>>, vector<8x8x16xbf16>
    tpu.vector_store %arg22[%c1_90, %c1_91, %c0_92], %69 {strides = array<i32>} : memref<10x10x16xbf16, #tpu.memory_space<vmem>>, vector<8x8x16xbf16>,
    %c0_93 = arith.constant 0 : index
    %c0_94 = arith.constant 0 : index
    %c0_95 = arith.constant 0 : index
    %71 = vector.load %arg22[%c0_93, %c0_94, %c0_95] : memref<10x10x16xbf16, #tpu.memory_space<vmem>>, vector<8x8x16xbf16>
    %72 = vector.shape_cast %71 : vector<8x8x16xbf16> to vector<64x16xbf16>
    %c0_96 = arith.constant 0 : index
    %c0_97 = arith.constant 0 : index
    %73 = vector.load %arg23[%c0_96, %c0_97] : memref<64x144xbf16, #tpu.memory_space<vmem>>, vector<64x16xbf16>
    tpu.vector_store %arg23[%c0_96, %c0_97], %72 {strides = array<i32>} : memref<64x144xbf16, #tpu.memory_space<vmem>>, vector<64x16xbf16>,
    %c0_98 = arith.constant 0 : index
    %c1_99 = arith.constant 1 : index
    %c0_100 = arith.constant 0 : index
    %74 = vector.load %arg22[%c0_98, %c1_99, %c0_100] : memref<10x10x16xbf16, #tpu.memory_space<vmem>>, vector<8x8x16xbf16>
    %75 = vector.shape_cast %74 : vector<8x8x16xbf16> to vector<64x16xbf16>
    %c0_101 = arith.constant 0 : index
    %c16_102 = arith.constant 16 : index
    %76 = vector.load %arg23[%c0_101, %c16_102] : memref<64x144xbf16, #tpu.memory_space<vmem>>, vector<64x16xbf16>
    tpu.vector_store %arg23[%c0_101, %c16_102], %75 {strides = array<i32>} : memref<64x144xbf16, #tpu.memory_space<vmem>>, vector<64x16xbf16>,
    %c0_103 = arith.constant 0 : index
    %c2_104 = arith.constant 2 : index
    %c0_105 = arith.constant 0 : index
    %77 = vector.load %arg22[%c0_103, %c2_104, %c0_105] : memref<10x10x16xbf16, #tpu.memory_space<vmem>>, vector<8x8x16xbf16>
    %78 = vector.shape_cast %77 : vector<8x8x16xbf16> to vector<64x16xbf16>
    %c0_106 = arith.constant 0 : index
    %c32_107 = arith.constant 32 : index
    %79 = vector.load %arg23[%c0_106, %c32_107] : memref<64x144xbf16, #tpu.memory_space<vmem>>, vector<64x16xbf16>
    tpu.vector_store %arg23[%c0_106, %c32_107], %78 {strides = array<i32>} : memref<64x144xbf16, #tpu.memory_space<vmem>>, vector<64x16xbf16>,
    %c1_108 = arith.constant 1 : index
    %c0_109 = arith.constant 0 : index
    %c0_110 = arith.constant 0 : index
    %80 = vector.load %arg22[%c1_108, %c0_109, %c0_110] : memref<10x10x16xbf16, #tpu.memory_space<vmem>>, vector<8x8x16xbf16>
    %81 = vector.shape_cast %80 : vector<8x8x16xbf16> to vector<64x16xbf16>
    %c0_111 = arith.constant 0 : index
    %c48_112 = arith.constant 48 : index
    %82 = vector.load %arg23[%c0_111, %c48_112] : memref<64x144xbf16, #tpu.memory_space<vmem>>, vector<64x16xbf16>
    tpu.vector_store %arg23[%c0_111, %c48_112], %81 {strides = array<i32>} : memref<64x144xbf16, #tpu.memory_space<vmem>>, vector<64x16xbf16>,
    %c1_113 = arith.constant 1 : index
    %c1_114 = arith.constant 1 : index
    %c0_115 = arith.constant 0 : index
    %83 = vector.load %arg22[%c1_113, %c1_114, %c0_115] : memref<10x10x16xbf16, #tpu.memory_space<vmem>>, vector<8x8x16xbf16>
    %84 = vector.shape_cast %83 : vector<8x8x16xbf16> to vector<64x16xbf16>
    %c0_116 = arith.constant 0 : index
    %c64_117 = arith.constant 64 : index
    %85 = vector.load %arg23[%c0_116, %c64_117] : memref<64x144xbf16, #tpu.memory_space<vmem>>, vector<64x16xbf16>
    tpu.vector_store %arg23[%c0_116, %c64_117], %84 {strides = array<i32>} : memref<64x144xbf16, #tpu.memory_space<vmem>>, vector<64x16xbf16>,
    %c1_118 = arith.constant 1 : index
    %c2_119 = arith.constant 2 : index
    %c0_120 = arith.constant 0 : index
    %86 = vector.load %arg22[%c1_118, %c2_119, %c0_120] : memref<10x10x16xbf16, #tpu.memory_space<vmem>>, vector<8x8x16xbf16>
    %87 = vector.shape_cast %86 : vector<8x8x16xbf16> to vector<64x16xbf16>
    %c0_121 = arith.constant 0 : index
    %c80 = arith.constant 80 : index
    %88 = vector.load %arg23[%c0_121, %c80] : memref<64x144xbf16, #tpu.memory_space<vmem>>, vector<64x16xbf16>
    tpu.vector_store %arg23[%c0_121, %c80], %87 {strides = array<i32>} : memref<64x144xbf16, #tpu.memory_space<vmem>>, vector<64x16xbf16>,
    %c2_122 = arith.constant 2 : index
    %c0_123 = arith.constant 0 : index
    %c0_124 = arith.constant 0 : index
    %89 = vector.load %arg22[%c2_122, %c0_123, %c0_124] : memref<10x10x16xbf16, #tpu.memory_space<vmem>>, vector<8x8x16xbf16>
    %90 = vector.shape_cast %89 : vector<8x8x16xbf16> to vector<64x16xbf16>
    %c0_125 = arith.constant 0 : index
    %c96 = arith.constant 96 : index
    %91 = vector.load %arg23[%c0_125, %c96] : memref<64x144xbf16, #tpu.memory_space<vmem>>, vector<64x16xbf16>
    tpu.vector_store %arg23[%c0_125, %c96], %90 {strides = array<i32>} : memref<64x144xbf16, #tpu.memory_space<vmem>>, vector<64x16xbf16>,
    %c2_126 = arith.constant 2 : index
    %c1_127 = arith.constant 1 : index
    %c0_128 = arith.constant 0 : index
    %92 = vector.load %arg22[%c2_126, %c1_127, %c0_128] : memref<10x10x16xbf16, #tpu.memory_space<vmem>>, vector<8x8x16xbf16>
    %93 = vector.shape_cast %92 : vector<8x8x16xbf16> to vector<64x16xbf16>
    %c0_129 = arith.constant 0 : index
    %c112 = arith.constant 112 : index
    %94 = vector.load %arg23[%c0_129, %c112] : memref<64x144xbf16, #tpu.memory_space<vmem>>, vector<64x16xbf16>
    tpu.vector_store %arg23[%c0_129, %c112], %93 {strides = array<i32>} : memref<64x144xbf16, #tpu.memory_space<vmem>>, vector<64x16xbf16>,
    %c2_130 = arith.constant 2 : index
    %c2_131 = arith.constant 2 : index
    %c0_132 = arith.constant 0 : index
    %95 = vector.load %arg22[%c2_130, %c2_131, %c0_132] : memref<10x10x16xbf16, #tpu.memory_space<vmem>>, vector<8x8x16xbf16>
    %96 = vector.shape_cast %95 : vector<8x8x16xbf16> to vector<64x16xbf16>
    %c0_133 = arith.constant 0 : index
    %c128 = arith.constant 128 : index
    %97 = vector.load %arg23[%c0_133, %c128] : memref<64x144xbf16, #tpu.memory_space<vmem>>, vector<64x16xbf16>
    tpu.vector_store %arg23[%c0_133, %c128], %96 {strides = array<i32>} : memref<64x144xbf16, #tpu.memory_space<vmem>>, vector<64x16xbf16>,
    %c0_134 = arith.constant 0 : index
    %c0_135 = arith.constant 0 : index
    %98 = vector.load %arg23[%c0_134, %c0_135] : memref<64x144xbf16, #tpu.memory_space<vmem>>, vector<64x144xbf16>
    %c0_136 = arith.constant 0 : index
    %c0_137 = arith.constant 0 : index
    %99 = vector.load %arg7[%c0_136, %c0_137] : memref<144x16xbf16, #tpu.memory_space<vmem>>, vector<144x16xbf16>
    %cst_138 = arith.constant dense<0.000000e+00> : vector<64x16xf32>
    %100 = tpu.matmul %98, %99, %cst_138 {dimension_numbers = #tpu.dot_dimension_numbers<[1], [0], [0], [1], [0, 0, 1, 1], [], []>} : vector<64x144xbf16>, vector<144x16xbf16>, vector<64x16xf32> -> vector<64x16xf32>
    %c0_139 = arith.constant 0 : index
    %c0_140 = arith.constant 0 : index
    %101 = vector.load %arg8[%c0_139, %c0_140] : memref<1x16xf32, #tpu.memory_space<vmem>>, vector<1x16xf32>
    %102 = vector.broadcast %101 : vector<1x16xf32> to vector<64x16xf32>
    %103 = arith.addf %100, %102 : vector<64x16xf32>
    %104 = vector.shape_cast %103 : vector<64x16xf32> to vector<8x8x16xf32>
    %cst_141 = arith.constant dense<0.000000e+00> : vector<16xf32>
    %105 = vector.multi_reduction <add>, %103, %cst_141 [0] : vector<64x16xf32> to vector<16xf32>
    %106 = vector.shape_cast %105 : vector<16xf32> to vector<1x16xf32>
    %cst_142 = arith.constant 6.400000e+01 : f32
    %107 = vector.broadcast %cst_142 : f32 to vector<1x16xf32>
    %108 = arith.divf %106, %107 : vector<1x16xf32>
    %cst_143 = arith.constant dense<0xFF800000> : vector<16xf32>
    %109 = vector.multi_reduction <maximumf>, %103, %cst_143 [0] : vector<64x16xf32> to vector<16xf32>
    %110 = vector.shape_cast %109 : vector<16xf32> to vector<1x16xf32>
    %c0_144 = arith.constant 0 : index
    %c0_145 = arith.constant 0 : index
    %111 = vector.load %arg11[%c0_144, %c0_145] : memref<16x4xf32, #tpu.memory_space<vmem>>, vector<16x4xf32>
    %cst_146 = arith.constant dense<0.000000e+00> : vector<1x4xf32>
    %112 = tpu.matmul %108, %111, %cst_146 {dimension_numbers = #tpu.dot_dimension_numbers<[1], [0], [0], [1], [0, 0, 1, 1], [], []>} : vector<1x16xf32>, vector<16x4xf32>, vector<1x4xf32> -> vector<1x4xf32>
    %cst_147 = arith.constant 0.000000e+00 : f32
    %113 = vector.broadcast %cst_147 : f32 to vector<1x4xf32>
    %114 = arith.maximumf %112, %113 : vector<1x4xf32>
    %c0_148 = arith.constant 0 : index
    %c0_149 = arith.constant 0 : index
    %115 = vector.load %arg12[%c0_148, %c0_149] : memref<4x16xf32, #tpu.memory_space<vmem>>, vector<4x16xf32>
    %cst_150 = arith.constant dense<0.000000e+00> : vector<1x16xf32>
    %116 = tpu.matmul %114, %115, %cst_150 {dimension_numbers = #tpu.dot_dimension_numbers<[1], [0], [0], [1], [0, 0, 1, 1], [], []>} : vector<1x4xf32>, vector<4x16xf32>, vector<1x16xf32> -> vector<1x16xf32>
    %c0_151 = arith.constant 0 : index
    %c0_152 = arith.constant 0 : index
    %117 = vector.load %arg11[%c0_151, %c0_152] : memref<16x4xf32, #tpu.memory_space<vmem>>, vector<16x4xf32>
    %cst_153 = arith.constant dense<0.000000e+00> : vector<1x4xf32>
    %118 = tpu.matmul %110, %117, %cst_153 {dimension_numbers = #tpu.dot_dimension_numbers<[1], [0], [0], [1], [0, 0, 1, 1], [], []>} : vector<1x16xf32>, vector<16x4xf32>, vector<1x4xf32> -> vector<1x4xf32>
    %cst_154 = arith.constant 0.000000e+00 : f32
    %119 = vector.broadcast %cst_154 : f32 to vector<1x4xf32>
    %120 = arith.maximumf %118, %119 : vector<1x4xf32>
    %c0_155 = arith.constant 0 : index
    %c0_156 = arith.constant 0 : index
    %121 = vector.load %arg12[%c0_155, %c0_156] : memref<4x16xf32, #tpu.memory_space<vmem>>, vector<4x16xf32>
    %cst_157 = arith.constant dense<0.000000e+00> : vector<1x16xf32>
    %122 = tpu.matmul %120, %121, %cst_157 {dimension_numbers = #tpu.dot_dimension_numbers<[1], [0], [0], [1], [0, 0, 1, 1], [], []>} : vector<1x4xf32>, vector<4x16xf32>, vector<1x16xf32> -> vector<1x16xf32>
    %123 = arith.addf %116, %122 : vector<1x16xf32>
    %124 = arith.negf %123 : vector<1x16xf32>
    %125 = math.exp %124 : vector<1x16xf32>
    %cst_158 = arith.constant 1.000000e+00 : f32
    %126 = vector.broadcast %cst_158 : f32 to vector<1x16xf32>
    %127 = arith.addf %126, %125 : vector<1x16xf32>
    %128 = arith.divf %126, %127 : vector<1x16xf32>
    %129 = vector.shape_cast %128 : vector<1x16xf32> to vector<1x1x16xf32>
    %cst_159 = arith.constant dense<0.000000e+00> : vector<8x8xf32>
    %130 = vector.multi_reduction <add>, %104, %cst_159 [2] : vector<8x8x16xf32> to vector<8x8xf32>
    %cst_160 = arith.constant 1.600000e+01 : f32
    %131 = vector.broadcast %cst_160 : f32 to vector<8x8xf32>
    %132 = arith.divf %130, %131 : vector<8x8xf32>
    %cst_161 = arith.constant dense<0xFF800000> : vector<8x8xf32>
    %133 = vector.multi_reduction <maximumf>, %104, %cst_161 [2] : vector<8x8x16xf32> to vector<8x8xf32>
    %cst_162 = arith.constant 0.000000e+00 : f32
    %134 = vector.broadcast %cst_162 : f32 to vector<2x14x14xf32>
    %c0_163 = arith.constant 0 : index
    %c0_164 = arith.constant 0 : index
    %c0_165 = arith.constant 0 : index
    %135 = vector.load %arg24[%c0_163, %c0_164, %c0_165] : memref<2x14x14xf32, #tpu.memory_space<vmem>>, vector<2x14x14xf32>
    tpu.vector_store %arg24[%c0_163, %c0_164, %c0_165], %134 {strides = array<i32>} : memref<2x14x14xf32, #tpu.memory_space<vmem>>, vector<2x14x14xf32>,
    %c0_166 = arith.constant 0 : index
    %c3_167 = arith.constant 3 : index
    %c3_168 = arith.constant 3 : index
    %136 = vector.load %arg24[%c0_166, %c3_167, %c3_168] : memref<2x14x14xf32, #tpu.memory_space<vmem>>, vector<1x8x8xf32>
    %137 = vector.shape_cast %136 : vector<1x8x8xf32> to vector<8x8xf32>
    %138 = vector.shape_cast %132 : vector<8x8xf32> to vector<1x8x8xf32>
    tpu.vector_store %arg24[%c0_166, %c3_167, %c3_168], %138 {strides = array<i32>} : memref<2x14x14xf32, #tpu.memory_space<vmem>>, vector<1x8x8xf32>,
    %c1_169 = arith.constant 1 : index
    %c3_170 = arith.constant 3 : index
    %c3_171 = arith.constant 3 : index
    %139 = vector.load %arg24[%c1_169, %c3_170, %c3_171] : memref<2x14x14xf32, #tpu.memory_space<vmem>>, vector<1x8x8xf32>
    %140 = vector.shape_cast %139 : vector<1x8x8xf32> to vector<8x8xf32>
    %141 = vector.shape_cast %133 : vector<8x8xf32> to vector<1x8x8xf32>
    tpu.vector_store %arg24[%c1_169, %c3_170, %c3_171], %141 {strides = array<i32>} : memref<2x14x14xf32, #tpu.memory_space<vmem>>, vector<1x8x8xf32>,
    %cst_172 = arith.constant 0.000000e+00 : f32
    %142 = vector.broadcast %cst_172 : f32 to vector<8x8xf32>
    %c0_173 = arith.constant 0 : index
    %c0_174 = arith.constant 0 : index
    %143 = memref.load %arg15[%c0_173, %c0_174] : memref<2x49xf32, #tpu.memory_space<smem>>
    %c0_175 = arith.constant 0 : index
    %c0_176 = arith.constant 0 : index
    %c0_177 = arith.constant 0 : index
    %144 = vector.load %arg24[%c0_175, %c0_176, %c0_177] : memref<2x14x14xf32, #tpu.memory_space<vmem>>, vector<1x8x8xf32>
    %145 = vector.shape_cast %144 : vector<1x8x8xf32> to vector<8x8xf32>
    %146 = vector.broadcast %143 : f32 to vector<8x8xf32>
    %147 = arith.mulf %146, %145 : vector<8x8xf32>
    %c1_178 = arith.constant 1 : index
    %c0_179 = arith.constant 0 : index
    %148 = memref.load %arg15[%c1_178, %c0_179] : memref<2x49xf32, #tpu.memory_space<smem>>
    %c1_180 = arith.constant 1 : index
    %c0_181 = arith.constant 0 : index
    %c0_182 = arith.constant 0 : index
    %149 = vector.load %arg24[%c1_180, %c0_181, %c0_182] : memref<2x14x14xf32, #tpu.memory_space<vmem>>, vector<1x8x8xf32>
    %150 = vector.shape_cast %149 : vector<1x8x8xf32> to vector<8x8xf32>
    %151 = vector.broadcast %148 : f32 to vector<8x8xf32>
    %152 = arith.mulf %151, %150 : vector<8x8xf32>
    %153 = arith.addf %147, %152 : vector<8x8xf32>
    %154 = arith.addf %142, %153 : vector<8x8xf32>
    %c0_183 = arith.constant 0 : index
    %c1_184 = arith.constant 1 : index
    %155 = memref.load %arg15[%c0_183, %c1_184] : memref<2x49xf32, #tpu.memory_space<smem>>
    %c0_185 = arith.constant 0 : index
    %c0_186 = arith.constant 0 : index
    %c1_187 = arith.constant 1 : index
    %156 = vector.load %arg24[%c0_185, %c0_186, %c1_187] : memref<2x14x14xf32, #tpu.memory_space<vmem>>, vector<1x8x8xf32>
    %157 = vector.shape_cast %156 : vector<1x8x8xf32> to vector<8x8xf32>
    %158 = vector.broadcast %155 : f32 to vector<8x8xf32>
    %159 = arith.mulf %158, %157 : vector<8x8xf32>
    %c1_188 = arith.constant 1 : index
    %c1_189 = arith.constant 1 : index
    %160 = memref.load %arg15[%c1_188, %c1_189] : memref<2x49xf32, #tpu.memory_space<smem>>
    %c1_190 = arith.constant 1 : index
    %c0_191 = arith.constant 0 : index
    %c1_192 = arith.constant 1 : index
    %161 = vector.load %arg24[%c1_190, %c0_191, %c1_192] : memref<2x14x14xf32, #tpu.memory_space<vmem>>, vector<1x8x8xf32>
    %162 = vector.shape_cast %161 : vector<1x8x8xf32> to vector<8x8xf32>
    %163 = vector.broadcast %160 : f32 to vector<8x8xf32>
    %164 = arith.mulf %163, %162 : vector<8x8xf32>
    %165 = arith.addf %159, %164 : vector<8x8xf32>
    %166 = arith.addf %154, %165 : vector<8x8xf32>
    %c0_193 = arith.constant 0 : index
    %c2_194 = arith.constant 2 : index
    %167 = memref.load %arg15[%c0_193, %c2_194] : memref<2x49xf32, #tpu.memory_space<smem>>
    %c0_195 = arith.constant 0 : index
    %c0_196 = arith.constant 0 : index
    %c2_197 = arith.constant 2 : index
    %168 = vector.load %arg24[%c0_195, %c0_196, %c2_197] : memref<2x14x14xf32, #tpu.memory_space<vmem>>, vector<1x8x8xf32>
    %169 = vector.shape_cast %168 : vector<1x8x8xf32> to vector<8x8xf32>
    %170 = vector.broadcast %167 : f32 to vector<8x8xf32>
    %171 = arith.mulf %170, %169 : vector<8x8xf32>
    %c1_198 = arith.constant 1 : index
    %c2_199 = arith.constant 2 : index
    %172 = memref.load %arg15[%c1_198, %c2_199] : memref<2x49xf32, #tpu.memory_space<smem>>
    %c1_200 = arith.constant 1 : index
    %c0_201 = arith.constant 0 : index
    %c2_202 = arith.constant 2 : index
    %173 = vector.load %arg24[%c1_200, %c0_201, %c2_202] : memref<2x14x14xf32, #tpu.memory_space<vmem>>, vector<1x8x8xf32>
    %174 = vector.shape_cast %173 : vector<1x8x8xf32> to vector<8x8xf32>
    %175 = vector.broadcast %172 : f32 to vector<8x8xf32>
    %176 = arith.mulf %175, %174 : vector<8x8xf32>
    %177 = arith.addf %171, %176 : vector<8x8xf32>
    %178 = arith.addf %166, %177 : vector<8x8xf32>
    %c0_203 = arith.constant 0 : index
    %c3_204 = arith.constant 3 : index
    %179 = memref.load %arg15[%c0_203, %c3_204] : memref<2x49xf32, #tpu.memory_space<smem>>
    %c0_205 = arith.constant 0 : index
    %c0_206 = arith.constant 0 : index
    %c3_207 = arith.constant 3 : index
    %180 = vector.load %arg24[%c0_205, %c0_206, %c3_207] : memref<2x14x14xf32, #tpu.memory_space<vmem>>, vector<1x8x8xf32>
    %181 = vector.shape_cast %180 : vector<1x8x8xf32> to vector<8x8xf32>
    %182 = vector.broadcast %179 : f32 to vector<8x8xf32>
    %183 = arith.mulf %182, %181 : vector<8x8xf32>
    %c1_208 = arith.constant 1 : index
    %c3_209 = arith.constant 3 : index
    %184 = memref.load %arg15[%c1_208, %c3_209] : memref<2x49xf32, #tpu.memory_space<smem>>
    %c1_210 = arith.constant 1 : index
    %c0_211 = arith.constant 0 : index
    %c3_212 = arith.constant 3 : index
    %185 = vector.load %arg24[%c1_210, %c0_211, %c3_212] : memref<2x14x14xf32, #tpu.memory_space<vmem>>, vector<1x8x8xf32>
    %186 = vector.shape_cast %185 : vector<1x8x8xf32> to vector<8x8xf32>
    %187 = vector.broadcast %184 : f32 to vector<8x8xf32>
    %188 = arith.mulf %187, %186 : vector<8x8xf32>
    %189 = arith.addf %183, %188 : vector<8x8xf32>
    %190 = arith.addf %178, %189 : vector<8x8xf32>
    %c0_213 = arith.constant 0 : index
    %c4 = arith.constant 4 : index
    %191 = memref.load %arg15[%c0_213, %c4] : memref<2x49xf32, #tpu.memory_space<smem>>
    %c0_214 = arith.constant 0 : index
    %c0_215 = arith.constant 0 : index
    %c4_216 = arith.constant 4 : index
    %192 = vector.load %arg24[%c0_214, %c0_215, %c4_216] : memref<2x14x14xf32, #tpu.memory_space<vmem>>, vector<1x8x8xf32>
    %193 = vector.shape_cast %192 : vector<1x8x8xf32> to vector<8x8xf32>
    %194 = vector.broadcast %191 : f32 to vector<8x8xf32>
    %195 = arith.mulf %194, %193 : vector<8x8xf32>
    %c1_217 = arith.constant 1 : index
    %c4_218 = arith.constant 4 : index
    %196 = memref.load %arg15[%c1_217, %c4_218] : memref<2x49xf32, #tpu.memory_space<smem>>
    %c1_219 = arith.constant 1 : index
    %c0_220 = arith.constant 0 : index
    %c4_221 = arith.constant 4 : index
    %197 = vector.load %arg24[%c1_219, %c0_220, %c4_221] : memref<2x14x14xf32, #tpu.memory_space<vmem>>, vector<1x8x8xf32>
    %198 = vector.shape_cast %197 : vector<1x8x8xf32> to vector<8x8xf32>
    %199 = vector.broadcast %196 : f32 to vector<8x8xf32>
    %200 = arith.mulf %199, %198 : vector<8x8xf32>
    %201 = arith.addf %195, %200 : vector<8x8xf32>
    %202 = arith.addf %190, %201 : vector<8x8xf32>
    %c0_222 = arith.constant 0 : index
    %c5 = arith.constant 5 : index
    %203 = memref.load %arg15[%c0_222, %c5] : memref<2x49xf32, #tpu.memory_space<smem>>
    %c0_223 = arith.constant 0 : index
    %c0_224 = arith.constant 0 : index
    %c5_225 = arith.constant 5 : index
    %204 = vector.load %arg24[%c0_223, %c0_224, %c5_225] : memref<2x14x14xf32, #tpu.memory_space<vmem>>, vector<1x8x8xf32>
    %205 = vector.shape_cast %204 : vector<1x8x8xf32> to vector<8x8xf32>
    %206 = vector.broadcast %203 : f32 to vector<8x8xf32>
    %207 = arith.mulf %206, %205 : vector<8x8xf32>
    %c1_226 = arith.constant 1 : index
    %c5_227 = arith.constant 5 : index
    %208 = memref.load %arg15[%c1_226, %c5_227] : memref<2x49xf32, #tpu.memory_space<smem>>
    %c1_228 = arith.constant 1 : index
    %c0_229 = arith.constant 0 : index
    %c5_230 = arith.constant 5 : index
    %209 = vector.load %arg24[%c1_228, %c0_229, %c5_230] : memref<2x14x14xf32, #tpu.memory_space<vmem>>, vector<1x8x8xf32>
    %210 = vector.shape_cast %209 : vector<1x8x8xf32> to vector<8x8xf32>
    %211 = vector.broadcast %208 : f32 to vector<8x8xf32>
    %212 = arith.mulf %211, %210 : vector<8x8xf32>
    %213 = arith.addf %207, %212 : vector<8x8xf32>
    %214 = arith.addf %202, %213 : vector<8x8xf32>
    %c0_231 = arith.constant 0 : index
    %c6 = arith.constant 6 : index
    %215 = memref.load %arg15[%c0_231, %c6] : memref<2x49xf32, #tpu.memory_space<smem>>
    %c0_232 = arith.constant 0 : index
    %c0_233 = arith.constant 0 : index
    %c6_234 = arith.constant 6 : index
    %216 = vector.load %arg24[%c0_232, %c0_233, %c6_234] : memref<2x14x14xf32, #tpu.memory_space<vmem>>, vector<1x8x8xf32>
    %217 = vector.shape_cast %216 : vector<1x8x8xf32> to vector<8x8xf32>
    %218 = vector.broadcast %215 : f32 to vector<8x8xf32>
    %219 = arith.mulf %218, %217 : vector<8x8xf32>
    %c1_235 = arith.constant 1 : index
    %c6_236 = arith.constant 6 : index
    %220 = memref.load %arg15[%c1_235, %c6_236] : memref<2x49xf32, #tpu.memory_space<smem>>
    %c1_237 = arith.constant 1 : index
    %c0_238 = arith.constant 0 : index
    %c6_239 = arith.constant 6 : index
    %221 = vector.load %arg24[%c1_237, %c0_238, %c6_239] : memref<2x14x14xf32, #tpu.memory_space<vmem>>, vector<1x8x8xf32>
    %222 = vector.shape_cast %221 : vector<1x8x8xf32> to vector<8x8xf32>
    %223 = vector.broadcast %220 : f32 to vector<8x8xf32>
    %224 = arith.mulf %223, %222 : vector<8x8xf32>
    %225 = arith.addf %219, %224 : vector<8x8xf32>
    %226 = arith.addf %214, %225 : vector<8x8xf32>
    %c0_240 = arith.constant 0 : index
    %c7 = arith.constant 7 : index
    %227 = memref.load %arg15[%c0_240, %c7] : memref<2x49xf32, #tpu.memory_space<smem>>
    %c0_241 = arith.constant 0 : index
    %c1_242 = arith.constant 1 : index
    %c0_243 = arith.constant 0 : index
    %228 = vector.load %arg24[%c0_241, %c1_242, %c0_243] : memref<2x14x14xf32, #tpu.memory_space<vmem>>, vector<1x8x8xf32>
    %229 = vector.shape_cast %228 : vector<1x8x8xf32> to vector<8x8xf32>
    %230 = vector.broadcast %227 : f32 to vector<8x8xf32>
    %231 = arith.mulf %230, %229 : vector<8x8xf32>
    %c1_244 = arith.constant 1 : index
    %c7_245 = arith.constant 7 : index
    %232 = memref.load %arg15[%c1_244, %c7_245] : memref<2x49xf32, #tpu.memory_space<smem>>
    %c1_246 = arith.constant 1 : index
    %c1_247 = arith.constant 1 : index
    %c0_248 = arith.constant 0 : index
    %233 = vector.load %arg24[%c1_246, %c1_247, %c0_248] : memref<2x14x14xf32, #tpu.memory_space<vmem>>, vector<1x8x8xf32>
    %234 = vector.shape_cast %233 : vector<1x8x8xf32> to vector<8x8xf32>
    %235 = vector.broadcast %232 : f32 to vector<8x8xf32>
    %236 = arith.mulf %235, %234 : vector<8x8xf32>
    %237 = arith.addf %231, %236 : vector<8x8xf32>
    %238 = arith.addf %226, %237 : vector<8x8xf32>
    %c0_249 = arith.constant 0 : index
    %c8_250 = arith.constant 8 : index
    %239 = memref.load %arg15[%c0_249, %c8_250] : memref<2x49xf32, #tpu.memory_space<smem>>
    %c0_251 = arith.constant 0 : index
    %c1_252 = arith.constant 1 : index
    %c1_253 = arith.constant 1 : index
    %240 = vector.load %arg24[%c0_251, %c1_252, %c1_253] : memref<2x14x14xf32, #tpu.memory_space<vmem>>, vector<1x8x8xf32>
    %241 = vector.shape_cast %240 : vector<1x8x8xf32> to vector<8x8xf32>
    %242 = vector.broadcast %239 : f32 to vector<8x8xf32>
    %243 = arith.mulf %242, %241 : vector<8x8xf32>
    %c1_254 = arith.constant 1 : index
    %c8_255 = arith.constant 8 : index
    %244 = memref.load %arg15[%c1_254, %c8_255] : memref<2x49xf32, #tpu.memory_space<smem>>
    %c1_256 = arith.constant 1 : index
    %c1_257 = arith.constant 1 : index
    %c1_258 = arith.constant 1 : index
    %245 = vector.load %arg24[%c1_256, %c1_257, %c1_258] : memref<2x14x14xf32, #tpu.memory_space<vmem>>, vector<1x8x8xf32>
    %246 = vector.shape_cast %245 : vector<1x8x8xf32> to vector<8x8xf32>
    %247 = vector.broadcast %244 : f32 to vector<8x8xf32>
    %248 = arith.mulf %247, %246 : vector<8x8xf32>
    %249 = arith.addf %243, %248 : vector<8x8xf32>
    %250 = arith.addf %238, %249 : vector<8x8xf32>
    %c0_259 = arith.constant 0 : index
    %c9 = arith.constant 9 : index
    %251 = memref.load %arg15[%c0_259, %c9] : memref<2x49xf32, #tpu.memory_space<smem>>
    %c0_260 = arith.constant 0 : index
    %c1_261 = arith.constant 1 : index
    %c2_262 = arith.constant 2 : index
    %252 = vector.load %arg24[%c0_260, %c1_261, %c2_262] : memref<2x14x14xf32, #tpu.memory_space<vmem>>, vector<1x8x8xf32>
    %253 = vector.shape_cast %252 : vector<1x8x8xf32> to vector<8x8xf32>
    %254 = vector.broadcast %251 : f32 to vector<8x8xf32>
    %255 = arith.mulf %254, %253 : vector<8x8xf32>
    %c1_263 = arith.constant 1 : index
    %c9_264 = arith.constant 9 : index
    %256 = memref.load %arg15[%c1_263, %c9_264] : memref<2x49xf32, #tpu.memory_space<smem>>
    %c1_265 = arith.constant 1 : index
    %c1_266 = arith.constant 1 : index
    %c2_267 = arith.constant 2 : index
    %257 = vector.load %arg24[%c1_265, %c1_266, %c2_267] : memref<2x14x14xf32, #tpu.memory_space<vmem>>, vector<1x8x8xf32>
    %258 = vector.shape_cast %257 : vector<1x8x8xf32> to vector<8x8xf32>
    %259 = vector.broadcast %256 : f32 to vector<8x8xf32>
    %260 = arith.mulf %259, %258 : vector<8x8xf32>
    %261 = arith.addf %255, %260 : vector<8x8xf32>
    %262 = arith.addf %250, %261 : vector<8x8xf32>
    %c0_268 = arith.constant 0 : index
    %c10 = arith.constant 10 : index
    %263 = memref.load %arg15[%c0_268, %c10] : memref<2x49xf32, #tpu.memory_space<smem>>
    %c0_269 = arith.constant 0 : index
    %c1_270 = arith.constant 1 : index
    %c3_271 = arith.constant 3 : index
    %264 = vector.load %arg24[%c0_269, %c1_270, %c3_271] : memref<2x14x14xf32, #tpu.memory_space<vmem>>, vector<1x8x8xf32>
    %265 = vector.shape_cast %264 : vector<1x8x8xf32> to vector<8x8xf32>
    %266 = vector.broadcast %263 : f32 to vector<8x8xf32>
    %267 = arith.mulf %266, %265 : vector<8x8xf32>
    %c1_272 = arith.constant 1 : index
    %c10_273 = arith.constant 10 : index
    %268 = memref.load %arg15[%c1_272, %c10_273] : memref<2x49xf32, #tpu.memory_space<smem>>
    %c1_274 = arith.constant 1 : index
    %c1_275 = arith.constant 1 : index
    %c3_276 = arith.constant 3 : index
    %269 = vector.load %arg24[%c1_274, %c1_275, %c3_276] : memref<2x14x14xf32, #tpu.memory_space<vmem>>, vector<1x8x8xf32>
    %270 = vector.shape_cast %269 : vector<1x8x8xf32> to vector<8x8xf32>
    %271 = vector.broadcast %268 : f32 to vector<8x8xf32>
    %272 = arith.mulf %271, %270 : vector<8x8xf32>
    %273 = arith.addf %267, %272 : vector<8x8xf32>
    %274 = arith.addf %262, %273 : vector<8x8xf32>
    %c0_277 = arith.constant 0 : index
    %c11 = arith.constant 11 : index
    %275 = memref.load %arg15[%c0_277, %c11] : memref<2x49xf32, #tpu.memory_space<smem>>
    %c0_278 = arith.constant 0 : index
    %c1_279 = arith.constant 1 : index
    %c4_280 = arith.constant 4 : index
    %276 = vector.load %arg24[%c0_278, %c1_279, %c4_280] : memref<2x14x14xf32, #tpu.memory_space<vmem>>, vector<1x8x8xf32>
    %277 = vector.shape_cast %276 : vector<1x8x8xf32> to vector<8x8xf32>
    %278 = vector.broadcast %275 : f32 to vector<8x8xf32>
    %279 = arith.mulf %278, %277 : vector<8x8xf32>
    %c1_281 = arith.constant 1 : index
    %c11_282 = arith.constant 11 : index
    %280 = memref.load %arg15[%c1_281, %c11_282] : memref<2x49xf32, #tpu.memory_space<smem>>
    %c1_283 = arith.constant 1 : index
    %c1_284 = arith.constant 1 : index
    %c4_285 = arith.constant 4 : index
    %281 = vector.load %arg24[%c1_283, %c1_284, %c4_285] : memref<2x14x14xf32, #tpu.memory_space<vmem>>, vector<1x8x8xf32>
    %282 = vector.shape_cast %281 : vector<1x8x8xf32> to vector<8x8xf32>
    %283 = vector.broadcast %280 : f32 to vector<8x8xf32>
    %284 = arith.mulf %283, %282 : vector<8x8xf32>
    %285 = arith.addf %279, %284 : vector<8x8xf32>
    %286 = arith.addf %274, %285 : vector<8x8xf32>
    %c0_286 = arith.constant 0 : index
    %c12 = arith.constant 12 : index
    %287 = memref.load %arg15[%c0_286, %c12] : memref<2x49xf32, #tpu.memory_space<smem>>
    %c0_287 = arith.constant 0 : index
    %c1_288 = arith.constant 1 : index
    %c5_289 = arith.constant 5 : index
    %288 = vector.load %arg24[%c0_287, %c1_288, %c5_289] : memref<2x14x14xf32, #tpu.memory_space<vmem>>, vector<1x8x8xf32>
    %289 = vector.shape_cast %288 : vector<1x8x8xf32> to vector<8x8xf32>
    %290 = vector.broadcast %287 : f32 to vector<8x8xf32>
    %291 = arith.mulf %290, %289 : vector<8x8xf32>
    %c1_290 = arith.constant 1 : index
    %c12_291 = arith.constant 12 : index
    %292 = memref.load %arg15[%c1_290, %c12_291] : memref<2x49xf32, #tpu.memory_space<smem>>
    %c1_292 = arith.constant 1 : index
    %c1_293 = arith.constant 1 : index
    %c5_294 = arith.constant 5 : index
    %293 = vector.load %arg24[%c1_292, %c1_293, %c5_294] : memref<2x14x14xf32, #tpu.memory_space<vmem>>, vector<1x8x8xf32>
    %294 = vector.shape_cast %293 : vector<1x8x8xf32> to vector<8x8xf32>
    %295 = vector.broadcast %292 : f32 to vector<8x8xf32>
    %296 = arith.mulf %295, %294 : vector<8x8xf32>
    %297 = arith.addf %291, %296 : vector<8x8xf32>
    %298 = arith.addf %286, %297 : vector<8x8xf32>
    %c0_295 = arith.constant 0 : index
    %c13 = arith.constant 13 : index
    %299 = memref.load %arg15[%c0_295, %c13] : memref<2x49xf32, #tpu.memory_space<smem>>
    %c0_296 = arith.constant 0 : index
    %c1_297 = arith.constant 1 : index
    %c6_298 = arith.constant 6 : index
    %300 = vector.load %arg24[%c0_296, %c1_297, %c6_298] : memref<2x14x14xf32, #tpu.memory_space<vmem>>, vector<1x8x8xf32>
    %301 = vector.shape_cast %300 : vector<1x8x8xf32> to vector<8x8xf32>
    %302 = vector.broadcast %299 : f32 to vector<8x8xf32>
    %303 = arith.mulf %302, %301 : vector<8x8xf32>
    %c1_299 = arith.constant 1 : index
    %c13_300 = arith.constant 13 : index
    %304 = memref.load %arg15[%c1_299, %c13_300] : memref<2x49xf32, #tpu.memory_space<smem>>
    %c1_301 = arith.constant 1 : index
    %c1_302 = arith.constant 1 : index
    %c6_303 = arith.constant 6 : index
    %305 = vector.load %arg24[%c1_301, %c1_302, %c6_303] : memref<2x14x14xf32, #tpu.memory_space<vmem>>, vector<1x8x8xf32>
    %306 = vector.shape_cast %305 : vector<1x8x8xf32> to vector<8x8xf32>
    %307 = vector.broadcast %304 : f32 to vector<8x8xf32>
    %308 = arith.mulf %307, %306 : vector<8x8xf32>
    %309 = arith.addf %303, %308 : vector<8x8xf32>
    %310 = arith.addf %298, %309 : vector<8x8xf32>
    %c0_304 = arith.constant 0 : index
    %c14 = arith.constant 14 : index
    %311 = memref.load %arg15[%c0_304, %c14] : memref<2x49xf32, #tpu.memory_space<smem>>
    %c0_305 = arith.constant 0 : index
    %c2_306 = arith.constant 2 : index
    %c0_307 = arith.constant 0 : index
    %312 = vector.load %arg24[%c0_305, %c2_306, %c0_307] : memref<2x14x14xf32, #tpu.memory_space<vmem>>, vector<1x8x8xf32>
    %313 = vector.shape_cast %312 : vector<1x8x8xf32> to vector<8x8xf32>
    %314 = vector.broadcast %311 : f32 to vector<8x8xf32>
    %315 = arith.mulf %314, %313 : vector<8x8xf32>
    %c1_308 = arith.constant 1 : index
    %c14_309 = arith.constant 14 : index
    %316 = memref.load %arg15[%c1_308, %c14_309] : memref<2x49xf32, #tpu.memory_space<smem>>
    %c1_310 = arith.constant 1 : index
    %c2_311 = arith.constant 2 : index
    %c0_312 = arith.constant 0 : index
    %317 = vector.load %arg24[%c1_310, %c2_311, %c0_312] : memref<2x14x14xf32, #tpu.memory_space<vmem>>, vector<1x8x8xf32>
    %318 = vector.shape_cast %317 : vector<1x8x8xf32> to vector<8x8xf32>
    %319 = vector.broadcast %316 : f32 to vector<8x8xf32>
    %320 = arith.mulf %319, %318 : vector<8x8xf32>
    %321 = arith.addf %315, %320 : vector<8x8xf32>
    %322 = arith.addf %310, %321 : vector<8x8xf32>
    %c0_313 = arith.constant 0 : index
    %c15 = arith.constant 15 : index
    %323 = memref.load %arg15[%c0_313, %c15] : memref<2x49xf32, #tpu.memory_space<smem>>
    %c0_314 = arith.constant 0 : index
    %c2_315 = arith.constant 2 : index
    %c1_316 = arith.constant 1 : index
    %324 = vector.load %arg24[%c0_314, %c2_315, %c1_316] : memref<2x14x14xf32, #tpu.memory_space<vmem>>, vector<1x8x8xf32>
    %325 = vector.shape_cast %324 : vector<1x8x8xf32> to vector<8x8xf32>
    %326 = vector.broadcast %323 : f32 to vector<8x8xf32>
    %327 = arith.mulf %326, %325 : vector<8x8xf32>
    %c1_317 = arith.constant 1 : index
    %c15_318 = arith.constant 15 : index
    %328 = memref.load %arg15[%c1_317, %c15_318] : memref<2x49xf32, #tpu.memory_space<smem>>
    %c1_319 = arith.constant 1 : index
    %c2_320 = arith.constant 2 : index
    %c1_321 = arith.constant 1 : index
    %329 = vector.load %arg24[%c1_319, %c2_320, %c1_321] : memref<2x14x14xf32, #tpu.memory_space<vmem>>, vector<1x8x8xf32>
    %330 = vector.shape_cast %329 : vector<1x8x8xf32> to vector<8x8xf32>
    %331 = vector.broadcast %328 : f32 to vector<8x8xf32>
    %332 = arith.mulf %331, %330 : vector<8x8xf32>
    %333 = arith.addf %327, %332 : vector<8x8xf32>
    %334 = arith.addf %322, %333 : vector<8x8xf32>
    %c0_322 = arith.constant 0 : index
    %c16_323 = arith.constant 16 : index
    %335 = memref.load %arg15[%c0_322, %c16_323] : memref<2x49xf32, #tpu.memory_space<smem>>
    %c0_324 = arith.constant 0 : index
    %c2_325 = arith.constant 2 : index
    %c2_326 = arith.constant 2 : index
    %336 = vector.load %arg24[%c0_324, %c2_325, %c2_326] : memref<2x14x14xf32, #tpu.memory_space<vmem>>, vector<1x8x8xf32>
    %337 = vector.shape_cast %336 : vector<1x8x8xf32> to vector<8x8xf32>
    %338 = vector.broadcast %335 : f32 to vector<8x8xf32>
    %339 = arith.mulf %338, %337 : vector<8x8xf32>
    %c1_327 = arith.constant 1 : index
    %c16_328 = arith.constant 16 : index
    %340 = memref.load %arg15[%c1_327, %c16_328] : memref<2x49xf32, #tpu.memory_space<smem>>
    %c1_329 = arith.constant 1 : index
    %c2_330 = arith.constant 2 : index
    %c2_331 = arith.constant 2 : index
    %341 = vector.load %arg24[%c1_329, %c2_330, %c2_331] : memref<2x14x14xf32, #tpu.memory_space<vmem>>, vector<1x8x8xf32>
    %342 = vector.shape_cast %341 : vector<1x8x8xf32> to vector<8x8xf32>
    %343 = vector.broadcast %340 : f32 to vector<8x8xf32>
    %344 = arith.mulf %343, %342 : vector<8x8xf32>
    %345 = arith.addf %339, %344 : vector<8x8xf32>
    %346 = arith.addf %334, %345 : vector<8x8xf32>
    %c0_332 = arith.constant 0 : index
    %c17 = arith.constant 17 : index
    %347 = memref.load %arg15[%c0_332, %c17] : memref<2x49xf32, #tpu.memory_space<smem>>
    %c0_333 = arith.constant 0 : index
    %c2_334 = arith.constant 2 : index
    %c3_335 = arith.constant 3 : index
    %348 = vector.load %arg24[%c0_333, %c2_334, %c3_335] : memref<2x14x14xf32, #tpu.memory_space<vmem>>, vector<1x8x8xf32>
    %349 = vector.shape_cast %348 : vector<1x8x8xf32> to vector<8x8xf32>
    %350 = vector.broadcast %347 : f32 to vector<8x8xf32>
    %351 = arith.mulf %350, %349 : vector<8x8xf32>
    %c1_336 = arith.constant 1 : index
    %c17_337 = arith.constant 17 : index
    %352 = memref.load %arg15[%c1_336, %c17_337] : memref<2x49xf32, #tpu.memory_space<smem>>
    %c1_338 = arith.constant 1 : index
    %c2_339 = arith.constant 2 : index
    %c3_340 = arith.constant 3 : index
    %353 = vector.load %arg24[%c1_338, %c2_339, %c3_340] : memref<2x14x14xf32, #tpu.memory_space<vmem>>, vector<1x8x8xf32>
    %354 = vector.shape_cast %353 : vector<1x8x8xf32> to vector<8x8xf32>
    %355 = vector.broadcast %352 : f32 to vector<8x8xf32>
    %356 = arith.mulf %355, %354 : vector<8x8xf32>
    %357 = arith.addf %351, %356 : vector<8x8xf32>
    %358 = arith.addf %346, %357 : vector<8x8xf32>
    %c0_341 = arith.constant 0 : index
    %c18 = arith.constant 18 : index
    %359 = memref.load %arg15[%c0_341, %c18] : memref<2x49xf32, #tpu.memory_space<smem>>
    %c0_342 = arith.constant 0 : index
    %c2_343 = arith.constant 2 : index
    %c4_344 = arith.constant 4 : index
    %360 = vector.load %arg24[%c0_342, %c2_343, %c4_344] : memref<2x14x14xf32, #tpu.memory_space<vmem>>, vector<1x8x8xf32>
    %361 = vector.shape_cast %360 : vector<1x8x8xf32> to vector<8x8xf32>
    %362 = vector.broadcast %359 : f32 to vector<8x8xf32>
    %363 = arith.mulf %362, %361 : vector<8x8xf32>
    %c1_345 = arith.constant 1 : index
    %c18_346 = arith.constant 18 : index
    %364 = memref.load %arg15[%c1_345, %c18_346] : memref<2x49xf32, #tpu.memory_space<smem>>
    %c1_347 = arith.constant 1 : index
    %c2_348 = arith.constant 2 : index
    %c4_349 = arith.constant 4 : index
    %365 = vector.load %arg24[%c1_347, %c2_348, %c4_349] : memref<2x14x14xf32, #tpu.memory_space<vmem>>, vector<1x8x8xf32>
    %366 = vector.shape_cast %365 : vector<1x8x8xf32> to vector<8x8xf32>
    %367 = vector.broadcast %364 : f32 to vector<8x8xf32>
    %368 = arith.mulf %367, %366 : vector<8x8xf32>
    %369 = arith.addf %363, %368 : vector<8x8xf32>
    %370 = arith.addf %358, %369 : vector<8x8xf32>
    %c0_350 = arith.constant 0 : index
    %c19 = arith.constant 19 : index
    %371 = memref.load %arg15[%c0_350, %c19] : memref<2x49xf32, #tpu.memory_space<smem>>
    %c0_351 = arith.constant 0 : index
    %c2_352 = arith.constant 2 : index
    %c5_353 = arith.constant 5 : index
    %372 = vector.load %arg24[%c0_351, %c2_352, %c5_353] : memref<2x14x14xf32, #tpu.memory_space<vmem>>, vector<1x8x8xf32>
    %373 = vector.shape_cast %372 : vector<1x8x8xf32> to vector<8x8xf32>
    %374 = vector.broadcast %371 : f32 to vector<8x8xf32>
    %375 = arith.mulf %374, %373 : vector<8x8xf32>
    %c1_354 = arith.constant 1 : index
    %c19_355 = arith.constant 19 : index
    %376 = memref.load %arg15[%c1_354, %c19_355] : memref<2x49xf32, #tpu.memory_space<smem>>
    %c1_356 = arith.constant 1 : index
    %c2_357 = arith.constant 2 : index
    %c5_358 = arith.constant 5 : index
    %377 = vector.load %arg24[%c1_356, %c2_357, %c5_358] : memref<2x14x14xf32, #tpu.memory_space<vmem>>, vector<1x8x8xf32>
    %378 = vector.shape_cast %377 : vector<1x8x8xf32> to vector<8x8xf32>
    %379 = vector.broadcast %376 : f32 to vector<8x8xf32>
    %380 = arith.mulf %379, %378 : vector<8x8xf32>
    %381 = arith.addf %375, %380 : vector<8x8xf32>
    %382 = arith.addf %370, %381 : vector<8x8xf32>
    %c0_359 = arith.constant 0 : index
    %c20 = arith.constant 20 : index
    %383 = memref.load %arg15[%c0_359, %c20] : memref<2x49xf32, #tpu.memory_space<smem>>
    %c0_360 = arith.constant 0 : index
    %c2_361 = arith.constant 2 : index
    %c6_362 = arith.constant 6 : index
    %384 = vector.load %arg24[%c0_360, %c2_361, %c6_362] : memref<2x14x14xf32, #tpu.memory_space<vmem>>, vector<1x8x8xf32>
    %385 = vector.shape_cast %384 : vector<1x8x8xf32> to vector<8x8xf32>
    %386 = vector.broadcast %383 : f32 to vector<8x8xf32>
    %387 = arith.mulf %386, %385 : vector<8x8xf32>
    %c1_363 = arith.constant 1 : index
    %c20_364 = arith.constant 20 : index
    %388 = memref.load %arg15[%c1_363, %c20_364] : memref<2x49xf32, #tpu.memory_space<smem>>
    %c1_365 = arith.constant 1 : index
    %c2_366 = arith.constant 2 : index
    %c6_367 = arith.constant 6 : index
    %389 = vector.load %arg24[%c1_365, %c2_366, %c6_367] : memref<2x14x14xf32, #tpu.memory_space<vmem>>, vector<1x8x8xf32>
    %390 = vector.shape_cast %389 : vector<1x8x8xf32> to vector<8x8xf32>
    %391 = vector.broadcast %388 : f32 to vector<8x8xf32>
    %392 = arith.mulf %391, %390 : vector<8x8xf32>
    %393 = arith.addf %387, %392 : vector<8x8xf32>
    %394 = arith.addf %382, %393 : vector<8x8xf32>
    %c0_368 = arith.constant 0 : index
    %c21 = arith.constant 21 : index
    %395 = memref.load %arg15[%c0_368, %c21] : memref<2x49xf32, #tpu.memory_space<smem>>
    %c0_369 = arith.constant 0 : index
    %c3_370 = arith.constant 3 : index
    %c0_371 = arith.constant 0 : index
    %396 = vector.load %arg24[%c0_369, %c3_370, %c0_371] : memref<2x14x14xf32, #tpu.memory_space<vmem>>, vector<1x8x8xf32>
    %397 = vector.shape_cast %396 : vector<1x8x8xf32> to vector<8x8xf32>
    %398 = vector.broadcast %395 : f32 to vector<8x8xf32>
    %399 = arith.mulf %398, %397 : vector<8x8xf32>
    %c1_372 = arith.constant 1 : index
    %c21_373 = arith.constant 21 : index
    %400 = memref.load %arg15[%c1_372, %c21_373] : memref<2x49xf32, #tpu.memory_space<smem>>
    %c1_374 = arith.constant 1 : index
    %c3_375 = arith.constant 3 : index
    %c0_376 = arith.constant 0 : index
    %401 = vector.load %arg24[%c1_374, %c3_375, %c0_376] : memref<2x14x14xf32, #tpu.memory_space<vmem>>, vector<1x8x8xf32>
    %402 = vector.shape_cast %401 : vector<1x8x8xf32> to vector<8x8xf32>
    %403 = vector.broadcast %400 : f32 to vector<8x8xf32>
    %404 = arith.mulf %403, %402 : vector<8x8xf32>
    %405 = arith.addf %399, %404 : vector<8x8xf32>
    %406 = arith.addf %394, %405 : vector<8x8xf32>
    %c0_377 = arith.constant 0 : index
    %c22 = arith.constant 22 : index
    %407 = memref.load %arg15[%c0_377, %c22] : memref<2x49xf32, #tpu.memory_space<smem>>
    %c0_378 = arith.constant 0 : index
    %c3_379 = arith.constant 3 : index
    %c1_380 = arith.constant 1 : index
    %408 = vector.load %arg24[%c0_378, %c3_379, %c1_380] : memref<2x14x14xf32, #tpu.memory_space<vmem>>, vector<1x8x8xf32>
    %409 = vector.shape_cast %408 : vector<1x8x8xf32> to vector<8x8xf32>
    %410 = vector.broadcast %407 : f32 to vector<8x8xf32>
    %411 = arith.mulf %410, %409 : vector<8x8xf32>
    %c1_381 = arith.constant 1 : index
    %c22_382 = arith.constant 22 : index
    %412 = memref.load %arg15[%c1_381, %c22_382] : memref<2x49xf32, #tpu.memory_space<smem>>
    %c1_383 = arith.constant 1 : index
    %c3_384 = arith.constant 3 : index
    %c1_385 = arith.constant 1 : index
    %413 = vector.load %arg24[%c1_383, %c3_384, %c1_385] : memref<2x14x14xf32, #tpu.memory_space<vmem>>, vector<1x8x8xf32>
    %414 = vector.shape_cast %413 : vector<1x8x8xf32> to vector<8x8xf32>
    %415 = vector.broadcast %412 : f32 to vector<8x8xf32>
    %416 = arith.mulf %415, %414 : vector<8x8xf32>
    %417 = arith.addf %411, %416 : vector<8x8xf32>
    %418 = arith.addf %406, %417 : vector<8x8xf32>
    %c0_386 = arith.constant 0 : index
    %c23 = arith.constant 23 : index
    %419 = memref.load %arg15[%c0_386, %c23] : memref<2x49xf32, #tpu.memory_space<smem>>
    %c0_387 = arith.constant 0 : index
    %c3_388 = arith.constant 3 : index
    %c2_389 = arith.constant 2 : index
    %420 = vector.load %arg24[%c0_387, %c3_388, %c2_389] : memref<2x14x14xf32, #tpu.memory_space<vmem>>, vector<1x8x8xf32>
    %421 = vector.shape_cast %420 : vector<1x8x8xf32> to vector<8x8xf32>
    %422 = vector.broadcast %419 : f32 to vector<8x8xf32>
    %423 = arith.mulf %422, %421 : vector<8x8xf32>
    %c1_390 = arith.constant 1 : index
    %c23_391 = arith.constant 23 : index
    %424 = memref.load %arg15[%c1_390, %c23_391] : memref<2x49xf32, #tpu.memory_space<smem>>
    %c1_392 = arith.constant 1 : index
    %c3_393 = arith.constant 3 : index
    %c2_394 = arith.constant 2 : index
    %425 = vector.load %arg24[%c1_392, %c3_393, %c2_394] : memref<2x14x14xf32, #tpu.memory_space<vmem>>, vector<1x8x8xf32>
    %426 = vector.shape_cast %425 : vector<1x8x8xf32> to vector<8x8xf32>
    %427 = vector.broadcast %424 : f32 to vector<8x8xf32>
    %428 = arith.mulf %427, %426 : vector<8x8xf32>
    %429 = arith.addf %423, %428 : vector<8x8xf32>
    %430 = arith.addf %418, %429 : vector<8x8xf32>
    %c0_395 = arith.constant 0 : index
    %c24_396 = arith.constant 24 : index
    %431 = memref.load %arg15[%c0_395, %c24_396] : memref<2x49xf32, #tpu.memory_space<smem>>
    %c0_397 = arith.constant 0 : index
    %c3_398 = arith.constant 3 : index
    %c3_399 = arith.constant 3 : index
    %432 = vector.load %arg24[%c0_397, %c3_398, %c3_399] : memref<2x14x14xf32, #tpu.memory_space<vmem>>, vector<1x8x8xf32>
    %433 = vector.shape_cast %432 : vector<1x8x8xf32> to vector<8x8xf32>
    %434 = vector.broadcast %431 : f32 to vector<8x8xf32>
    %435 = arith.mulf %434, %433 : vector<8x8xf32>
    %c1_400 = arith.constant 1 : index
    %c24_401 = arith.constant 24 : index
    %436 = memref.load %arg15[%c1_400, %c24_401] : memref<2x49xf32, #tpu.memory_space<smem>>
    %c1_402 = arith.constant 1 : index
    %c3_403 = arith.constant 3 : index
    %c3_404 = arith.constant 3 : index
    %437 = vector.load %arg24[%c1_402, %c3_403, %c3_404] : memref<2x14x14xf32, #tpu.memory_space<vmem>>, vector<1x8x8xf32>
    %438 = vector.shape_cast %437 : vector<1x8x8xf32> to vector<8x8xf32>
    %439 = vector.broadcast %436 : f32 to vector<8x8xf32>
    %440 = arith.mulf %439, %438 : vector<8x8xf32>
    %441 = arith.addf %435, %440 : vector<8x8xf32>
    %442 = arith.addf %430, %441 : vector<8x8xf32>
    %c0_405 = arith.constant 0 : index
    %c25 = arith.constant 25 : index
    %443 = memref.load %arg15[%c0_405, %c25] : memref<2x49xf32, #tpu.memory_space<smem>>
    %c0_406 = arith.constant 0 : index
    %c3_407 = arith.constant 3 : index
    %c4_408 = arith.constant 4 : index
    %444 = vector.load %arg24[%c0_406, %c3_407, %c4_408] : memref<2x14x14xf32, #tpu.memory_space<vmem>>, vector<1x8x8xf32>
    %445 = vector.shape_cast %444 : vector<1x8x8xf32> to vector<8x8xf32>
    %446 = vector.broadcast %443 : f32 to vector<8x8xf32>
    %447 = arith.mulf %446, %445 : vector<8x8xf32>
    %c1_409 = arith.constant 1 : index
    %c25_410 = arith.constant 25 : index
    %448 = memref.load %arg15[%c1_409, %c25_410] : memref<2x49xf32, #tpu.memory_space<smem>>
    %c1_411 = arith.constant 1 : index
    %c3_412 = arith.constant 3 : index
    %c4_413 = arith.constant 4 : index
    %449 = vector.load %arg24[%c1_411, %c3_412, %c4_413] : memref<2x14x14xf32, #tpu.memory_space<vmem>>, vector<1x8x8xf32>
    %450 = vector.shape_cast %449 : vector<1x8x8xf32> to vector<8x8xf32>
    %451 = vector.broadcast %448 : f32 to vector<8x8xf32>
    %452 = arith.mulf %451, %450 : vector<8x8xf32>
    %453 = arith.addf %447, %452 : vector<8x8xf32>
    %454 = arith.addf %442, %453 : vector<8x8xf32>
    %c0_414 = arith.constant 0 : index
    %c26 = arith.constant 26 : index
    %455 = memref.load %arg15[%c0_414, %c26] : memref<2x49xf32, #tpu.memory_space<smem>>
    %c0_415 = arith.constant 0 : index
    %c3_416 = arith.constant 3 : index
    %c5_417 = arith.constant 5 : index
    %456 = vector.load %arg24[%c0_415, %c3_416, %c5_417] : memref<2x14x14xf32, #tpu.memory_space<vmem>>, vector<1x8x8xf32>
    %457 = vector.shape_cast %456 : vector<1x8x8xf32> to vector<8x8xf32>
    %458 = vector.broadcast %455 : f32 to vector<8x8xf32>
    %459 = arith.mulf %458, %457 : vector<8x8xf32>
    %c1_418 = arith.constant 1 : index
    %c26_419 = arith.constant 26 : index
    %460 = memref.load %arg15[%c1_418, %c26_419] : memref<2x49xf32, #tpu.memory_space<smem>>
    %c1_420 = arith.constant 1 : index
    %c3_421 = arith.constant 3 : index
    %c5_422 = arith.constant 5 : index
    %461 = vector.load %arg24[%c1_420, %c3_421, %c5_422] : memref<2x14x14xf32, #tpu.memory_space<vmem>>, vector<1x8x8xf32>
    %462 = vector.shape_cast %461 : vector<1x8x8xf32> to vector<8x8xf32>
    %463 = vector.broadcast %460 : f32 to vector<8x8xf32>
    %464 = arith.mulf %463, %462 : vector<8x8xf32>
    %465 = arith.addf %459, %464 : vector<8x8xf32>
    %466 = arith.addf %454, %465 : vector<8x8xf32>
    %c0_423 = arith.constant 0 : index
    %c27 = arith.constant 27 : index
    %467 = memref.load %arg15[%c0_423, %c27] : memref<2x49xf32, #tpu.memory_space<smem>>
    %c0_424 = arith.constant 0 : index
    %c3_425 = arith.constant 3 : index
    %c6_426 = arith.constant 6 : index
    %468 = vector.load %arg24[%c0_424, %c3_425, %c6_426] : memref<2x14x14xf32, #tpu.memory_space<vmem>>, vector<1x8x8xf32>
    %469 = vector.shape_cast %468 : vector<1x8x8xf32> to vector<8x8xf32>
    %470 = vector.broadcast %467 : f32 to vector<8x8xf32>
    %471 = arith.mulf %470, %469 : vector<8x8xf32>
    %c1_427 = arith.constant 1 : index
    %c27_428 = arith.constant 27 : index
    %472 = memref.load %arg15[%c1_427, %c27_428] : memref<2x49xf32, #tpu.memory_space<smem>>
    %c1_429 = arith.constant 1 : index
    %c3_430 = arith.constant 3 : index
    %c6_431 = arith.constant 6 : index
    %473 = vector.load %arg24[%c1_429, %c3_430, %c6_431] : memref<2x14x14xf32, #tpu.memory_space<vmem>>, vector<1x8x8xf32>
    %474 = vector.shape_cast %473 : vector<1x8x8xf32> to vector<8x8xf32>
    %475 = vector.broadcast %472 : f32 to vector<8x8xf32>
    %476 = arith.mulf %475, %474 : vector<8x8xf32>
    %477 = arith.addf %471, %476 : vector<8x8xf32>
    %478 = arith.addf %466, %477 : vector<8x8xf32>
    %c0_432 = arith.constant 0 : index
    %c28 = arith.constant 28 : index
    %479 = memref.load %arg15[%c0_432, %c28] : memref<2x49xf32, #tpu.memory_space<smem>>
    %c0_433 = arith.constant 0 : index
    %c4_434 = arith.constant 4 : index
    %c0_435 = arith.constant 0 : index
    %480 = vector.load %arg24[%c0_433, %c4_434, %c0_435] : memref<2x14x14xf32, #tpu.memory_space<vmem>>, vector<1x8x8xf32>
    %481 = vector.shape_cast %480 : vector<1x8x8xf32> to vector<8x8xf32>
    %482 = vector.broadcast %479 : f32 to vector<8x8xf32>
    %483 = arith.mulf %482, %481 : vector<8x8xf32>
    %c1_436 = arith.constant 1 : index
    %c28_437 = arith.constant 28 : index
    %484 = memref.load %arg15[%c1_436, %c28_437] : memref<2x49xf32, #tpu.memory_space<smem>>
    %c1_438 = arith.constant 1 : index
    %c4_439 = arith.constant 4 : index
    %c0_440 = arith.constant 0 : index
    %485 = vector.load %arg24[%c1_438, %c4_439, %c0_440] : memref<2x14x14xf32, #tpu.memory_space<vmem>>, vector<1x8x8xf32>
    %486 = vector.shape_cast %485 : vector<1x8x8xf32> to vector<8x8xf32>
    %487 = vector.broadcast %484 : f32 to vector<8x8xf32>
    %488 = arith.mulf %487, %486 : vector<8x8xf32>
    %489 = arith.addf %483, %488 : vector<8x8xf32>
    %490 = arith.addf %478, %489 : vector<8x8xf32>
    %c0_441 = arith.constant 0 : index
    %c29 = arith.constant 29 : index
    %491 = memref.load %arg15[%c0_441, %c29] : memref<2x49xf32, #tpu.memory_space<smem>>
    %c0_442 = arith.constant 0 : index
    %c4_443 = arith.constant 4 : index
    %c1_444 = arith.constant 1 : index
    %492 = vector.load %arg24[%c0_442, %c4_443, %c1_444] : memref<2x14x14xf32, #tpu.memory_space<vmem>>, vector<1x8x8xf32>
    %493 = vector.shape_cast %492 : vector<1x8x8xf32> to vector<8x8xf32>
    %494 = vector.broadcast %491 : f32 to vector<8x8xf32>
    %495 = arith.mulf %494, %493 : vector<8x8xf32>
    %c1_445 = arith.constant 1 : index
    %c29_446 = arith.constant 29 : index
    %496 = memref.load %arg15[%c1_445, %c29_446] : memref<2x49xf32, #tpu.memory_space<smem>>
    %c1_447 = arith.constant 1 : index
    %c4_448 = arith.constant 4 : index
    %c1_449 = arith.constant 1 : index
    %497 = vector.load %arg24[%c1_447, %c4_448, %c1_449] : memref<2x14x14xf32, #tpu.memory_space<vmem>>, vector<1x8x8xf32>
    %498 = vector.shape_cast %497 : vector<1x8x8xf32> to vector<8x8xf32>
    %499 = vector.broadcast %496 : f32 to vector<8x8xf32>
    %500 = arith.mulf %499, %498 : vector<8x8xf32>
    %501 = arith.addf %495, %500 : vector<8x8xf32>
    %502 = arith.addf %490, %501 : vector<8x8xf32>
    %c0_450 = arith.constant 0 : index
    %c30 = arith.constant 30 : index
    %503 = memref.load %arg15[%c0_450, %c30] : memref<2x49xf32, #tpu.memory_space<smem>>
    %c0_451 = arith.constant 0 : index
    %c4_452 = arith.constant 4 : index
    %c2_453 = arith.constant 2 : index
    %504 = vector.load %arg24[%c0_451, %c4_452, %c2_453] : memref<2x14x14xf32, #tpu.memory_space<vmem>>, vector<1x8x8xf32>
    %505 = vector.shape_cast %504 : vector<1x8x8xf32> to vector<8x8xf32>
    %506 = vector.broadcast %503 : f32 to vector<8x8xf32>
    %507 = arith.mulf %506, %505 : vector<8x8xf32>
    %c1_454 = arith.constant 1 : index
    %c30_455 = arith.constant 30 : index
    %508 = memref.load %arg15[%c1_454, %c30_455] : memref<2x49xf32, #tpu.memory_space<smem>>
    %c1_456 = arith.constant 1 : index
    %c4_457 = arith.constant 4 : index
    %c2_458 = arith.constant 2 : index
    %509 = vector.load %arg24[%c1_456, %c4_457, %c2_458] : memref<2x14x14xf32, #tpu.memory_space<vmem>>, vector<1x8x8xf32>
    %510 = vector.shape_cast %509 : vector<1x8x8xf32> to vector<8x8xf32>
    %511 = vector.broadcast %508 : f32 to vector<8x8xf32>
    %512 = arith.mulf %511, %510 : vector<8x8xf32>
    %513 = arith.addf %507, %512 : vector<8x8xf32>
    %514 = arith.addf %502, %513 : vector<8x8xf32>
    %c0_459 = arith.constant 0 : index
    %c31 = arith.constant 31 : index
    %515 = memref.load %arg15[%c0_459, %c31] : memref<2x49xf32, #tpu.memory_space<smem>>
    %c0_460 = arith.constant 0 : index
    %c4_461 = arith.constant 4 : index
    %c3_462 = arith.constant 3 : index
    %516 = vector.load %arg24[%c0_460, %c4_461, %c3_462] : memref<2x14x14xf32, #tpu.memory_space<vmem>>, vector<1x8x8xf32>
    %517 = vector.shape_cast %516 : vector<1x8x8xf32> to vector<8x8xf32>
    %518 = vector.broadcast %515 : f32 to vector<8x8xf32>
    %519 = arith.mulf %518, %517 : vector<8x8xf32>
    %c1_463 = arith.constant 1 : index
    %c31_464 = arith.constant 31 : index
    %520 = memref.load %arg15[%c1_463, %c31_464] : memref<2x49xf32, #tpu.memory_space<smem>>
    %c1_465 = arith.constant 1 : index
    %c4_466 = arith.constant 4 : index
    %c3_467 = arith.constant 3 : index
    %521 = vector.load %arg24[%c1_465, %c4_466, %c3_467] : memref<2x14x14xf32, #tpu.memory_space<vmem>>, vector<1x8x8xf32>
    %522 = vector.shape_cast %521 : vector<1x8x8xf32> to vector<8x8xf32>
    %523 = vector.broadcast %520 : f32 to vector<8x8xf32>
    %524 = arith.mulf %523, %522 : vector<8x8xf32>
    %525 = arith.addf %519, %524 : vector<8x8xf32>
    %526 = arith.addf %514, %525 : vector<8x8xf32>
    %c0_468 = arith.constant 0 : index
    %c32_469 = arith.constant 32 : index
    %527 = memref.load %arg15[%c0_468, %c32_469] : memref<2x49xf32, #tpu.memory_space<smem>>
    %c0_470 = arith.constant 0 : index
    %c4_471 = arith.constant 4 : index
    %c4_472 = arith.constant 4 : index
    %528 = vector.load %arg24[%c0_470, %c4_471, %c4_472] : memref<2x14x14xf32, #tpu.memory_space<vmem>>, vector<1x8x8xf32>
    %529 = vector.shape_cast %528 : vector<1x8x8xf32> to vector<8x8xf32>
    %530 = vector.broadcast %527 : f32 to vector<8x8xf32>
    %531 = arith.mulf %530, %529 : vector<8x8xf32>
    %c1_473 = arith.constant 1 : index
    %c32_474 = arith.constant 32 : index
    %532 = memref.load %arg15[%c1_473, %c32_474] : memref<2x49xf32, #tpu.memory_space<smem>>
    %c1_475 = arith.constant 1 : index
    %c4_476 = arith.constant 4 : index
    %c4_477 = arith.constant 4 : index
    %533 = vector.load %arg24[%c1_475, %c4_476, %c4_477] : memref<2x14x14xf32, #tpu.memory_space<vmem>>, vector<1x8x8xf32>
    %534 = vector.shape_cast %533 : vector<1x8x8xf32> to vector<8x8xf32>
    %535 = vector.broadcast %532 : f32 to vector<8x8xf32>
    %536 = arith.mulf %535, %534 : vector<8x8xf32>
    %537 = arith.addf %531, %536 : vector<8x8xf32>
    %538 = arith.addf %526, %537 : vector<8x8xf32>
    %c0_478 = arith.constant 0 : index
    %c33 = arith.constant 33 : index
    %539 = memref.load %arg15[%c0_478, %c33] : memref<2x49xf32, #tpu.memory_space<smem>>
    %c0_479 = arith.constant 0 : index
    %c4_480 = arith.constant 4 : index
    %c5_481 = arith.constant 5 : index
    %540 = vector.load %arg24[%c0_479, %c4_480, %c5_481] : memref<2x14x14xf32, #tpu.memory_space<vmem>>, vector<1x8x8xf32>
    %541 = vector.shape_cast %540 : vector<1x8x8xf32> to vector<8x8xf32>
    %542 = vector.broadcast %539 : f32 to vector<8x8xf32>
    %543 = arith.mulf %542, %541 : vector<8x8xf32>
    %c1_482 = arith.constant 1 : index
    %c33_483 = arith.constant 33 : index
    %544 = memref.load %arg15[%c1_482, %c33_483] : memref<2x49xf32, #tpu.memory_space<smem>>
    %c1_484 = arith.constant 1 : index
    %c4_485 = arith.constant 4 : index
    %c5_486 = arith.constant 5 : index
    %545 = vector.load %arg24[%c1_484, %c4_485, %c5_486] : memref<2x14x14xf32, #tpu.memory_space<vmem>>, vector<1x8x8xf32>
    %546 = vector.shape_cast %545 : vector<1x8x8xf32> to vector<8x8xf32>
    %547 = vector.broadcast %544 : f32 to vector<8x8xf32>
    %548 = arith.mulf %547, %546 : vector<8x8xf32>
    %549 = arith.addf %543, %548 : vector<8x8xf32>
    %550 = arith.addf %538, %549 : vector<8x8xf32>
    %c0_487 = arith.constant 0 : index
    %c34 = arith.constant 34 : index
    %551 = memref.load %arg15[%c0_487, %c34] : memref<2x49xf32, #tpu.memory_space<smem>>
    %c0_488 = arith.constant 0 : index
    %c4_489 = arith.constant 4 : index
    %c6_490 = arith.constant 6 : index
    %552 = vector.load %arg24[%c0_488, %c4_489, %c6_490] : memref<2x14x14xf32, #tpu.memory_space<vmem>>, vector<1x8x8xf32>
    %553 = vector.shape_cast %552 : vector<1x8x8xf32> to vector<8x8xf32>
    %554 = vector.broadcast %551 : f32 to vector<8x8xf32>
    %555 = arith.mulf %554, %553 : vector<8x8xf32>
    %c1_491 = arith.constant 1 : index
    %c34_492 = arith.constant 34 : index
    %556 = memref.load %arg15[%c1_491, %c34_492] : memref<2x49xf32, #tpu.memory_space<smem>>
    %c1_493 = arith.constant 1 : index
    %c4_494 = arith.constant 4 : index
    %c6_495 = arith.constant 6 : index
    %557 = vector.load %arg24[%c1_493, %c4_494, %c6_495] : memref<2x14x14xf32, #tpu.memory_space<vmem>>, vector<1x8x8xf32>
    %558 = vector.shape_cast %557 : vector<1x8x8xf32> to vector<8x8xf32>
    %559 = vector.broadcast %556 : f32 to vector<8x8xf32>
    %560 = arith.mulf %559, %558 : vector<8x8xf32>
    %561 = arith.addf %555, %560 : vector<8x8xf32>
    %562 = arith.addf %550, %561 : vector<8x8xf32>
    %c0_496 = arith.constant 0 : index
    %c35 = arith.constant 35 : index
    %563 = memref.load %arg15[%c0_496, %c35] : memref<2x49xf32, #tpu.memory_space<smem>>
    %c0_497 = arith.constant 0 : index
    %c5_498 = arith.constant 5 : index
    %c0_499 = arith.constant 0 : index
    %564 = vector.load %arg24[%c0_497, %c5_498, %c0_499] : memref<2x14x14xf32, #tpu.memory_space<vmem>>, vector<1x8x8xf32>
    %565 = vector.shape_cast %564 : vector<1x8x8xf32> to vector<8x8xf32>
    %566 = vector.broadcast %563 : f32 to vector<8x8xf32>
    %567 = arith.mulf %566, %565 : vector<8x8xf32>
    %c1_500 = arith.constant 1 : index
    %c35_501 = arith.constant 35 : index
    %568 = memref.load %arg15[%c1_500, %c35_501] : memref<2x49xf32, #tpu.memory_space<smem>>
    %c1_502 = arith.constant 1 : index
    %c5_503 = arith.constant 5 : index
    %c0_504 = arith.constant 0 : index
    %569 = vector.load %arg24[%c1_502, %c5_503, %c0_504] : memref<2x14x14xf32, #tpu.memory_space<vmem>>, vector<1x8x8xf32>
    %570 = vector.shape_cast %569 : vector<1x8x8xf32> to vector<8x8xf32>
    %571 = vector.broadcast %568 : f32 to vector<8x8xf32>
    %572 = arith.mulf %571, %570 : vector<8x8xf32>
    %573 = arith.addf %567, %572 : vector<8x8xf32>
    %574 = arith.addf %562, %573 : vector<8x8xf32>
    %c0_505 = arith.constant 0 : index
    %c36 = arith.constant 36 : index
    %575 = memref.load %arg15[%c0_505, %c36] : memref<2x49xf32, #tpu.memory_space<smem>>
    %c0_506 = arith.constant 0 : index
    %c5_507 = arith.constant 5 : index
    %c1_508 = arith.constant 1 : index
    %576 = vector.load %arg24[%c0_506, %c5_507, %c1_508] : memref<2x14x14xf32, #tpu.memory_space<vmem>>, vector<1x8x8xf32>
    %577 = vector.shape_cast %576 : vector<1x8x8xf32> to vector<8x8xf32>
    %578 = vector.broadcast %575 : f32 to vector<8x8xf32>
    %579 = arith.mulf %578, %577 : vector<8x8xf32>
    %c1_509 = arith.constant 1 : index
    %c36_510 = arith.constant 36 : index
    %580 = memref.load %arg15[%c1_509, %c36_510] : memref<2x49xf32, #tpu.memory_space<smem>>
    %c1_511 = arith.constant 1 : index
    %c5_512 = arith.constant 5 : index
    %c1_513 = arith.constant 1 : index
    %581 = vector.load %arg24[%c1_511, %c5_512, %c1_513] : memref<2x14x14xf32, #tpu.memory_space<vmem>>, vector<1x8x8xf32>
    %582 = vector.shape_cast %581 : vector<1x8x8xf32> to vector<8x8xf32>
    %583 = vector.broadcast %580 : f32 to vector<8x8xf32>
    %584 = arith.mulf %583, %582 : vector<8x8xf32>
    %585 = arith.addf %579, %584 : vector<8x8xf32>
    %586 = arith.addf %574, %585 : vector<8x8xf32>
    %c0_514 = arith.constant 0 : index
    %c37 = arith.constant 37 : index
    %587 = memref.load %arg15[%c0_514, %c37] : memref<2x49xf32, #tpu.memory_space<smem>>
    %c0_515 = arith.constant 0 : index
    %c5_516 = arith.constant 5 : index
    %c2_517 = arith.constant 2 : index
    %588 = vector.load %arg24[%c0_515, %c5_516, %c2_517] : memref<2x14x14xf32, #tpu.memory_space<vmem>>, vector<1x8x8xf32>
    %589 = vector.shape_cast %588 : vector<1x8x8xf32> to vector<8x8xf32>
    %590 = vector.broadcast %587 : f32 to vector<8x8xf32>
    %591 = arith.mulf %590, %589 : vector<8x8xf32>
    %c1_518 = arith.constant 1 : index
    %c37_519 = arith.constant 37 : index
    %592 = memref.load %arg15[%c1_518, %c37_519] : memref<2x49xf32, #tpu.memory_space<smem>>
    %c1_520 = arith.constant 1 : index
    %c5_521 = arith.constant 5 : index
    %c2_522 = arith.constant 2 : index
    %593 = vector.load %arg24[%c1_520, %c5_521, %c2_522] : memref<2x14x14xf32, #tpu.memory_space<vmem>>, vector<1x8x8xf32>
    %594 = vector.shape_cast %593 : vector<1x8x8xf32> to vector<8x8xf32>
    %595 = vector.broadcast %592 : f32 to vector<8x8xf32>
    %596 = arith.mulf %595, %594 : vector<8x8xf32>
    %597 = arith.addf %591, %596 : vector<8x8xf32>
    %598 = arith.addf %586, %597 : vector<8x8xf32>
    %c0_523 = arith.constant 0 : index
    %c38 = arith.constant 38 : index
    %599 = memref.load %arg15[%c0_523, %c38] : memref<2x49xf32, #tpu.memory_space<smem>>
    %c0_524 = arith.constant 0 : index
    %c5_525 = arith.constant 5 : index
    %c3_526 = arith.constant 3 : index
    %600 = vector.load %arg24[%c0_524, %c5_525, %c3_526] : memref<2x14x14xf32, #tpu.memory_space<vmem>>, vector<1x8x8xf32>
    %601 = vector.shape_cast %600 : vector<1x8x8xf32> to vector<8x8xf32>
    %602 = vector.broadcast %599 : f32 to vector<8x8xf32>
    %603 = arith.mulf %602, %601 : vector<8x8xf32>
    %c1_527 = arith.constant 1 : index
    %c38_528 = arith.constant 38 : index
    %604 = memref.load %arg15[%c1_527, %c38_528] : memref<2x49xf32, #tpu.memory_space<smem>>
    %c1_529 = arith.constant 1 : index
    %c5_530 = arith.constant 5 : index
    %c3_531 = arith.constant 3 : index
    %605 = vector.load %arg24[%c1_529, %c5_530, %c3_531] : memref<2x14x14xf32, #tpu.memory_space<vmem>>, vector<1x8x8xf32>
    %606 = vector.shape_cast %605 : vector<1x8x8xf32> to vector<8x8xf32>
    %607 = vector.broadcast %604 : f32 to vector<8x8xf32>
    %608 = arith.mulf %607, %606 : vector<8x8xf32>
    %609 = arith.addf %603, %608 : vector<8x8xf32>
    %610 = arith.addf %598, %609 : vector<8x8xf32>
    %c0_532 = arith.constant 0 : index
    %c39 = arith.constant 39 : index
    %611 = memref.load %arg15[%c0_532, %c39] : memref<2x49xf32, #tpu.memory_space<smem>>
    %c0_533 = arith.constant 0 : index
    %c5_534 = arith.constant 5 : index
    %c4_535 = arith.constant 4 : index
    %612 = vector.load %arg24[%c0_533, %c5_534, %c4_535] : memref<2x14x14xf32, #tpu.memory_space<vmem>>, vector<1x8x8xf32>
    %613 = vector.shape_cast %612 : vector<1x8x8xf32> to vector<8x8xf32>
    %614 = vector.broadcast %611 : f32 to vector<8x8xf32>
    %615 = arith.mulf %614, %613 : vector<8x8xf32>
    %c1_536 = arith.constant 1 : index
    %c39_537 = arith.constant 39 : index
    %616 = memref.load %arg15[%c1_536, %c39_537] : memref<2x49xf32, #tpu.memory_space<smem>>
    %c1_538 = arith.constant 1 : index
    %c5_539 = arith.constant 5 : index
    %c4_540 = arith.constant 4 : index
    %617 = vector.load %arg24[%c1_538, %c5_539, %c4_540] : memref<2x14x14xf32, #tpu.memory_space<vmem>>, vector<1x8x8xf32>
    %618 = vector.shape_cast %617 : vector<1x8x8xf32> to vector<8x8xf32>
    %619 = vector.broadcast %616 : f32 to vector<8x8xf32>
    %620 = arith.mulf %619, %618 : vector<8x8xf32>
    %621 = arith.addf %615, %620 : vector<8x8xf32>
    %622 = arith.addf %610, %621 : vector<8x8xf32>
    %c0_541 = arith.constant 0 : index
    %c40_542 = arith.constant 40 : index
    %623 = memref.load %arg15[%c0_541, %c40_542] : memref<2x49xf32, #tpu.memory_space<smem>>
    %c0_543 = arith.constant 0 : index
    %c5_544 = arith.constant 5 : index
    %c5_545 = arith.constant 5 : index
    %624 = vector.load %arg24[%c0_543, %c5_544, %c5_545] : memref<2x14x14xf32, #tpu.memory_space<vmem>>, vector<1x8x8xf32>
    %625 = vector.shape_cast %624 : vector<1x8x8xf32> to vector<8x8xf32>
    %626 = vector.broadcast %623 : f32 to vector<8x8xf32>
    %627 = arith.mulf %626, %625 : vector<8x8xf32>
    %c1_546 = arith.constant 1 : index
    %c40_547 = arith.constant 40 : index
    %628 = memref.load %arg15[%c1_546, %c40_547] : memref<2x49xf32, #tpu.memory_space<smem>>
    %c1_548 = arith.constant 1 : index
    %c5_549 = arith.constant 5 : index
    %c5_550 = arith.constant 5 : index
    %629 = vector.load %arg24[%c1_548, %c5_549, %c5_550] : memref<2x14x14xf32, #tpu.memory_space<vmem>>, vector<1x8x8xf32>
    %630 = vector.shape_cast %629 : vector<1x8x8xf32> to vector<8x8xf32>
    %631 = vector.broadcast %628 : f32 to vector<8x8xf32>
    %632 = arith.mulf %631, %630 : vector<8x8xf32>
    %633 = arith.addf %627, %632 : vector<8x8xf32>
    %634 = arith.addf %622, %633 : vector<8x8xf32>
    %c0_551 = arith.constant 0 : index
    %c41 = arith.constant 41 : index
    %635 = memref.load %arg15[%c0_551, %c41] : memref<2x49xf32, #tpu.memory_space<smem>>
    %c0_552 = arith.constant 0 : index
    %c5_553 = arith.constant 5 : index
    %c6_554 = arith.constant 6 : index
    %636 = vector.load %arg24[%c0_552, %c5_553, %c6_554] : memref<2x14x14xf32, #tpu.memory_space<vmem>>, vector<1x8x8xf32>
    %637 = vector.shape_cast %636 : vector<1x8x8xf32> to vector<8x8xf32>
    %638 = vector.broadcast %635 : f32 to vector<8x8xf32>
    %639 = arith.mulf %638, %637 : vector<8x8xf32>
    %c1_555 = arith.constant 1 : index
    %c41_556 = arith.constant 41 : index
    %640 = memref.load %arg15[%c1_555, %c41_556] : memref<2x49xf32, #tpu.memory_space<smem>>
    %c1_557 = arith.constant 1 : index
    %c5_558 = arith.constant 5 : index
    %c6_559 = arith.constant 6 : index
    %641 = vector.load %arg24[%c1_557, %c5_558, %c6_559] : memref<2x14x14xf32, #tpu.memory_space<vmem>>, vector<1x8x8xf32>
    %642 = vector.shape_cast %641 : vector<1x8x8xf32> to vector<8x8xf32>
    %643 = vector.broadcast %640 : f32 to vector<8x8xf32>
    %644 = arith.mulf %643, %642 : vector<8x8xf32>
    %645 = arith.addf %639, %644 : vector<8x8xf32>
    %646 = arith.addf %634, %645 : vector<8x8xf32>
    %c0_560 = arith.constant 0 : index
    %c42 = arith.constant 42 : index
    %647 = memref.load %arg15[%c0_560, %c42] : memref<2x49xf32, #tpu.memory_space<smem>>
    %c0_561 = arith.constant 0 : index
    %c6_562 = arith.constant 6 : index
    %c0_563 = arith.constant 0 : index
    %648 = vector.load %arg24[%c0_561, %c6_562, %c0_563] : memref<2x14x14xf32, #tpu.memory_space<vmem>>, vector<1x8x8xf32>
    %649 = vector.shape_cast %648 : vector<1x8x8xf32> to vector<8x8xf32>
    %650 = vector.broadcast %647 : f32 to vector<8x8xf32>
    %651 = arith.mulf %650, %649 : vector<8x8xf32>
    %c1_564 = arith.constant 1 : index
    %c42_565 = arith.constant 42 : index
    %652 = memref.load %arg15[%c1_564, %c42_565] : memref<2x49xf32, #tpu.memory_space<smem>>
    %c1_566 = arith.constant 1 : index
    %c6_567 = arith.constant 6 : index
    %c0_568 = arith.constant 0 : index
    %653 = vector.load %arg24[%c1_566, %c6_567, %c0_568] : memref<2x14x14xf32, #tpu.memory_space<vmem>>, vector<1x8x8xf32>
    %654 = vector.shape_cast %653 : vector<1x8x8xf32> to vector<8x8xf32>
    %655 = vector.broadcast %652 : f32 to vector<8x8xf32>
    %656 = arith.mulf %655, %654 : vector<8x8xf32>
    %657 = arith.addf %651, %656 : vector<8x8xf32>
    %658 = arith.addf %646, %657 : vector<8x8xf32>
    %c0_569 = arith.constant 0 : index
    %c43 = arith.constant 43 : index
    %659 = memref.load %arg15[%c0_569, %c43] : memref<2x49xf32, #tpu.memory_space<smem>>
    %c0_570 = arith.constant 0 : index
    %c6_571 = arith.constant 6 : index
    %c1_572 = arith.constant 1 : index
    %660 = vector.load %arg24[%c0_570, %c6_571, %c1_572] : memref<2x14x14xf32, #tpu.memory_space<vmem>>, vector<1x8x8xf32>
    %661 = vector.shape_cast %660 : vector<1x8x8xf32> to vector<8x8xf32>
    %662 = vector.broadcast %659 : f32 to vector<8x8xf32>
    %663 = arith.mulf %662, %661 : vector<8x8xf32>
    %c1_573 = arith.constant 1 : index
    %c43_574 = arith.constant 43 : index
    %664 = memref.load %arg15[%c1_573, %c43_574] : memref<2x49xf32, #tpu.memory_space<smem>>
    %c1_575 = arith.constant 1 : index
    %c6_576 = arith.constant 6 : index
    %c1_577 = arith.constant 1 : index
    %665 = vector.load %arg24[%c1_575, %c6_576, %c1_577] : memref<2x14x14xf32, #tpu.memory_space<vmem>>, vector<1x8x8xf32>
    %666 = vector.shape_cast %665 : vector<1x8x8xf32> to vector<8x8xf32>
    %667 = vector.broadcast %664 : f32 to vector<8x8xf32>
    %668 = arith.mulf %667, %666 : vector<8x8xf32>
    %669 = arith.addf %663, %668 : vector<8x8xf32>
    %670 = arith.addf %658, %669 : vector<8x8xf32>
    %c0_578 = arith.constant 0 : index
    %c44 = arith.constant 44 : index
    %671 = memref.load %arg15[%c0_578, %c44] : memref<2x49xf32, #tpu.memory_space<smem>>
    %c0_579 = arith.constant 0 : index
    %c6_580 = arith.constant 6 : index
    %c2_581 = arith.constant 2 : index
    %672 = vector.load %arg24[%c0_579, %c6_580, %c2_581] : memref<2x14x14xf32, #tpu.memory_space<vmem>>, vector<1x8x8xf32>
    %673 = vector.shape_cast %672 : vector<1x8x8xf32> to vector<8x8xf32>
    %674 = vector.broadcast %671 : f32 to vector<8x8xf32>
    %675 = arith.mulf %674, %673 : vector<8x8xf32>
    %c1_582 = arith.constant 1 : index
    %c44_583 = arith.constant 44 : index
    %676 = memref.load %arg15[%c1_582, %c44_583] : memref<2x49xf32, #tpu.memory_space<smem>>
    %c1_584 = arith.constant 1 : index
    %c6_585 = arith.constant 6 : index
    %c2_586 = arith.constant 2 : index
    %677 = vector.load %arg24[%c1_584, %c6_585, %c2_586] : memref<2x14x14xf32, #tpu.memory_space<vmem>>, vector<1x8x8xf32>
    %678 = vector.shape_cast %677 : vector<1x8x8xf32> to vector<8x8xf32>
    %679 = vector.broadcast %676 : f32 to vector<8x8xf32>
    %680 = arith.mulf %679, %678 : vector<8x8xf32>
    %681 = arith.addf %675, %680 : vector<8x8xf32>
    %682 = arith.addf %670, %681 : vector<8x8xf32>
    %c0_587 = arith.constant 0 : index
    %c45 = arith.constant 45 : index
    %683 = memref.load %arg15[%c0_587, %c45] : memref<2x49xf32, #tpu.memory_space<smem>>
    %c0_588 = arith.constant 0 : index
    %c6_589 = arith.constant 6 : index
    %c3_590 = arith.constant 3 : index
    %684 = vector.load %arg24[%c0_588, %c6_589, %c3_590] : memref<2x14x14xf32, #tpu.memory_space<vmem>>, vector<1x8x8xf32>
    %685 = vector.shape_cast %684 : vector<1x8x8xf32> to vector<8x8xf32>
    %686 = vector.broadcast %683 : f32 to vector<8x8xf32>
    %687 = arith.mulf %686, %685 : vector<8x8xf32>
    %c1_591 = arith.constant 1 : index
    %c45_592 = arith.constant 45 : index
    %688 = memref.load %arg15[%c1_591, %c45_592] : memref<2x49xf32, #tpu.memory_space<smem>>
    %c1_593 = arith.constant 1 : index
    %c6_594 = arith.constant 6 : index
    %c3_595 = arith.constant 3 : index
    %689 = vector.load %arg24[%c1_593, %c6_594, %c3_595] : memref<2x14x14xf32, #tpu.memory_space<vmem>>, vector<1x8x8xf32>
    %690 = vector.shape_cast %689 : vector<1x8x8xf32> to vector<8x8xf32>
    %691 = vector.broadcast %688 : f32 to vector<8x8xf32>
    %692 = arith.mulf %691, %690 : vector<8x8xf32>
    %693 = arith.addf %687, %692 : vector<8x8xf32>
    %694 = arith.addf %682, %693 : vector<8x8xf32>
    %c0_596 = arith.constant 0 : index
    %c46 = arith.constant 46 : index
    %695 = memref.load %arg15[%c0_596, %c46] : memref<2x49xf32, #tpu.memory_space<smem>>
    %c0_597 = arith.constant 0 : index
    %c6_598 = arith.constant 6 : index
    %c4_599 = arith.constant 4 : index
    %696 = vector.load %arg24[%c0_597, %c6_598, %c4_599] : memref<2x14x14xf32, #tpu.memory_space<vmem>>, vector<1x8x8xf32>
    %697 = vector.shape_cast %696 : vector<1x8x8xf32> to vector<8x8xf32>
    %698 = vector.broadcast %695 : f32 to vector<8x8xf32>
    %699 = arith.mulf %698, %697 : vector<8x8xf32>
    %c1_600 = arith.constant 1 : index
    %c46_601 = arith.constant 46 : index
    %700 = memref.load %arg15[%c1_600, %c46_601] : memref<2x49xf32, #tpu.memory_space<smem>>
    %c1_602 = arith.constant 1 : index
    %c6_603 = arith.constant 6 : index
    %c4_604 = arith.constant 4 : index
    %701 = vector.load %arg24[%c1_602, %c6_603, %c4_604] : memref<2x14x14xf32, #tpu.memory_space<vmem>>, vector<1x8x8xf32>
    %702 = vector.shape_cast %701 : vector<1x8x8xf32> to vector<8x8xf32>
    %703 = vector.broadcast %700 : f32 to vector<8x8xf32>
    %704 = arith.mulf %703, %702 : vector<8x8xf32>
    %705 = arith.addf %699, %704 : vector<8x8xf32>
    %706 = arith.addf %694, %705 : vector<8x8xf32>
    %c0_605 = arith.constant 0 : index
    %c47 = arith.constant 47 : index
    %707 = memref.load %arg15[%c0_605, %c47] : memref<2x49xf32, #tpu.memory_space<smem>>
    %c0_606 = arith.constant 0 : index
    %c6_607 = arith.constant 6 : index
    %c5_608 = arith.constant 5 : index
    %708 = vector.load %arg24[%c0_606, %c6_607, %c5_608] : memref<2x14x14xf32, #tpu.memory_space<vmem>>, vector<1x8x8xf32>
    %709 = vector.shape_cast %708 : vector<1x8x8xf32> to vector<8x8xf32>
    %710 = vector.broadcast %707 : f32 to vector<8x8xf32>
    %711 = arith.mulf %710, %709 : vector<8x8xf32>
    %c1_609 = arith.constant 1 : index
    %c47_610 = arith.constant 47 : index
    %712 = memref.load %arg15[%c1_609, %c47_610] : memref<2x49xf32, #tpu.memory_space<smem>>
    %c1_611 = arith.constant 1 : index
    %c6_612 = arith.constant 6 : index
    %c5_613 = arith.constant 5 : index
    %713 = vector.load %arg24[%c1_611, %c6_612, %c5_613] : memref<2x14x14xf32, #tpu.memory_space<vmem>>, vector<1x8x8xf32>
    %714 = vector.shape_cast %713 : vector<1x8x8xf32> to vector<8x8xf32>
    %715 = vector.broadcast %712 : f32 to vector<8x8xf32>
    %716 = arith.mulf %715, %714 : vector<8x8xf32>
    %717 = arith.addf %711, %716 : vector<8x8xf32>
    %718 = arith.addf %706, %717 : vector<8x8xf32>
    %c0_614 = arith.constant 0 : index
    %c48_615 = arith.constant 48 : index
    %719 = memref.load %arg15[%c0_614, %c48_615] : memref<2x49xf32, #tpu.memory_space<smem>>
    %c0_616 = arith.constant 0 : index
    %c6_617 = arith.constant 6 : index
    %c6_618 = arith.constant 6 : index
    %720 = vector.load %arg24[%c0_616, %c6_617, %c6_618] : memref<2x14x14xf32, #tpu.memory_space<vmem>>, vector<1x8x8xf32>
    %721 = vector.shape_cast %720 : vector<1x8x8xf32> to vector<8x8xf32>
    %722 = vector.broadcast %719 : f32 to vector<8x8xf32>
    %723 = arith.mulf %722, %721 : vector<8x8xf32>
    %c1_619 = arith.constant 1 : index
    %c48_620 = arith.constant 48 : index
    %724 = memref.load %arg15[%c1_619, %c48_620] : memref<2x49xf32, #tpu.memory_space<smem>>
    %c1_621 = arith.constant 1 : index
    %c6_622 = arith.constant 6 : index
    %c6_623 = arith.constant 6 : index
    %725 = vector.load %arg24[%c1_621, %c6_622, %c6_623] : memref<2x14x14xf32, #tpu.memory_space<vmem>>, vector<1x8x8xf32>
    %726 = vector.shape_cast %725 : vector<1x8x8xf32> to vector<8x8xf32>
    %727 = vector.broadcast %724 : f32 to vector<8x8xf32>
    %728 = arith.mulf %727, %726 : vector<8x8xf32>
    %729 = arith.addf %723, %728 : vector<8x8xf32>
    %730 = arith.addf %718, %729 : vector<8x8xf32>
    %731 = arith.negf %730 : vector<8x8xf32>
    %732 = math.exp %731 : vector<8x8xf32>
    %cst_624 = arith.constant 1.000000e+00 : f32
    %733 = vector.broadcast %cst_624 : f32 to vector<8x8xf32>
    %734 = arith.addf %733, %732 : vector<8x8xf32>
    %735 = arith.divf %733, %734 : vector<8x8xf32>
    %736 = vector.shape_cast %735 : vector<8x8xf32> to vector<8x8x1xf32>
    %c0_625 = arith.constant 0 : index
    %737 = memref.load %arg17[%c0_625] : memref<3xf32, #tpu.memory_space<smem>>
    %c1_626 = arith.constant 1 : index
    %738 = memref.load %arg17[%c1_626] : memref<3xf32, #tpu.memory_space<smem>>
    %739 = vector.broadcast %738 : f32 to vector<1x1x16xf32>
    %740 = arith.mulf %739, %129 : vector<1x1x16xf32>
    %741 = vector.broadcast %737 : f32 to vector<1x1x16xf32>
    %742 = arith.addf %741, %740 : vector<1x1x16xf32>
    %c2_627 = arith.constant 2 : index
    %743 = memref.load %arg17[%c2_627] : memref<3xf32, #tpu.memory_space<smem>>
    %744 = vector.broadcast %743 : f32 to vector<8x8x1xf32>
    %745 = arith.mulf %744, %736 : vector<8x8x1xf32>
    %746 = vector.broadcast %742 : vector<1x1x16xf32> to vector<8x8x16xf32>
    %747 = vector.broadcast %745 : vector<8x8x1xf32> to vector<8x8x16xf32>
    %748 = arith.addf %746, %747 : vector<8x8x16xf32>
    %749 = arith.mulf %104, %748 : vector<8x8x16xf32>
    %750 = vector.shape_cast %749 : vector<8x8x16xf32> to vector<64x16xf32>
    %cst_628 = arith.constant dense<0.000000e+00> : vector<16xf32>
    %751 = vector.multi_reduction <add>, %750, %cst_628 [0] : vector<64x16xf32> to vector<16xf32>
    %752 = vector.shape_cast %751 : vector<16xf32> to vector<1x16xf32>
    %cst_629 = arith.constant 6.400000e+01 : f32
    %753 = vector.broadcast %cst_629 : f32 to vector<1x16xf32>
    %754 = arith.divf %752, %753 : vector<1x16xf32>
    %cst_630 = arith.constant dense<0xFF800000> : vector<16xf32>
    %755 = vector.multi_reduction <maximumf>, %750, %cst_630 [0] : vector<64x16xf32> to vector<16xf32>
    %756 = vector.shape_cast %755 : vector<16xf32> to vector<1x16xf32>
    %c0_631 = arith.constant 0 : index
    %c0_632 = arith.constant 0 : index
    %757 = vector.load %arg13[%c0_631, %c0_632] : memref<16x4xf32, #tpu.memory_space<vmem>>, vector<16x4xf32>
    %cst_633 = arith.constant dense<0.000000e+00> : vector<1x4xf32>
    %758 = tpu.matmul %754, %757, %cst_633 {dimension_numbers = #tpu.dot_dimension_numbers<[1], [0], [0], [1], [0, 0, 1, 1], [], []>} : vector<1x16xf32>, vector<16x4xf32>, vector<1x4xf32> -> vector<1x4xf32>
    %cst_634 = arith.constant 0.000000e+00 : f32
    %759 = vector.broadcast %cst_634 : f32 to vector<1x4xf32>
    %760 = arith.maximumf %758, %759 : vector<1x4xf32>
    %c0_635 = arith.constant 0 : index
    %c0_636 = arith.constant 0 : index
    %761 = vector.load %arg14[%c0_635, %c0_636] : memref<4x16xf32, #tpu.memory_space<vmem>>, vector<4x16xf32>
    %cst_637 = arith.constant dense<0.000000e+00> : vector<1x16xf32>
    %762 = tpu.matmul %760, %761, %cst_637 {dimension_numbers = #tpu.dot_dimension_numbers<[1], [0], [0], [1], [0, 0, 1, 1], [], []>} : vector<1x4xf32>, vector<4x16xf32>, vector<1x16xf32> -> vector<1x16xf32>
    %c0_638 = arith.constant 0 : index
    %c0_639 = arith.constant 0 : index
    %763 = vector.load %arg13[%c0_638, %c0_639] : memref<16x4xf32, #tpu.memory_space<vmem>>, vector<16x4xf32>
    %cst_640 = arith.constant dense<0.000000e+00> : vector<1x4xf32>
    %764 = tpu.matmul %756, %763, %cst_640 {dimension_numbers = #tpu.dot_dimension_numbers<[1], [0], [0], [1], [0, 0, 1, 1], [], []>} : vector<1x16xf32>, vector<16x4xf32>, vector<1x4xf32> -> vector<1x4xf32>
    %cst_641 = arith.constant 0.000000e+00 : f32
    %765 = vector.broadcast %cst_641 : f32 to vector<1x4xf32>
    %766 = arith.maximumf %764, %765 : vector<1x4xf32>
    %c0_642 = arith.constant 0 : index
    %c0_643 = arith.constant 0 : index
    %767 = vector.load %arg14[%c0_642, %c0_643] : memref<4x16xf32, #tpu.memory_space<vmem>>, vector<4x16xf32>
    %cst_644 = arith.constant dense<0.000000e+00> : vector<1x16xf32>
    %768 = tpu.matmul %766, %767, %cst_644 {dimension_numbers = #tpu.dot_dimension_numbers<[1], [0], [0], [1], [0, 0, 1, 1], [], []>} : vector<1x4xf32>, vector<4x16xf32>, vector<1x16xf32> -> vector<1x16xf32>
    %769 = arith.addf %762, %768 : vector<1x16xf32>
    %770 = arith.negf %769 : vector<1x16xf32>
    %771 = math.exp %770 : vector<1x16xf32>
    %cst_645 = arith.constant 1.000000e+00 : f32
    %772 = vector.broadcast %cst_645 : f32 to vector<1x16xf32>
    %773 = arith.addf %772, %771 : vector<1x16xf32>
    %774 = arith.divf %772, %773 : vector<1x16xf32>
    %775 = vector.shape_cast %774 : vector<1x16xf32> to vector<1x1x16xf32>
    %cst_646 = arith.constant dense<0.000000e+00> : vector<8x8xf32>
    %776 = vector.multi_reduction <add>, %749, %cst_646 [2] : vector<8x8x16xf32> to vector<8x8xf32>
    %cst_647 = arith.constant 1.600000e+01 : f32
    %777 = vector.broadcast %cst_647 : f32 to vector<8x8xf32>
    %778 = arith.divf %776, %777 : vector<8x8xf32>
    %cst_648 = arith.constant dense<0xFF800000> : vector<8x8xf32>
    %779 = vector.multi_reduction <maximumf>, %749, %cst_648 [2] : vector<8x8x16xf32> to vector<8x8xf32>
    %cst_649 = arith.constant 0.000000e+00 : f32
    %780 = vector.broadcast %cst_649 : f32 to vector<2x14x14xf32>
    %c0_650 = arith.constant 0 : index
    %c0_651 = arith.constant 0 : index
    %c0_652 = arith.constant 0 : index
    %781 = vector.load %arg24[%c0_650, %c0_651, %c0_652] : memref<2x14x14xf32, #tpu.memory_space<vmem>>, vector<2x14x14xf32>
    tpu.vector_store %arg24[%c0_650, %c0_651, %c0_652], %780 {strides = array<i32>} : memref<2x14x14xf32, #tpu.memory_space<vmem>>, vector<2x14x14xf32>,
    %c0_653 = arith.constant 0 : index
    %c3_654 = arith.constant 3 : index
    %c3_655 = arith.constant 3 : index
    %782 = vector.load %arg24[%c0_653, %c3_654, %c3_655] : memref<2x14x14xf32, #tpu.memory_space<vmem>>, vector<1x8x8xf32>
    %783 = vector.shape_cast %782 : vector<1x8x8xf32> to vector<8x8xf32>
    %784 = vector.shape_cast %778 : vector<8x8xf32> to vector<1x8x8xf32>
    tpu.vector_store %arg24[%c0_653, %c3_654, %c3_655], %784 {strides = array<i32>} : memref<2x14x14xf32, #tpu.memory_space<vmem>>, vector<1x8x8xf32>,
    %c1_656 = arith.constant 1 : index
    %c3_657 = arith.constant 3 : index
    %c3_658 = arith.constant 3 : index
    %785 = vector.load %arg24[%c1_656, %c3_657, %c3_658] : memref<2x14x14xf32, #tpu.memory_space<vmem>>, vector<1x8x8xf32>
    %786 = vector.shape_cast %785 : vector<1x8x8xf32> to vector<8x8xf32>
    %787 = vector.shape_cast %779 : vector<8x8xf32> to vector<1x8x8xf32>
    tpu.vector_store %arg24[%c1_656, %c3_657, %c3_658], %787 {strides = array<i32>} : memref<2x14x14xf32, #tpu.memory_space<vmem>>, vector<1x8x8xf32>,
    %cst_659 = arith.constant 0.000000e+00 : f32
    %788 = vector.broadcast %cst_659 : f32 to vector<8x8xf32>
    %c0_660 = arith.constant 0 : index
    %c0_661 = arith.constant 0 : index
    %789 = memref.load %arg16[%c0_660, %c0_661] : memref<2x49xf32, #tpu.memory_space<smem>>
    %c0_662 = arith.constant 0 : index
    %c0_663 = arith.constant 0 : index
    %c0_664 = arith.constant 0 : index
    %790 = vector.load %arg24[%c0_662, %c0_663, %c0_664] : memref<2x14x14xf32, #tpu.memory_space<vmem>>, vector<1x8x8xf32>
    %791 = vector.shape_cast %790 : vector<1x8x8xf32> to vector<8x8xf32>
    %792 = vector.broadcast %789 : f32 to vector<8x8xf32>
    %793 = arith.mulf %792, %791 : vector<8x8xf32>
    %c1_665 = arith.constant 1 : index
    %c0_666 = arith.constant 0 : index
    %794 = memref.load %arg16[%c1_665, %c0_666] : memref<2x49xf32, #tpu.memory_space<smem>>
    %c1_667 = arith.constant 1 : index
    %c0_668 = arith.constant 0 : index
    %c0_669 = arith.constant 0 : index
    %795 = vector.load %arg24[%c1_667, %c0_668, %c0_669] : memref<2x14x14xf32, #tpu.memory_space<vmem>>, vector<1x8x8xf32>
    %796 = vector.shape_cast %795 : vector<1x8x8xf32> to vector<8x8xf32>
    %797 = vector.broadcast %794 : f32 to vector<8x8xf32>
    %798 = arith.mulf %797, %796 : vector<8x8xf32>
    %799 = arith.addf %793, %798 : vector<8x8xf32>
    %800 = arith.addf %788, %799 : vector<8x8xf32>
    %c0_670 = arith.constant 0 : index
    %c1_671 = arith.constant 1 : index
    %801 = memref.load %arg16[%c0_670, %c1_671] : memref<2x49xf32, #tpu.memory_space<smem>>
    %c0_672 = arith.constant 0 : index
    %c0_673 = arith.constant 0 : index
    %c1_674 = arith.constant 1 : index
    %802 = vector.load %arg24[%c0_672, %c0_673, %c1_674] : memref<2x14x14xf32, #tpu.memory_space<vmem>>, vector<1x8x8xf32>
    %803 = vector.shape_cast %802 : vector<1x8x8xf32> to vector<8x8xf32>
    %804 = vector.broadcast %801 : f32 to vector<8x8xf32>
    %805 = arith.mulf %804, %803 : vector<8x8xf32>
    %c1_675 = arith.constant 1 : index
    %c1_676 = arith.constant 1 : index
    %806 = memref.load %arg16[%c1_675, %c1_676] : memref<2x49xf32, #tpu.memory_space<smem>>
    %c1_677 = arith.constant 1 : index
    %c0_678 = arith.constant 0 : index
    %c1_679 = arith.constant 1 : index
    %807 = vector.load %arg24[%c1_677, %c0_678, %c1_679] : memref<2x14x14xf32, #tpu.memory_space<vmem>>, vector<1x8x8xf32>
    %808 = vector.shape_cast %807 : vector<1x8x8xf32> to vector<8x8xf32>
    %809 = vector.broadcast %806 : f32 to vector<8x8xf32>
    %810 = arith.mulf %809, %808 : vector<8x8xf32>
    %811 = arith.addf %805, %810 : vector<8x8xf32>
    %812 = arith.addf %800, %811 : vector<8x8xf32>
    %c0_680 = arith.constant 0 : index
    %c2_681 = arith.constant 2 : index
    %813 = memref.load %arg16[%c0_680, %c2_681] : memref<2x49xf32, #tpu.memory_space<smem>>
    %c0_682 = arith.constant 0 : index
    %c0_683 = arith.constant 0 : index
    %c2_684 = arith.constant 2 : index
    %814 = vector.load %arg24[%c0_682, %c0_683, %c2_684] : memref<2x14x14xf32, #tpu.memory_space<vmem>>, vector<1x8x8xf32>
    %815 = vector.shape_cast %814 : vector<1x8x8xf32> to vector<8x8xf32>
    %816 = vector.broadcast %813 : f32 to vector<8x8xf32>
    %817 = arith.mulf %816, %815 : vector<8x8xf32>
    %c1_685 = arith.constant 1 : index
    %c2_686 = arith.constant 2 : index
    %818 = memref.load %arg16[%c1_685, %c2_686] : memref<2x49xf32, #tpu.memory_space<smem>>
    %c1_687 = arith.constant 1 : index
    %c0_688 = arith.constant 0 : index
    %c2_689 = arith.constant 2 : index
    %819 = vector.load %arg24[%c1_687, %c0_688, %c2_689] : memref<2x14x14xf32, #tpu.memory_space<vmem>>, vector<1x8x8xf32>
    %820 = vector.shape_cast %819 : vector<1x8x8xf32> to vector<8x8xf32>
    %821 = vector.broadcast %818 : f32 to vector<8x8xf32>
    %822 = arith.mulf %821, %820 : vector<8x8xf32>
    %823 = arith.addf %817, %822 : vector<8x8xf32>
    %824 = arith.addf %812, %823 : vector<8x8xf32>
    %c0_690 = arith.constant 0 : index
    %c3_691 = arith.constant 3 : index
    %825 = memref.load %arg16[%c0_690, %c3_691] : memref<2x49xf32, #tpu.memory_space<smem>>
    %c0_692 = arith.constant 0 : index
    %c0_693 = arith.constant 0 : index
    %c3_694 = arith.constant 3 : index
    %826 = vector.load %arg24[%c0_692, %c0_693, %c3_694] : memref<2x14x14xf32, #tpu.memory_space<vmem>>, vector<1x8x8xf32>
    %827 = vector.shape_cast %826 : vector<1x8x8xf32> to vector<8x8xf32>
    %828 = vector.broadcast %825 : f32 to vector<8x8xf32>
    %829 = arith.mulf %828, %827 : vector<8x8xf32>
    %c1_695 = arith.constant 1 : index
    %c3_696 = arith.constant 3 : index
    %830 = memref.load %arg16[%c1_695, %c3_696] : memref<2x49xf32, #tpu.memory_space<smem>>
    %c1_697 = arith.constant 1 : index
    %c0_698 = arith.constant 0 : index
    %c3_699 = arith.constant 3 : index
    %831 = vector.load %arg24[%c1_697, %c0_698, %c3_699] : memref<2x14x14xf32, #tpu.memory_space<vmem>>, vector<1x8x8xf32>
    %832 = vector.shape_cast %831 : vector<1x8x8xf32> to vector<8x8xf32>
    %833 = vector.broadcast %830 : f32 to vector<8x8xf32>
    %834 = arith.mulf %833, %832 : vector<8x8xf32>
    %835 = arith.addf %829, %834 : vector<8x8xf32>
    %836 = arith.addf %824, %835 : vector<8x8xf32>
    %c0_700 = arith.constant 0 : index
    %c4_701 = arith.constant 4 : index
    %837 = memref.load %arg16[%c0_700, %c4_701] : memref<2x49xf32, #tpu.memory_space<smem>>
    %c0_702 = arith.constant 0 : index
    %c0_703 = arith.constant 0 : index
    %c4_704 = arith.constant 4 : index
    %838 = vector.load %arg24[%c0_702, %c0_703, %c4_704] : memref<2x14x14xf32, #tpu.memory_space<vmem>>, vector<1x8x8xf32>
    %839 = vector.shape_cast %838 : vector<1x8x8xf32> to vector<8x8xf32>
    %840 = vector.broadcast %837 : f32 to vector<8x8xf32>
    %841 = arith.mulf %840, %839 : vector<8x8xf32>
    %c1_705 = arith.constant 1 : index
    %c4_706 = arith.constant 4 : index
    %842 = memref.load %arg16[%c1_705, %c4_706] : memref<2x49xf32, #tpu.memory_space<smem>>
    %c1_707 = arith.constant 1 : index
    %c0_708 = arith.constant 0 : index
    %c4_709 = arith.constant 4 : index
    %843 = vector.load %arg24[%c1_707, %c0_708, %c4_709] : memref<2x14x14xf32, #tpu.memory_space<vmem>>, vector<1x8x8xf32>
    %844 = vector.shape_cast %843 : vector<1x8x8xf32> to vector<8x8xf32>
    %845 = vector.broadcast %842 : f32 to vector<8x8xf32>
    %846 = arith.mulf %845, %844 : vector<8x8xf32>
    %847 = arith.addf %841, %846 : vector<8x8xf32>
    %848 = arith.addf %836, %847 : vector<8x8xf32>
    %c0_710 = arith.constant 0 : index
    %c5_711 = arith.constant 5 : index
    %849 = memref.load %arg16[%c0_710, %c5_711] : memref<2x49xf32, #tpu.memory_space<smem>>
    %c0_712 = arith.constant 0 : index
    %c0_713 = arith.constant 0 : index
    %c5_714 = arith.constant 5 : index
    %850 = vector.load %arg24[%c0_712, %c0_713, %c5_714] : memref<2x14x14xf32, #tpu.memory_space<vmem>>, vector<1x8x8xf32>
    %851 = vector.shape_cast %850 : vector<1x8x8xf32> to vector<8x8xf32>
    %852 = vector.broadcast %849 : f32 to vector<8x8xf32>
    %853 = arith.mulf %852, %851 : vector<8x8xf32>
    %c1_715 = arith.constant 1 : index
    %c5_716 = arith.constant 5 : index
    %854 = memref.load %arg16[%c1_715, %c5_716] : memref<2x49xf32, #tpu.memory_space<smem>>
    %c1_717 = arith.constant 1 : index
    %c0_718 = arith.constant 0 : index
    %c5_719 = arith.constant 5 : index
    %855 = vector.load %arg24[%c1_717, %c0_718, %c5_719] : memref<2x14x14xf32, #tpu.memory_space<vmem>>, vector<1x8x8xf32>
    %856 = vector.shape_cast %855 : vector<1x8x8xf32> to vector<8x8xf32>
    %857 = vector.broadcast %854 : f32 to vector<8x8xf32>
    %858 = arith.mulf %857, %856 : vector<8x8xf32>
    %859 = arith.addf %853, %858 : vector<8x8xf32>
    %860 = arith.addf %848, %859 : vector<8x8xf32>
    %c0_720 = arith.constant 0 : index
    %c6_721 = arith.constant 6 : index
    %861 = memref.load %arg16[%c0_720, %c6_721] : memref<2x49xf32, #tpu.memory_space<smem>>
    %c0_722 = arith.constant 0 : index
    %c0_723 = arith.constant 0 : index
    %c6_724 = arith.constant 6 : index
    %862 = vector.load %arg24[%c0_722, %c0_723, %c6_724] : memref<2x14x14xf32, #tpu.memory_space<vmem>>, vector<1x8x8xf32>
    %863 = vector.shape_cast %862 : vector<1x8x8xf32> to vector<8x8xf32>
    %864 = vector.broadcast %861 : f32 to vector<8x8xf32>
    %865 = arith.mulf %864, %863 : vector<8x8xf32>
    %c1_725 = arith.constant 1 : index
    %c6_726 = arith.constant 6 : index
    %866 = memref.load %arg16[%c1_725, %c6_726] : memref<2x49xf32, #tpu.memory_space<smem>>
    %c1_727 = arith.constant 1 : index
    %c0_728 = arith.constant 0 : index
    %c6_729 = arith.constant 6 : index
    %867 = vector.load %arg24[%c1_727, %c0_728, %c6_729] : memref<2x14x14xf32, #tpu.memory_space<vmem>>, vector<1x8x8xf32>
    %868 = vector.shape_cast %867 : vector<1x8x8xf32> to vector<8x8xf32>
    %869 = vector.broadcast %866 : f32 to vector<8x8xf32>
    %870 = arith.mulf %869, %868 : vector<8x8xf32>
    %871 = arith.addf %865, %870 : vector<8x8xf32>
    %872 = arith.addf %860, %871 : vector<8x8xf32>
    %c0_730 = arith.constant 0 : index
    %c7_731 = arith.constant 7 : index
    %873 = memref.load %arg16[%c0_730, %c7_731] : memref<2x49xf32, #tpu.memory_space<smem>>
    %c0_732 = arith.constant 0 : index
    %c1_733 = arith.constant 1 : index
    %c0_734 = arith.constant 0 : index
    %874 = vector.load %arg24[%c0_732, %c1_733, %c0_734] : memref<2x14x14xf32, #tpu.memory_space<vmem>>, vector<1x8x8xf32>
    %875 = vector.shape_cast %874 : vector<1x8x8xf32> to vector<8x8xf32>
    %876 = vector.broadcast %873 : f32 to vector<8x8xf32>
    %877 = arith.mulf %876, %875 : vector<8x8xf32>
    %c1_735 = arith.constant 1 : index
    %c7_736 = arith.constant 7 : index
    %878 = memref.load %arg16[%c1_735, %c7_736] : memref<2x49xf32, #tpu.memory_space<smem>>
    %c1_737 = arith.constant 1 : index
    %c1_738 = arith.constant 1 : index
    %c0_739 = arith.constant 0 : index
    %879 = vector.load %arg24[%c1_737, %c1_738, %c0_739] : memref<2x14x14xf32, #tpu.memory_space<vmem>>, vector<1x8x8xf32>
    %880 = vector.shape_cast %879 : vector<1x8x8xf32> to vector<8x8xf32>
    %881 = vector.broadcast %878 : f32 to vector<8x8xf32>
    %882 = arith.mulf %881, %880 : vector<8x8xf32>
    %883 = arith.addf %877, %882 : vector<8x8xf32>
    %884 = arith.addf %872, %883 : vector<8x8xf32>
    %c0_740 = arith.constant 0 : index
    %c8_741 = arith.constant 8 : index
    %885 = memref.load %arg16[%c0_740, %c8_741] : memref<2x49xf32, #tpu.memory_space<smem>>
    %c0_742 = arith.constant 0 : index
    %c1_743 = arith.constant 1 : index
    %c1_744 = arith.constant 1 : index
    %886 = vector.load %arg24[%c0_742, %c1_743, %c1_744] : memref<2x14x14xf32, #tpu.memory_space<vmem>>, vector<1x8x8xf32>
    %887 = vector.shape_cast %886 : vector<1x8x8xf32> to vector<8x8xf32>
    %888 = vector.broadcast %885 : f32 to vector<8x8xf32>
    %889 = arith.mulf %888, %887 : vector<8x8xf32>
    %c1_745 = arith.constant 1 : index
    %c8_746 = arith.constant 8 : index
    %890 = memref.load %arg16[%c1_745, %c8_746] : memref<2x49xf32, #tpu.memory_space<smem>>
    %c1_747 = arith.constant 1 : index
    %c1_748 = arith.constant 1 : index
    %c1_749 = arith.constant 1 : index
    %891 = vector.load %arg24[%c1_747, %c1_748, %c1_749] : memref<2x14x14xf32, #tpu.memory_space<vmem>>, vector<1x8x8xf32>
    %892 = vector.shape_cast %891 : vector<1x8x8xf32> to vector<8x8xf32>
    %893 = vector.broadcast %890 : f32 to vector<8x8xf32>
    %894 = arith.mulf %893, %892 : vector<8x8xf32>
    %895 = arith.addf %889, %894 : vector<8x8xf32>
    %896 = arith.addf %884, %895 : vector<8x8xf32>
    %c0_750 = arith.constant 0 : index
    %c9_751 = arith.constant 9 : index
    %897 = memref.load %arg16[%c0_750, %c9_751] : memref<2x49xf32, #tpu.memory_space<smem>>
    %c0_752 = arith.constant 0 : index
    %c1_753 = arith.constant 1 : index
    %c2_754 = arith.constant 2 : index
    %898 = vector.load %arg24[%c0_752, %c1_753, %c2_754] : memref<2x14x14xf32, #tpu.memory_space<vmem>>, vector<1x8x8xf32>
    %899 = vector.shape_cast %898 : vector<1x8x8xf32> to vector<8x8xf32>
    %900 = vector.broadcast %897 : f32 to vector<8x8xf32>
    %901 = arith.mulf %900, %899 : vector<8x8xf32>
    %c1_755 = arith.constant 1 : index
    %c9_756 = arith.constant 9 : index
    %902 = memref.load %arg16[%c1_755, %c9_756] : memref<2x49xf32, #tpu.memory_space<smem>>
    %c1_757 = arith.constant 1 : index
    %c1_758 = arith.constant 1 : index
    %c2_759 = arith.constant 2 : index
    %903 = vector.load %arg24[%c1_757, %c1_758, %c2_759] : memref<2x14x14xf32, #tpu.memory_space<vmem>>, vector<1x8x8xf32>
    %904 = vector.shape_cast %903 : vector<1x8x8xf32> to vector<8x8xf32>
    %905 = vector.broadcast %902 : f32 to vector<8x8xf32>
    %906 = arith.mulf %905, %904 : vector<8x8xf32>
    %907 = arith.addf %901, %906 : vector<8x8xf32>
    %908 = arith.addf %896, %907 : vector<8x8xf32>
    %c0_760 = arith.constant 0 : index
    %c10_761 = arith.constant 10 : index
    %909 = memref.load %arg16[%c0_760, %c10_761] : memref<2x49xf32, #tpu.memory_space<smem>>
    %c0_762 = arith.constant 0 : index
    %c1_763 = arith.constant 1 : index
    %c3_764 = arith.constant 3 : index
    %910 = vector.load %arg24[%c0_762, %c1_763, %c3_764] : memref<2x14x14xf32, #tpu.memory_space<vmem>>, vector<1x8x8xf32>
    %911 = vector.shape_cast %910 : vector<1x8x8xf32> to vector<8x8xf32>
    %912 = vector.broadcast %909 : f32 to vector<8x8xf32>
    %913 = arith.mulf %912, %911 : vector<8x8xf32>
    %c1_765 = arith.constant 1 : index
    %c10_766 = arith.constant 10 : index
    %914 = memref.load %arg16[%c1_765, %c10_766] : memref<2x49xf32, #tpu.memory_space<smem>>
    %c1_767 = arith.constant 1 : index
    %c1_768 = arith.constant 1 : index
    %c3_769 = arith.constant 3 : index
    %915 = vector.load %arg24[%c1_767, %c1_768, %c3_769] : memref<2x14x14xf32, #tpu.memory_space<vmem>>, vector<1x8x8xf32>
    %916 = vector.shape_cast %915 : vector<1x8x8xf32> to vector<8x8xf32>
    %917 = vector.broadcast %914 : f32 to vector<8x8xf32>
    %918 = arith.mulf %917, %916 : vector<8x8xf32>
    %919 = arith.addf %913, %918 : vector<8x8xf32>
    %920 = arith.addf %908, %919 : vector<8x8xf32>
    %c0_770 = arith.constant 0 : index
    %c11_771 = arith.constant 11 : index
    %921 = memref.load %arg16[%c0_770, %c11_771] : memref<2x49xf32, #tpu.memory_space<smem>>
    %c0_772 = arith.constant 0 : index
    %c1_773 = arith.constant 1 : index
    %c4_774 = arith.constant 4 : index
    %922 = vector.load %arg24[%c0_772, %c1_773, %c4_774] : memref<2x14x14xf32, #tpu.memory_space<vmem>>, vector<1x8x8xf32>
    %923 = vector.shape_cast %922 : vector<1x8x8xf32> to vector<8x8xf32>
    %924 = vector.broadcast %921 : f32 to vector<8x8xf32>
    %925 = arith.mulf %924, %923 : vector<8x8xf32>
    %c1_775 = arith.constant 1 : index
    %c11_776 = arith.constant 11 : index
    %926 = memref.load %arg16[%c1_775, %c11_776] : memref<2x49xf32, #tpu.memory_space<smem>>
    %c1_777 = arith.constant 1 : index
    %c1_778 = arith.constant 1 : index
    %c4_779 = arith.constant 4 : index
    %927 = vector.load %arg24[%c1_777, %c1_778, %c4_779] : memref<2x14x14xf32, #tpu.memory_space<vmem>>, vector<1x8x8xf32>
    %928 = vector.shape_cast %927 : vector<1x8x8xf32> to vector<8x8xf32>
    %929 = vector.broadcast %926 : f32 to vector<8x8xf32>
    %930 = arith.mulf %929, %928 : vector<8x8xf32>
    %931 = arith.addf %925, %930 : vector<8x8xf32>
    %932 = arith.addf %920, %931 : vector<8x8xf32>
    %c0_780 = arith.constant 0 : index
    %c12_781 = arith.constant 12 : index
    %933 = memref.load %arg16[%c0_780, %c12_781] : memref<2x49xf32, #tpu.memory_space<smem>>
    %c0_782 = arith.constant 0 : index
    %c1_783 = arith.constant 1 : index
    %c5_784 = arith.constant 5 : index
    %934 = vector.load %arg24[%c0_782, %c1_783, %c5_784] : memref<2x14x14xf32, #tpu.memory_space<vmem>>, vector<1x8x8xf32>
    %935 = vector.shape_cast %934 : vector<1x8x8xf32> to vector<8x8xf32>
    %936 = vector.broadcast %933 : f32 to vector<8x8xf32>
    %937 = arith.mulf %936, %935 : vector<8x8xf32>
    %c1_785 = arith.constant 1 : index
    %c12_786 = arith.constant 12 : index
    %938 = memref.load %arg16[%c1_785, %c12_786] : memref<2x49xf32, #tpu.memory_space<smem>>
    %c1_787 = arith.constant 1 : index
    %c1_788 = arith.constant 1 : index
    %c5_789 = arith.constant 5 : index
    %939 = vector.load %arg24[%c1_787, %c1_788, %c5_789] : memref<2x14x14xf32, #tpu.memory_space<vmem>>, vector<1x8x8xf32>
    %940 = vector.shape_cast %939 : vector<1x8x8xf32> to vector<8x8xf32>
    %941 = vector.broadcast %938 : f32 to vector<8x8xf32>
    %942 = arith.mulf %941, %940 : vector<8x8xf32>
    %943 = arith.addf %937, %942 : vector<8x8xf32>
    %944 = arith.addf %932, %943 : vector<8x8xf32>
    %c0_790 = arith.constant 0 : index
    %c13_791 = arith.constant 13 : index
    %945 = memref.load %arg16[%c0_790, %c13_791] : memref<2x49xf32, #tpu.memory_space<smem>>
    %c0_792 = arith.constant 0 : index
    %c1_793 = arith.constant 1 : index
    %c6_794 = arith.constant 6 : index
    %946 = vector.load %arg24[%c0_792, %c1_793, %c6_794] : memref<2x14x14xf32, #tpu.memory_space<vmem>>, vector<1x8x8xf32>
    %947 = vector.shape_cast %946 : vector<1x8x8xf32> to vector<8x8xf32>
    %948 = vector.broadcast %945 : f32 to vector<8x8xf32>
    %949 = arith.mulf %948, %947 : vector<8x8xf32>
    %c1_795 = arith.constant 1 : index
    %c13_796 = arith.constant 13 : index
    %950 = memref.load %arg16[%c1_795, %c13_796] : memref<2x49xf32, #tpu.memory_space<smem>>
    %c1_797 = arith.constant 1 : index
    %c1_798 = arith.constant 1 : index
    %c6_799 = arith.constant 6 : index
    %951 = vector.load %arg24[%c1_797, %c1_798, %c6_799] : memref<2x14x14xf32, #tpu.memory_space<vmem>>, vector<1x8x8xf32>
    %952 = vector.shape_cast %951 : vector<1x8x8xf32> to vector<8x8xf32>
    %953 = vector.broadcast %950 : f32 to vector<8x8xf32>
    %954 = arith.mulf %953, %952 : vector<8x8xf32>
    %955 = arith.addf %949, %954 : vector<8x8xf32>
    %956 = arith.addf %944, %955 : vector<8x8xf32>
    %c0_800 = arith.constant 0 : index
    %c14_801 = arith.constant 14 : index
    %957 = memref.load %arg16[%c0_800, %c14_801] : memref<2x49xf32, #tpu.memory_space<smem>>
    %c0_802 = arith.constant 0 : index
    %c2_803 = arith.constant 2 : index
    %c0_804 = arith.constant 0 : index
    %958 = vector.load %arg24[%c0_802, %c2_803, %c0_804] : memref<2x14x14xf32, #tpu.memory_space<vmem>>, vector<1x8x8xf32>
    %959 = vector.shape_cast %958 : vector<1x8x8xf32> to vector<8x8xf32>
    %960 = vector.broadcast %957 : f32 to vector<8x8xf32>
    %961 = arith.mulf %960, %959 : vector<8x8xf32>
    %c1_805 = arith.constant 1 : index
    %c14_806 = arith.constant 14 : index
    %962 = memref.load %arg16[%c1_805, %c14_806] : memref<2x49xf32, #tpu.memory_space<smem>>
    %c1_807 = arith.constant 1 : index
    %c2_808 = arith.constant 2 : index
    %c0_809 = arith.constant 0 : index
    %963 = vector.load %arg24[%c1_807, %c2_808, %c0_809] : memref<2x14x14xf32, #tpu.memory_space<vmem>>, vector<1x8x8xf32>
    %964 = vector.shape_cast %963 : vector<1x8x8xf32> to vector<8x8xf32>
    %965 = vector.broadcast %962 : f32 to vector<8x8xf32>
    %966 = arith.mulf %965, %964 : vector<8x8xf32>
    %967 = arith.addf %961, %966 : vector<8x8xf32>
    %968 = arith.addf %956, %967 : vector<8x8xf32>
    %c0_810 = arith.constant 0 : index
    %c15_811 = arith.constant 15 : index
    %969 = memref.load %arg16[%c0_810, %c15_811] : memref<2x49xf32, #tpu.memory_space<smem>>
    %c0_812 = arith.constant 0 : index
    %c2_813 = arith.constant 2 : index
    %c1_814 = arith.constant 1 : index
    %970 = vector.load %arg24[%c0_812, %c2_813, %c1_814] : memref<2x14x14xf32, #tpu.memory_space<vmem>>, vector<1x8x8xf32>
    %971 = vector.shape_cast %970 : vector<1x8x8xf32> to vector<8x8xf32>
    %972 = vector.broadcast %969 : f32 to vector<8x8xf32>
    %973 = arith.mulf %972, %971 : vector<8x8xf32>
    %c1_815 = arith.constant 1 : index
    %c15_816 = arith.constant 15 : index
    %974 = memref.load %arg16[%c1_815, %c15_816] : memref<2x49xf32, #tpu.memory_space<smem>>
    %c1_817 = arith.constant 1 : index
    %c2_818 = arith.constant 2 : index
    %c1_819 = arith.constant 1 : index
    %975 = vector.load %arg24[%c1_817, %c2_818, %c1_819] : memref<2x14x14xf32, #tpu.memory_space<vmem>>, vector<1x8x8xf32>
    %976 = vector.shape_cast %975 : vector<1x8x8xf32> to vector<8x8xf32>
    %977 = vector.broadcast %974 : f32 to vector<8x8xf32>
    %978 = arith.mulf %977, %976 : vector<8x8xf32>
    %979 = arith.addf %973, %978 : vector<8x8xf32>
    %980 = arith.addf %968, %979 : vector<8x8xf32>
    %c0_820 = arith.constant 0 : index
    %c16_821 = arith.constant 16 : index
    %981 = memref.load %arg16[%c0_820, %c16_821] : memref<2x49xf32, #tpu.memory_space<smem>>
    %c0_822 = arith.constant 0 : index
    %c2_823 = arith.constant 2 : index
    %c2_824 = arith.constant 2 : index
    %982 = vector.load %arg24[%c0_822, %c2_823, %c2_824] : memref<2x14x14xf32, #tpu.memory_space<vmem>>, vector<1x8x8xf32>
    %983 = vector.shape_cast %982 : vector<1x8x8xf32> to vector<8x8xf32>
    %984 = vector.broadcast %981 : f32 to vector<8x8xf32>
    %985 = arith.mulf %984, %983 : vector<8x8xf32>
    %c1_825 = arith.constant 1 : index
    %c16_826 = arith.constant 16 : index
    %986 = memref.load %arg16[%c1_825, %c16_826] : memref<2x49xf32, #tpu.memory_space<smem>>
    %c1_827 = arith.constant 1 : index
    %c2_828 = arith.constant 2 : index
    %c2_829 = arith.constant 2 : index
    %987 = vector.load %arg24[%c1_827, %c2_828, %c2_829] : memref<2x14x14xf32, #tpu.memory_space<vmem>>, vector<1x8x8xf32>
    %988 = vector.shape_cast %987 : vector<1x8x8xf32> to vector<8x8xf32>
    %989 = vector.broadcast %986 : f32 to vector<8x8xf32>
    %990 = arith.mulf %989, %988 : vector<8x8xf32>
    %991 = arith.addf %985, %990 : vector<8x8xf32>
    %992 = arith.addf %980, %991 : vector<8x8xf32>
    %c0_830 = arith.constant 0 : index
    %c17_831 = arith.constant 17 : index
    %993 = memref.load %arg16[%c0_830, %c17_831] : memref<2x49xf32, #tpu.memory_space<smem>>
    %c0_832 = arith.constant 0 : index
    %c2_833 = arith.constant 2 : index
    %c3_834 = arith.constant 3 : index
    %994 = vector.load %arg24[%c0_832, %c2_833, %c3_834] : memref<2x14x14xf32, #tpu.memory_space<vmem>>, vector<1x8x8xf32>
    %995 = vector.shape_cast %994 : vector<1x8x8xf32> to vector<8x8xf32>
    %996 = vector.broadcast %993 : f32 to vector<8x8xf32>
    %997 = arith.mulf %996, %995 : vector<8x8xf32>
    %c1_835 = arith.constant 1 : index
    %c17_836 = arith.constant 17 : index
    %998 = memref.load %arg16[%c1_835, %c17_836] : memref<2x49xf32, #tpu.memory_space<smem>>
    %c1_837 = arith.constant 1 : index
    %c2_838 = arith.constant 2 : index
    %c3_839 = arith.constant 3 : index
    %999 = vector.load %arg24[%c1_837, %c2_838, %c3_839] : memref<2x14x14xf32, #tpu.memory_space<vmem>>, vector<1x8x8xf32>
    %1000 = vector.shape_cast %999 : vector<1x8x8xf32> to vector<8x8xf32>
    %1001 = vector.broadcast %998 : f32 to vector<8x8xf32>
    %1002 = arith.mulf %1001, %1000 : vector<8x8xf32>
    %1003 = arith.addf %997, %1002 : vector<8x8xf32>
    %1004 = arith.addf %992, %1003 : vector<8x8xf32>
    %c0_840 = arith.constant 0 : index
    %c18_841 = arith.constant 18 : index
    %1005 = memref.load %arg16[%c0_840, %c18_841] : memref<2x49xf32, #tpu.memory_space<smem>>
    %c0_842 = arith.constant 0 : index
    %c2_843 = arith.constant 2 : index
    %c4_844 = arith.constant 4 : index
    %1006 = vector.load %arg24[%c0_842, %c2_843, %c4_844] : memref<2x14x14xf32, #tpu.memory_space<vmem>>, vector<1x8x8xf32>
    %1007 = vector.shape_cast %1006 : vector<1x8x8xf32> to vector<8x8xf32>
    %1008 = vector.broadcast %1005 : f32 to vector<8x8xf32>
    %1009 = arith.mulf %1008, %1007 : vector<8x8xf32>
    %c1_845 = arith.constant 1 : index
    %c18_846 = arith.constant 18 : index
    %1010 = memref.load %arg16[%c1_845, %c18_846] : memref<2x49xf32, #tpu.memory_space<smem>>
    %c1_847 = arith.constant 1 : index
    %c2_848 = arith.constant 2 : index
    %c4_849 = arith.constant 4 : index
    %1011 = vector.load %arg24[%c1_847, %c2_848, %c4_849] : memref<2x14x14xf32, #tpu.memory_space<vmem>>, vector<1x8x8xf32>
    %1012 = vector.shape_cast %1011 : vector<1x8x8xf32> to vector<8x8xf32>
    %1013 = vector.broadcast %1010 : f32 to vector<8x8xf32>
    %1014 = arith.mulf %1013, %1012 : vector<8x8xf32>
    %1015 = arith.addf %1009, %1014 : vector<8x8xf32>
    %1016 = arith.addf %1004, %1015 : vector<8x8xf32>
    %c0_850 = arith.constant 0 : index
    %c19_851 = arith.constant 19 : index
    %1017 = memref.load %arg16[%c0_850, %c19_851] : memref<2x49xf32, #tpu.memory_space<smem>>
    %c0_852 = arith.constant 0 : index
    %c2_853 = arith.constant 2 : index
    %c5_854 = arith.constant 5 : index
    %1018 = vector.load %arg24[%c0_852, %c2_853, %c5_854] : memref<2x14x14xf32, #tpu.memory_space<vmem>>, vector<1x8x8xf32>
    %1019 = vector.shape_cast %1018 : vector<1x8x8xf32> to vector<8x8xf32>
    %1020 = vector.broadcast %1017 : f32 to vector<8x8xf32>
    %1021 = arith.mulf %1020, %1019 : vector<8x8xf32>
    %c1_855 = arith.constant 1 : index
    %c19_856 = arith.constant 19 : index
    %1022 = memref.load %arg16[%c1_855, %c19_856] : memref<2x49xf32, #tpu.memory_space<smem>>
    %c1_857 = arith.constant 1 : index
    %c2_858 = arith.constant 2 : index
    %c5_859 = arith.constant 5 : index
    %1023 = vector.load %arg24[%c1_857, %c2_858, %c5_859] : memref<2x14x14xf32, #tpu.memory_space<vmem>>, vector<1x8x8xf32>
    %1024 = vector.shape_cast %1023 : vector<1x8x8xf32> to vector<8x8xf32>
    %1025 = vector.broadcast %1022 : f32 to vector<8x8xf32>
    %1026 = arith.mulf %1025, %1024 : vector<8x8xf32>
    %1027 = arith.addf %1021, %1026 : vector<8x8xf32>
    %1028 = arith.addf %1016, %1027 : vector<8x8xf32>
    %c0_860 = arith.constant 0 : index
    %c20_861 = arith.constant 20 : index
    %1029 = memref.load %arg16[%c0_860, %c20_861] : memref<2x49xf32, #tpu.memory_space<smem>>
    %c0_862 = arith.constant 0 : index
    %c2_863 = arith.constant 2 : index
    %c6_864 = arith.constant 6 : index
    %1030 = vector.load %arg24[%c0_862, %c2_863, %c6_864] : memref<2x14x14xf32, #tpu.memory_space<vmem>>, vector<1x8x8xf32>
    %1031 = vector.shape_cast %1030 : vector<1x8x8xf32> to vector<8x8xf32>
    %1032 = vector.broadcast %1029 : f32 to vector<8x8xf32>
    %1033 = arith.mulf %1032, %1031 : vector<8x8xf32>
    %c1_865 = arith.constant 1 : index
    %c20_866 = arith.constant 20 : index
    %1034 = memref.load %arg16[%c1_865, %c20_866] : memref<2x49xf32, #tpu.memory_space<smem>>
    %c1_867 = arith.constant 1 : index
    %c2_868 = arith.constant 2 : index
    %c6_869 = arith.constant 6 : index
    %1035 = vector.load %arg24[%c1_867, %c2_868, %c6_869] : memref<2x14x14xf32, #tpu.memory_space<vmem>>, vector<1x8x8xf32>
    %1036 = vector.shape_cast %1035 : vector<1x8x8xf32> to vector<8x8xf32>
    %1037 = vector.broadcast %1034 : f32 to vector<8x8xf32>
    %1038 = arith.mulf %1037, %1036 : vector<8x8xf32>
    %1039 = arith.addf %1033, %1038 : vector<8x8xf32>
    %1040 = arith.addf %1028, %1039 : vector<8x8xf32>
    %c0_870 = arith.constant 0 : index
    %c21_871 = arith.constant 21 : index
    %1041 = memref.load %arg16[%c0_870, %c21_871] : memref<2x49xf32, #tpu.memory_space<smem>>
    %c0_872 = arith.constant 0 : index
    %c3_873 = arith.constant 3 : index
    %c0_874 = arith.constant 0 : index
    %1042 = vector.load %arg24[%c0_872, %c3_873, %c0_874] : memref<2x14x14xf32, #tpu.memory_space<vmem>>, vector<1x8x8xf32>
    %1043 = vector.shape_cast %1042 : vector<1x8x8xf32> to vector<8x8xf32>
    %1044 = vector.broadcast %1041 : f32 to vector<8x8xf32>
    %1045 = arith.mulf %1044, %1043 : vector<8x8xf32>
    %c1_875 = arith.constant 1 : index
    %c21_876 = arith.constant 21 : index
    %1046 = memref.load %arg16[%c1_875, %c21_876] : memref<2x49xf32, #tpu.memory_space<smem>>
    %c1_877 = arith.constant 1 : index
    %c3_878 = arith.constant 3 : index
    %c0_879 = arith.constant 0 : index
    %1047 = vector.load %arg24[%c1_877, %c3_878, %c0_879] : memref<2x14x14xf32, #tpu.memory_space<vmem>>, vector<1x8x8xf32>
    %1048 = vector.shape_cast %1047 : vector<1x8x8xf32> to vector<8x8xf32>
    %1049 = vector.broadcast %1046 : f32 to vector<8x8xf32>
    %1050 = arith.mulf %1049, %1048 : vector<8x8xf32>
    %1051 = arith.addf %1045, %1050 : vector<8x8xf32>
    %1052 = arith.addf %1040, %1051 : vector<8x8xf32>
    %c0_880 = arith.constant 0 : index
    %c22_881 = arith.constant 22 : index
    %1053 = memref.load %arg16[%c0_880, %c22_881] : memref<2x49xf32, #tpu.memory_space<smem>>
    %c0_882 = arith.constant 0 : index
    %c3_883 = arith.constant 3 : index
    %c1_884 = arith.constant 1 : index
    %1054 = vector.load %arg24[%c0_882, %c3_883, %c1_884] : memref<2x14x14xf32, #tpu.memory_space<vmem>>, vector<1x8x8xf32>
    %1055 = vector.shape_cast %1054 : vector<1x8x8xf32> to vector<8x8xf32>
    %1056 = vector.broadcast %1053 : f32 to vector<8x8xf32>
    %1057 = arith.mulf %1056, %1055 : vector<8x8xf32>
    %c1_885 = arith.constant 1 : index
    %c22_886 = arith.constant 22 : index
    %1058 = memref.load %arg16[%c1_885, %c22_886] : memref<2x49xf32, #tpu.memory_space<smem>>
    %c1_887 = arith.constant 1 : index
    %c3_888 = arith.constant 3 : index
    %c1_889 = arith.constant 1 : index
    %1059 = vector.load %arg24[%c1_887, %c3_888, %c1_889] : memref<2x14x14xf32, #tpu.memory_space<vmem>>, vector<1x8x8xf32>
    %1060 = vector.shape_cast %1059 : vector<1x8x8xf32> to vector<8x8xf32>
    %1061 = vector.broadcast %1058 : f32 to vector<8x8xf32>
    %1062 = arith.mulf %1061, %1060 : vector<8x8xf32>
    %1063 = arith.addf %1057, %1062 : vector<8x8xf32>
    %1064 = arith.addf %1052, %1063 : vector<8x8xf32>
    %c0_890 = arith.constant 0 : index
    %c23_891 = arith.constant 23 : index
    %1065 = memref.load %arg16[%c0_890, %c23_891] : memref<2x49xf32, #tpu.memory_space<smem>>
    %c0_892 = arith.constant 0 : index
    %c3_893 = arith.constant 3 : index
    %c2_894 = arith.constant 2 : index
    %1066 = vector.load %arg24[%c0_892, %c3_893, %c2_894] : memref<2x14x14xf32, #tpu.memory_space<vmem>>, vector<1x8x8xf32>
    %1067 = vector.shape_cast %1066 : vector<1x8x8xf32> to vector<8x8xf32>
    %1068 = vector.broadcast %1065 : f32 to vector<8x8xf32>
    %1069 = arith.mulf %1068, %1067 : vector<8x8xf32>
    %c1_895 = arith.constant 1 : index
    %c23_896 = arith.constant 23 : index
    %1070 = memref.load %arg16[%c1_895, %c23_896] : memref<2x49xf32, #tpu.memory_space<smem>>
    %c1_897 = arith.constant 1 : index
    %c3_898 = arith.constant 3 : index
    %c2_899 = arith.constant 2 : index
    %1071 = vector.load %arg24[%c1_897, %c3_898, %c2_899] : memref<2x14x14xf32, #tpu.memory_space<vmem>>, vector<1x8x8xf32>
    %1072 = vector.shape_cast %1071 : vector<1x8x8xf32> to vector<8x8xf32>
    %1073 = vector.broadcast %1070 : f32 to vector<8x8xf32>
    %1074 = arith.mulf %1073, %1072 : vector<8x8xf32>
    %1075 = arith.addf %1069, %1074 : vector<8x8xf32>
    %1076 = arith.addf %1064, %1075 : vector<8x8xf32>
    %c0_900 = arith.constant 0 : index
    %c24_901 = arith.constant 24 : index
    %1077 = memref.load %arg16[%c0_900, %c24_901] : memref<2x49xf32, #tpu.memory_space<smem>>
    %c0_902 = arith.constant 0 : index
    %c3_903 = arith.constant 3 : index
    %c3_904 = arith.constant 3 : index
    %1078 = vector.load %arg24[%c0_902, %c3_903, %c3_904] : memref<2x14x14xf32, #tpu.memory_space<vmem>>, vector<1x8x8xf32>
    %1079 = vector.shape_cast %1078 : vector<1x8x8xf32> to vector<8x8xf32>
    %1080 = vector.broadcast %1077 : f32 to vector<8x8xf32>
    %1081 = arith.mulf %1080, %1079 : vector<8x8xf32>
    %c1_905 = arith.constant 1 : index
    %c24_906 = arith.constant 24 : index
    %1082 = memref.load %arg16[%c1_905, %c24_906] : memref<2x49xf32, #tpu.memory_space<smem>>
    %c1_907 = arith.constant 1 : index
    %c3_908 = arith.constant 3 : index
    %c3_909 = arith.constant 3 : index
    %1083 = vector.load %arg24[%c1_907, %c3_908, %c3_909] : memref<2x14x14xf32, #tpu.memory_space<vmem>>, vector<1x8x8xf32>
    %1084 = vector.shape_cast %1083 : vector<1x8x8xf32> to vector<8x8xf32>
    %1085 = vector.broadcast %1082 : f32 to vector<8x8xf32>
    %1086 = arith.mulf %1085, %1084 : vector<8x8xf32>
    %1087 = arith.addf %1081, %1086 : vector<8x8xf32>
    %1088 = arith.addf %1076, %1087 : vector<8x8xf32>
    %c0_910 = arith.constant 0 : index
    %c25_911 = arith.constant 25 : index
    %1089 = memref.load %arg16[%c0_910, %c25_911] : memref<2x49xf32, #tpu.memory_space<smem>>
    %c0_912 = arith.constant 0 : index
    %c3_913 = arith.constant 3 : index
    %c4_914 = arith.constant 4 : index
    %1090 = vector.load %arg24[%c0_912, %c3_913, %c4_914] : memref<2x14x14xf32, #tpu.memory_space<vmem>>, vector<1x8x8xf32>
    %1091 = vector.shape_cast %1090 : vector<1x8x8xf32> to vector<8x8xf32>
    %1092 = vector.broadcast %1089 : f32 to vector<8x8xf32>
    %1093 = arith.mulf %1092, %1091 : vector<8x8xf32>
    %c1_915 = arith.constant 1 : index
    %c25_916 = arith.constant 25 : index
    %1094 = memref.load %arg16[%c1_915, %c25_916] : memref<2x49xf32, #tpu.memory_space<smem>>
    %c1_917 = arith.constant 1 : index
    %c3_918 = arith.constant 3 : index
    %c4_919 = arith.constant 4 : index
    %1095 = vector.load %arg24[%c1_917, %c3_918, %c4_919] : memref<2x14x14xf32, #tpu.memory_space<vmem>>, vector<1x8x8xf32>
    %1096 = vector.shape_cast %1095 : vector<1x8x8xf32> to vector<8x8xf32>
    %1097 = vector.broadcast %1094 : f32 to vector<8x8xf32>
    %1098 = arith.mulf %1097, %1096 : vector<8x8xf32>
    %1099 = arith.addf %1093, %1098 : vector<8x8xf32>
    %1100 = arith.addf %1088, %1099 : vector<8x8xf32>
    %c0_920 = arith.constant 0 : index
    %c26_921 = arith.constant 26 : index
    %1101 = memref.load %arg16[%c0_920, %c26_921] : memref<2x49xf32, #tpu.memory_space<smem>>
    %c0_922 = arith.constant 0 : index
    %c3_923 = arith.constant 3 : index
    %c5_924 = arith.constant 5 : index
    %1102 = vector.load %arg24[%c0_922, %c3_923, %c5_924] : memref<2x14x14xf32, #tpu.memory_space<vmem>>, vector<1x8x8xf32>
    %1103 = vector.shape_cast %1102 : vector<1x8x8xf32> to vector<8x8xf32>
    %1104 = vector.broadcast %1101 : f32 to vector<8x8xf32>
    %1105 = arith.mulf %1104, %1103 : vector<8x8xf32>
    %c1_925 = arith.constant 1 : index
    %c26_926 = arith.constant 26 : index
    %1106 = memref.load %arg16[%c1_925, %c26_926] : memref<2x49xf32, #tpu.memory_space<smem>>
    %c1_927 = arith.constant 1 : index
    %c3_928 = arith.constant 3 : index
    %c5_929 = arith.constant 5 : index
    %1107 = vector.load %arg24[%c1_927, %c3_928, %c5_929] : memref<2x14x14xf32, #tpu.memory_space<vmem>>, vector<1x8x8xf32>
    %1108 = vector.shape_cast %1107 : vector<1x8x8xf32> to vector<8x8xf32>
    %1109 = vector.broadcast %1106 : f32 to vector<8x8xf32>
    %1110 = arith.mulf %1109, %1108 : vector<8x8xf32>
    %1111 = arith.addf %1105, %1110 : vector<8x8xf32>
    %1112 = arith.addf %1100, %1111 : vector<8x8xf32>
    %c0_930 = arith.constant 0 : index
    %c27_931 = arith.constant 27 : index
    %1113 = memref.load %arg16[%c0_930, %c27_931] : memref<2x49xf32, #tpu.memory_space<smem>>
    %c0_932 = arith.constant 0 : index
    %c3_933 = arith.constant 3 : index
    %c6_934 = arith.constant 6 : index
    %1114 = vector.load %arg24[%c0_932, %c3_933, %c6_934] : memref<2x14x14xf32, #tpu.memory_space<vmem>>, vector<1x8x8xf32>
    %1115 = vector.shape_cast %1114 : vector<1x8x8xf32> to vector<8x8xf32>
    %1116 = vector.broadcast %1113 : f32 to vector<8x8xf32>
    %1117 = arith.mulf %1116, %1115 : vector<8x8xf32>
    %c1_935 = arith.constant 1 : index
    %c27_936 = arith.constant 27 : index
    %1118 = memref.load %arg16[%c1_935, %c27_936] : memref<2x49xf32, #tpu.memory_space<smem>>
    %c1_937 = arith.constant 1 : index
    %c3_938 = arith.constant 3 : index
    %c6_939 = arith.constant 6 : index
    %1119 = vector.load %arg24[%c1_937, %c3_938, %c6_939] : memref<2x14x14xf32, #tpu.memory_space<vmem>>, vector<1x8x8xf32>
    %1120 = vector.shape_cast %1119 : vector<1x8x8xf32> to vector<8x8xf32>
    %1121 = vector.broadcast %1118 : f32 to vector<8x8xf32>
    %1122 = arith.mulf %1121, %1120 : vector<8x8xf32>
    %1123 = arith.addf %1117, %1122 : vector<8x8xf32>
    %1124 = arith.addf %1112, %1123 : vector<8x8xf32>
    %c0_940 = arith.constant 0 : index
    %c28_941 = arith.constant 28 : index
    %1125 = memref.load %arg16[%c0_940, %c28_941] : memref<2x49xf32, #tpu.memory_space<smem>>
    %c0_942 = arith.constant 0 : index
    %c4_943 = arith.constant 4 : index
    %c0_944 = arith.constant 0 : index
    %1126 = vector.load %arg24[%c0_942, %c4_943, %c0_944] : memref<2x14x14xf32, #tpu.memory_space<vmem>>, vector<1x8x8xf32>
    %1127 = vector.shape_cast %1126 : vector<1x8x8xf32> to vector<8x8xf32>
    %1128 = vector.broadcast %1125 : f32 to vector<8x8xf32>
    %1129 = arith.mulf %1128, %1127 : vector<8x8xf32>
    %c1_945 = arith.constant 1 : index
    %c28_946 = arith.constant 28 : index
    %1130 = memref.load %arg16[%c1_945, %c28_946] : memref<2x49xf32, #tpu.memory_space<smem>>
    %c1_947 = arith.constant 1 : index
    %c4_948 = arith.constant 4 : index
    %c0_949 = arith.constant 0 : index
    %1131 = vector.load %arg24[%c1_947, %c4_948, %c0_949] : memref<2x14x14xf32, #tpu.memory_space<vmem>>, vector<1x8x8xf32>
    %1132 = vector.shape_cast %1131 : vector<1x8x8xf32> to vector<8x8xf32>
    %1133 = vector.broadcast %1130 : f32 to vector<8x8xf32>
    %1134 = arith.mulf %1133, %1132 : vector<8x8xf32>
    %1135 = arith.addf %1129, %1134 : vector<8x8xf32>
    %1136 = arith.addf %1124, %1135 : vector<8x8xf32>
    %c0_950 = arith.constant 0 : index
    %c29_951 = arith.constant 29 : index
    %1137 = memref.load %arg16[%c0_950, %c29_951] : memref<2x49xf32, #tpu.memory_space<smem>>
    %c0_952 = arith.constant 0 : index
    %c4_953 = arith.constant 4 : index
    %c1_954 = arith.constant 1 : index
    %1138 = vector.load %arg24[%c0_952, %c4_953, %c1_954] : memref<2x14x14xf32, #tpu.memory_space<vmem>>, vector<1x8x8xf32>
    %1139 = vector.shape_cast %1138 : vector<1x8x8xf32> to vector<8x8xf32>
    %1140 = vector.broadcast %1137 : f32 to vector<8x8xf32>
    %1141 = arith.mulf %1140, %1139 : vector<8x8xf32>
    %c1_955 = arith.constant 1 : index
    %c29_956 = arith.constant 29 : index
    %1142 = memref.load %arg16[%c1_955, %c29_956] : memref<2x49xf32, #tpu.memory_space<smem>>
    %c1_957 = arith.constant 1 : index
    %c4_958 = arith.constant 4 : index
    %c1_959 = arith.constant 1 : index
    %1143 = vector.load %arg24[%c1_957, %c4_958, %c1_959] : memref<2x14x14xf32, #tpu.memory_space<vmem>>, vector<1x8x8xf32>
    %1144 = vector.shape_cast %1143 : vector<1x8x8xf32> to vector<8x8xf32>
    %1145 = vector.broadcast %1142 : f32 to vector<8x8xf32>
    %1146 = arith.mulf %1145, %1144 : vector<8x8xf32>
    %1147 = arith.addf %1141, %1146 : vector<8x8xf32>
    %1148 = arith.addf %1136, %1147 : vector<8x8xf32>
    %c0_960 = arith.constant 0 : index
    %c30_961 = arith.constant 30 : index
    %1149 = memref.load %arg16[%c0_960, %c30_961] : memref<2x49xf32, #tpu.memory_space<smem>>
    %c0_962 = arith.constant 0 : index
    %c4_963 = arith.constant 4 : index
    %c2_964 = arith.constant 2 : index
    %1150 = vector.load %arg24[%c0_962, %c4_963, %c2_964] : memref<2x14x14xf32, #tpu.memory_space<vmem>>, vector<1x8x8xf32>
    %1151 = vector.shape_cast %1150 : vector<1x8x8xf32> to vector<8x8xf32>
    %1152 = vector.broadcast %1149 : f32 to vector<8x8xf32>
    %1153 = arith.mulf %1152, %1151 : vector<8x8xf32>
    %c1_965 = arith.constant 1 : index
    %c30_966 = arith.constant 30 : index
    %1154 = memref.load %arg16[%c1_965, %c30_966] : memref<2x49xf32, #tpu.memory_space<smem>>
    %c1_967 = arith.constant 1 : index
    %c4_968 = arith.constant 4 : index
    %c2_969 = arith.constant 2 : index
    %1155 = vector.load %arg24[%c1_967, %c4_968, %c2_969] : memref<2x14x14xf32, #tpu.memory_space<vmem>>, vector<1x8x8xf32>
    %1156 = vector.shape_cast %1155 : vector<1x8x8xf32> to vector<8x8xf32>
    %1157 = vector.broadcast %1154 : f32 to vector<8x8xf32>
    %1158 = arith.mulf %1157, %1156 : vector<8x8xf32>
    %1159 = arith.addf %1153, %1158 : vector<8x8xf32>
    %1160 = arith.addf %1148, %1159 : vector<8x8xf32>
    %c0_970 = arith.constant 0 : index
    %c31_971 = arith.constant 31 : index
    %1161 = memref.load %arg16[%c0_970, %c31_971] : memref<2x49xf32, #tpu.memory_space<smem>>
    %c0_972 = arith.constant 0 : index
    %c4_973 = arith.constant 4 : index
    %c3_974 = arith.constant 3 : index
    %1162 = vector.load %arg24[%c0_972, %c4_973, %c3_974] : memref<2x14x14xf32, #tpu.memory_space<vmem>>, vector<1x8x8xf32>
    %1163 = vector.shape_cast %1162 : vector<1x8x8xf32> to vector<8x8xf32>
    %1164 = vector.broadcast %1161 : f32 to vector<8x8xf32>
    %1165 = arith.mulf %1164, %1163 : vector<8x8xf32>
    %c1_975 = arith.constant 1 : index
    %c31_976 = arith.constant 31 : index
    %1166 = memref.load %arg16[%c1_975, %c31_976] : memref<2x49xf32, #tpu.memory_space<smem>>
    %c1_977 = arith.constant 1 : index
    %c4_978 = arith.constant 4 : index
    %c3_979 = arith.constant 3 : index
    %1167 = vector.load %arg24[%c1_977, %c4_978, %c3_979] : memref<2x14x14xf32, #tpu.memory_space<vmem>>, vector<1x8x8xf32>
    %1168 = vector.shape_cast %1167 : vector<1x8x8xf32> to vector<8x8xf32>
    %1169 = vector.broadcast %1166 : f32 to vector<8x8xf32>
    %1170 = arith.mulf %1169, %1168 : vector<8x8xf32>
    %1171 = arith.addf %1165, %1170 : vector<8x8xf32>
    %1172 = arith.addf %1160, %1171 : vector<8x8xf32>
    %c0_980 = arith.constant 0 : index
    %c32_981 = arith.constant 32 : index
    %1173 = memref.load %arg16[%c0_980, %c32_981] : memref<2x49xf32, #tpu.memory_space<smem>>
    %c0_982 = arith.constant 0 : index
    %c4_983 = arith.constant 4 : index
    %c4_984 = arith.constant 4 : index
    %1174 = vector.load %arg24[%c0_982, %c4_983, %c4_984] : memref<2x14x14xf32, #tpu.memory_space<vmem>>, vector<1x8x8xf32>
    %1175 = vector.shape_cast %1174 : vector<1x8x8xf32> to vector<8x8xf32>
    %1176 = vector.broadcast %1173 : f32 to vector<8x8xf32>
    %1177 = arith.mulf %1176, %1175 : vector<8x8xf32>
    %c1_985 = arith.constant 1 : index
    %c32_986 = arith.constant 32 : index
    %1178 = memref.load %arg16[%c1_985, %c32_986] : memref<2x49xf32, #tpu.memory_space<smem>>
    %c1_987 = arith.constant 1 : index
    %c4_988 = arith.constant 4 : index
    %c4_989 = arith.constant 4 : index
    %1179 = vector.load %arg24[%c1_987, %c4_988, %c4_989] : memref<2x14x14xf32, #tpu.memory_space<vmem>>, vector<1x8x8xf32>
    %1180 = vector.shape_cast %1179 : vector<1x8x8xf32> to vector<8x8xf32>
    %1181 = vector.broadcast %1178 : f32 to vector<8x8xf32>
    %1182 = arith.mulf %1181, %1180 : vector<8x8xf32>
    %1183 = arith.addf %1177, %1182 : vector<8x8xf32>
    %1184 = arith.addf %1172, %1183 : vector<8x8xf32>
    %c0_990 = arith.constant 0 : index
    %c33_991 = arith.constant 33 : index
    %1185 = memref.load %arg16[%c0_990, %c33_991] : memref<2x49xf32, #tpu.memory_space<smem>>
    %c0_992 = arith.constant 0 : index
    %c4_993 = arith.constant 4 : index
    %c5_994 = arith.constant 5 : index
    %1186 = vector.load %arg24[%c0_992, %c4_993, %c5_994] : memref<2x14x14xf32, #tpu.memory_space<vmem>>, vector<1x8x8xf32>
    %1187 = vector.shape_cast %1186 : vector<1x8x8xf32> to vector<8x8xf32>
    %1188 = vector.broadcast %1185 : f32 to vector<8x8xf32>
    %1189 = arith.mulf %1188, %1187 : vector<8x8xf32>
    %c1_995 = arith.constant 1 : index
    %c33_996 = arith.constant 33 : index
    %1190 = memref.load %arg16[%c1_995, %c33_996] : memref<2x49xf32, #tpu.memory_space<smem>>
    %c1_997 = arith.constant 1 : index
    %c4_998 = arith.constant 4 : index
    %c5_999 = arith.constant 5 : index
    %1191 = vector.load %arg24[%c1_997, %c4_998, %c5_999] : memref<2x14x14xf32, #tpu.memory_space<vmem>>, vector<1x8x8xf32>
    %1192 = vector.shape_cast %1191 : vector<1x8x8xf32> to vector<8x8xf32>
    %1193 = vector.broadcast %1190 : f32 to vector<8x8xf32>
    %1194 = arith.mulf %1193, %1192 : vector<8x8xf32>
    %1195 = arith.addf %1189, %1194 : vector<8x8xf32>
    %1196 = arith.addf %1184, %1195 : vector<8x8xf32>
    %c0_1000 = arith.constant 0 : index
    %c34_1001 = arith.constant 34 : index
    %1197 = memref.load %arg16[%c0_1000, %c34_1001] : memref<2x49xf32, #tpu.memory_space<smem>>
    %c0_1002 = arith.constant 0 : index
    %c4_1003 = arith.constant 4 : index
    %c6_1004 = arith.constant 6 : index
    %1198 = vector.load %arg24[%c0_1002, %c4_1003, %c6_1004] : memref<2x14x14xf32, #tpu.memory_space<vmem>>, vector<1x8x8xf32>
    %1199 = vector.shape_cast %1198 : vector<1x8x8xf32> to vector<8x8xf32>
    %1200 = vector.broadcast %1197 : f32 to vector<8x8xf32>
    %1201 = arith.mulf %1200, %1199 : vector<8x8xf32>
    %c1_1005 = arith.constant 1 : index
    %c34_1006 = arith.constant 34 : index
    %1202 = memref.load %arg16[%c1_1005, %c34_1006] : memref<2x49xf32, #tpu.memory_space<smem>>
    %c1_1007 = arith.constant 1 : index
    %c4_1008 = arith.constant 4 : index
    %c6_1009 = arith.constant 6 : index
    %1203 = vector.load %arg24[%c1_1007, %c4_1008, %c6_1009] : memref<2x14x14xf32, #tpu.memory_space<vmem>>, vector<1x8x8xf32>
    %1204 = vector.shape_cast %1203 : vector<1x8x8xf32> to vector<8x8xf32>
    %1205 = vector.broadcast %1202 : f32 to vector<8x8xf32>
    %1206 = arith.mulf %1205, %1204 : vector<8x8xf32>
    %1207 = arith.addf %1201, %1206 : vector<8x8xf32>
    %1208 = arith.addf %1196, %1207 : vector<8x8xf32>
    %c0_1010 = arith.constant 0 : index
    %c35_1011 = arith.constant 35 : index
    %1209 = memref.load %arg16[%c0_1010, %c35_1011] : memref<2x49xf32, #tpu.memory_space<smem>>
    %c0_1012 = arith.constant 0 : index
    %c5_1013 = arith.constant 5 : index
    %c0_1014 = arith.constant 0 : index
    %1210 = vector.load %arg24[%c0_1012, %c5_1013, %c0_1014] : memref<2x14x14xf32, #tpu.memory_space<vmem>>, vector<1x8x8xf32>
    %1211 = vector.shape_cast %1210 : vector<1x8x8xf32> to vector<8x8xf32>
    %1212 = vector.broadcast %1209 : f32 to vector<8x8xf32>
    %1213 = arith.mulf %1212, %1211 : vector<8x8xf32>
    %c1_1015 = arith.constant 1 : index
    %c35_1016 = arith.constant 35 : index
    %1214 = memref.load %arg16[%c1_1015, %c35_1016] : memref<2x49xf32, #tpu.memory_space<smem>>
    %c1_1017 = arith.constant 1 : index
    %c5_1018 = arith.constant 5 : index
    %c0_1019 = arith.constant 0 : index
    %1215 = vector.load %arg24[%c1_1017, %c5_1018, %c0_1019] : memref<2x14x14xf32, #tpu.memory_space<vmem>>, vector<1x8x8xf32>
    %1216 = vector.shape_cast %1215 : vector<1x8x8xf32> to vector<8x8xf32>
    %1217 = vector.broadcast %1214 : f32 to vector<8x8xf32>
    %1218 = arith.mulf %1217, %1216 : vector<8x8xf32>
    %1219 = arith.addf %1213, %1218 : vector<8x8xf32>
    %1220 = arith.addf %1208, %1219 : vector<8x8xf32>
    %c0_1020 = arith.constant 0 : index
    %c36_1021 = arith.constant 36 : index
    %1221 = memref.load %arg16[%c0_1020, %c36_1021] : memref<2x49xf32, #tpu.memory_space<smem>>
    %c0_1022 = arith.constant 0 : index
    %c5_1023 = arith.constant 5 : index
    %c1_1024 = arith.constant 1 : index
    %1222 = vector.load %arg24[%c0_1022, %c5_1023, %c1_1024] : memref<2x14x14xf32, #tpu.memory_space<vmem>>, vector<1x8x8xf32>
    %1223 = vector.shape_cast %1222 : vector<1x8x8xf32> to vector<8x8xf32>
    %1224 = vector.broadcast %1221 : f32 to vector<8x8xf32>
    %1225 = arith.mulf %1224, %1223 : vector<8x8xf32>
    %c1_1025 = arith.constant 1 : index
    %c36_1026 = arith.constant 36 : index
    %1226 = memref.load %arg16[%c1_1025, %c36_1026] : memref<2x49xf32, #tpu.memory_space<smem>>
    %c1_1027 = arith.constant 1 : index
    %c5_1028 = arith.constant 5 : index
    %c1_1029 = arith.constant 1 : index
    %1227 = vector.load %arg24[%c1_1027, %c5_1028, %c1_1029] : memref<2x14x14xf32, #tpu.memory_space<vmem>>, vector<1x8x8xf32>
    %1228 = vector.shape_cast %1227 : vector<1x8x8xf32> to vector<8x8xf32>
    %1229 = vector.broadcast %1226 : f32 to vector<8x8xf32>
    %1230 = arith.mulf %1229, %1228 : vector<8x8xf32>
    %1231 = arith.addf %1225, %1230 : vector<8x8xf32>
    %1232 = arith.addf %1220, %1231 : vector<8x8xf32>
    %c0_1030 = arith.constant 0 : index
    %c37_1031 = arith.constant 37 : index
    %1233 = memref.load %arg16[%c0_1030, %c37_1031] : memref<2x49xf32, #tpu.memory_space<smem>>
    %c0_1032 = arith.constant 0 : index
    %c5_1033 = arith.constant 5 : index
    %c2_1034 = arith.constant 2 : index
    %1234 = vector.load %arg24[%c0_1032, %c5_1033, %c2_1034] : memref<2x14x14xf32, #tpu.memory_space<vmem>>, vector<1x8x8xf32>
    %1235 = vector.shape_cast %1234 : vector<1x8x8xf32> to vector<8x8xf32>
    %1236 = vector.broadcast %1233 : f32 to vector<8x8xf32>
    %1237 = arith.mulf %1236, %1235 : vector<8x8xf32>
    %c1_1035 = arith.constant 1 : index
    %c37_1036 = arith.constant 37 : index
    %1238 = memref.load %arg16[%c1_1035, %c37_1036] : memref<2x49xf32, #tpu.memory_space<smem>>
    %c1_1037 = arith.constant 1 : index
    %c5_1038 = arith.constant 5 : index
    %c2_1039 = arith.constant 2 : index
    %1239 = vector.load %arg24[%c1_1037, %c5_1038, %c2_1039] : memref<2x14x14xf32, #tpu.memory_space<vmem>>, vector<1x8x8xf32>
    %1240 = vector.shape_cast %1239 : vector<1x8x8xf32> to vector<8x8xf32>
    %1241 = vector.broadcast %1238 : f32 to vector<8x8xf32>
    %1242 = arith.mulf %1241, %1240 : vector<8x8xf32>
    %1243 = arith.addf %1237, %1242 : vector<8x8xf32>
    %1244 = arith.addf %1232, %1243 : vector<8x8xf32>
    %c0_1040 = arith.constant 0 : index
    %c38_1041 = arith.constant 38 : index
    %1245 = memref.load %arg16[%c0_1040, %c38_1041] : memref<2x49xf32, #tpu.memory_space<smem>>
    %c0_1042 = arith.constant 0 : index
    %c5_1043 = arith.constant 5 : index
    %c3_1044 = arith.constant 3 : index
    %1246 = vector.load %arg24[%c0_1042, %c5_1043, %c3_1044] : memref<2x14x14xf32, #tpu.memory_space<vmem>>, vector<1x8x8xf32>
    %1247 = vector.shape_cast %1246 : vector<1x8x8xf32> to vector<8x8xf32>
    %1248 = vector.broadcast %1245 : f32 to vector<8x8xf32>
    %1249 = arith.mulf %1248, %1247 : vector<8x8xf32>
    %c1_1045 = arith.constant 1 : index
    %c38_1046 = arith.constant 38 : index
    %1250 = memref.load %arg16[%c1_1045, %c38_1046] : memref<2x49xf32, #tpu.memory_space<smem>>
    %c1_1047 = arith.constant 1 : index
    %c5_1048 = arith.constant 5 : index
    %c3_1049 = arith.constant 3 : index
    %1251 = vector.load %arg24[%c1_1047, %c5_1048, %c3_1049] : memref<2x14x14xf32, #tpu.memory_space<vmem>>, vector<1x8x8xf32>
    %1252 = vector.shape_cast %1251 : vector<1x8x8xf32> to vector<8x8xf32>
    %1253 = vector.broadcast %1250 : f32 to vector<8x8xf32>
    %1254 = arith.mulf %1253, %1252 : vector<8x8xf32>
    %1255 = arith.addf %1249, %1254 : vector<8x8xf32>
    %1256 = arith.addf %1244, %1255 : vector<8x8xf32>
    %c0_1050 = arith.constant 0 : index
    %c39_1051 = arith.constant 39 : index
    %1257 = memref.load %arg16[%c0_1050, %c39_1051] : memref<2x49xf32, #tpu.memory_space<smem>>
    %c0_1052 = arith.constant 0 : index
    %c5_1053 = arith.constant 5 : index
    %c4_1054 = arith.constant 4 : index
    %1258 = vector.load %arg24[%c0_1052, %c5_1053, %c4_1054] : memref<2x14x14xf32, #tpu.memory_space<vmem>>, vector<1x8x8xf32>
    %1259 = vector.shape_cast %1258 : vector<1x8x8xf32> to vector<8x8xf32>
    %1260 = vector.broadcast %1257 : f32 to vector<8x8xf32>
    %1261 = arith.mulf %1260, %1259 : vector<8x8xf32>
    %c1_1055 = arith.constant 1 : index
    %c39_1056 = arith.constant 39 : index
    %1262 = memref.load %arg16[%c1_1055, %c39_1056] : memref<2x49xf32, #tpu.memory_space<smem>>
    %c1_1057 = arith.constant 1 : index
    %c5_1058 = arith.constant 5 : index
    %c4_1059 = arith.constant 4 : index
    %1263 = vector.load %arg24[%c1_1057, %c5_1058, %c4_1059] : memref<2x14x14xf32, #tpu.memory_space<vmem>>, vector<1x8x8xf32>
    %1264 = vector.shape_cast %1263 : vector<1x8x8xf32> to vector<8x8xf32>
    %1265 = vector.broadcast %1262 : f32 to vector<8x8xf32>
    %1266 = arith.mulf %1265, %1264 : vector<8x8xf32>
    %1267 = arith.addf %1261, %1266 : vector<8x8xf32>
    %1268 = arith.addf %1256, %1267 : vector<8x8xf32>
    %c0_1060 = arith.constant 0 : index
    %c40_1061 = arith.constant 40 : index
    %1269 = memref.load %arg16[%c0_1060, %c40_1061] : memref<2x49xf32, #tpu.memory_space<smem>>
    %c0_1062 = arith.constant 0 : index
    %c5_1063 = arith.constant 5 : index
    %c5_1064 = arith.constant 5 : index
    %1270 = vector.load %arg24[%c0_1062, %c5_1063, %c5_1064] : memref<2x14x14xf32, #tpu.memory_space<vmem>>, vector<1x8x8xf32>
    %1271 = vector.shape_cast %1270 : vector<1x8x8xf32> to vector<8x8xf32>
    %1272 = vector.broadcast %1269 : f32 to vector<8x8xf32>
    %1273 = arith.mulf %1272, %1271 : vector<8x8xf32>
    %c1_1065 = arith.constant 1 : index
    %c40_1066 = arith.constant 40 : index
    %1274 = memref.load %arg16[%c1_1065, %c40_1066] : memref<2x49xf32, #tpu.memory_space<smem>>
    %c1_1067 = arith.constant 1 : index
    %c5_1068 = arith.constant 5 : index
    %c5_1069 = arith.constant 5 : index
    %1275 = vector.load %arg24[%c1_1067, %c5_1068, %c5_1069] : memref<2x14x14xf32, #tpu.memory_space<vmem>>, vector<1x8x8xf32>
    %1276 = vector.shape_cast %1275 : vector<1x8x8xf32> to vector<8x8xf32>
    %1277 = vector.broadcast %1274 : f32 to vector<8x8xf32>
    %1278 = arith.mulf %1277, %1276 : vector<8x8xf32>
    %1279 = arith.addf %1273, %1278 : vector<8x8xf32>
    %1280 = arith.addf %1268, %1279 : vector<8x8xf32>
    %c0_1070 = arith.constant 0 : index
    %c41_1071 = arith.constant 41 : index
    %1281 = memref.load %arg16[%c0_1070, %c41_1071] : memref<2x49xf32, #tpu.memory_space<smem>>
    %c0_1072 = arith.constant 0 : index
    %c5_1073 = arith.constant 5 : index
    %c6_1074 = arith.constant 6 : index
    %1282 = vector.load %arg24[%c0_1072, %c5_1073, %c6_1074] : memref<2x14x14xf32, #tpu.memory_space<vmem>>, vector<1x8x8xf32>
    %1283 = vector.shape_cast %1282 : vector<1x8x8xf32> to vector<8x8xf32>
    %1284 = vector.broadcast %1281 : f32 to vector<8x8xf32>
    %1285 = arith.mulf %1284, %1283 : vector<8x8xf32>
    %c1_1075 = arith.constant 1 : index
    %c41_1076 = arith.constant 41 : index
    %1286 = memref.load %arg16[%c1_1075, %c41_1076] : memref<2x49xf32, #tpu.memory_space<smem>>
    %c1_1077 = arith.constant 1 : index
    %c5_1078 = arith.constant 5 : index
    %c6_1079 = arith.constant 6 : index
    %1287 = vector.load %arg24[%c1_1077, %c5_1078, %c6_1079] : memref<2x14x14xf32, #tpu.memory_space<vmem>>, vector<1x8x8xf32>
    %1288 = vector.shape_cast %1287 : vector<1x8x8xf32> to vector<8x8xf32>
    %1289 = vector.broadcast %1286 : f32 to vector<8x8xf32>
    %1290 = arith.mulf %1289, %1288 : vector<8x8xf32>
    %1291 = arith.addf %1285, %1290 : vector<8x8xf32>
    %1292 = arith.addf %1280, %1291 : vector<8x8xf32>
    %c0_1080 = arith.constant 0 : index
    %c42_1081 = arith.constant 42 : index
    %1293 = memref.load %arg16[%c0_1080, %c42_1081] : memref<2x49xf32, #tpu.memory_space<smem>>
    %c0_1082 = arith.constant 0 : index
    %c6_1083 = arith.constant 6 : index
    %c0_1084 = arith.constant 0 : index
    %1294 = vector.load %arg24[%c0_1082, %c6_1083, %c0_1084] : memref<2x14x14xf32, #tpu.memory_space<vmem>>, vector<1x8x8xf32>
    %1295 = vector.shape_cast %1294 : vector<1x8x8xf32> to vector<8x8xf32>
    %1296 = vector.broadcast %1293 : f32 to vector<8x8xf32>
    %1297 = arith.mulf %1296, %1295 : vector<8x8xf32>
    %c1_1085 = arith.constant 1 : index
    %c42_1086 = arith.constant 42 : index
    %1298 = memref.load %arg16[%c1_1085, %c42_1086] : memref<2x49xf32, #tpu.memory_space<smem>>
    %c1_1087 = arith.constant 1 : index
    %c6_1088 = arith.constant 6 : index
    %c0_1089 = arith.constant 0 : index
    %1299 = vector.load %arg24[%c1_1087, %c6_1088, %c0_1089] : memref<2x14x14xf32, #tpu.memory_space<vmem>>, vector<1x8x8xf32>
    %1300 = vector.shape_cast %1299 : vector<1x8x8xf32> to vector<8x8xf32>
    %1301 = vector.broadcast %1298 : f32 to vector<8x8xf32>
    %1302 = arith.mulf %1301, %1300 : vector<8x8xf32>
    %1303 = arith.addf %1297, %1302 : vector<8x8xf32>
    %1304 = arith.addf %1292, %1303 : vector<8x8xf32>
    %c0_1090 = arith.constant 0 : index
    %c43_1091 = arith.constant 43 : index
    %1305 = memref.load %arg16[%c0_1090, %c43_1091] : memref<2x49xf32, #tpu.memory_space<smem>>
    %c0_1092 = arith.constant 0 : index
    %c6_1093 = arith.constant 6 : index
    %c1_1094 = arith.constant 1 : index
    %1306 = vector.load %arg24[%c0_1092, %c6_1093, %c1_1094] : memref<2x14x14xf32, #tpu.memory_space<vmem>>, vector<1x8x8xf32>
    %1307 = vector.shape_cast %1306 : vector<1x8x8xf32> to vector<8x8xf32>
    %1308 = vector.broadcast %1305 : f32 to vector<8x8xf32>
    %1309 = arith.mulf %1308, %1307 : vector<8x8xf32>
    %c1_1095 = arith.constant 1 : index
    %c43_1096 = arith.constant 43 : index
    %1310 = memref.load %arg16[%c1_1095, %c43_1096] : memref<2x49xf32, #tpu.memory_space<smem>>
    %c1_1097 = arith.constant 1 : index
    %c6_1098 = arith.constant 6 : index
    %c1_1099 = arith.constant 1 : index
    %1311 = vector.load %arg24[%c1_1097, %c6_1098, %c1_1099] : memref<2x14x14xf32, #tpu.memory_space<vmem>>, vector<1x8x8xf32>
    %1312 = vector.shape_cast %1311 : vector<1x8x8xf32> to vector<8x8xf32>
    %1313 = vector.broadcast %1310 : f32 to vector<8x8xf32>
    %1314 = arith.mulf %1313, %1312 : vector<8x8xf32>
    %1315 = arith.addf %1309, %1314 : vector<8x8xf32>
    %1316 = arith.addf %1304, %1315 : vector<8x8xf32>
    %c0_1100 = arith.constant 0 : index
    %c44_1101 = arith.constant 44 : index
    %1317 = memref.load %arg16[%c0_1100, %c44_1101] : memref<2x49xf32, #tpu.memory_space<smem>>
    %c0_1102 = arith.constant 0 : index
    %c6_1103 = arith.constant 6 : index
    %c2_1104 = arith.constant 2 : index
    %1318 = vector.load %arg24[%c0_1102, %c6_1103, %c2_1104] : memref<2x14x14xf32, #tpu.memory_space<vmem>>, vector<1x8x8xf32>
    %1319 = vector.shape_cast %1318 : vector<1x8x8xf32> to vector<8x8xf32>
    %1320 = vector.broadcast %1317 : f32 to vector<8x8xf32>
    %1321 = arith.mulf %1320, %1319 : vector<8x8xf32>
    %c1_1105 = arith.constant 1 : index
    %c44_1106 = arith.constant 44 : index
    %1322 = memref.load %arg16[%c1_1105, %c44_1106] : memref<2x49xf32, #tpu.memory_space<smem>>
    %c1_1107 = arith.constant 1 : index
    %c6_1108 = arith.constant 6 : index
    %c2_1109 = arith.constant 2 : index
    %1323 = vector.load %arg24[%c1_1107, %c6_1108, %c2_1109] : memref<2x14x14xf32, #tpu.memory_space<vmem>>, vector<1x8x8xf32>
    %1324 = vector.shape_cast %1323 : vector<1x8x8xf32> to vector<8x8xf32>
    %1325 = vector.broadcast %1322 : f32 to vector<8x8xf32>
    %1326 = arith.mulf %1325, %1324 : vector<8x8xf32>
    %1327 = arith.addf %1321, %1326 : vector<8x8xf32>
    %1328 = arith.addf %1316, %1327 : vector<8x8xf32>
    %c0_1110 = arith.constant 0 : index
    %c45_1111 = arith.constant 45 : index
    %1329 = memref.load %arg16[%c0_1110, %c45_1111] : memref<2x49xf32, #tpu.memory_space<smem>>
    %c0_1112 = arith.constant 0 : index
    %c6_1113 = arith.constant 6 : index
    %c3_1114 = arith.constant 3 : index
    %1330 = vector.load %arg24[%c0_1112, %c6_1113, %c3_1114] : memref<2x14x14xf32, #tpu.memory_space<vmem>>, vector<1x8x8xf32>
    %1331 = vector.shape_cast %1330 : vector<1x8x8xf32> to vector<8x8xf32>
    %1332 = vector.broadcast %1329 : f32 to vector<8x8xf32>
    %1333 = arith.mulf %1332, %1331 : vector<8x8xf32>
    %c1_1115 = arith.constant 1 : index
    %c45_1116 = arith.constant 45 : index
    %1334 = memref.load %arg16[%c1_1115, %c45_1116] : memref<2x49xf32, #tpu.memory_space<smem>>
    %c1_1117 = arith.constant 1 : index
    %c6_1118 = arith.constant 6 : index
    %c3_1119 = arith.constant 3 : index
    %1335 = vector.load %arg24[%c1_1117, %c6_1118, %c3_1119] : memref<2x14x14xf32, #tpu.memory_space<vmem>>, vector<1x8x8xf32>
    %1336 = vector.shape_cast %1335 : vector<1x8x8xf32> to vector<8x8xf32>
    %1337 = vector.broadcast %1334 : f32 to vector<8x8xf32>
    %1338 = arith.mulf %1337, %1336 : vector<8x8xf32>
    %1339 = arith.addf %1333, %1338 : vector<8x8xf32>
    %1340 = arith.addf %1328, %1339 : vector<8x8xf32>
    %c0_1120 = arith.constant 0 : index
    %c46_1121 = arith.constant 46 : index
    %1341 = memref.load %arg16[%c0_1120, %c46_1121] : memref<2x49xf32, #tpu.memory_space<smem>>
    %c0_1122 = arith.constant 0 : index
    %c6_1123 = arith.constant 6 : index
    %c4_1124 = arith.constant 4 : index
    %1342 = vector.load %arg24[%c0_1122, %c6_1123, %c4_1124] : memref<2x14x14xf32, #tpu.memory_space<vmem>>, vector<1x8x8xf32>
    %1343 = vector.shape_cast %1342 : vector<1x8x8xf32> to vector<8x8xf32>
    %1344 = vector.broadcast %1341 : f32 to vector<8x8xf32>
    %1345 = arith.mulf %1344, %1343 : vector<8x8xf32>
    %c1_1125 = arith.constant 1 : index
    %c46_1126 = arith.constant 46 : index
    %1346 = memref.load %arg16[%c1_1125, %c46_1126] : memref<2x49xf32, #tpu.memory_space<smem>>
    %c1_1127 = arith.constant 1 : index
    %c6_1128 = arith.constant 6 : index
    %c4_1129 = arith.constant 4 : index
    %1347 = vector.load %arg24[%c1_1127, %c6_1128, %c4_1129] : memref<2x14x14xf32, #tpu.memory_space<vmem>>, vector<1x8x8xf32>
    %1348 = vector.shape_cast %1347 : vector<1x8x8xf32> to vector<8x8xf32>
    %1349 = vector.broadcast %1346 : f32 to vector<8x8xf32>
    %1350 = arith.mulf %1349, %1348 : vector<8x8xf32>
    %1351 = arith.addf %1345, %1350 : vector<8x8xf32>
    %1352 = arith.addf %1340, %1351 : vector<8x8xf32>
    %c0_1130 = arith.constant 0 : index
    %c47_1131 = arith.constant 47 : index
    %1353 = memref.load %arg16[%c0_1130, %c47_1131] : memref<2x49xf32, #tpu.memory_space<smem>>
    %c0_1132 = arith.constant 0 : index
    %c6_1133 = arith.constant 6 : index
    %c5_1134 = arith.constant 5 : index
    %1354 = vector.load %arg24[%c0_1132, %c6_1133, %c5_1134] : memref<2x14x14xf32, #tpu.memory_space<vmem>>, vector<1x8x8xf32>
    %1355 = vector.shape_cast %1354 : vector<1x8x8xf32> to vector<8x8xf32>
    %1356 = vector.broadcast %1353 : f32 to vector<8x8xf32>
    %1357 = arith.mulf %1356, %1355 : vector<8x8xf32>
    %c1_1135 = arith.constant 1 : index
    %c47_1136 = arith.constant 47 : index
    %1358 = memref.load %arg16[%c1_1135, %c47_1136] : memref<2x49xf32, #tpu.memory_space<smem>>
    %c1_1137 = arith.constant 1 : index
    %c6_1138 = arith.constant 6 : index
    %c5_1139 = arith.constant 5 : index
    %1359 = vector.load %arg24[%c1_1137, %c6_1138, %c5_1139] : memref<2x14x14xf32, #tpu.memory_space<vmem>>, vector<1x8x8xf32>
    %1360 = vector.shape_cast %1359 : vector<1x8x8xf32> to vector<8x8xf32>
    %1361 = vector.broadcast %1358 : f32 to vector<8x8xf32>
    %1362 = arith.mulf %1361, %1360 : vector<8x8xf32>
    %1363 = arith.addf %1357, %1362 : vector<8x8xf32>
    %1364 = arith.addf %1352, %1363 : vector<8x8xf32>
    %c0_1140 = arith.constant 0 : index
    %c48_1141 = arith.constant 48 : index
    %1365 = memref.load %arg16[%c0_1140, %c48_1141] : memref<2x49xf32, #tpu.memory_space<smem>>
    %c0_1142 = arith.constant 0 : index
    %c6_1143 = arith.constant 6 : index
    %c6_1144 = arith.constant 6 : index
    %1366 = vector.load %arg24[%c0_1142, %c6_1143, %c6_1144] : memref<2x14x14xf32, #tpu.memory_space<vmem>>, vector<1x8x8xf32>
    %1367 = vector.shape_cast %1366 : vector<1x8x8xf32> to vector<8x8xf32>
    %1368 = vector.broadcast %1365 : f32 to vector<8x8xf32>
    %1369 = arith.mulf %1368, %1367 : vector<8x8xf32>
    %c1_1145 = arith.constant 1 : index
    %c48_1146 = arith.constant 48 : index
    %1370 = memref.load %arg16[%c1_1145, %c48_1146] : memref<2x49xf32, #tpu.memory_space<smem>>
    %c1_1147 = arith.constant 1 : index
    %c6_1148 = arith.constant 6 : index
    %c6_1149 = arith.constant 6 : index
    %1371 = vector.load %arg24[%c1_1147, %c6_1148, %c6_1149] : memref<2x14x14xf32, #tpu.memory_space<vmem>>, vector<1x8x8xf32>
    %1372 = vector.shape_cast %1371 : vector<1x8x8xf32> to vector<8x8xf32>
    %1373 = vector.broadcast %1370 : f32 to vector<8x8xf32>
    %1374 = arith.mulf %1373, %1372 : vector<8x8xf32>
    %1375 = arith.addf %1369, %1374 : vector<8x8xf32>
    %1376 = arith.addf %1364, %1375 : vector<8x8xf32>
    %1377 = arith.negf %1376 : vector<8x8xf32>
    %1378 = math.exp %1377 : vector<8x8xf32>
    %cst_1150 = arith.constant 1.000000e+00 : f32
    %1379 = vector.broadcast %cst_1150 : f32 to vector<8x8xf32>
    %1380 = arith.addf %1379, %1378 : vector<8x8xf32>
    %1381 = arith.divf %1379, %1380 : vector<8x8xf32>
    %1382 = vector.shape_cast %1381 : vector<8x8xf32> to vector<8x8x1xf32>
    %c0_1151 = arith.constant 0 : index
    %1383 = memref.load %arg18[%c0_1151] : memref<3xf32, #tpu.memory_space<smem>>
    %c1_1152 = arith.constant 1 : index
    %1384 = memref.load %arg18[%c1_1152] : memref<3xf32, #tpu.memory_space<smem>>
    %1385 = vector.broadcast %1384 : f32 to vector<1x1x16xf32>
    %1386 = arith.mulf %1385, %775 : vector<1x1x16xf32>
    %1387 = vector.broadcast %1383 : f32 to vector<1x1x16xf32>
    %1388 = arith.addf %1387, %1386 : vector<1x1x16xf32>
    %c2_1153 = arith.constant 2 : index
    %1389 = memref.load %arg18[%c2_1153] : memref<3xf32, #tpu.memory_space<smem>>
    %1390 = vector.broadcast %1389 : f32 to vector<8x8x1xf32>
    %1391 = arith.mulf %1390, %1382 : vector<8x8x1xf32>
    %1392 = vector.broadcast %1388 : vector<1x1x16xf32> to vector<8x8x16xf32>
    %1393 = vector.broadcast %1391 : vector<8x8x1xf32> to vector<8x8x16xf32>
    %1394 = arith.addf %1392, %1393 : vector<8x8x16xf32>
    %1395 = arith.mulf %749, %1394 : vector<8x8x16xf32>
    %c0_1154 = arith.constant 0 : index
    %c0_1155 = arith.constant 0 : index
    %c0_1156 = arith.constant 0 : index
    %c0_1157 = arith.constant 0 : index
    %1396 = vector.load %arg1[%c0_1154, %c0_1155, %c0_1156, %c0_1157] : memref<1x8x8x8xbf16, #tpu.memory_space<vmem>>, vector<1x8x8x8xbf16>
    %1397 = vector.shape_cast %1396 : vector<1x8x8x8xbf16> to vector<8x8x8xbf16>
    %1398 = vector.shape_cast %1397 : vector<8x8x8xbf16> to vector<64x8xbf16>
    %c0_1158 = arith.constant 0 : index
    %c0_1159 = arith.constant 0 : index
    %1399 = vector.load %arg9[%c0_1158, %c0_1159] : memref<8x16xbf16, #tpu.memory_space<vmem>>, vector<8x16xbf16>
    %cst_1160 = arith.constant dense<0.000000e+00> : vector<64x16xf32>
    %1400 = tpu.matmul %1398, %1399, %cst_1160 {dimension_numbers = #tpu.dot_dimension_numbers<[1], [0], [0], [1], [0, 0, 1, 1], [], []>} : vector<64x8xbf16>, vector<8x16xbf16>, vector<64x16xf32> -> vector<64x16xf32>
    %c0_1161 = arith.constant 0 : index
    %c0_1162 = arith.constant 0 : index
    %1401 = vector.load %arg10[%c0_1161, %c0_1162] : memref<1x16xf32, #tpu.memory_space<vmem>>, vector<1x16xf32>
    %1402 = vector.broadcast %1401 : vector<1x16xf32> to vector<64x16xf32>
    %1403 = arith.addf %1400, %1402 : vector<64x16xf32>
    %1404 = vector.shape_cast %1403 : vector<64x16xf32> to vector<8x8x16xf32>
    %1405 = arith.addf %1395, %1404 : vector<8x8x16xf32>
    %cst_1163 = arith.constant 0.000000e+00 : f32
    %1406 = vector.broadcast %cst_1163 : f32 to vector<8x8x16xf32>
    %1407 = arith.maximumf %1405, %1406 : vector<8x8x16xf32>
    %1408 = vector.shape_cast %1407 : vector<8x8x16xf32> to vector<1x8x8x16xf32>
    %c0_1164 = arith.constant 0 : index
    %c0_1165 = arith.constant 0 : index
    %c0_1166 = arith.constant 0 : index
    %c0_1167 = arith.constant 0 : index
    %1409 = vector.load %arg19[%c0_1164, %c0_1165, %c0_1166, %c0_1167] : memref<1x8x8x16xf32, #tpu.memory_space<vmem>>, vector<1x8x8x16xf32>
    tpu.vector_store %arg19[%c0_1164, %c0_1165, %c0_1166, %c0_1167], %1408 {strides = array<i32>} : memref<1x8x8x16xf32, #tpu.memory_space<vmem>>, vector<1x8x8x16xf32>,
    return
  }
  func.func @transform_0(%arg0: i32) -> (i32, i32, i32, i32) {
    %c0_i32 = arith.constant 0 : i32
    %c0_i32_0 = arith.constant 0 : i32
    %c0_i32_1 = arith.constant 0 : i32
    %c0_i32_2 = arith.constant 0 : i32
    return %arg0, %c0_i32, %c0_i32_0, %c0_i32_1 : i32, i32, i32, i32
  }
  func.func @transform_1(%arg0: i32) -> (i32, i32, i32, i32) {
    %c0_i32 = arith.constant 0 : i32
    %c0_i32_0 = arith.constant 0 : i32
    %c0_i32_1 = arith.constant 0 : i32
    %c0_i32_2 = arith.constant 0 : i32
    return %arg0, %c0_i32, %c0_i32_0, %c0_i32_1 : i32, i32, i32, i32
  }
  func.func @transform_2(%arg0: i32) -> (i32, i32, i32, i32) {
    %c0_i32 = arith.constant 0 : i32
    %c0_i32_0 = arith.constant 0 : i32
    %c0_i32_1 = arith.constant 0 : i32
    %c0_i32_2 = arith.constant 0 : i32
    return %arg0, %c0_i32, %c0_i32_0, %c0_i32_1 : i32, i32, i32, i32
  }
  func.func @transform_3(%arg0: i32) -> (i32, i32, i32, i32) {
    %c0_i32 = arith.constant 0 : i32
    %c0_i32_0 = arith.constant 0 : i32
    %c0_i32_1 = arith.constant 0 : i32
    %c0_i32_2 = arith.constant 0 : i32
    return %arg0, %c0_i32, %c0_i32_0, %c0_i32_1 : i32, i32, i32, i32
  }
  func.func @transform_4(%arg0: i32) -> (i32, i32) {
    %c0_i32 = arith.constant 0 : i32
    %c0_i32_0 = arith.constant 0 : i32
    %c0_i32_1 = arith.constant 0 : i32
    return %c0_i32, %c0_i32_0 : i32, i32
  }
  func.func @transform_5(%arg0: i32) -> (i32, i32) {
    %c0_i32 = arith.constant 0 : i32
    %c0_i32_0 = arith.constant 0 : i32
    %c0_i32_1 = arith.constant 0 : i32
    return %c0_i32, %c0_i32_0 : i32, i32
  }
  func.func @transform_6(%arg0: i32) -> (i32, i32) {
    %c0_i32 = arith.constant 0 : i32
    %c0_i32_0 = arith.constant 0 : i32
    %c0_i32_1 = arith.constant 0 : i32
    return %c0_i32, %c0_i32_0 : i32, i32
  }
  func.func @transform_7(%arg0: i32) -> (i32, i32) {
    %c0_i32 = arith.constant 0 : i32
    %c0_i32_0 = arith.constant 0 : i32
    %c0_i32_1 = arith.constant 0 : i32
    return %c0_i32, %c0_i32_0 : i32, i32
  }
  func.func @transform_8(%arg0: i32) -> (i32, i32) {
    %c0_i32 = arith.constant 0 : i32
    %c0_i32_0 = arith.constant 0 : i32
    %c0_i32_1 = arith.constant 0 : i32
    return %c0_i32, %c0_i32_0 : i32, i32
  }
  func.func @transform_9(%arg0: i32) -> (i32, i32) {
    %c0_i32 = arith.constant 0 : i32
    %c0_i32_0 = arith.constant 0 : i32
    %c0_i32_1 = arith.constant 0 : i32
    return %c0_i32, %c0_i32_0 : i32, i32
  }
  func.func @transform_10(%arg0: i32) -> (i32, i32) {
    %c0_i32 = arith.constant 0 : i32
    %c0_i32_0 = arith.constant 0 : i32
    %c0_i32_1 = arith.constant 0 : i32
    return %c0_i32, %c0_i32_0 : i32, i32
  }
  func.func @transform_11(%arg0: i32) -> (i32, i32) {
    %c0_i32 = arith.constant 0 : i32
    %c0_i32_0 = arith.constant 0 : i32
    %c0_i32_1 = arith.constant 0 : i32
    return %c0_i32, %c0_i32_0 : i32, i32
  }
  func.func @transform_12(%arg0: i32) -> (i32, i32) {
    %c0_i32 = arith.constant 0 : i32
    %c0_i32_0 = arith.constant 0 : i32
    %c0_i32_1 = arith.constant 0 : i32
    return %c0_i32, %c0_i32_0 : i32, i32
  }
  func.func @transform_13(%arg0: i32) -> (i32, i32) {
    %c0_i32 = arith.constant 0 : i32
    %c0_i32_0 = arith.constant 0 : i32
    %c0_i32_1 = arith.constant 0 : i32
    return %c0_i32, %c0_i32_0 : i32, i32
  }
  func.func @transform_14(%arg0: i32) -> (i32, i32) {
    %c0_i32 = arith.constant 0 : i32
    %c0_i32_0 = arith.constant 0 : i32
    %c0_i32_1 = arith.constant 0 : i32
    return %c0_i32, %c0_i32_0 : i32, i32
  }
  func.func @transform_15(%arg0: i32) -> (i32, i32) {
    %c0_i32 = arith.constant 0 : i32
    %c0_i32_0 = arith.constant 0 : i32
    %c0_i32_1 = arith.constant 0 : i32
    return %c0_i32, %c0_i32_0 : i32, i32
  }
  func.func @transform_16(%arg0: i32) -> i32 {
    %c0_i32 = arith.constant 0 : i32
    %c0_i32_0 = arith.constant 0 : i32
    return %c0_i32 : i32
  }
  func.func @transform_17(%arg0: i32) -> i32 {
    %c0_i32 = arith.constant 0 : i32
    %c0_i32_0 = arith.constant 0 : i32
    return %c0_i32 : i32
  }
  func.func @transform_18(%arg0: i32) -> (i32, i32, i32, i32) {
    %c0_i32 = arith.constant 0 : i32
    %c0_i32_0 = arith.constant 0 : i32
    %c0_i32_1 = arith.constant 0 : i32
    %c0_i32_2 = arith.constant 0 : i32
    return %arg0, %c0_i32, %c0_i32_0, %c0_i32_1 : i32, i32, i32, i32
  }
}

</mosaic_0001>

<llo_original>
// kernel: basic_block_forward.1
$region0: #{basic_block_forward.1}
  #allocation0 [shape = 'u32[]', space=smem, size = 0x4, offset = 0x4, fixed_abs, tag = 'smem constant byte address 0x4 - core index']
  #allocation1 [shape = 'u32[144,128]{1,0:T(1,128)}', space=vmem, size = 0x12000, scoped, tag = 'internal scratch']
  #allocation2 [shape = 'bf16[4,9,9,8]{3,2,1,0:T(8,128)(2,1)}', space=vmem, size = 0x24000, scoped, tag = 'scratch operand']
  #allocation3 [shape = 'bf16[64,72]{1,0:T(16,128)(2,1)}', space=vmem, size = 0x4000, scoped, tag = 'scratch operand']
  #allocation4 [shape = 'bf16[10,10,16]{2,1,0:T(8,128)(2,1)}', space=vmem, size = 0xa000, scoped, tag = 'scratch operand']
  #allocation5 [shape = 'bf16[64,144]{1,0:T(16,128)(2,1)}', space=vmem, size = 0x8000, scoped, tag = 'scratch operand']
  #allocation6 [shape = 'f32[2,14,14]{2,1,0:T(8,128)}', space=vmem, size = 0x4000, scoped, tag = 'scratch operand']
  %s0 = inlined_call_operand.vmem [shape: bf16[2,8,8,8], index: 0, kind: input, shape index: {}]
  %s1 = inlined_call_operand.vmem [shape: bf16[2,8,8,8], index: 1, kind: input, shape index: {}]
  %s2 = inlined_call_operand.vmem [shape: bf16[2,8,8,8], index: 2, kind: input, shape index: {}]
  %s3 = inlined_call_operand.vmem [shape: bf16[2,8,8,8], index: 3, kind: input, shape index: {}]
  %s4 = inlined_call_operand.vmem [shape: bf16[72,16], index: 4, kind: input, shape index: {}]
  %s5 = inlined_call_operand.vmem [shape: f32[1,16], index: 5, kind: input, shape index: {}]
  %s6 = inlined_call_operand.vmem [shape: bf16[144,16], index: 6, kind: input, shape index: {}]
  %s7 = inlined_call_operand.vmem [shape: f32[1,16], index: 7, kind: input, shape index: {}]
  %s8 = inlined_call_operand.vmem [shape: bf16[8,16], index: 8, kind: input, shape index: {}]
  %s9 = inlined_call_operand.vmem [shape: f32[1,16], index: 9, kind: input, shape index: {}]
  %s10 = inlined_call_operand.vmem [shape: f32[16,4], index: 10, kind: input, shape index: {}]
  %s11 = inlined_call_operand.vmem [shape: f32[4,16], index: 11, kind: input, shape index: {}]
  %s12 = inlined_call_operand.vmem [shape: f32[16,4], index: 12, kind: input, shape index: {}]
  %s13 = inlined_call_operand.vmem [shape: f32[4,16], index: 13, kind: input, shape index: {}]
  %s14 = inlined_call_operand.vmem [shape: f32[2,49], index: 14, kind: input, shape index: {}]
  %s15 = inlined_call_operand.vmem [shape: f32[2,49], index: 15, kind: input, shape index: {}]
  %s16 = inlined_call_operand.vmem [shape: f32[3], index: 16, kind: input, shape index: {}]
  %s17 = inlined_call_operand.vmem [shape: f32[3], index: 17, kind: input, shape index: {}]
  %s18 = inlined_call_operand.hbm [shape: f32[2,8,8,16], index: 18, kind: output, shape index: {}]
  %s19 = sld [smem:[#allocation0]]
  $region121: #{basic_block_forward.1} parent=0
    _
  %s21 = ssub.s32 1, %s19
  %s22 = scalar_select 0, %s21, %s19
  $region1: #{basic_block_forward.1} parent=0
    #allocation7 [shape = 'u8[1024]{0}', space=smem, size = 0x400, scoped, tag = 'input window, operand 14, single buffered']
    #allocation8 [shape = 's32[2]{0}', space=sflag, size = 0x8, scoped, tag = 'scoped memory for basic_block_forward.1']
    #allocation9 [shape = 's32[2]{0}', space=sflag, size = 0x8, scoped, tag = 'scoped memory for basic_block_forward.1']
    #allocation10 [shape = 'u8[1024]{0}', space=smem, size = 0x400, scoped, tag = 'input window, operand 15, single buffered']
    #allocation11 [shape = 's32[1]{0}', space=sflag, size = 0x4, scoped, tag = 'scoped memory for basic_block_forward.1']
    #allocation12 [shape = 'u8[512]{0}', space=smem, size = 0x200, scoped, tag = 'input window, operand 16, single buffered']
    #allocation13 [shape = 'u8[512]{0}', space=smem, size = 0x200, scoped, tag = 'input window, operand 17, single buffered']
    #allocation14 [shape = 's32[1]{0}', space=sflag, size = 0x4, scoped, tag = 'scoped memory for basic_block_forward.1']
    #allocation15 [shape = 'u8[65536]{0}', space=vmem, size = 0x10000, scoped, tag = 'output window, operand 0']
    %23 = vsyncpa [#allocation9], 0
    %24 = vsyncpa [#allocation11], 0
    %25 = vsyncpa [#allocation14], 0
    %26 = vsyncpa [#allocation8], 0
    %s27 = scalar_lea.sflag [#allocation8], 1
    %28 = vsyncpa %s27, 0
    loop: start=0, step=1, limit=4
    $region2: #{basic_block_forward.1} parent=1 // loop_pre_header
      _
    $region3: #{basic_block_forward.1} parent=1 // loop_header
      %s30 = sphi 0, %s34
      %p31 = scmp.ge.s32.totalorder %s30, 4
      %s40 = sphi 0, %s42
      %s43 = sphi 0, %s40
      %s44 = sphi 0, %s43
      %s60 = sphi 0, %s44
      %s66 = sphi 0, %s68
      %s69 = sphi 0, %s66
      %s70 = sphi 0, %s69
      %s86 = sphi 0, %s70
      %s92 = sphi 0, %s94
      %s95 = sphi 0, %s92
      %s96 = sphi 0, %s95
      %s112 = sphi 0, %s96
      %s118 = sphi 0, %s120
      %s121 = sphi 0, %s118
      %s122 = sphi 0, %s121
      %s138 = sphi 0, %s122
      %s142 = sphi 0, %s142
      %s144 = sphi 0, %s142
      %s145 = sphi 0, %s144
      %s159 = sphi 0, %s145
      %s163 = sphi 0, %s163
      %s165 = sphi 0, %s163
      %s166 = sphi 0, %s165
      %s180 = sphi 0, %s166
      %s184 = sphi 0, %s184
      %s186 = sphi 0, %s184
      %s187 = sphi 0, %s186
      %s201 = sphi 0, %s187
      %s205 = sphi 0, %s205
      %s207 = sphi 0, %s205
      %s208 = sphi 0, %s207
      %s222 = sphi 0, %s208
      %s226 = sphi 0, %s226
      %s228 = sphi 0, %s226
      %s229 = sphi 0, %s228
      %s243 = sphi 0, %s229
      %s247 = sphi 0, %s247
      %s249 = sphi 0, %s247
      %s250 = sphi 0, %s249
      %s264 = sphi 0, %s250
      %s268 = sphi 0, %s268
      %s270 = sphi 0, %s268
      %s271 = sphi 0, %s270
      %s285 = sphi 0, %s271
      %s289 = sphi 0, %s289
      %s291 = sphi 0, %s289
      %s292 = sphi 0, %s291
      %s306 = sphi 0, %s292
      %s310 = sphi 0, %s310
      %s312 = sphi 0, %s310
      %s313 = sphi 0, %s312
      %s327 = sphi 0, %s313
      %s331 = sphi 0, %s331
      %s333 = sphi 0, %s331
      %s334 = sphi 0, %s333
      %s348 = sphi 0, %s334
      %s352 = sphi 0, %s352
      %s354 = sphi 0, %s352
      %s355 = sphi 0, %s354
      %s369 = sphi 0, %s355
      %s373 = sphi 0, %s373
      %s375 = sphi 0, %s373
      %s376 = sphi 0, %s375
      %s390 = sphi 0, %s376
      %s394 = sphi 0, %s394
      %s396 = sphi 0, %s394
      %s397 = sphi 0, %s396
      %s411 = sphi 0, %s397
      %s415 = sphi 0, %s415
      %s417 = sphi 0, %s415
      %s418 = sphi 0, %s417
      %s432 = sphi 0, %s418
      %s438 = sphi 0, %s440
      %s441 = sphi 0, %s438
      %s442 = sphi 0, %s441
      %s458 = sphi 0, %s442
    $region4: #{basic_block_forward.1} parent=1 // loop_header_branch
      %33 = sbr.rel (%p31) target = $region8
    $region5: #{basic_block_forward.1} parent=1 // loop_body
      %s35 = ssub.s32 %s30, 1
      %s36 = ssub.s32 %s30, 2
      %s37 = sadd.s32 %s30, 1
      %s38 = ssub.s32 %s30, %s37
      %p39 = scmp.eq.s32.totalorder %s38, 0
      %s41 = sadd.s32 %s40, 1
      %s42 = scalar_select %p39, %s40, %s41
      %p45 = pneg %p39
      %p46 = scmp.eq.s32.totalorder %s30, 1
      %p47 = por %p45, %p46
      %p48 = scmp.ne.s32.totalorder %s40, %s43
      %p49 = scmp.eq.s32.totalorder %s30, 0
      %p50 = por %p48, %p49
      %p51 = scmp.ne.s32.totalorder %s40, %s43
      %p52 = scmp.eq.s32.totalorder %s35, 1
      %p53 = por %p51, %p52
      %p54 = scmp.ne.s32.totalorder %s43, %s44
      %p55 = scmp.eq.s32.totalorder %s35, 0
      %p56 = por %p54, %p55
      %p57 = scmp.ne.s32.totalorder %s43, %s44
      %p58 = scmp.eq.s32.totalorder %s36, 1
      %p59 = por %p57, %p58
      %p61 = scmp.ne.s32.totalorder %s44, %s60
      %p62 = scmp.eq.s32.totalorder %s36, 0
      %p63 = por %p61, %p62
      %s64 = ssub.s32 %s30, %s37
      %p65 = scmp.eq.s32.totalorder %s64, 0
      %s67 = sadd.s32 %s66, 1
      %s68 = scalar_select %p65, %s66, %s67
      %p71 = pneg %p65
      %p72 = scmp.eq.s32.totalorder %s30, 1
      %p73 = por %p71, %p72
      %p74 = scmp.ne.s32.totalorder %s66, %s69
      %p75 = scmp.eq.s32.totalorder %s30, 0
      %p76 = por %p74, %p75
      %p77 = scmp.ne.s32.totalorder %s66, %s69
      %p78 = scmp.eq.s32.totalorder %s35, 1
      %p79 = por %p77, %p78
      %p80 = scmp.ne.s32.totalorder %s69, %s70
      %p81 = scmp.eq.s32.totalorder %s35, 0
      %p82 = por %p80, %p81
      %p83 = scmp.ne.s32.totalorder %s69, %s70
      %p84 = scmp.eq.s32.totalorder %s36, 1
      %p85 = por %p83, %p84
      %p87 = scmp.ne.s32.totalorder %s70, %s86
      %p88 = scmp.eq.s32.totalorder %s36, 0
      %p89 = por %p87, %p88
      %s90 = ssub.s32 %s30, %s37
      %p91 = scmp.eq.s32.totalorder %s90, 0
      %s93 = sadd.s32 %s92, 1
      %s94 = scalar_select %p91, %s92, %s93
      %p97 = pneg %p91
      %p98 = scmp.eq.s32.totalorder %s30, 1
      %p99 = por %p97, %p98
      %p100 = scmp.ne.s32.totalorder %s92, %s95
      %p101 = scmp.eq.s32.totalorder %s30, 0
      %p102 = por %p100, %p101
      %p103 = scmp.ne.s32.totalorder %s92, %s95
      %p104 = scmp.eq.s32.totalorder %s35, 1
      %p105 = por %p103, %p104
      %p106 = scmp.ne.s32.totalorder %s95, %s96
      %p107 = scmp.eq.s32.totalorder %s35, 0
      %p108 = por %p106, %p107
      %p109 = scmp.ne.s32.totalorder %s95, %s96
      %p110 = scmp.eq.s32.totalorder %s36, 1
      %p111 = por %p109, %p110
      %p113 = scmp.ne.s32.totalorder %s96, %s112
      %p114 = scmp.eq.s32.totalorder %s36, 0
      %p115 = por %p113, %p114
      %s116 = ssub.s32 %s30, %s37
      %p117 = scmp.eq.s32.totalorder %s116, 0
      %s119 = sadd.s32 %s118, 1
      %s120 = scalar_select %p117, %s118, %s119
      %p123 = pneg %p117
      %p124 = scmp.eq.s32.totalorder %s30, 1
      %p125 = por %p123, %p124
      %p126 = scmp.ne.s32.totalorder %s118, %s121
      %p127 = scmp.eq.s32.totalorder %s30, 0
      %p128 = por %p126, %p127
      %p129 = scmp.ne.s32.totalorder %s118, %s121
      %p130 = scmp.eq.s32.totalorder %s35, 1
      %p131 = por %p129, %p130
      %p132 = scmp.ne.s32.totalorder %s121, %s122
      %p133 = scmp.eq.s32.totalorder %s35, 0
      %p134 = por %p132, %p133
      %p135 = scmp.ne.s32.totalorder %s121, %s122
      %p136 = scmp.eq.s32.totalorder %s36, 1
      %p137 = por %p135, %p136
      %p139 = scmp.ne.s32.totalorder %s122, %s138
      %p140 = scmp.eq.s32.totalorder %s36, 0
      %p141 = por %p139, %p140
      %s143 = sadd.s32 %s142, 1
      %p146 = scmp.eq.s32.totalorder %s30, 1
      %p147 = scmp.ne.s32.totalorder %s142, %s144
      %p148 = scmp.eq.s32.totalorder %s30, 0
      %p149 = por %p147, %p148
      %p150 = scmp.ne.s32.totalorder %s142, %s144
      %p151 = scmp.eq.s32.totalorder %s35, 1
      %p152 = por %p150, %p151
      %p153 = scmp.ne.s32.totalorder %s144, %s145
      %p154 = scmp.eq.s32.totalorder %s35, 0
      %p155 = por %p153, %p154
      %p156 = scmp.ne.s32.totalorder %s144, %s145
      %p157 = scmp.eq.s32.totalorder %s36, 1
      %p158 = por %p156, %p157
      %p160 = scmp.ne.s32.totalorder %s145, %s159
      %p161 = scmp.eq.s32.totalorder %s36, 0
      %p162 = por %p160, %p161
      %s164 = sadd.s32 %s163, 1
      %p167 = scmp.eq.s32.totalorder %s30, 1
      %p168 = scmp.ne.s32.totalorder %s163, %s165
      %p169 = scmp.eq.s32.totalorder %s30, 0
      %p170 = por %p168, %p169
      %p171 = scmp.ne.s32.totalorder %s163, %s165
      %p172 = scmp.eq.s32.totalorder %s35, 1
      %p173 = por %p171, %p172
      %p174 = scmp.ne.s32.totalorder %s165, %s166
      %p175 = scmp.eq.s32.totalorder %s35, 0
      %p176 = por %p174, %p175
      %p177 = scmp.ne.s32.totalorder %s165, %s166
      %p178 = scmp.eq.s32.totalorder %s36, 1
      %p179 = por %p177, %p178
      %p181 = scmp.ne.s32.totalorder %s166, %s180
      %p182 = scmp.eq.s32.totalorder %s36, 0
      %p183 = por %p181, %p182
      %s185 = sadd.s32 %s184, 1
      %p188 = scmp.eq.s32.totalorder %s30, 1
      %p189 = scmp.ne.s32.totalorder %s184, %s186
      %p190 = scmp.eq.s32.totalorder %s30, 0
      %p191 = por %p189, %p190
      %p192 = scmp.ne.s32.totalorder %s184, %s186
      %p193 = scmp.eq.s32.totalorder %s35, 1
      %p194 = por %p192, %p193
      %p195 = scmp.ne.s32.totalorder %s186, %s187
      %p196 = scmp.eq.s32.totalorder %s35, 0
      %p197 = por %p195, %p196
      %p198 = scmp.ne.s32.totalorder %s186, %s187
      %p199 = scmp.eq.s32.totalorder %s36, 1
      %p200 = por %p198, %p199
      %p202 = scmp.ne.s32.totalorder %s187, %s201
      %p203 = scmp.eq.s32.totalorder %s36, 0
      %p204 = por %p202, %p203
      %s206 = sadd.s32 %s205, 1
      %p209 = scmp.eq.s32.totalorder %s30, 1
      %p210 = scmp.ne.s32.totalorder %s205, %s207
      %p211 = scmp.eq.s32.totalorder %s30, 0
      %p212 = por %p210, %p211
      %p213 = scmp.ne.s32.totalorder %s205, %s207
      %p214 = scmp.eq.s32.totalorder %s35, 1
      %p215 = por %p213, %p214
      %p216 = scmp.ne.s32.totalorder %s207, %s208
      %p217 = scmp.eq.s32.totalorder %s35, 0
      %p218 = por %p216, %p217
      %p219 = scmp.ne.s32.totalorder %s207, %s208
      %p220 = scmp.eq.s32.totalorder %s36, 1
      %p221 = por %p219, %p220
      %p223 = scmp.ne.s32.totalorder %s208, %s222
      %p224 = scmp.eq.s32.totalorder %s36, 0
      %p225 = por %p223, %p224
      %s227 = sadd.s32 %s226, 1
      %p230 = scmp.eq.s32.totalorder %s30, 1
      %p231 = scmp.ne.s32.totalorder %s226, %s228
      %p232 = scmp.eq.s32.totalorder %s30, 0
      %p233 = por %p231, %p232
      %p234 = scmp.ne.s32.totalorder %s226, %s228
      %p235 = scmp.eq.s32.totalorder %s35, 1
      %p236 = por %p234, %p235
      %p237 = scmp.ne.s32.totalorder %s228, %s229
      %p238 = scmp.eq.s32.totalorder %s35, 0
      %p239 = por %p237, %p238
      %p240 = scmp.ne.s32.totalorder %s228, %s229
      %p241 = scmp.eq.s32.totalorder %s36, 1
      %p242 = por %p240, %p241
      %p244 = scmp.ne.s32.totalorder %s229, %s243
      %p245 = scmp.eq.s32.totalorder %s36, 0
      %p246 = por %p244, %p245
      %s248 = sadd.s32 %s247, 1
      %p251 = scmp.eq.s32.totalorder %s30, 1
      %p252 = scmp.ne.s32.totalorder %s247, %s249
      %p253 = scmp.eq.s32.totalorder %s30, 0
      %p254 = por %p252, %p253
      %p255 = scmp.ne.s32.totalorder %s247, %s249
      %p256 = scmp.eq.s32.totalorder %s35, 1
      %p257 = por %p255, %p256
      %p258 = scmp.ne.s32.totalorder %s249, %s250
      %p259 = scmp.eq.s32.totalorder %s35, 0
      %p260 = por %p258, %p259
      %p261 = scmp.ne.s32.totalorder %s249, %s250
      %p262 = scmp.eq.s32.totalorder %s36, 1
      %p263 = por %p261, %p262
      %p265 = scmp.ne.s32.totalorder %s250, %s264
      %p266 = scmp.eq.s32.totalorder %s36, 0
      %p267 = por %p265, %p266
      %s269 = sadd.s32 %s268, 1
      %p272 = scmp.eq.s32.totalorder %s30, 1
      %p273 = scmp.ne.s32.totalorder %s268, %s270
      %p274 = scmp.eq.s32.totalorder %s30, 0
      %p275 = por %p273, %p274
      %p276 = scmp.ne.s32.totalorder %s268, %s270
      %p277 = scmp.eq.s32.totalorder %s35, 1
      %p278 = por %p276, %p277
      %p279 = scmp.ne.s32.totalorder %s270, %s271
      %p280 = scmp.eq.s32.totalorder %s35, 0
      %p281 = por %p279, %p280
      %p282 = scmp.ne.s32.totalorder %s270, %s271
      %p283 = scmp.eq.s32.totalorder %s36, 1
      %p284 = por %p282, %p283
      %p286 = scmp.ne.s32.totalorder %s271, %s285
      %p287 = scmp.eq.s32.totalorder %s36, 0
      %p288 = por %p286, %p287
      %s290 = sadd.s32 %s289, 1
      %p293 = scmp.eq.s32.totalorder %s30, 1
      %p294 = scmp.ne.s32.totalorder %s289, %s291
      %p295 = scmp.eq.s32.totalorder %s30, 0
      %p296 = por %p294, %p295
      %p297 = scmp.ne.s32.totalorder %s289, %s291
      %p298 = scmp.eq.s32.totalorder %s35, 1
      %p299 = por %p297, %p298
      %p300 = scmp.ne.s32.totalorder %s291, %s292
      %p301 = scmp.eq.s32.totalorder %s35, 0
      %p302 = por %p300, %p301
      %p303 = scmp.ne.s32.totalorder %s291, %s292
      %p304 = scmp.eq.s32.totalorder %s36, 1
      %p305 = por %p303, %p304
      %p307 = scmp.ne.s32.totalorder %s292, %s306
      %p308 = scmp.eq.s32.totalorder %s36, 0
      %p309 = por %p307, %p308
      %s311 = sadd.s32 %s310, 1
      %p314 = scmp.eq.s32.totalorder %s30, 1
      %p315 = scmp.ne.s32.totalorder %s310, %s312
      %p316 = scmp.eq.s32.totalorder %s30, 0
      %p317 = por %p315, %p316
      %p318 = scmp.ne.s32.totalorder %s310, %s312
      %p319 = scmp.eq.s32.totalorder %s35, 1
      %p320 = por %p318, %p319
      %p321 = scmp.ne.s32.totalorder %s312, %s313
      %p322 = scmp.eq.s32.totalorder %s35, 0
      %p323 = por %p321, %p322
      %p324 = scmp.ne.s32.totalorder %s312, %s313
      %p325 = scmp.eq.s32.totalorder %s36, 1
      %p326 = por %p324, %p325
      %p328 = scmp.ne.s32.totalorder %s313, %s327
      %p329 = scmp.eq.s32.totalorder %s36, 0
      %p330 = por %p328, %p329
      %s332 = sadd.s32 %s331, 1
      %p335 = scmp.eq.s32.totalorder %s30, 1
      %p336 = scmp.ne.s32.totalorder %s331, %s333
      %p337 = scmp.eq.s32.totalorder %s30, 0
      %p338 = por %p336, %p337
      %p339 = scmp.ne.s32.totalorder %s331, %s333
      %p340 = scmp.eq.s32.totalorder %s35, 1
      %p341 = por %p339, %p340
      %p342 = scmp.ne.s32.totalorder %s333, %s334
      %p343 = scmp.eq.s32.totalorder %s35, 0
      %p344 = por %p342, %p343
      %p345 = scmp.ne.s32.totalorder %s333, %s334
      %p346 = scmp.eq.s32.totalorder %s36, 1
      %p347 = por %p345, %p346
      %p349 = scmp.ne.s32.totalorder %s334, %s348
      %p350 = scmp.eq.s32.totalorder %s36, 0
      %p351 = por %p349, %p350
      %s353 = sadd.s32 %s352, 1
      %p356 = scmp.eq.s32.totalorder %s30, 1
      %p357 = scmp.ne.s32.totalorder %s352, %s354
      %p358 = scmp.eq.s32.totalorder %s30, 0
      %p359 = por %p357, %p358
      %p360 = scmp.ne.s32.totalorder %s352, %s354
      %p361 = scmp.eq.s32.totalorder %s35, 1
      %p362 = por %p360, %p361
      %p363 = scmp.ne.s32.totalorder %s354, %s355
      %p364 = scmp.eq.s32.totalorder %s35, 0
      %p365 = por %p363, %p364
      %p366 = scmp.ne.s32.totalorder %s354, %s355
      %p367 = scmp.eq.s32.totalorder %s36, 1
      %p368 = por %p366, %p367
      %p370 = scmp.ne.s32.totalorder %s355, %s369
      %p371 = scmp.eq.s32.totalorder %s36, 0
      %p372 = por %p370, %p371
      %s374 = sadd.s32 %s373, 1
      %p377 = scmp.eq.s32.totalorder %s30, 1
      %p378 = scmp.ne.s32.totalorder %s373, %s375
      %p379 = scmp.eq.s32.totalorder %s30, 0
      %p380 = por %p378, %p379
      %p381 = scmp.ne.s32.totalorder %s373, %s375
      %p382 = scmp.eq.s32.totalorder %s35, 1
      %p383 = por %p381, %p382
      %p384 = scmp.ne.s32.totalorder %s375, %s376
      %p385 = scmp.eq.s32.totalorder %s35, 0
      %p386 = por %p384, %p385
      %p387 = scmp.ne.s32.totalorder %s375, %s376
      %p388 = scmp.eq.s32.totalorder %s36, 1
      %p389 = por %p387, %p388
      %p391 = scmp.ne.s32.totalorder %s376, %s390
      %p392 = scmp.eq.s32.totalorder %s36, 0
      %p393 = por %p391, %p392
      %s395 = sadd.s32 %s394, 1
      %p398 = scmp.eq.s32.totalorder %s30, 1
      %p399 = scmp.ne.s32.totalorder %s394, %s396
      %p400 = scmp.eq.s32.totalorder %s30, 0
      %p401 = por %p399, %p400
      %p402 = scmp.ne.s32.totalorder %s394, %s396
      %p403 = scmp.eq.s32.totalorder %s35, 1
      %p404 = por %p402, %p403
      %p405 = scmp.ne.s32.totalorder %s396, %s397
      %p406 = scmp.eq.s32.totalorder %s35, 0
      %p407 = por %p405, %p406
      %p408 = scmp.ne.s32.totalorder %s396, %s397
      %p409 = scmp.eq.s32.totalorder %s36, 1
      %p410 = por %p408, %p409
      %p412 = scmp.ne.s32.totalorder %s397, %s411
      %p413 = scmp.eq.s32.totalorder %s36, 0
      %p414 = por %p412, %p413
      %s416 = sadd.s32 %s415, 1
      %p419 = scmp.eq.s32.totalorder %s30, 1
      %p420 = scmp.ne.s32.totalorder %s415, %s417
      %p421 = scmp.eq.s32.totalorder %s30, 0
      %p422 = por %p420, %p421
      %p423 = scmp.ne.s32.totalorder %s415, %s417
      %p424 = scmp.eq.s32.totalorder %s35, 1
      %p425 = por %p423, %p424
      %p426 = scmp.ne.s32.totalorder %s417, %s418
      %p427 = scmp.eq.s32.totalorder %s35, 0
      %p428 = por %p426, %p427
      %p429 = scmp.ne.s32.totalorder %s417, %s418
      %p430 = scmp.eq.s32.totalorder %s36, 1
      %p431 = por %p429, %p430
      %p433 = scmp.ne.s32.totalorder %s418, %s432
      %p434 = scmp.eq.s32.totalorder %s36, 0
      %p435 = por %p433, %p434
      %s436 = ssub.s32 %s30, %s37
      %p437 = scmp.eq.s32.totalorder %s436, 0
      %s439 = sadd.s32 %s438, 1
      %s440 = scalar_select %p437, %s438, %s439
      %p443 = pneg %p437
      %p444 = scmp.eq.s32.totalorder %s30, 1
      %p445 = por %p443, %p444
      %p446 = scmp.ne.s32.totalorder %s438, %s441
      %p447 = scmp.eq.s32.totalorder %s30, 0
      %p448 = por %p446, %p447
      %p449 = scmp.ne.s32.totalorder %s438, %s441
      %p450 = scmp.eq.s32.totalorder %s35, 1
      %p451 = por %p449, %p450
      %p452 = scmp.ne.s32.totalorder %s441, %s442
      %p453 = scmp.eq.s32.totalorder %s35, 0
      %p454 = por %p452, %p453
      %p455 = scmp.ne.s32.totalorder %s441, %s442
      %p456 = scmp.eq.s32.totalorder %s36, 1
      %p457 = por %p455, %p456
      %p459 = scmp.ne.s32.totalorder %s442, %s458
      %p460 = scmp.eq.s32.totalorder %s36, 0
      %p461 = por %p459, %p460
      %p462 = scmp.le.s32.totalorder 1, %s30
      %p463 = scmp.lt.s32.totalorder %s30, 3
      %p464 = pnand %p462, %p463
      %p465 = pneg %p464
      // Predicated region
      $region9: #{basic_block_forward.1} parent=5 // pred_check
        _
      $region10: #{basic_block_forward.1} parent=5 // pred_check_branch
        %467 = sbr.rel (%p464) target = $region12
      $region11: #{basic_block_forward.1} parent=5 // pred_region
        %s468 = ssub.s32 %s30, 1
        // Predicated region
        $region13: #{basic_block_forward.1} parent=11 // pred_check
          %p469 = pneg %p155
        $region14: #{basic_block_forward.1} parent=11 // pred_check_branch
          %471 = sbr.rel (%p469) target = $region16
        $region15: #{basic_block_forward.1} parent=11 // pred_region
          _
        $region16: #{basic_block_forward.1} parent=11 // pred_fallthru
          _
        // Predicated region
        $region17: #{basic_block_forward.1} parent=11 // pred_check
          %p472 = pneg %p176
        $region18: #{basic_block_forward.1} parent=11 // pred_check_branch
          %474 = sbr.rel (%p472) target = $region20
        $region19: #{basic_block_forward.1} parent=11 // pred_region
          _
        $region20: #{basic_block_forward.1} parent=11 // pred_fallthru
          _
        // Predicated region
        $region21: #{basic_block_forward.1} parent=11 // pred_check
          %p475 = pneg %p197
        $region22: #{basic_block_forward.1} parent=11 // pred_check_branch
          %477 = sbr.rel (%p475) target = $region24
        $region23: #{basic_block_forward.1} parent=11 // pred_region
          _
        $region24: #{basic_block_forward.1} parent=11 // pred_fallthru
          _
        // Predicated region
        $region25: #{basic_block_forward.1} parent=11 // pred_check
          %p478 = pneg %p218
        $region26: #{basic_block_forward.1} parent=11 // pred_check_branch
          %480 = sbr.rel (%p478) target = $region28
        $region27: #{basic_block_forward.1} parent=11 // pred_region
          _
        $region28: #{basic_block_forward.1} parent=11 // pred_fallthru
          _
        // Predicated region
        $region29: #{basic_block_forward.1} parent=11 // pred_check
          %p481 = pneg %p239
        $region30: #{basic_block_forward.1} parent=11 // pred_check_branch
          %483 = sbr.rel (%p481) target = $region32
        $region31: #{basic_block_forward.1} parent=11 // pred_region
          _
        $region32: #{basic_block_forward.1} parent=11 // pred_fallthru
          _
        // Predicated region
        $region33: #{basic_block_forward.1} parent=11 // pred_check
          %p484 = pneg %p260
        $region34: #{basic_block_forward.1} parent=11 // pred_check_branch
          %486 = sbr.rel (%p484) target = $region36
        $region35: #{basic_block_forward.1} parent=11 // pred_region
          _
        $region36: #{basic_block_forward.1} parent=11 // pred_fallthru
          _
        // Predicated region
        $region37: #{basic_block_forward.1} parent=11 // pred_check
          %p487 = pneg %p281
        $region38: #{basic_block_forward.1} parent=11 // pred_check_branch
          %489 = sbr.rel (%p487) target = $region40
        $region39: #{basic_block_forward.1} parent=11 // pred_region
          _
        $region40: #{basic_block_forward.1} parent=11 // pred_fallthru
          _
        // Predicated region
        $region41: #{basic_block_forward.1} parent=11 // pred_check
          %p490 = pneg %p302
        $region42: #{basic_block_forward.1} parent=11 // pred_check_branch
          %492 = sbr.rel (%p490) target = $region44
        $region43: #{basic_block_forward.1} parent=11 // pred_region
          _
        $region44: #{basic_block_forward.1} parent=11 // pred_fallthru
          _
        // Predicated region
        $region45: #{basic_block_forward.1} parent=11 // pred_check
          %p493 = pneg %p323
        $region46: #{basic_block_forward.1} parent=11 // pred_check_branch
          %495 = sbr.rel (%p493) target = $region48
        $region47: #{basic_block_forward.1} parent=11 // pred_region
          _
        $region48: #{basic_block_forward.1} parent=11 // pred_fallthru
          _
        // Predicated region
        $region49: #{basic_block_forward.1} parent=11 // pred_check
          %p496 = pneg %p344
        $region50: #{basic_block_forward.1} parent=11 // pred_check_branch
          %498 = sbr.rel (%p496) target = $region52
        $region51: #{basic_block_forward.1} parent=11 // pred_region
          _
        $region52: #{basic_block_forward.1} parent=11 // pred_fallthru
          _
        // Predicated region
        $region53: #{basic_block_forward.1} parent=11 // pred_check
          %p499 = pneg %p365
        $region54: #{basic_block_forward.1} parent=11 // pred_check_branch
          %501 = sbr.rel (%p499) target = $region56
        $region55: #{basic_block_forward.1} parent=11 // pred_region
          %s503 = ssub.s32 32, 32
          %504 = vsyncadd [#allocation9], %s503
          %s506 = sshll.u32 %s14, 4
          %s507 = int_to_ptr.vmem [resolvable:$true] %s506
          %509 = dma.vmem_to_smem %s507, 32, [#allocation7], [#allocation9]
        $region56: #{basic_block_forward.1} parent=11 // pred_fallthru
          _
        // Predicated region
        $region57: #{basic_block_forward.1} parent=11 // pred_check
          %p510 = pneg %p386
        $region58: #{basic_block_forward.1} parent=11 // pred_check_branch
          %512 = sbr.rel (%p510) target = $region60
        $region59: #{basic_block_forward.1} parent=11 // pred_region
          %s514 = ssub.s32 32, 32
          %515 = vsyncadd [#allocation11], %s514
          %s517 = sshll.u32 %s15, 4
          %s518 = int_to_ptr.vmem [resolvable:$true] %s517
          %520 = dma.vmem_to_smem %s518, 32, [#allocation10], [#allocation11]
        $region60: #{basic_block_forward.1} parent=11 // pred_fallthru
          _
        // Predicated region
        $region61: #{basic_block_forward.1} parent=11 // pred_check
          %p521 = pneg %p407
        $region62: #{basic_block_forward.1} parent=11 // pred_check_branch
          %523 = sbr.rel (%p521) target = $region64
        $region63: #{basic_block_forward.1} parent=11 // pred_region
          %s525 = ssub.s32 16, 16
          %526 = vsyncadd [#allocation11], %s525
          %s528 = sshll.u32 %s16, 4
          %s529 = int_to_ptr.vmem [resolvable:$true] %s528
          %531 = dma.vmem_to_smem %s529, 16, [#allocation12], [#allocation11]
        $region64: #{basic_block_forward.1} parent=11 // pred_fallthru
          _
        // Predicated region
        $region65: #{basic_block_forward.1} parent=11 // pred_check
          %p532 = pneg %p428
        $region66: #{basic_block_forward.1} parent=11 // pred_check_branch
          %534 = sbr.rel (%p532) target = $region68
        $region67: #{basic_block_forward.1} parent=11 // pred_region
          %s536 = ssub.s32 16, 16
          %537 = vsyncadd [#allocation14], %s536
          %s539 = sshll.u32 %s17, 4
          %s540 = int_to_ptr.vmem [resolvable:$true] %s539
          %542 = dma.vmem_to_smem %s540, 16, [#allocation13], [#allocation14]
        $region68: #{basic_block_forward.1} parent=11 // pred_fallthru
          _
      $region12: #{basic_block_forward.1} parent=5 // pred_fallthru
        _
      %p543 = scmp.lt.s32.totalorder %s30, 2
      // Predicated region
      $region69: #{basic_block_forward.1} parent=5 // pred_check
        %p544 = pneg %p543
      $region70: #{basic_block_forward.1} parent=5 // pred_check_branch
        %546 = sbr.rel (%p544) target = $region72
      $region71: #{basic_block_forward.1} parent=5 // pred_region
        // Predicated region
        $region73: #{basic_block_forward.1} parent=71 // pred_check
          %p547 = pneg %p50
        $region74: #{basic_block_forward.1} parent=71 // pred_check_branch
          %549 = sbr.rel (%p547) target = $region76
        $region75: #{basic_block_forward.1} parent=71 // pred_region
          %p550 = scmp.lt.s32.totalorder %s30, 1
          %s551 = scalar_select %p550, %s30, 1
          %s552 = smul.addr %s551, 8
          %s553 = smul.addr %s552, 4
          %s554 = scalar_lea.vmem %s0, %s553
        $region76: #{basic_block_forward.1} parent=71 // pred_fallthru
          _
        // Predicated region
        $region77: #{basic_block_forward.1} parent=71 // pred_check
          %p555 = pneg %p76
        $region78: #{basic_block_forward.1} parent=71 // pred_check_branch
          %557 = sbr.rel (%p555) target = $region80
        $region79: #{basic_block_forward.1} parent=71 // pred_region
          %p558 = scmp.lt.s32.totalorder %s30, 1
          %s559 = scalar_select %p558, %s30, 1
          %s560 = smul.addr %s559, 8
          %s561 = smul.addr %s560, 4
          %s562 = scalar_lea.vmem %s1, %s561
        $region80: #{basic_block_forward.1} parent=71 // pred_fallthru
          _
        // Predicated region
        $region81: #{basic_block_forward.1} parent=71 // pred_check
          %p563 = pneg %p102
        $region82: #{basic_block_forward.1} parent=71 // pred_check_branch
          %565 = sbr.rel (%p563) target = $region84
        $region83: #{basic_block_forward.1} parent=71 // pred_region
          %p566 = scmp.lt.s32.totalorder %s30, 1
          %s567 = scalar_select %p566, %s30, 1
          %s568 = smul.addr %s567, 8
          %s569 = smul.addr %s568, 4
          %s570 = scalar_lea.vmem %s2, %s569
        $region84: #{basic_block_forward.1} parent=71 // pred_fallthru
          _
        // Predicated region
        $region85: #{basic_block_forward.1} parent=71 // pred_check
          %p571 = pneg %p128
        $region86: #{basic_block_forward.1} parent=71 // pred_check_branch
          %573 = sbr.rel (%p571) target = $region88
        $region87: #{basic_block_forward.1} parent=71 // pred_region
          %p574 = scmp.lt.s32.totalorder %s30, 1
          %s575 = scalar_select %p574, %s30, 1
          %s576 = smul.addr %s575, 8
          %s577 = smul.addr %s576, 4
          %s578 = scalar_lea.vmem %s3, %s577
        $region88: #{basic_block_forward.1} parent=71 // pred_fallthru
          _
      $region72: #{basic_block_forward.1} parent=5 // pred_fallthru
        _
      %p579 = scmp.le.s32.totalorder 1, %s30
      %p580 = scmp.lt.s32.totalorder %s30, 3
      %p581 = pnand %p579, %p580
      %p582 = pneg %p581
      // Predicated region
      $region89: #{basic_block_forward.1} parent=5 // pred_check
        _
      $region90: #{basic_block_forward.1} parent=5 // pred_check_branch
        %584 = sbr.rel (%p581) target = $region92
      $region91: #{basic_block_forward.1} parent=5 // pred_region
        %s585 = ssub.s32 %s30, 1
        // Predicated region
        $region93: #{basic_block_forward.1} parent=91 // pred_check
          %p586 = pneg %p365
        $region94: #{basic_block_forward.1} parent=91 // pred_check_branch
          %588 = sbr.rel (%p586) target = $region96
        $region95: #{basic_block_forward.1} parent=91 // pred_region
          %589 = dma.done [#allocation9], 32
        $region96: #{basic_block_forward.1} parent=91 // pred_fallthru
          _
        // Predicated region
        $region97: #{basic_block_forward.1} parent=91 // pred_check
          %p590 = pneg %p386
        $region98: #{basic_block_forward.1} parent=91 // pred_check_branch
          %592 = sbr.rel (%p590) target = $region100
        $region99: #{basic_block_forward.1} parent=91 // pred_region
          %593 = dma.done [#allocation11], 32
        $region100: #{basic_block_forward.1} parent=91 // pred_fallthru
          _
        // Predicated region
        $region101: #{basic_block_forward.1} parent=91 // pred_check
          %p594 = pneg %p407
        $region102: #{basic_block_forward.1} parent=91 // pred_check_branch
          %596 = sbr.rel (%p594) target = $region104
        $region103: #{basic_block_forward.1} parent=91 // pred_region
          %597 = dma.done [#allocation11], 16
        $region104: #{basic_block_forward.1} parent=91 // pred_fallthru
          _
        // Predicated region
        $region105: #{basic_block_forward.1} parent=91 // pred_check
          %p598 = pneg %p428
        $region106: #{basic_block_forward.1} parent=91 // pred_check_branch
          %600 = sbr.rel (%p598) target = $region108
        $region107: #{basic_block_forward.1} parent=91 // pred_region
          %601 = dma.done [#allocation14], 16
        $region108: #{basic_block_forward.1} parent=91 // pred_fallthru
          _
        %602 = sfence
        %p603 = scmp.lt.s32.totalorder %s35, 1
        %s604 = scalar_select %p603, %s35, 1
        %s605 = smul.addr %s604, 8
        %s606 = smul.addr %s605, 4
        %s607 = scalar_lea.vmem %s0, %s606
        %p608 = pneg %p56
        %p609 = pneg %p53
        %p610 = scmp.lt.s32.totalorder %s35, 1
        %s611 = scalar_select %p610, %s35, 1
        %s612 = smul.addr %s611, 8
        %s613 = smul.addr %s612, 4
        %s614 = scalar_lea.vmem %s1, %s613
        %p615 = pneg %p82
        %p616 = pneg %p79
        %p617 = scmp.lt.s32.totalorder %s35, 1
        %s618 = scalar_select %p617, %s35, 1
        %s619 = smul.addr %s618, 8
        %s620 = smul.addr %s619, 4
        %s621 = scalar_lea.vmem %s2, %s620
        %p622 = pneg %p108
        %p623 = pneg %p105
        %p624 = scmp.lt.s32.totalorder %s35, 1
        %s625 = scalar_select %p624, %s35, 1
        %s626 = smul.addr %s625, 8
        %s627 = smul.addr %s626, 4
        %s628 = scalar_lea.vmem %s3, %s627
        %p629 = pneg %p134
        %p630 = pneg %p131
        %p631 = pneg %p155
        %p632 = pneg %p152
        %p633 = pneg %p176
        %p634 = pneg %p173
        %p635 = pneg %p197
        %p636 = pneg %p194
        %p637 = pneg %p218
        %p638 = pneg %p215
        %p639 = pneg %p239
        %p640 = pneg %p236
        %p641 = pneg %p260
        %p642 = pneg %p257
        %p643 = pneg %p281
        %p644 = pneg %p278
        %p645 = pneg %p302
        %p646 = pneg %p299
        %p647 = pneg %p323
        %p648 = pneg %p320
        %p649 = pneg %p344
        %p650 = pneg %p341
        %p651 = pneg %p365
        %p652 = pneg %p362
        %p653 = pneg %p386
        %p654 = pneg %p383
        %p655 = pneg %p407
        %p656 = pneg %p404
        %p657 = pneg %p428
        %p658 = pneg %p425
        %p659 = pneg %p454
        %p660 = pneg %p451
        %s661 = sand.u32 %s441, 1
        %s662 = scalar_lea.sflag [#allocation8], %s661
        %s663 = sand.u32 %s441, 1
        %s664 = smul.addr %s663, 64
        %s665 = scalar_lea.vmem [#allocation15], %s664
        %p666 = scmp.lt.s32.totalorder %s35, 1
        %s667 = scalar_select %p666, %s35, 1
        %s668 = smul.addr %s667, 8
        %s669 = smul.addr %s668, 4
        %s670 = scalar_lea.vmem %s0, %s669
        %p671 = scmp.lt.s32.totalorder %s35, 1
        %s672 = scalar_select %p671, %s35, 1
        %s673 = smul.addr %s672, 8
        %s674 = smul.addr %s673, 4
        %s675 = scalar_lea.vmem %s1, %s674
        %p676 = scmp.lt.s32.totalorder %s35, 1
        %s677 = scalar_select %p676, %s35, 1
        %s678 = smul.addr %s677, 8
        %s679 = smul.addr %s678, 4
        %s680 = scalar_lea.vmem %s2, %s679
        %p681 = scmp.lt.s32.totalorder %s35, 1
        %s682 = scalar_select %p681, %s35, 1
        %s683 = smul.addr %s682, 8
        %s684 = smul.addr %s683, 4
        %s685 = scalar_lea.vmem %s3, %s684
        %vm687 = vcmask 60416
        %688 = vst.msk [vmem:[#allocation2] sm:$0xf] %vm687, 0
        %vm689 = vcmask 57344
        %vm690 = vsmask.f32 256
        %vm691 = vmand %vm689, %vm690
        %v692 = vld [vmem:[#allocation2 + $0x4] sm:$0x1]
        %v693 = vsel %vm691, 0, %v692
        %694 = vst [vmem:[#allocation2 + $0x4] sm:$0x1] %v693
        %695 = vst.msk [vmem:[#allocation2 + $0x8] sm:$0xf] %vm687, 0
        %v696 = vld [vmem:[#allocation2 + $0xc] sm:$0x1]
        %v697 = vsel %vm691, 0, %v696
        %698 = vst [vmem:[#allocation2 + $0xc] sm:$0x1] %v697
        %699 = vst.msk [vmem:[#allocation2 + $0x10] sm:$0xf] %vm687, 0
        %v700 = vld [vmem:[#allocation2 + $0x14] sm:$0x1]
        %v701 = vsel %vm691, 0, %v700
        %702 = vst [vmem:[#allocation2 + $0x14] sm:$0x1] %v701
        %703 = vst.msk [vmem:[#allocation2 + $0x18] sm:$0xf] %vm687, 0
        %v704 = vld [vmem:[#allocation2 + $0x1c] sm:$0x1]
        %v705 = vsel %vm691, 0, %v704
        %706 = vst [vmem:[#allocation2 + $0x1c] sm:$0x1] %v705
        %707 = vst.msk [vmem:[#allocation2 + $0x20] sm:$0xf] %vm687, 0
        %v708 = vld [vmem:[#allocation2 + $0x24] sm:$0x1]
        %v709 = vsel %vm691, 0, %v708
        %710 = vst [vmem:[#allocation2 + $0x24] sm:$0x1] %v709
        %711 = vst.msk [vmem:[#allocation2 + $0x28] sm:$0xf] %vm687, 0
        %v712 = vld [vmem:[#allocation2 + $0x2c] sm:$0x1]
        %v713 = vsel %vm691, 0, %v712
        %714 = vst [vmem:[#allocation2 + $0x2c] sm:$0x1] %v713
        %715 = vst.msk [vmem:[#allocation2 + $0x30] sm:$0xf] %vm687, 0
        %v716 = vld [vmem:[#allocation2 + $0x34] sm:$0x1]
        %v717 = vsel %vm691, 0, %v716
        %718 = vst [vmem:[#allocation2 + $0x34] sm:$0x1] %v717
        %719 = vst.msk [vmem:[#allocation2 + $0x38] sm:$0xf] %vm687, 0
        %v720 = vld [vmem:[#allocation2 + $0x3c] sm:$0x1]
        %v721 = vsel %vm691, 0, %v720
        %722 = vst [vmem:[#allocation2 + $0x3c] sm:$0x1] %v721
        %723 = vst.msk [vmem:[#allocation2 + $0x40] sm:$0xf] %vm687, 0
        %v724 = vld [vmem:[#allocation2 + $0x44] sm:$0x1]
        %v725 = vsel %vm691, 0, %v724
        %726 = vst [vmem:[#allocation2 + $0x44] sm:$0x1] %v725
        %727 = vst.msk [vmem:[#allocation2 + $0x48] sm:$0xf] %vm687, 0
        %v728 = vld [vmem:[#allocation2 + $0x4c] sm:$0x1]
        %v729 = vsel %vm691, 0, %v728
        %730 = vst [vmem:[#allocation2 + $0x4c] sm:$0x1] %v729
        %731 = vst.msk [vmem:[#allocation2 + $0x50] sm:$0xf] %vm687, 0
        %v732 = vld [vmem:[#allocation2 + $0x54] sm:$0x1]
        %v733 = vsel %vm691, 0, %v732
        %734 = vst [vmem:[#allocation2 + $0x54] sm:$0x1] %v733
        %735 = vst.msk [vmem:[#allocation2 + $0x58] sm:$0xf] %vm687, 0
        %v736 = vld [vmem:[#allocation2 + $0x5c] sm:$0x1]
        %v737 = vsel %vm691, 0, %v736
        %738 = vst [vmem:[#allocation2 + $0x5c] sm:$0x1] %v737
        %739 = vst.msk [vmem:[#allocation2 + $0x60] sm:$0xf] %vm687, 0
        %v740 = vld [vmem:[#allocation2 + $0x64] sm:$0x1]
        %v741 = vsel %vm691, 0, %v740
        %742 = vst [vmem:[#allocation2 + $0x64] sm:$0x1] %v741
        %743 = vst.msk [vmem:[#allocation2 + $0x68] sm:$0xf] %vm687, 0
        %v744 = vld [vmem:[#allocation2 + $0x6c] sm:$0x1]
        %v745 = vsel %vm691, 0, %v744
        %746 = vst [vmem:[#allocation2 + $0x6c] sm:$0x1] %v745
        %747 = vst.msk [vmem:[#allocation2 + $0x70] sm:$0xf] %vm687, 0
        %v748 = vld [vmem:[#allocation2 + $0x74] sm:$0x1]
        %v749 = vsel %vm691, 0, %v748
        %750 = vst [vmem:[#allocation2 + $0x74] sm:$0x1] %v749
        %751 = vst.msk [vmem:[#allocation2 + $0x78] sm:$0xf] %vm687, 0
        %v752 = vld [vmem:[#allocation2 + $0x7c] sm:$0x1]
        %v753 = vsel %vm691, 0, %v752
        %754 = vst [vmem:[#allocation2 + $0x7c] sm:$0x1] %v753
        %755 = vst.msk [vmem:[#allocation2 + $0x80] sm:$0xf] %vm687, 0
        %v756 = vld [vmem:[#allocation2 + $0x84] sm:$0x1]
        %v757 = vsel %vm691, 0, %v756
        %758 = vst [vmem:[#allocation2 + $0x84] sm:$0x1] %v757
        %759 = vst.msk [vmem:[#allocation2 + $0x88] sm:$0xf] %vm687, 0
        %v760 = vld [vmem:[#allocation2 + $0x8c] sm:$0x1]
        %v761 = vsel %vm691, 0, %v760
        %762 = vst [vmem:[#allocation2 + $0x8c] sm:$0x1] %v761
        %763 = vst.msk [vmem:[#allocation2 + $0x90] sm:$0xf] %vm687, 0
        %v764 = vld [vmem:[#allocation2 + $0x94] sm:$0x1]
        %v765 = vsel %vm691, 0, %v764
        %766 = vst [vmem:[#allocation2 + $0x94] sm:$0x1] %v765
        %767 = vst.msk [vmem:[#allocation2 + $0x98] sm:$0xf] %vm687, 0
        %v768 = vld [vmem:[#allocation2 + $0x9c] sm:$0x1]
        %v769 = vsel %vm691, 0, %v768
        %770 = vst [vmem:[#allocation2 + $0x9c] sm:$0x1] %v769
        %771 = vst.msk [vmem:[#allocation2 + $0xa0] sm:$0xf] %vm687, 0
        %v772 = vld [vmem:[#allocation2 + $0xa4] sm:$0x1]
        %v773 = vsel %vm691, 0, %v772
        %774 = vst [vmem:[#allocation2 + $0xa4] sm:$0x1] %v773
        %775 = vst.msk [vmem:[#allocation2 + $0xa8] sm:$0xf] %vm687, 0
        %v776 = vld [vmem:[#allocation2 + $0xac] sm:$0x1]
        %v777 = vsel %vm691, 0, %v776
        %778 = vst [vmem:[#allocation2 + $0xac] sm:$0x1] %v777
        %779 = vst.msk [vmem:[#allocation2 + $0xb0] sm:$0xf] %vm687, 0
        %v780 = vld [vmem:[#allocation2 + $0xb4] sm:$0x1]
        %v781 = vsel %vm691, 0, %v780
        %782 = vst [vmem:[#allocation2 + $0xb4] sm:$0x1] %v781
        %783 = vst.msk [vmem:[#allocation2 + $0xb8] sm:$0xf] %vm687, 0
        %v784 = vld [vmem:[#allocation2 + $0xbc] sm:$0x1]
        %v785 = vsel %vm691, 0, %v784
        %786 = vst [vmem:[#allocation2 + $0xbc] sm:$0x1] %v785
        %787 = vst.msk [vmem:[#allocation2 + $0xc0] sm:$0xf] %vm687, 0
        %v788 = vld [vmem:[#allocation2 + $0xc4] sm:$0x1]
        %v789 = vsel %vm691, 0, %v788
        %790 = vst [vmem:[#allocation2 + $0xc4] sm:$0x1] %v789
        %791 = vst.msk [vmem:[#allocation2 + $0xc8] sm:$0xf] %vm687, 0
        %v792 = vld [vmem:[#allocation2 + $0xcc] sm:$0x1]
        %v793 = vsel %vm691, 0, %v792
        %794 = vst [vmem:[#allocation2 + $0xcc] sm:$0x1] %v793
        %795 = vst.msk [vmem:[#allocation2 + $0xd0] sm:$0xf] %vm687, 0
        %v796 = vld [vmem:[#allocation2 + $0xd4] sm:$0x1]
        %v797 = vsel %vm691, 0, %v796
        %798 = vst [vmem:[#allocation2 + $0xd4] sm:$0x1] %v797
        %799 = vst.msk [vmem:[#allocation2 + $0xd8] sm:$0xf] %vm687, 0
        %v800 = vld [vmem:[#allocation2 + $0xdc] sm:$0x1]
        %v801 = vsel %vm691, 0, %v800
        %802 = vst [vmem:[#allocation2 + $0xdc] sm:$0x1] %v801
        %803 = vst.msk [vmem:[#allocation2 + $0xe0] sm:$0xf] %vm687, 0
        %v804 = vld [vmem:[#allocation2 + $0xe4] sm:$0x1]
        %v805 = vsel %vm691, 0, %v804
        %806 = vst [vmem:[#allocation2 + $0xe4] sm:$0x1] %v805
        %807 = vst.msk [vmem:[#allocation2 + $0xe8] sm:$0xf] %vm687, 0
        %v808 = vld [vmem:[#allocation2 + $0xec] sm:$0x1]
        %v809 = vsel %vm691, 0, %v808
        %810 = vst [vmem:[#allocation2 + $0xec] sm:$0x1] %v809
        %811 = vst.msk [vmem:[#allocation2 + $0xf0] sm:$0xf] %vm687, 0
        %v812 = vld [vmem:[#allocation2 + $0xf4] sm:$0x1]
        %v813 = vsel %vm691, 0, %v812
        %814 = vst [vmem:[#allocation2 + $0xf4] sm:$0x1] %v813
        %815 = vst.msk [vmem:[#allocation2 + $0xf8] sm:$0xf] %vm687, 0
        %v816 = vld [vmem:[#allocation2 + $0xfc] sm:$0x1]
        %v817 = vsel %vm691, 0, %v816
        %818 = vst [vmem:[#allocation2 + $0xfc] sm:$0x1] %v817
        %819 = vst.msk [vmem:[#allocation2 + $0x100] sm:$0xf] %vm687, 0
        %v820 = vld [vmem:[#allocation2 + $0x104] sm:$0x1]
        %v821 = vsel %vm691, 0, %v820
        %822 = vst [vmem:[#allocation2 + $0x104] sm:$0x1] %v821
        %823 = vst.msk [vmem:[#allocation2 + $0x108] sm:$0xf] %vm687, 0
        %v824 = vld [vmem:[#allocation2 + $0x10c] sm:$0x1]
        %v825 = vsel %vm691, 0, %v824
        %826 = vst [vmem:[#allocation2 + $0x10c] sm:$0x1] %v825
        %827 = vst.msk [vmem:[#allocation2 + $0x110] sm:$0xf] %vm687, 0
        %v828 = vld [vmem:[#allocation2 + $0x114] sm:$0x1]
        %v829 = vsel %vm691, 0, %v828
        %830 = vst [vmem:[#allocation2 + $0x114] sm:$0x1] %v829
        %831 = vst.msk [vmem:[#allocation2 + $0x118] sm:$0xf] %vm687, 0
        %v832 = vld [vmem:[#allocation2 + $0x11c] sm:$0x1]
        %v833 = vsel %vm691, 0, %v832
        %834 = vst [vmem:[#allocation2 + $0x11c] sm:$0x1] %v833
        %v835 = vld [vmem:[%s670] sm:$0xf]
        %v836 = vld [vmem:[%s670 + $0x4] sm:$0xf]
        %v837 = vld [vmem:[%s670 + $0x8] sm:$0xf]
        %v838 = vld [vmem:[%s670 + $0xc] sm:$0xf]
        %v839 = vld [vmem:[%s670 + $0x10] sm:$0xf]
        %v840 = vld [vmem:[%s670 + $0x14] sm:$0xf]
        %v841 = vld [vmem:[%s670 + $0x18] sm:$0xf]
        %v842 = vld [vmem:[%s670 + $0x1c] sm:$0xf]
        %v844 = vshrl.u32 %v835, 16
        %v846 = vrot.slane %v844, 7
        %v847 = vshll.u32 %v835, 16
        %v849 = vor.u32 %v846, %v847
        %v850 = vrot.slane %v846, 4
        %v852 = vshrl.u32 %v836, 16
        %v854 = vrot.slane %v852, 7
        %v855 = vshll.u32 %v836, 16
        %v857 = vor.u32 %v854, %v855
        %v858 = vrot.slane %v854, 4
        %v860 = vshrl.u32 %v837, 16
        %v862 = vrot.slane %v860, 7
        %v863 = vshll.u32 %v837, 16
        %v865 = vor.u32 %v862, %v863
        %v866 = vrot.slane %v862, 4
        %v868 = vshrl.u32 %v838, 16
        %v870 = vrot.slane %v868, 7
        %v871 = vshll.u32 %v838, 16
        %v873 = vor.u32 %v870, %v871
        %v874 = vrot.slane %v870, 4
        %v876 = vshrl.u32 %v839, 16
        %v878 = vrot.slane %v876, 7
        %v879 = vshll.u32 %v839, 16
        %v881 = vor.u32 %v878, %v879
        %v882 = vrot.slane %v878, 4
        %v884 = vshrl.u32 %v840, 16
        %v886 = vrot.slane %v884, 7
        %v887 = vshll.u32 %v840, 16
        %v889 = vor.u32 %v886, %v887
        %v890 = vrot.slane %v886, 4
        %v892 = vshrl.u32 %v841, 16
        %v894 = vrot.slane %v892, 7
        %v895 = vshll.u32 %v841, 16
        %v897 = vor.u32 %v894, %v895
        %v898 = vrot.slane %v894, 4
        %v900 = vshrl.u32 %v842, 16
        %v902 = vrot.slane %v900, 7
        %v903 = vshll.u32 %v842, 16
        %v905 = vor.u32 %v902, %v903
        %v906 = vrot.slane %v902, 4
        %s923 = scalar_lea.vmem [#allocation2], 8
        %vm924 = vcmask 60416
        %vm925 = vsmask.f32 7938
        %vm926 = vmand %vm924, %vm925
        %v927 = vld [vmem:[%s923] sm:$0xf]
        %v928 = vsel %vm926, %v849, %v927
        %929 = vst [vmem:[%s923] sm:$0xf] %v928
        %v930 = vld [vmem:[%s923 + $0x4] sm:$0x1]
        %v931 = vsel %vm691, %v850, %v930
        %932 = vst [vmem:[%s923 + $0x4] sm:$0x1] %v931
        %v933 = vld [vmem:[%s923 + $0x8] sm:$0xf]
        %v934 = vsel %vm926, %v857, %v933
        %935 = vst [vmem:[%s923 + $0x8] sm:$0xf] %v934
        %v936 = vld [vmem:[%s923 + $0xc] sm:$0x1]
        %v937 = vsel %vm691, %v858, %v936
        %938 = vst [vmem:[%s923 + $0xc] sm:$0x1] %v937
        %v939 = vld [vmem:[%s923 + $0x10] sm:$0xf]
        %v940 = vsel %vm926, %v865, %v939
        %941 = vst [vmem:[%s923 + $0x10] sm:$0xf] %v940
        %v942 = vld [vmem:[%s923 + $0x14] sm:$0x1]
        %v943 = vsel %vm691, %v866, %v942
        %944 = vst [vmem:[%s923 + $0x14] sm:$0x1] %v943
        %v945 = vld [vmem:[%s923 + $0x18] sm:$0xf]
        %v946 = vsel %vm926, %v873, %v945
        %947 = vst [vmem:[%s923 + $0x18] sm:$0xf] %v946
        %v948 = vld [vmem:[%s923 + $0x1c] sm:$0x1]
        %v949 = vsel %vm691, %v874, %v948
        %950 = vst [vmem:[%s923 + $0x1c] sm:$0x1] %v949
        %v951 = vld [vmem:[%s923 + $0x20] sm:$0xf]
        %v952 = vsel %vm926, %v881, %v951
        %953 = vst [vmem:[%s923 + $0x20] sm:$0xf] %v952
        %v954 = vld [vmem:[%s923 + $0x24] sm:$0x1]
        %v955 = vsel %vm691, %v882, %v954
        %956 = vst [vmem:[%s923 + $0x24] sm:$0x1] %v955
        %v957 = vld [vmem:[%s923 + $0x28] sm:$0xf]
        %v958 = vsel %vm926, %v889, %v957
        %959 = vst [vmem:[%s923 + $0x28] sm:$0xf] %v958
        %v960 = vld [vmem:[%s923 + $0x2c] sm:$0x1]
        %v961 = vsel %vm691, %v890, %v960
        %962 = vst [vmem:[%s923 + $0x2c] sm:$0x1] %v961
        %v963 = vld [vmem:[%s923 + $0x30] sm:$0xf]
        %v964 = vsel %vm926, %v897, %v963
        %965 = vst [vmem:[%s923 + $0x30] sm:$0xf] %v964
        %v966 = vld [vmem:[%s923 + $0x34] sm:$0x1]
        %v967 = vsel %vm691, %v898, %v966
        %968 = vst [vmem:[%s923 + $0x34] sm:$0x1] %v967
        %v969 = vld [vmem:[%s923 + $0x38] sm:$0xf]
        %v970 = vsel %vm926, %v905, %v969
        %971 = vst [vmem:[%s923 + $0x38] sm:$0xf] %v970
        %v972 = vld [vmem:[%s923 + $0x3c] sm:$0x1]
        %v973 = vsel %vm691, %v906, %v972
        %974 = vst [vmem:[%s923 + $0x3c] sm:$0x1] %v973
        %v975 = vld [vmem:[%s675] sm:$0xf]
        %v976 = vld [vmem:[%s675 + $0x4] sm:$0xf]
        %v977 = vld [vmem:[%s675 + $0x8] sm:$0xf]
        %v978 = vld [vmem:[%s675 + $0xc] sm:$0xf]
        %v979 = vld [vmem:[%s675 + $0x10] sm:$0xf]
        %v980 = vld [vmem:[%s675 + $0x14] sm:$0xf]
        %v981 = vld [vmem:[%s675 + $0x18] sm:$0xf]
        %v982 = vld [vmem:[%s675 + $0x1c] sm:$0xf]
        %v984 = vshrl.u32 %v975, 16
        %v986 = vrot.slane %v984, 7
        %v987 = vshll.u32 %v975, 16
        %v989 = vor.u32 %v986, %v987
        %v990 = vrot.slane %v986, 4
        %v992 = vshrl.u32 %v976, 16
        %v994 = vrot.slane %v992, 7
        %v995 = vshll.u32 %v976, 16
        %v997 = vor.u32 %v994, %v995
        %v998 = vrot.slane %v994, 4
        %v1000 = vshrl.u32 %v977, 16
        %v1002 = vrot.slane %v1000, 7
        %v1003 = vshll.u32 %v977, 16
        %v1005 = vor.u32 %v1002, %v1003
        %v1006 = vrot.slane %v1002, 4
        %v1008 = vshrl.u32 %v978, 16
        %v1010 = vrot.slane %v1008, 7
        %v1011 = vshll.u32 %v978, 16
        %v1013 = vor.u32 %v1010, %v1011
        %v1014 = vrot.slane %v1010, 4
        %v1016 = vshrl.u32 %v979, 16
        %v1018 = vrot.slane %v1016, 7
        %v1019 = vshll.u32 %v979, 16
        %v1021 = vor.u32 %v1018, %v1019
        %v1022 = vrot.slane %v1018, 4
        %v1024 = vshrl.u32 %v980, 16
        %v1026 = vrot.slane %v1024, 7
        %v1027 = vshll.u32 %v980, 16
        %v1029 = vor.u32 %v1026, %v1027
        %v1030 = vrot.slane %v1026, 4
        %v1032 = vshrl.u32 %v981, 16
        %v1034 = vrot.slane %v1032, 7
        %v1035 = vshll.u32 %v981, 16
        %v1037 = vor.u32 %v1034, %v1035
        %v1038 = vrot.slane %v1034, 4
        %v1040 = vshrl.u32 %v982, 16
        %v1042 = vrot.slane %v1040, 7
        %v1043 = vshll.u32 %v982, 16
        %v1045 = vor.u32 %v1042, %v1043
        %v1046 = vrot.slane %v1042, 4
        %s1063 = scalar_lea.vmem [#allocation2], 80
        %v1064 = vld [vmem:[%s1063] sm:$0xf]
        %v1065 = vsel %vm926, %v989, %v1064
        %1066 = vst [vmem:[%s1063] sm:$0xf] %v1065
        %v1067 = vld [vmem:[%s1063 + $0x4] sm:$0x1]
        %v1068 = vsel %vm691, %v990, %v1067
        %1069 = vst [vmem:[%s1063 + $0x4] sm:$0x1] %v1068
        %v1070 = vld [vmem:[%s1063 + $0x8] sm:$0xf]
        %v1071 = vsel %vm926, %v997, %v1070
        %1072 = vst [vmem:[%s1063 + $0x8] sm:$0xf] %v1071
        %v1073 = vld [vmem:[%s1063 + $0xc] sm:$0x1]
        %v1074 = vsel %vm691, %v998, %v1073
        %1075 = vst [vmem:[%s1063 + $0xc] sm:$0x1] %v1074
        %v1076 = vld [vmem:[%s1063 + $0x10] sm:$0xf]
        %v1077 = vsel %vm926, %v1005, %v1076
        %1078 = vst [vmem:[%s1063 + $0x10] sm:$0xf] %v1077
        %v1079 = vld [vmem:[%s1063 + $0x14] sm:$0x1]
        %v1080 = vsel %vm691, %v1006, %v1079
        %1081 = vst [vmem:[%s1063 + $0x14] sm:$0x1] %v1080
        %v1082 = vld [vmem:[%s1063 + $0x18] sm:$0xf]
        %v1083 = vsel %vm926, %v1013, %v1082
        %1084 = vst [vmem:[%s1063 + $0x18] sm:$0xf] %v1083
        %v1085 = vld [vmem:[%s1063 + $0x1c] sm:$0x1]
        %v1086 = vsel %vm691, %v1014, %v1085
        %1087 = vst [vmem:[%s1063 + $0x1c] sm:$0x1] %v1086
        %v1088 = vld [vmem:[%s1063 + $0x20] sm:$0xf]
        %v1089 = vsel %vm926, %v1021, %v1088
        %1090 = vst [vmem:[%s1063 + $0x20] sm:$0xf] %v1089
        %v1091 = vld [vmem:[%s1063 + $0x24] sm:$0x1]
        %v1092 = vsel %vm691, %v1022, %v1091
        %1093 = vst [vmem:[%s1063 + $0x24] sm:$0x1] %v1092
        %v1094 = vld [vmem:[%s1063 + $0x28] sm:$0xf]
        %v1095 = vsel %vm926, %v1029, %v1094
        %1096 = vst [vmem:[%s1063 + $0x28] sm:$0xf] %v1095
        %v1097 = vld [vmem:[%s1063 + $0x2c] sm:$0x1]
        %v1098 = vsel %vm691, %v1030, %v1097
        %1099 = vst [vmem:[%s1063 + $0x2c] sm:$0x1] %v1098
        %v1100 = vld [vmem:[%s1063 + $0x30] sm:$0xf]
        %v1101 = vsel %vm926, %v1037, %v1100
        %1102 = vst [vmem:[%s1063 + $0x30] sm:$0xf] %v1101
        %v1103 = vld [vmem:[%s1063 + $0x34] sm:$0x1]
        %v1104 = vsel %vm691, %v1038, %v1103
        %1105 = vst [vmem:[%s1063 + $0x34] sm:$0x1] %v1104
        %v1106 = vld [vmem:[%s1063 + $0x38] sm:$0xf]
        %v1107 = vsel %vm926, %v1045, %v1106
        %1108 = vst [vmem:[%s1063 + $0x38] sm:$0xf] %v1107
        %v1109 = vld [vmem:[%s1063 + $0x3c] sm:$0x1]
        %v1110 = vsel %vm691, %v1046, %v1109
        %1111 = vst [vmem:[%s1063 + $0x3c] sm:$0x1] %v1110
        %v1112 = vld [vmem:[%s680] sm:$0xf]
        %v1113 = vld [vmem:[%s680 + $0x4] sm:$0xf]
        %v1114 = vld [vmem:[%s680 + $0x8] sm:$0xf]
        %v1115 = vld [vmem:[%s680 + $0xc] sm:$0xf]
        %v1116 = vld [vmem:[%s680 + $0x10] sm:$0xf]
        %v1117 = vld [vmem:[%s680 + $0x14] sm:$0xf]
        %v1118 = vld [vmem:[%s680 + $0x18] sm:$0xf]
        %v1119 = vld [vmem:[%s680 + $0x1c] sm:$0xf]
        %v1121 = vshrl.u32 %v1112, 16
        %v1123 = vrot.slane %v1121, 7
        %v1124 = vshll.u32 %v1112, 16
        %v1126 = vor.u32 %v1123, %v1124
        %v1127 = vrot.slane %v1123, 4
        %v1129 = vshrl.u32 %v1113, 16
        %v1131 = vrot.slane %v1129, 7
        %v1132 = vshll.u32 %v1113, 16
        %v1134 = vor.u32 %v1131, %v1132
        %v1135 = vrot.slane %v1131, 4
        %v1137 = vshrl.u32 %v1114, 16
        %v1139 = vrot.slane %v1137, 7
        %v1140 = vshll.u32 %v1114, 16
        %v1142 = vor.u32 %v1139, %v1140
        %v1143 = vrot.slane %v1139, 4
        %v1145 = vshrl.u32 %v1115, 16
        %v1147 = vrot.slane %v1145, 7
        %v1148 = vshll.u32 %v1115, 16
        %v1150 = vor.u32 %v1147, %v1148
        %v1151 = vrot.slane %v1147, 4
        %v1153 = vshrl.u32 %v1116, 16
        %v1155 = vrot.slane %v1153, 7
        %v1156 = vshll.u32 %v1116, 16
        %v1158 = vor.u32 %v1155, %v1156
        %v1159 = vrot.slane %v1155, 4
        %v1161 = vshrl.u32 %v1117, 16
        %v1163 = vrot.slane %v1161, 7
        %v1164 = vshll.u32 %v1117, 16
        %v1166 = vor.u32 %v1163, %v1164
        %v1167 = vrot.slane %v1163, 4
        %v1169 = vshrl.u32 %v1118, 16
        %v1171 = vrot.slane %v1169, 7
        %v1172 = vshll.u32 %v1118, 16
        %v1174 = vor.u32 %v1171, %v1172
        %v1175 = vrot.slane %v1171, 4
        %v1177 = vshrl.u32 %v1119, 16
        %v1179 = vrot.slane %v1177, 7
        %v1180 = vshll.u32 %v1119, 16
        %v1182 = vor.u32 %v1179, %v1180
        %v1183 = vrot.slane %v1179, 4
        %s1200 = scalar_lea.vmem [#allocation2], 152
        %v1201 = vld [vmem:[%s1200] sm:$0xf]
        %v1202 = vsel %vm926, %v1126, %v1201
        %1203 = vst [vmem:[%s1200] sm:$0xf] %v1202
        %v1204 = vld [vmem:[%s1200 + $0x4] sm:$0x1]
        %v1205 = vsel %vm691, %v1127, %v1204
        %1206 = vst [vmem:[%s1200 + $0x4] sm:$0x1] %v1205
        %v1207 = vld [vmem:[%s1200 + $0x8] sm:$0xf]
        %v1208 = vsel %vm926, %v1134, %v1207
        %1209 = vst [vmem:[%s1200 + $0x8] sm:$0xf] %v1208
        %v1210 = vld [vmem:[%s1200 + $0xc] sm:$0x1]
        %v1211 = vsel %vm691, %v1135, %v1210
        %1212 = vst [vmem:[%s1200 + $0xc] sm:$0x1] %v1211
        %v1213 = vld [vmem:[%s1200 + $0x10] sm:$0xf]
        %v1214 = vsel %vm926, %v1142, %v1213
        %1215 = vst [vmem:[%s1200 + $0x10] sm:$0xf] %v1214
        %v1216 = vld [vmem:[%s1200 + $0x14] sm:$0x1]
        %v1217 = vsel %vm691, %v1143, %v1216
        %1218 = vst [vmem:[%s1200 + $0x14] sm:$0x1] %v1217
        %v1219 = vld [vmem:[%s1200 + $0x18] sm:$0xf]
        %v1220 = vsel %vm926, %v1150, %v1219
        %1221 = vst [vmem:[%s1200 + $0x18] sm:$0xf] %v1220
        %v1222 = vld [vmem:[%s1200 + $0x1c] sm:$0x1]
        %v1223 = vsel %vm691, %v1151, %v1222
        %1224 = vst [vmem:[%s1200 + $0x1c] sm:$0x1] %v1223
        %v1225 = vld [vmem:[%s1200 + $0x20] sm:$0xf]
        %v1226 = vsel %vm926, %v1158, %v1225
        %1227 = vst [vmem:[%s1200 + $0x20] sm:$0xf] %v1226
        %v1228 = vld [vmem:[%s1200 + $0x24] sm:$0x1]
        %v1229 = vsel %vm691, %v1159, %v1228
        %1230 = vst [vmem:[%s1200 + $0x24] sm:$0x1] %v1229
        %v1231 = vld [vmem:[%s1200 + $0x28] sm:$0xf]
        %v1232 = vsel %vm926, %v1166, %v1231
        %1233 = vst [vmem:[%s1200 + $0x28] sm:$0xf] %v1232
        %v1234 = vld [vmem:[%s1200 + $0x2c] sm:$0x1]
        %v1235 = vsel %vm691, %v1167, %v1234
        %1236 = vst [vmem:[%s1200 + $0x2c] sm:$0x1] %v1235
        %v1237 = vld [vmem:[%s1200 + $0x30] sm:$0xf]
        %v1238 = vsel %vm926, %v1174, %v1237
        %1239 = vst [vmem:[%s1200 + $0x30] sm:$0xf] %v1238
        %v1240 = vld [vmem:[%s1200 + $0x34] sm:$0x1]
        %v1241 = vsel %vm691, %v1175, %v1240
        %1242 = vst [vmem:[%s1200 + $0x34] sm:$0x1] %v1241
        %v1243 = vld [vmem:[%s1200 + $0x38] sm:$0xf]
        %v1244 = vsel %vm926, %v1182, %v1243
        %1245 = vst [vmem:[%s1200 + $0x38] sm:$0xf] %v1244
        %v1246 = vld [vmem:[%s1200 + $0x3c] sm:$0x1]
        %v1247 = vsel %vm691, %v1183, %v1246
        %1248 = vst [vmem:[%s1200 + $0x3c] sm:$0x1] %v1247
        %v1249 = vld [vmem:[%s685] sm:$0xf]
        %v1250 = vld [vmem:[%s685 + $0x4] sm:$0xf]
        %v1251 = vld [vmem:[%s685 + $0x8] sm:$0xf]
        %v1252 = vld [vmem:[%s685 + $0xc] sm:$0xf]
        %v1253 = vld [vmem:[%s685 + $0x10] sm:$0xf]
        %v1254 = vld [vmem:[%s685 + $0x14] sm:$0xf]
        %v1255 = vld [vmem:[%s685 + $0x18] sm:$0xf]
        %v1256 = vld [vmem:[%s685 + $0x1c] sm:$0xf]
        %v1258 = vshrl.u32 %v1249, 16
        %v1260 = vrot.slane %v1258, 7
        %v1261 = vshll.u32 %v1249, 16
        %v1263 = vor.u32 %v1260, %v1261
        %v1264 = vrot.slane %v1260, 4
        %v1266 = vshrl.u32 %v1250, 16
        %v1268 = vrot.slane %v1266, 7
        %v1269 = vshll.u32 %v1250, 16
        %v1271 = vor.u32 %v1268, %v1269
        %v1272 = vrot.slane %v1268, 4
        %v1274 = vshrl.u32 %v1251, 16
        %v1276 = vrot.slane %v1274, 7
        %v1277 = vshll.u32 %v1251, 16
        %v1279 = vor.u32 %v1276, %v1277
        %v1280 = vrot.slane %v1276, 4
        %v1282 = vshrl.u32 %v1252, 16
        %v1284 = vrot.slane %v1282, 7
        %v1285 = vshll.u32 %v1252, 16
        %v1287 = vor.u32 %v1284, %v1285
        %v1288 = vrot.slane %v1284, 4
        %v1290 = vshrl.u32 %v1253, 16
        %v1292 = vrot.slane %v1290, 7
        %v1293 = vshll.u32 %v1253, 16
        %v1295 = vor.u32 %v1292, %v1293
        %v1296 = vrot.slane %v1292, 4
        %v1298 = vshrl.u32 %v1254, 16
        %v1300 = vrot.slane %v1298, 7
        %v1301 = vshll.u32 %v1254, 16
        %v1303 = vor.u32 %v1300, %v1301
        %v1304 = vrot.slane %v1300, 4
        %v1306 = vshrl.u32 %v1255, 16
        %v1308 = vrot.slane %v1306, 7
        %v1309 = vshll.u32 %v1255, 16
        %v1311 = vor.u32 %v1308, %v1309
        %v1312 = vrot.slane %v1308, 4
        %v1314 = vshrl.u32 %v1256, 16
        %v1316 = vrot.slane %v1314, 7
        %v1317 = vshll.u32 %v1256, 16
        %v1319 = vor.u32 %v1316, %v1317
        %v1320 = vrot.slane %v1316, 4
        %s1337 = scalar_lea.vmem [#allocation2], 224
        %v1338 = vld [vmem:[%s1337] sm:$0xf]
        %v1339 = vsel %vm926, %v1263, %v1338
        %1340 = vst [vmem:[%s1337] sm:$0xf] %v1339
        %v1341 = vld [vmem:[%s1337 + $0x4] sm:$0x1]
        %v1342 = vsel %vm691, %v1264, %v1341
        %1343 = vst [vmem:[%s1337 + $0x4] sm:$0x1] %v1342
        %v1344 = vld [vmem:[%s1337 + $0x8] sm:$0xf]
        %v1345 = vsel %vm926, %v1271, %v1344
        %1346 = vst [vmem:[%s1337 + $0x8] sm:$0xf] %v1345
        %v1347 = vld [vmem:[%s1337 + $0xc] sm:$0x1]
        %v1348 = vsel %vm691, %v1272, %v1347
        %1349 = vst [vmem:[%s1337 + $0xc] sm:$0x1] %v1348
        %v1350 = vld [vmem:[%s1337 + $0x10] sm:$0xf]
        %v1351 = vsel %vm926, %v1279, %v1350
        %1352 = vst [vmem:[%s1337 + $0x10] sm:$0xf] %v1351
        %v1353 = vld [vmem:[%s1337 + $0x14] sm:$0x1]
        %v1354 = vsel %vm691, %v1280, %v1353
        %1355 = vst [vmem:[%s1337 + $0x14] sm:$0x1] %v1354
        %v1356 = vld [vmem:[%s1337 + $0x18] sm:$0xf]
        %v1357 = vsel %vm926, %v1287, %v1356
        %1358 = vst [vmem:[%s1337 + $0x18] sm:$0xf] %v1357
        %v1359 = vld [vmem:[%s1337 + $0x1c] sm:$0x1]
        %v1360 = vsel %vm691, %v1288, %v1359
        %1361 = vst [vmem:[%s1337 + $0x1c] sm:$0x1] %v1360
        %v1362 = vld [vmem:[%s1337 + $0x20] sm:$0xf]
        %v1363 = vsel %vm926, %v1295, %v1362
        %1364 = vst [vmem:[%s1337 + $0x20] sm:$0xf] %v1363
        %v1365 = vld [vmem:[%s1337 + $0x24] sm:$0x1]
        %v1366 = vsel %vm691, %v1296, %v1365
        %1367 = vst [vmem:[%s1337 + $0x24] sm:$0x1] %v1366
        %v1368 = vld [vmem:[%s1337 + $0x28] sm:$0xf]
        %v1369 = vsel %vm926, %v1303, %v1368
        %1370 = vst [vmem:[%s1337 + $0x28] sm:$0xf] %v1369
        %v1371 = vld [vmem:[%s1337 + $0x2c] sm:$0x1]
        %v1372 = vsel %vm691, %v1304, %v1371
        %1373 = vst [vmem:[%s1337 + $0x2c] sm:$0x1] %v1372
        %v1374 = vld [vmem:[%s1337 + $0x30] sm:$0xf]
        %v1375 = vsel %vm926, %v1311, %v1374
        %1376 = vst [vmem:[%s1337 + $0x30] sm:$0xf] %v1375
        %v1377 = vld [vmem:[%s1337 + $0x34] sm:$0x1]
        %v1378 = vsel %vm691, %v1312, %v1377
        %1379 = vst [vmem:[%s1337 + $0x34] sm:$0x1] %v1378
        %v1380 = vld [vmem:[%s1337 + $0x38] sm:$0xf]
        %v1381 = vsel %vm926, %v1319, %v1380
        %1382 = vst [vmem:[%s1337 + $0x38] sm:$0xf] %v1381
        %v1383 = vld [vmem:[%s1337 + $0x3c] sm:$0x1]
        %v1384 = vsel %vm691, %v1320, %v1383
        %1385 = vst [vmem:[%s1337 + $0x3c] sm:$0x1] %v1384
        %s1386 = scalar_lea.vmem [#allocation2], 216
        %v1387 = vld [vmem:[%s1386] sm:$0xf]
        %v1388 = vld [vmem:[%s1386 + $0x8] sm:$0xf]
        %v1389 = vld [vmem:[%s1386 + $0x10] sm:$0xf]
        %v1390 = vld [vmem:[%s1386 + $0x18] sm:$0xf]
        %v1391 = vld [vmem:[%s1386 + $0x20] sm:$0xf]
        %v1392 = vld [vmem:[%s1386 + $0x28] sm:$0xf]
        %v1393 = vld [vmem:[%s1386 + $0x30] sm:$0xf]
        %v1394 = vld [vmem:[%s1386 + $0x38] sm:$0xf]
        %v1403 = vunpack.c.l.b16 %v1387
        %v1404 = vunpack.c.l.b16 %v1388
        %v1405 = vunpack.c.l.b16 %v1389
        %v1406 = vunpack.c.l.b16 %v1390
        %v1407 = vunpack.c.l.b16 %v1391
        %v1408 = vunpack.c.l.b16 %v1392
        %v1409 = vunpack.c.l.b16 %v1393
        %v1410 = vunpack.c.l.b16 %v1394
        %v1411 = vpack.c.b16 %v1404, %v1403
        %v1412 = vpack.c.b16 %v1406, %v1405
        %v1413 = vpack.c.b16 %v1408, %v1407
        %v1414 = vpack.c.b16 %v1410, %v1409
        %vm1419 = vcmask 64512
        %1420 = vst.msk [vmem:[#allocation3] sm:$0xff] %vm1419, %v1411
        %1421 = vst.msk [vmem:[#allocation3 + $0x8] sm:$0xff] %vm1419, %v1412
        %1422 = vst.msk [vmem:[#allocation3 + $0x10] sm:$0xff] %vm1419, %v1413
        %1423 = vst.msk [vmem:[#allocation3 + $0x18] sm:$0xff] %vm1419, %v1414
        %s1424 = scalar_lea.vmem [#allocation2], 144
        %v1425 = vld [vmem:[%s1424] sm:$0xf]
        %v1426 = vld [vmem:[%s1424 + $0x4] sm:$0x1]
        %v1427 = vld [vmem:[%s1424 + $0x8] sm:$0xf]
        %v1428 = vld [vmem:[%s1424 + $0xc] sm:$0x1]
        %v1429 = vld [vmem:[%s1424 + $0x10] sm:$0xf]
        %v1430 = vld [vmem:[%s1424 + $0x14] sm:$0x1]
        %v1431 = vld [vmem:[%s1424 + $0x18] sm:$0xf]
        %v1432 = vld [vmem:[%s1424 + $0x1c] sm:$0x1]
        %v1433 = vld [vmem:[%s1424 + $0x20] sm:$0xf]
        %v1434 = vld [vmem:[%s1424 + $0x24] sm:$0x1]
        %v1435 = vld [vmem:[%s1424 + $0x28] sm:$0xf]
        %v1436 = vld [vmem:[%s1424 + $0x2c] sm:$0x1]
        %v1437 = vld [vmem:[%s1424 + $0x30] sm:$0xf]
        %v1438 = vld [vmem:[%s1424 + $0x34] sm:$0x1]
        %v1439 = vld [vmem:[%s1424 + $0x38] sm:$0xf]
        %v1440 = vld [vmem:[%s1424 + $0x3c] sm:$0x1]
        %vm1441 = vsmask.f32 3328
        %vm1442 = vsmask.f32 7440
        %vm1443 = vmor %vm1441, %vm1442
        %v1445 = vshrl.u32 %v1425, 16
        %v1447 = vrot.slane %v1445, 4
        %v1448 = vshll.u32 %v1425, 16
        %v1450 = vrot.slane %v1448, 5
        %v1451 = vor.u32 %v1447, %v1450
        %v1452 = vrot.slane %v1451, 4
        %v1454 = vshll.u32 %v1426, 16
        %v1456 = vrot.slane %v1454, 5
        %v1457 = vsel %vm1443, %v1452, %v1456
        %v1459 = vshrl.u32 %v1427, 16
        %v1461 = vrot.slane %v1459, 4
        %v1462 = vshll.u32 %v1427, 16
        %v1464 = vrot.slane %v1462, 5
        %v1465 = vor.u32 %v1461, %v1464
        %v1466 = vrot.slane %v1465, 4
        %v1468 = vshll.u32 %v1428, 16
        %v1470 = vrot.slane %v1468, 5
        %v1471 = vsel %vm1443, %v1466, %v1470
        %v1473 = vshrl.u32 %v1429, 16
        %v1475 = vrot.slane %v1473, 4
        %v1476 = vshll.u32 %v1429, 16
        %v1478 = vrot.slane %v1476, 5
        %v1479 = vor.u32 %v1475, %v1478
        %v1480 = vrot.slane %v1479, 4
        %v1482 = vshll.u32 %v1430, 16
        %v1484 = vrot.slane %v1482, 5
        %v1485 = vsel %vm1443, %v1480, %v1484
        %v1487 = vshrl.u32 %v1431, 16
        %v1489 = vrot.slane %v1487, 4
        %v1490 = vshll.u32 %v1431, 16
        %v1492 = vrot.slane %v1490, 5
        %v1493 = vor.u32 %v1489, %v1492
        %v1494 = vrot.slane %v1493, 4
        %v1496 = vshll.u32 %v1432, 16
        %v1498 = vrot.slane %v1496, 5
        %v1499 = vsel %vm1443, %v1494, %v1498
        %v1501 = vshrl.u32 %v1433, 16
        %v1503 = vrot.slane %v1501, 4
        %v1504 = vshll.u32 %v1433, 16
        %v1506 = vrot.slane %v1504, 5
        %v1507 = vor.u32 %v1503, %v1506
        %v1508 = vrot.slane %v1507, 4
        %v1510 = vshll.u32 %v1434, 16
        %v1512 = vrot.slane %v1510, 5
        %v1513 = vsel %vm1443, %v1508, %v1512
        %v1515 = vshrl.u32 %v1435, 16
        %v1517 = vrot.slane %v1515, 4
        %v1518 = vshll.u32 %v1435, 16
        %v1520 = vrot.slane %v1518, 5
        %v1521 = vor.u32 %v1517, %v1520
        %v1522 = vrot.slane %v1521, 4
        %v1524 = vshll.u32 %v1436, 16
        %v1526 = vrot.slane %v1524, 5
        %v1527 = vsel %vm1443, %v1522, %v1526
        %v1529 = vshrl.u32 %v1437, 16
        %v1531 = vrot.slane %v1529, 4
        %v1532 = vshll.u32 %v1437, 16
        %v1534 = vrot.slane %v1532, 5
        %v1535 = vor.u32 %v1531, %v1534
        %v1536 = vrot.slane %v1535, 4
        %v1538 = vshll.u32 %v1438, 16
        %v1540 = vrot.slane %v1538, 5
        %v1541 = vsel %vm1443, %v1536, %v1540
        %v1543 = vshrl.u32 %v1439, 16
        %v1545 = vrot.slane %v1543, 4
        %v1546 = vshll.u32 %v1439, 16
        %v1548 = vrot.slane %v1546, 5
        %v1549 = vor.u32 %v1545, %v1548
        %v1550 = vrot.slane %v1549, 4
        %v1552 = vshll.u32 %v1440, 16
        %v1554 = vrot.slane %v1552, 5
        %v1555 = vsel %vm1443, %v1550, %v1554
        %v1556 = vunpack.c.l.b16 %v1457
        %v1557 = vunpack.c.l.b16 %v1471
        %v1558 = vunpack.c.l.b16 %v1485
        %v1559 = vunpack.c.l.b16 %v1499
        %v1560 = vunpack.c.l.b16 %v1513
        %v1561 = vunpack.c.l.b16 %v1527
        %v1562 = vunpack.c.l.b16 %v1541
        %v1563 = vunpack.c.l.b16 %v1555
        %v1564 = vpack.c.b16 %v1557, %v1556
        %v1565 = vpack.c.b16 %v1559, %v1558
        %v1566 = vpack.c.b16 %v1561, %v1560
        %v1567 = vpack.c.b16 %v1563, %v1562
        %1568 = vrot.lane.b32.xlu0 %v1564, 8
        %v1569 = vpop.permute.xlu0 %1568
        %1570 = vrot.lane.b32.xlu0 %v1565, 8
        %v1571 = vpop.permute.xlu0 %1570
        %1572 = vrot.lane.b32.xlu0 %v1566, 8
        %v1573 = vpop.permute.xlu0 %1572
        %1574 = vrot.lane.b32.xlu0 %v1567, 8
        %v1575 = vpop.permute.xlu0 %1574
        %vm1580 = vcmask 130112
        %1581 = vst.msk [vmem:[#allocation3] sm:$0xff] %vm1580, %v1569
        %1582 = vst.msk [vmem:[#allocation3 + $0x8] sm:$0xff] %vm1580, %v1571
        %1583 = vst.msk [vmem:[#allocation3 + $0x10] sm:$0xff] %vm1580, %v1573
        %1584 = vst.msk [vmem:[#allocation3 + $0x18] sm:$0xff] %vm1580, %v1575
        %v1585 = vld [vmem:[%s1386] sm:$0xf]
        %v1586 = vld [vmem:[%s1386 + $0x4] sm:$0x1]
        %v1587 = vld [vmem:[%s1386 + $0x8] sm:$0xf]
        %v1588 = vld [vmem:[%s1386 + $0xc] sm:$0x1]
        %v1589 = vld [vmem:[%s1386 + $0x10] sm:$0xf]
        %v1590 = vld [vmem:[%s1386 + $0x14] sm:$0x1]
        %v1591 = vld [vmem:[%s1386 + $0x18] sm:$0xf]
        %v1592 = vld [vmem:[%s1386 + $0x1c] sm:$0x1]
        %v1593 = vld [vmem:[%s1386 + $0x20] sm:$0xf]
        %v1594 = vld [vmem:[%s1386 + $0x24] sm:$0x1]
        %v1595 = vld [vmem:[%s1386 + $0x28] sm:$0xf]
        %v1596 = vld [vmem:[%s1386 + $0x2c] sm:$0x1]
        %v1597 = vld [vmem:[%s1386 + $0x30] sm:$0xf]
        %v1598 = vld [vmem:[%s1386 + $0x34] sm:$0x1]
        %v1599 = vld [vmem:[%s1386 + $0x38] sm:$0xf]
        %v1600 = vld [vmem:[%s1386 + $0x3c] sm:$0x1]
        %v1602 = vshrl.u32 %v1585, 16
        %v1604 = vrot.slane %v1602, 4
        %v1605 = vshll.u32 %v1585, 16
        %v1607 = vrot.slane %v1605, 5
        %v1608 = vor.u32 %v1604, %v1607
        %v1609 = vrot.slane %v1608, 4
        %v1611 = vshll.u32 %v1586, 16
        %v1613 = vrot.slane %v1611, 5
        %v1614 = vsel %vm1443, %v1609, %v1613
        %v1616 = vshrl.u32 %v1587, 16
        %v1618 = vrot.slane %v1616, 4
        %v1619 = vshll.u32 %v1587, 16
        %v1621 = vrot.slane %v1619, 5
        %v1622 = vor.u32 %v1618, %v1621
        %v1623 = vrot.slane %v1622, 4
        %v1625 = vshll.u32 %v1588, 16
        %v1627 = vrot.slane %v1625, 5
        %v1628 = vsel %vm1443, %v1623, %v1627
        %v1630 = vshrl.u32 %v1589, 16
        %v1632 = vrot.slane %v1630, 4
        %v1633 = vshll.u32 %v1589, 16
        %v1635 = vrot.slane %v1633, 5
        %v1636 = vor.u32 %v1632, %v1635
        %v1637 = vrot.slane %v1636, 4
        %v1639 = vshll.u32 %v1590, 16
        %v1641 = vrot.slane %v1639, 5
        %v1642 = vsel %vm1443, %v1637, %v1641
        %v1644 = vshrl.u32 %v1591, 16
        %v1646 = vrot.slane %v1644, 4
        %v1647 = vshll.u32 %v1591, 16
        %v1649 = vrot.slane %v1647, 5
        %v1650 = vor.u32 %v1646, %v1649
        %v1651 = vrot.slane %v1650, 4
        %v1653 = vshll.u32 %v1592, 16
        %v1655 = vrot.slane %v1653, 5
        %v1656 = vsel %vm1443, %v1651, %v1655
        %v1658 = vshrl.u32 %v1593, 16
        %v1660 = vrot.slane %v1658, 4
        %v1661 = vshll.u32 %v1593, 16
        %v1663 = vrot.slane %v1661, 5
        %v1664 = vor.u32 %v1660, %v1663
        %v1665 = vrot.slane %v1664, 4
        %v1667 = vshll.u32 %v1594, 16
        %v1669 = vrot.slane %v1667, 5
        %v1670 = vsel %vm1443, %v1665, %v1669
        %v1672 = vshrl.u32 %v1595, 16
        %v1674 = vrot.slane %v1672, 4
        %v1675 = vshll.u32 %v1595, 16
        %v1677 = vrot.slane %v1675, 5
        %v1678 = vor.u32 %v1674, %v1677
        %v1679 = vrot.slane %v1678, 4
        %v1681 = vshll.u32 %v1596, 16
        %v1683 = vrot.slane %v1681, 5
        %v1684 = vsel %vm1443, %v1679, %v1683
        %v1686 = vshrl.u32 %v1597, 16
        %v1688 = vrot.slane %v1686, 4
        %v1689 = vshll.u32 %v1597, 16
        %v1691 = vrot.slane %v1689, 5
        %v1692 = vor.u32 %v1688, %v1691
        %v1693 = vrot.slane %v1692, 4
        %v1695 = vshll.u32 %v1598, 16
        %v1697 = vrot.slane %v1695, 5
        %v1698 = vsel %vm1443, %v1693, %v1697
        %v1700 = vshrl.u32 %v1599, 16
        %v1702 = vrot.slane %v1700, 4
        %v1703 = vshll.u32 %v1599, 16
        %v1705 = vrot.slane %v1703, 5
        %v1706 = vor.u32 %v1702, %v1705
        %v1707 = vrot.slane %v1706, 4
        %v1709 = vshll.u32 %v1600, 16
        %v1711 = vrot.slane %v1709, 5
        %v1712 = vsel %vm1443, %v1707, %v1711
        %v1713 = vunpack.c.l.b16 %v1614
        %v1714 = vunpack.c.l.b16 %v1628
        %v1715 = vunpack.c.l.b16 %v1642
        %v1716 = vunpack.c.l.b16 %v1656
        %v1717 = vunpack.c.l.b16 %v1670
        %v1718 = vunpack.c.l.b16 %v1684
        %v1719 = vunpack.c.l.b16 %v1698
        %v1720 = vunpack.c.l.b16 %v1712
        %v1721 = vpack.c.b16 %v1714, %v1713
        %v1722 = vpack.c.b16 %v1716, %v1715
        %v1723 = vpack.c.b16 %v1718, %v1717
        %v1724 = vpack.c.b16 %v1720, %v1719
        %1725 = vrot.lane.b32.xlu0 %v1721, 16
        %v1726 = vpop.permute.xlu0 %1725
        %1727 = vrot.lane.b32.xlu0 %v1722, 16
        %v1728 = vpop.permute.xlu0 %1727
        %1729 = vrot.lane.b32.xlu0 %v1723, 16
        %v1730 = vpop.permute.xlu0 %1729
        %1731 = vrot.lane.b32.xlu0 %v1724, 16
        %v1732 = vpop.permute.xlu0 %1731
        %vm1737 = vcmask 195712
        %1738 = vst.msk [vmem:[#allocation3] sm:$0xff] %vm1737, %v1726
        %1739 = vst.msk [vmem:[#allocation3 + $0x8] sm:$0xff] %vm1737, %v1728
        %1740 = vst.msk [vmem:[#allocation3 + $0x10] sm:$0xff] %vm1737, %v1730
        %1741 = vst.msk [vmem:[#allocation3 + $0x18] sm:$0xff] %vm1737, %v1732
        %v1742 = vld [vmem:[%s1063] sm:$0xf]
        %v1743 = vld [vmem:[%s1063 + $0x8] sm:$0xf]
        %v1744 = vld [vmem:[%s1063 + $0x10] sm:$0xf]
        %v1745 = vld [vmem:[%s1063 + $0x18] sm:$0xf]
        %v1746 = vld [vmem:[%s1063 + $0x20] sm:$0xf]
        %v1747 = vld [vmem:[%s1063 + $0x28] sm:$0xf]
        %v1748 = vld [vmem:[%s1063 + $0x30] sm:$0xf]
        %v1749 = vld [vmem:[%s1063 + $0x38] sm:$0xf]
        %v1758 = vunpack.c.l.b16 %v1742
        %v1759 = vunpack.c.l.b16 %v1743
        %v1760 = vunpack.c.l.b16 %v1744
        %v1761 = vunpack.c.l.b16 %v1745
        %v1762 = vunpack.c.l.b16 %v1746
        %v1763 = vunpack.c.l.b16 %v1747
        %v1764 = vunpack.c.l.b16 %v1748
        %v1765 = vunpack.c.l.b16 %v1749
        %v1766 = vpack.c.b16 %v1759, %v1758
        %v1767 = vpack.c.b16 %v1761, %v1760
        %v1768 = vpack.c.b16 %v1763, %v1762
        %v1769 = vpack.c.b16 %v1765, %v1764
        %1770 = vrot.lane.b32.xlu0 %v1766, 24
        %v1771 = vpop.permute.xlu0 %1770
        %1772 = vrot.lane.b32.xlu0 %v1767, 24
        %v1773 = vpop.permute.xlu0 %1772
        %1774 = vrot.lane.b32.xlu0 %v1768, 24
        %v1775 = vpop.permute.xlu0 %1774
        %1776 = vrot.lane.b32.xlu0 %v1769, 24
        %v1777 = vpop.permute.xlu0 %1776
        %vm1782 = vcmask 261312
        %1783 = vst.msk [vmem:[#allocation3] sm:$0xff] %vm1782, %v1771
        %1784 = vst.msk [vmem:[#allocation3 + $0x8] sm:$0xff] %vm1782, %v1773
        %1785 = vst.msk [vmem:[#allocation3 + $0x10] sm:$0xff] %vm1782, %v1775
        %1786 = vst.msk [vmem:[#allocation3 + $0x18] sm:$0xff] %vm1782, %v1777
        %v1787 = vld [vmem:[%s923] sm:$0xf]
        %v1788 = vld [vmem:[%s923 + $0x4] sm:$0x1]
        %v1789 = vld [vmem:[%s923 + $0x8] sm:$0xf]
        %v1790 = vld [vmem:[%s923 + $0xc] sm:$0x1]
        %v1791 = vld [vmem:[%s923 + $0x10] sm:$0xf]
        %v1792 = vld [vmem:[%s923 + $0x14] sm:$0x1]
        %v1793 = vld [vmem:[%s923 + $0x18] sm:$0xf]
        %v1794 = vld [vmem:[%s923 + $0x1c] sm:$0x1]
        %v1795 = vld [vmem:[%s923 + $0x20] sm:$0xf]
        %v1796 = vld [vmem:[%s923 + $0x24] sm:$0x1]
        %v1797 = vld [vmem:[%s923 + $0x28] sm:$0xf]
        %v1798 = vld [vmem:[%s923 + $0x2c] sm:$0x1]
        %v1799 = vld [vmem:[%s923 + $0x30] sm:$0xf]
        %v1800 = vld [vmem:[%s923 + $0x34] sm:$0x1]
        %v1801 = vld [vmem:[%s923 + $0x38] sm:$0xf]
        %v1802 = vld [vmem:[%s923 + $0x3c] sm:$0x1]
        %v1804 = vshrl.u32 %v1787, 16
        %v1806 = vrot.slane %v1804, 4
        %v1807 = vshll.u32 %v1787, 16
        %v1809 = vrot.slane %v1807, 5
        %v1810 = vor.u32 %v1806, %v1809
        %v1811 = vrot.slane %v1810, 4
        %v1813 = vshll.u32 %v1788, 16
        %v1815 = vrot.slane %v1813, 5
        %v1816 = vsel %vm1443, %v1811, %v1815
        %v1818 = vshrl.u32 %v1789, 16
        %v1820 = vrot.slane %v1818, 4
        %v1821 = vshll.u32 %v1789, 16
        %v1823 = vrot.slane %v1821, 5
        %v1824 = vor.u32 %v1820, %v1823
        %v1825 = vrot.slane %v1824, 4
        %v1827 = vshll.u32 %v1790, 16
        %v1829 = vrot.slane %v1827, 5
        %v1830 = vsel %vm1443, %v1825, %v1829
        %v1832 = vshrl.u32 %v1791, 16
        %v1834 = vrot.slane %v1832, 4
        %v1835 = vshll.u32 %v1791, 16
        %v1837 = vrot.slane %v1835, 5
        %v1838 = vor.u32 %v1834, %v1837
        %v1839 = vrot.slane %v1838, 4
        %v1841 = vshll.u32 %v1792, 16
        %v1843 = vrot.slane %v1841, 5
        %v1844 = vsel %vm1443, %v1839, %v1843
        %v1846 = vshrl.u32 %v1793, 16
        %v1848 = vrot.slane %v1846, 4
        %v1849 = vshll.u32 %v1793, 16
        %v1851 = vrot.slane %v1849, 5
        %v1852 = vor.u32 %v1848, %v1851
        %v1853 = vrot.slane %v1852, 4
        %v1855 = vshll.u32 %v1794, 16
        %v1857 = vrot.slane %v1855, 5
        %v1858 = vsel %vm1443, %v1853, %v1857
        %v1860 = vshrl.u32 %v1795, 16
        %v1862 = vrot.slane %v1860, 4
        %v1863 = vshll.u32 %v1795, 16
        %v1865 = vrot.slane %v1863, 5
        %v1866 = vor.u32 %v1862, %v1865
        %v1867 = vrot.slane %v1866, 4
        %v1869 = vshll.u32 %v1796, 16
        %v1871 = vrot.slane %v1869, 5
        %v1872 = vsel %vm1443, %v1867, %v1871
        %v1874 = vshrl.u32 %v1797, 16
        %v1876 = vrot.slane %v1874, 4
        %v1877 = vshll.u32 %v1797, 16
        %v1879 = vrot.slane %v1877, 5
        %v1880 = vor.u32 %v1876, %v1879
        %v1881 = vrot.slane %v1880, 4
        %v1883 = vshll.u32 %v1798, 16
        %v1885 = vrot.slane %v1883, 5
        %v1886 = vsel %vm1443, %v1881, %v1885
        %v1888 = vshrl.u32 %v1799, 16
        %v1890 = vrot.slane %v1888, 4
        %v1891 = vshll.u32 %v1799, 16
        %v1893 = vrot.slane %v1891, 5
        %v1894 = vor.u32 %v1890, %v1893
        %v1895 = vrot.slane %v1894, 4
        %v1897 = vshll.u32 %v1800, 16
        %v1899 = vrot.slane %v1897, 5
        %v1900 = vsel %vm1443, %v1895, %v1899
        %v1902 = vshrl.u32 %v1801, 16
        %v1904 = vrot.slane %v1902, 4
        %v1905 = vshll.u32 %v1801, 16
        %v1907 = vrot.slane %v1905, 5
        %v1908 = vor.u32 %v1904, %v1907
        %v1909 = vrot.slane %v1908, 4
        %v1911 = vshll.u32 %v1802, 16
        %v1913 = vrot.slane %v1911, 5
        %v1914 = vsel %vm1443, %v1909, %v1913
        %v1915 = vunpack.c.l.b16 %v1816
        %v1916 = vunpack.c.l.b16 %v1830
        %v1917 = vunpack.c.l.b16 %v1844
        %v1918 = vunpack.c.l.b16 %v1858
        %v1919 = vunpack.c.l.b16 %v1872
        %v1920 = vunpack.c.l.b16 %v1886
        %v1921 = vunpack.c.l.b16 %v1900
        %v1922 = vunpack.c.l.b16 %v1914
        %v1923 = vpack.c.b16 %v1916, %v1915
        %v1924 = vpack.c.b16 %v1918, %v1917
        %v1925 = vpack.c.b16 %v1920, %v1919
        %v1926 = vpack.c.b16 %v1922, %v1921
        %1927 = vrot.lane.b32.xlu0 %v1923, 32
        %v1928 = vpop.permute.xlu0 %1927
        %1929 = vrot.lane.b32.xlu0 %v1924, 32
        %v1930 = vpop.permute.xlu0 %1929
        %1931 = vrot.lane.b32.xlu0 %v1925, 32
        %v1932 = vpop.permute.xlu0 %1931
        %1933 = vrot.lane.b32.xlu0 %v1926, 32
        %v1934 = vpop.permute.xlu0 %1933
        %vm1939 = vcmask 326912
        %1940 = vst.msk [vmem:[#allocation3] sm:$0xff] %vm1939, %v1928
        %1941 = vst.msk [vmem:[#allocation3 + $0x8] sm:$0xff] %vm1939, %v1930
        %1942 = vst.msk [vmem:[#allocation3 + $0x10] sm:$0xff] %vm1939, %v1932
        %1943 = vst.msk [vmem:[#allocation3 + $0x18] sm:$0xff] %vm1939, %v1934
        %v1944 = vld [vmem:[%s1063] sm:$0xf]
        %v1945 = vld [vmem:[%s1063 + $0x4] sm:$0x1]
        %v1946 = vld [vmem:[%s1063 + $0x8] sm:$0xf]
        %v1947 = vld [vmem:[%s1063 + $0xc] sm:$0x1]
        %v1948 = vld [vmem:[%s1063 + $0x10] sm:$0xf]
        %v1949 = vld [vmem:[%s1063 + $0x14] sm:$0x1]
        %v1950 = vld [vmem:[%s1063 + $0x18] sm:$0xf]
        %v1951 = vld [vmem:[%s1063 + $0x1c] sm:$0x1]
        %v1952 = vld [vmem:[%s1063 + $0x20] sm:$0xf]
        %v1953 = vld [vmem:[%s1063 + $0x24] sm:$0x1]
        %v1954 = vld [vmem:[%s1063 + $0x28] sm:$0xf]
        %v1955 = vld [vmem:[%s1063 + $0x2c] sm:$0x1]
        %v1956 = vld [vmem:[%s1063 + $0x30] sm:$0xf]
        %v1957 = vld [vmem:[%s1063 + $0x34] sm:$0x1]
        %v1958 = vld [vmem:[%s1063 + $0x38] sm:$0xf]
        %v1959 = vld [vmem:[%s1063 + $0x3c] sm:$0x1]
        %v1961 = vshrl.u32 %v1944, 16
        %v1963 = vrot.slane %v1961, 4
        %v1964 = vshll.u32 %v1944, 16
        %v1966 = vrot.slane %v1964, 5
        %v1967 = vor.u32 %v1963, %v1966
        %v1968 = vrot.slane %v1967, 4
        %v1970 = vshll.u32 %v1945, 16
        %v1972 = vrot.slane %v1970, 5
        %v1973 = vsel %vm1443, %v1968, %v1972
        %v1975 = vshrl.u32 %v1946, 16
        %v1977 = vrot.slane %v1975, 4
        %v1978 = vshll.u32 %v1946, 16
        %v1980 = vrot.slane %v1978, 5
        %v1981 = vor.u32 %v1977, %v1980
        %v1982 = vrot.slane %v1981, 4
        %v1984 = vshll.u32 %v1947, 16
        %v1986 = vrot.slane %v1984, 5
        %v1987 = vsel %vm1443, %v1982, %v1986
        %v1989 = vshrl.u32 %v1948, 16
        %v1991 = vrot.slane %v1989, 4
        %v1992 = vshll.u32 %v1948, 16
        %v1994 = vrot.slane %v1992, 5
        %v1995 = vor.u32 %v1991, %v1994
        %v1996 = vrot.slane %v1995, 4
        %v1998 = vshll.u32 %v1949, 16
        %v2000 = vrot.slane %v1998, 5
        %v2001 = vsel %vm1443, %v1996, %v2000
        %v2003 = vshrl.u32 %v1950, 16
        %v2005 = vrot.slane %v2003, 4
        %v2006 = vshll.u32 %v1950, 16
        %v2008 = vrot.slane %v2006, 5
        %v2009 = vor.u32 %v2005, %v2008
        %v2010 = vrot.slane %v2009, 4
        %v2012 = vshll.u32 %v1951, 16
        %v2014 = vrot.slane %v2012, 5
        %v2015 = vsel %vm1443, %v2010, %v2014
        %v2017 = vshrl.u32 %v1952, 16
        %v2019 = vrot.slane %v2017, 4
        %v2020 = vshll.u32 %v1952, 16
        %v2022 = vrot.slane %v2020, 5
        %v2023 = vor.u32 %v2019, %v2022
        %v2024 = vrot.slane %v2023, 4
        %v2026 = vshll.u32 %v1953, 16
        %v2028 = vrot.slane %v2026, 5
        %v2029 = vsel %vm1443, %v2024, %v2028
        %v2031 = vshrl.u32 %v1954, 16
        %v2033 = vrot.slane %v2031, 4
        %v2034 = vshll.u32 %v1954, 16
        %v2036 = vrot.slane %v2034, 5
        %v2037 = vor.u32 %v2033, %v2036
        %v2038 = vrot.slane %v2037, 4
        %v2040 = vshll.u32 %v1955, 16
        %v2042 = vrot.slane %v2040, 5
        %v2043 = vsel %vm1443, %v2038, %v2042
        %v2045 = vshrl.u32 %v1956, 16
        %v2047 = vrot.slane %v2045, 4
        %v2048 = vshll.u32 %v1956, 16
        %v2050 = vrot.slane %v2048, 5
        %v2051 = vor.u32 %v2047, %v2050
        %v2052 = vrot.slane %v2051, 4
        %v2054 = vshll.u32 %v1957, 16
        %v2056 = vrot.slane %v2054, 5
        %v2057 = vsel %vm1443, %v2052, %v2056
        %v2059 = vshrl.u32 %v1958, 16
        %v2061 = vrot.slane %v2059, 4
        %v2062 = vshll.u32 %v1958, 16
        %v2064 = vrot.slane %v2062, 5
        %v2065 = vor.u32 %v2061, %v2064
        %v2066 = vrot.slane %v2065, 4
        %v2068 = vshll.u32 %v1959, 16
        %v2070 = vrot.slane %v2068, 5
        %v2071 = vsel %vm1443, %v2066, %v2070
        %v2072 = vunpack.c.l.b16 %v1973
        %v2073 = vunpack.c.l.b16 %v1987
        %v2074 = vunpack.c.l.b16 %v2001
        %v2075 = vunpack.c.l.b16 %v2015
        %v2076 = vunpack.c.l.b16 %v2029
        %v2077 = vunpack.c.l.b16 %v2043
        %v2078 = vunpack.c.l.b16 %v2057
        %v2079 = vunpack.c.l.b16 %v2071
        %v2080 = vpack.c.b16 %v2073, %v2072
        %v2081 = vpack.c.b16 %v2075, %v2074
        %v2082 = vpack.c.b16 %v2077, %v2076
        %v2083 = vpack.c.b16 %v2079, %v2078
        %2084 = vrot.lane.b32.xlu0 %v2080, 40
        %v2085 = vpop.permute.xlu0 %2084
        %2086 = vrot.lane.b32.xlu0 %v2081, 40
        %v2087 = vpop.permute.xlu0 %2086
        %2088 = vrot.lane.b32.xlu0 %v2082, 40
        %v2089 = vpop.permute.xlu0 %2088
        %2090 = vrot.lane.b32.xlu0 %v2083, 40
        %v2091 = vpop.permute.xlu0 %2090
        %vm2096 = vcmask 392512
        %2097 = vst.msk [vmem:[#allocation3] sm:$0xff] %vm2096, %v2085
        %2098 = vst.msk [vmem:[#allocation3 + $0x8] sm:$0xff] %vm2096, %v2087
        %2099 = vst.msk [vmem:[#allocation3 + $0x10] sm:$0xff] %vm2096, %v2089
        %2100 = vst.msk [vmem:[#allocation3 + $0x18] sm:$0xff] %vm2096, %v2091
        %v2101 = vld [vmem:[%s1337] sm:$0xf]
        %v2102 = vld [vmem:[%s1337 + $0x8] sm:$0xf]
        %v2103 = vld [vmem:[%s1337 + $0x10] sm:$0xf]
        %v2104 = vld [vmem:[%s1337 + $0x18] sm:$0xf]
        %v2105 = vld [vmem:[%s1337 + $0x20] sm:$0xf]
        %v2106 = vld [vmem:[%s1337 + $0x28] sm:$0xf]
        %v2107 = vld [vmem:[%s1337 + $0x30] sm:$0xf]
        %v2108 = vld [vmem:[%s1337 + $0x38] sm:$0xf]
        %v2117 = vunpack.c.l.b16 %v2101
        %v2118 = vunpack.c.l.b16 %v2102
        %v2119 = vunpack.c.l.b16 %v2103
        %v2120 = vunpack.c.l.b16 %v2104
        %v2121 = vunpack.c.l.b16 %v2105
        %v2122 = vunpack.c.l.b16 %v2106
        %v2123 = vunpack.c.l.b16 %v2107
        %v2124 = vunpack.c.l.b16 %v2108
        %v2125 = vpack.c.b16 %v2118, %v2117
        %v2126 = vpack.c.b16 %v2120, %v2119
        %v2127 = vpack.c.b16 %v2122, %v2121
        %v2128 = vpack.c.b16 %v2124, %v2123
        %2129 = vrot.lane.b32.xlu0 %v2125, 48
        %v2130 = vpop.permute.xlu0 %2129
        %2131 = vrot.lane.b32.xlu0 %v2126, 48
        %v2132 = vpop.permute.xlu0 %2131
        %2133 = vrot.lane.b32.xlu0 %v2127, 48
        %v2134 = vpop.permute.xlu0 %2133
        %2135 = vrot.lane.b32.xlu0 %v2128, 48
        %v2136 = vpop.permute.xlu0 %2135
        %vm2141 = vcmask 458112
        %2142 = vst.msk [vmem:[#allocation3] sm:$0xff] %vm2141, %v2130
        %2143 = vst.msk [vmem:[#allocation3 + $0x8] sm:$0xff] %vm2141, %v2132
        %2144 = vst.msk [vmem:[#allocation3 + $0x10] sm:$0xff] %vm2141, %v2134
        %2145 = vst.msk [vmem:[#allocation3 + $0x18] sm:$0xff] %vm2141, %v2136
        %v2146 = vld [vmem:[%s1200] sm:$0xf]
        %v2147 = vld [vmem:[%s1200 + $0x4] sm:$0x1]
        %v2148 = vld [vmem:[%s1200 + $0x8] sm:$0xf]
        %v2149 = vld [vmem:[%s1200 + $0xc] sm:$0x1]
        %v2150 = vld [vmem:[%s1200 + $0x10] sm:$0xf]
        %v2151 = vld [vmem:[%s1200 + $0x14] sm:$0x1]
        %v2152 = vld [vmem:[%s1200 + $0x18] sm:$0xf]
        %v2153 = vld [vmem:[%s1200 + $0x1c] sm:$0x1]
        %v2154 = vld [vmem:[%s1200 + $0x20] sm:$0xf]
        %v2155 = vld [vmem:[%s1200 + $0x24] sm:$0x1]
        %v2156 = vld [vmem:[%s1200 + $0x28] sm:$0xf]
        %v2157 = vld [vmem:[%s1200 + $0x2c] sm:$0x1]
        %v2158 = vld [vmem:[%s1200 + $0x30] sm:$0xf]
        %v2159 = vld [vmem:[%s1200 + $0x34] sm:$0x1]
        %v2160 = vld [vmem:[%s1200 + $0x38] sm:$0xf]
        %v2161 = vld [vmem:[%s1200 + $0x3c] sm:$0x1]
        %v2163 = vshrl.u32 %v2146, 16
        %v2165 = vrot.slane %v2163, 4
        %v2166 = vshll.u32 %v2146, 16
        %v2168 = vrot.slane %v2166, 5
        %v2169 = vor.u32 %v2165, %v2168
        %v2170 = vrot.slane %v2169, 4
        %v2172 = vshll.u32 %v2147, 16
        %v2174 = vrot.slane %v2172, 5
        %v2175 = vsel %vm1443, %v2170, %v2174
        %v2177 = vshrl.u32 %v2148, 16
        %v2179 = vrot.slane %v2177, 4
        %v2180 = vshll.u32 %v2148, 16
        %v2182 = vrot.slane %v2180, 5
        %v2183 = vor.u32 %v2179, %v2182
        %v2184 = vrot.slane %v2183, 4
        %v2186 = vshll.u32 %v2149, 16
        %v2188 = vrot.slane %v2186, 5
        %v2189 = vsel %vm1443, %v2184, %v2188
        %v2191 = vshrl.u32 %v2150, 16
        %v2193 = vrot.slane %v2191, 4
        %v2194 = vshll.u32 %v2150, 16
        %v2196 = vrot.slane %v2194, 5
        %v2197 = vor.u32 %v2193, %v2196
        %v2198 = vrot.slane %v2197, 4
        %v2200 = vshll.u32 %v2151, 16
        %v2202 = vrot.slane %v2200, 5
        %v2203 = vsel %vm1443, %v2198, %v2202
        %v2205 = vshrl.u32 %v2152, 16
        %v2207 = vrot.slane %v2205, 4
        %v2208 = vshll.u32 %v2152, 16
        %v2210 = vrot.slane %v2208, 5
        %v2211 = vor.u32 %v2207, %v2210
        %v2212 = vrot.slane %v2211, 4
        %v2214 = vshll.u32 %v2153, 16
        %v2216 = vrot.slane %v2214, 5
        %v2217 = vsel %vm1443, %v2212, %v2216
        %v2219 = vshrl.u32 %v2154, 16
        %v2221 = vrot.slane %v2219, 4
        %v2222 = vshll.u32 %v2154, 16
        %v2224 = vrot.slane %v2222, 5
        %v2225 = vor.u32 %v2221, %v2224
        %v2226 = vrot.slane %v2225, 4
        %v2228 = vshll.u32 %v2155, 16
        %v2230 = vrot.slane %v2228, 5
        %v2231 = vsel %vm1443, %v2226, %v2230
        %v2233 = vshrl.u32 %v2156, 16
        %v2235 = vrot.slane %v2233, 4
        %v2236 = vshll.u32 %v2156, 16
        %v2238 = vrot.slane %v2236, 5
        %v2239 = vor.u32 %v2235, %v2238
        %v2240 = vrot.slane %v2239, 4
        %v2242 = vshll.u32 %v2157, 16
        %v2244 = vrot.slane %v2242, 5
        %v2245 = vsel %vm1443, %v2240, %v2244
        %v2247 = vshrl.u32 %v2158, 16
        %v2249 = vrot.slane %v2247, 4
        %v2250 = vshll.u32 %v2158, 16
        %v2252 = vrot.slane %v2250, 5
        %v2253 = vor.u32 %v2249, %v2252
        %v2254 = vrot.slane %v2253, 4
        %v2256 = vshll.u32 %v2159, 16
        %v2258 = vrot.slane %v2256, 5
        %v2259 = vsel %vm1443, %v2254, %v2258
        %v2261 = vshrl.u32 %v2160, 16
        %v2263 = vrot.slane %v2261, 4
        %v2264 = vshll.u32 %v2160, 16
        %v2266 = vrot.slane %v2264, 5
        %v2267 = vor.u32 %v2263, %v2266
        %v2268 = vrot.slane %v2267, 4
        %v2270 = vshll.u32 %v2161, 16
        %v2272 = vrot.slane %v2270, 5
        %v2273 = vsel %vm1443, %v2268, %v2272
        %v2274 = vunpack.c.l.b16 %v2175
        %v2275 = vunpack.c.l.b16 %v2189
        %v2276 = vunpack.c.l.b16 %v2203
        %v2277 = vunpack.c.l.b16 %v2217
        %v2278 = vunpack.c.l.b16 %v2231
        %v2279 = vunpack.c.l.b16 %v2245
        %v2280 = vunpack.c.l.b16 %v2259
        %v2281 = vunpack.c.l.b16 %v2273
        %v2282 = vpack.c.b16 %v2275, %v2274
        %v2283 = vpack.c.b16 %v2277, %v2276
        %v2284 = vpack.c.b16 %v2279, %v2278
        %v2285 = vpack.c.b16 %v2281, %v2280
        %2286 = vrot.lane.b32.xlu0 %v2282, 56
        %v2287 = vpop.permute.xlu0 %2286
        %2288 = vrot.lane.b32.xlu0 %v2283, 56
        %v2289 = vpop.permute.xlu0 %2288
        %2290 = vrot.lane.b32.xlu0 %v2284, 56
        %v2291 = vpop.permute.xlu0 %2290
        %2292 = vrot.lane.b32.xlu0 %v2285, 56
        %v2293 = vpop.permute.xlu0 %2292
        %vm2298 = vcmask 523712
        %2299 = vst.msk [vmem:[#allocation3] sm:$0xff] %vm2298, %v2287
        %2300 = vst.msk [vmem:[#allocation3 + $0x8] sm:$0xff] %vm2298, %v2289
        %2301 = vst.msk [vmem:[#allocation3 + $0x10] sm:$0xff] %vm2298, %v2291
        %2302 = vst.msk [vmem:[#allocation3 + $0x18] sm:$0xff] %vm2298, %v2293
        %v2303 = vld [vmem:[%s1337] sm:$0xf]
        %v2304 = vld [vmem:[%s1337 + $0x4] sm:$0x1]
        %v2305 = vld [vmem:[%s1337 + $0x8] sm:$0xf]
        %v2306 = vld [vmem:[%s1337 + $0xc] sm:$0x1]
        %v2307 = vld [vmem:[%s1337 + $0x10] sm:$0xf]
        %v2308 = vld [vmem:[%s1337 + $0x14] sm:$0x1]
        %v2309 = vld [vmem:[%s1337 + $0x18] sm:$0xf]
        %v2310 = vld [vmem:[%s1337 + $0x1c] sm:$0x1]
        %v2311 = vld [vmem:[%s1337 + $0x20] sm:$0xf]
        %v2312 = vld [vmem:[%s1337 + $0x24] sm:$0x1]
        %v2313 = vld [vmem:[%s1337 + $0x28] sm:$0xf]
        %v2314 = vld [vmem:[%s1337 + $0x2c] sm:$0x1]
        %v2315 = vld [vmem:[%s1337 + $0x30] sm:$0xf]
        %v2316 = vld [vmem:[%s1337 + $0x34] sm:$0x1]
        %v2317 = vld [vmem:[%s1337 + $0x38] sm:$0xf]
        %v2318 = vld [vmem:[%s1337 + $0x3c] sm:$0x1]
        %v2320 = vshrl.u32 %v2303, 16
        %v2322 = vrot.slane %v2320, 4
        %v2323 = vshll.u32 %v2303, 16
        %v2325 = vrot.slane %v2323, 5
        %v2326 = vor.u32 %v2322, %v2325
        %v2327 = vrot.slane %v2326, 4
        %v2329 = vshll.u32 %v2304, 16
        %v2331 = vrot.slane %v2329, 5
        %v2332 = vsel %vm1443, %v2327, %v2331
        %v2334 = vshrl.u32 %v2305, 16
        %v2336 = vrot.slane %v2334, 4
        %v2337 = vshll.u32 %v2305, 16
        %v2339 = vrot.slane %v2337, 5
        %v2340 = vor.u32 %v2336, %v2339
        %v2341 = vrot.slane %v2340, 4
        %v2343 = vshll.u32 %v2306, 16
        %v2345 = vrot.slane %v2343, 5
        %v2346 = vsel %vm1443, %v2341, %v2345
        %v2348 = vshrl.u32 %v2307, 16
        %v2350 = vrot.slane %v2348, 4
        %v2351 = vshll.u32 %v2307, 16
        %v2353 = vrot.slane %v2351, 5
        %v2354 = vor.u32 %v2350, %v2353
        %v2355 = vrot.slane %v2354, 4
        %v2357 = vshll.u32 %v2308, 16
        %v2359 = vrot.slane %v2357, 5
        %v2360 = vsel %vm1443, %v2355, %v2359
        %v2362 = vshrl.u32 %v2309, 16
        %v2364 = vrot.slane %v2362, 4
        %v2365 = vshll.u32 %v2309, 16
        %v2367 = vrot.slane %v2365, 5
        %v2368 = vor.u32 %v2364, %v2367
        %v2369 = vrot.slane %v2368, 4
        %v2371 = vshll.u32 %v2310, 16
        %v2373 = vrot.slane %v2371, 5
        %v2374 = vsel %vm1443, %v2369, %v2373
        %v2376 = vshrl.u32 %v2311, 16
        %v2378 = vrot.slane %v2376, 4
        %v2379 = vshll.u32 %v2311, 16
        %v2381 = vrot.slane %v2379, 5
        %v2382 = vor.u32 %v2378, %v2381
        %v2383 = vrot.slane %v2382, 4
        %v2385 = vshll.u32 %v2312, 16
        %v2387 = vrot.slane %v2385, 5
        %v2388 = vsel %vm1443, %v2383, %v2387
        %v2390 = vshrl.u32 %v2313, 16
        %v2392 = vrot.slane %v2390, 4
        %v2393 = vshll.u32 %v2313, 16
        %v2395 = vrot.slane %v2393, 5
        %v2396 = vor.u32 %v2392, %v2395
        %v2397 = vrot.slane %v2396, 4
        %v2399 = vshll.u32 %v2314, 16
        %v2401 = vrot.slane %v2399, 5
        %v2402 = vsel %vm1443, %v2397, %v2401
        %v2404 = vshrl.u32 %v2315, 16
        %v2406 = vrot.slane %v2404, 4
        %v2407 = vshll.u32 %v2315, 16
        %v2409 = vrot.slane %v2407, 5
        %v2410 = vor.u32 %v2406, %v2409
        %v2411 = vrot.slane %v2410, 4
        %v2413 = vshll.u32 %v2316, 16
        %v2415 = vrot.slane %v2413, 5
        %v2416 = vsel %vm1443, %v2411, %v2415
        %v2418 = vshrl.u32 %v2317, 16
        %v2420 = vrot.slane %v2418, 4
        %v2421 = vshll.u32 %v2317, 16
        %v2423 = vrot.slane %v2421, 5
        %v2424 = vor.u32 %v2420, %v2423
        %v2425 = vrot.slane %v2424, 4
        %v2427 = vshll.u32 %v2318, 16
        %v2429 = vrot.slane %v2427, 5
        %v2430 = vsel %vm1443, %v2425, %v2429
        %v2431 = vunpack.c.l.b16 %v2332
        %v2432 = vunpack.c.l.b16 %v2346
        %v2433 = vunpack.c.l.b16 %v2360
        %v2434 = vunpack.c.l.b16 %v2374
        %v2435 = vunpack.c.l.b16 %v2388
        %v2436 = vunpack.c.l.b16 %v2402
        %v2437 = vunpack.c.l.b16 %v2416
        %v2438 = vunpack.c.l.b16 %v2430
        %v2439 = vpack.c.b16 %v2432, %v2431
        %v2440 = vpack.c.b16 %v2434, %v2433
        %v2441 = vpack.c.b16 %v2436, %v2435
        %v2442 = vpack.c.b16 %v2438, %v2437
        %2443 = vrot.lane.b32.xlu0 %v2439, 64
        %v2444 = vpop.permute.xlu0 %2443
        %2445 = vrot.lane.b32.xlu0 %v2440, 64
        %v2446 = vpop.permute.xlu0 %2445
        %2447 = vrot.lane.b32.xlu0 %v2441, 64
        %v2448 = vpop.permute.xlu0 %2447
        %2449 = vrot.lane.b32.xlu0 %v2442, 64
        %v2450 = vpop.permute.xlu0 %2449
        %vm2455 = vcmask 589312
        %2456 = vst.msk [vmem:[#allocation3] sm:$0xff] %vm2455, %v2444
        %2457 = vst.msk [vmem:[#allocation3 + $0x8] sm:$0xff] %vm2455, %v2446
        %2458 = vst.msk [vmem:[#allocation3 + $0x10] sm:$0xff] %vm2455, %v2448
        %2459 = vst.msk [vmem:[#allocation3 + $0x18] sm:$0xff] %vm2455, %v2450
        %v2460 = vld [vmem:[#allocation3] sm:$0xff]
        %v2461 = vld [vmem:[#allocation3 + $0x8] sm:$0xff]
        %v2462 = vld [vmem:[#allocation3 + $0x10] sm:$0xff]
        %v2463 = vld [vmem:[#allocation3 + $0x18] sm:$0xff]
        %v2464 = vld [vmem:[%s4] sm:$0xf]
        %v2465 = vld [vmem:[%s4 + $0x4] sm:$0xf]
        %v2466 = vld [vmem:[%s4 + $0x8] sm:$0xf]
        %v2467 = vld [vmem:[%s4 + $0xc] sm:$0xf]
        %v2468 = vld [vmem:[%s4 + $0x10] sm:$0xf]
        %v2469 = vld [vmem:[%s4 + $0x14] sm:$0xf]
        %v2470 = vld [vmem:[%s4 + $0x18] sm:$0xf]
        %v2471 = vld [vmem:[%s4 + $0x1c] sm:$0xf]
        %v2472 = vld [vmem:[%s4 + $0x20] sm:$0xf]
        %v2473 = vld [vmem:[%s5] sm:$0x1]
        %v2475 = vlaneseq
        %v2476 = vshrl.u32 %v2475, 7
        %v2477 = vsub.s32 0, %v2476
        %v2478 = vrot.slane %v2473, %v2477
        %v2489 = vunpack.c.l.b16 %v2464
        %v2490 = vunpack.c.l.b16 %v2465
        %v2491 = vunpack.c.l.b16 %v2466
        %v2492 = vunpack.c.l.b16 %v2467
        %v2493 = vunpack.c.l.b16 %v2468
        %v2494 = vunpack.c.l.b16 %v2469
        %v2495 = vunpack.c.l.b16 %v2470
        %v2496 = vunpack.c.l.b16 %v2471
        %v2497 = vunpack.c.l.b16 %v2472
        %v2498 = vpack.c.b16 %v2490, %v2489
        %v2499 = vpack.c.b16 %v2492, %v2491
        %v2500 = vpack.c.b16 %v2494, %v2493
        %v2501 = vpack.c.b16 %v2496, %v2495
        %v2502 = vpack.c.b16 %v2497, %v2497
        %vm2507 = vcmask 588800
        %v2509 = vsel %vm2507, %v2460, 0
        %v2512 = vsel %vm2507, %v2461, 0
        %v2515 = vsel %vm2507, %v2462, 0
        %v2518 = vsel %vm2507, %v2463, 0
        %vm2520 = vcmask 1043456
        %v2522 = vsel %vm2520, %v2502, 0
        %2524 = vmatprep.subr.bf16.mxu0 0
        %2525 = vmatpush1.bf16.msra.mxu0 %v2498
        %2526 = vmatprep.subr.bf16.mxu0 0
        %2527 = vmatpush1.bf16.msra.mxu0 %v2499
        %2528 = vmatprep.subr.bf16.mxu0 0
        %2529 = vmatpush1.bf16.msra.mxu0 %v2500
        %2530 = vmatprep.subr.bf16.mxu0 0
        %2531 = vmatpush1.bf16.msra.mxu0 %v2501
        %2532 = vmatprep.subr.bf16.mxu0 0
        %2533 = vmatpush1.bf16.msra.mxu0 %v2522
        %2534 = vmatprep.subr.bf16.mxu0 0
        %2535 = vmatpush1.bf16.msra.mxu0 0
        %2536 = vmatprep.subr.bf16.mxu0 0
        %2537 = vmatpush1.bf16.msra.mxu0 0
        %2538 = vmatprep.subr.bf16.mxu0 0
        %2539 = vmatpush1.bf16.msra.mxu0 0
        %2540 = vmatprep.subr.bf16.mxu0 0
        %2541 = vmatpush1.bf16.msra.mxu0 0
        %2542 = vmatprep.subr.bf16.mxu0 0
        %2543 = vmatpush1.bf16.msra.mxu0 0
        %2544 = vmatprep.subr.bf16.mxu0 0
        %2545 = vmatpush1.bf16.msra.mxu0 0
        %2546 = vmatprep.subr.bf16.mxu0 0
        %2547 = vmatpush1.bf16.msra.mxu0 0
        %2548 = vmatprep.subr.bf16.mxu0 0
        %2549 = vmatpush1.bf16.msra.mxu0 0
        %2550 = vmatprep.subr.bf16.mxu0 0
        %2551 = vmatpush1.bf16.msra.mxu0 0
        %2552 = vmatprep.subr.bf16.mxu0 0
        %2553 = vmatpush1.bf16.msra.mxu0 0
        %2554 = vmatprep.subr.bf16.mxu0 0
        %2555 = vmatpush1.bf16.msra.mxu0 0
        %2556 = vmatprep.mubr.bf16.mxu0 0
        %2557 = vmatmul.mubr.bf16.gmra.mrb[0].mxu0 %v2509
        %v2558 = vpop.f32.mrb[0].mxu0
        %v2559 = vadd.f32 %v2478, %v2558
        %v2560 = vpop.f32.mrb[0].mxu0
        %v2561 = vpop.f32.mrb[0].mxu0
        %v2562 = vadd.f32 %v2478, %v2561
        %v2563 = vpop.f32.mrb[0].mxu0
        %2564 = vmatprep.mubr.bf16.mxu0 0
        %2565 = vmatmul.mubr.bf16.gmra.mrb[0].mxu0 %v2512
        %v2566 = vpop.f32.mrb[0].mxu0
        %v2567 = vadd.f32 %v2478, %v2566
        %v2568 = vpop.f32.mrb[0].mxu0
        %v2569 = vpop.f32.mrb[0].mxu0
        %v2570 = vadd.f32 %v2478, %v2569
        %v2571 = vpop.f32.mrb[0].mxu0
        %2572 = vmatprep.mubr.bf16.mxu0 0
        %2573 = vmatmul.mubr.bf16.gmra.mrb[0].mxu0 %v2515
        %v2574 = vpop.f32.mrb[0].mxu0
        %v2575 = vadd.f32 %v2478, %v2574
        %v2576 = vpop.f32.mrb[0].mxu0
        %v2577 = vpop.f32.mrb[0].mxu0
        %v2578 = vadd.f32 %v2478, %v2577
        %v2579 = vpop.f32.mrb[0].mxu0
        %2580 = vmatprep.mubr.bf16.mxu0 0
        %2581 = vmatmul.mubr.bf16.gmra.mrb[0].mxu0 %v2518
        %v2582 = vpop.f32.mrb[0].mxu0
        %v2583 = vadd.f32 %v2478, %v2582
        %v2584 = vpop.f32.mrb[0].mxu0
        %v2585 = vpop.f32.mrb[0].mxu0
        %v2586 = vadd.f32 %v2478, %v2585
        %v2587 = vpop.f32.mrb[0].mxu0
        %2588 = vdwg.mxu0
        %v2589 = vmax.f32 %v2559, 0.0
        %v2590 = vmax.f32 %v2562, 0.0
        %v2591 = vmax.f32 %v2567, 0.0
        %v2592 = vmax.f32 %v2570, 0.0
        %v2593 = vmax.f32 %v2575, 0.0
        %v2594 = vmax.f32 %v2578, 0.0
        %v2595 = vmax.f32 %v2583, 0.0
        %v2596 = vmax.f32 %v2586, 0.0
        %vm2597 = vcmask 125952
        %2598 = vst.msk [vmem:[#allocation4] sm:$0xf] %vm2597, 0
        %vm2599 = vcmask 122880
        %2600 = vst.msk [vmem:[#allocation4 + $0x4] sm:$0x1] %vm2599, 0
        %2601 = vst.msk [vmem:[#allocation4 + $0x8] sm:$0xf] %vm2597, 0
        %2602 = vst.msk [vmem:[#allocation4 + $0xc] sm:$0x1] %vm2599, 0
        %2603 = vst.msk [vmem:[#allocation4 + $0x10] sm:$0xf] %vm2597, 0
        %2604 = vst.msk [vmem:[#allocation4 + $0x14] sm:$0x1] %vm2599, 0
        %2605 = vst.msk [vmem:[#allocation4 + $0x18] sm:$0xf] %vm2597, 0
        %2606 = vst.msk [vmem:[#allocation4 + $0x1c] sm:$0x1] %vm2599, 0
        %2607 = vst.msk [vmem:[#allocation4 + $0x20] sm:$0xf] %vm2597, 0
        %2608 = vst.msk [vmem:[#allocation4 + $0x24] sm:$0x1] %vm2599, 0
        %2609 = vst.msk [vmem:[#allocation4 + $0x28] sm:$0xf] %vm2597, 0
        %2610 = vst.msk [vmem:[#allocation4 + $0x2c] sm:$0x1] %vm2599, 0
        %2611 = vst.msk [vmem:[#allocation4 + $0x30] sm:$0xf] %vm2597, 0
        %2612 = vst.msk [vmem:[#allocation4 + $0x34] sm:$0x1] %vm2599, 0
        %2613 = vst.msk [vmem:[#allocation4 + $0x38] sm:$0xf] %vm2597, 0
        %2614 = vst.msk [vmem:[#allocation4 + $0x3c] sm:$0x1] %vm2599, 0
        %2615 = vst.msk [vmem:[#allocation4 + $0x40] sm:$0xf] %vm2597, 0
        %2616 = vst.msk [vmem:[#allocation4 + $0x44] sm:$0x1] %vm2599, 0
        %2617 = vst.msk [vmem:[#allocation4 + $0x48] sm:$0xf] %vm2597, 0
        %2618 = vst.msk [vmem:[#allocation4 + $0x4c] sm:$0x1] %vm2599, 0
        %v2619 = vpack.c.bf16 %v2589, %v2589
        %v2620 = vpack.c.bf16 %v2590, %v2590
        %v2621 = vpack.c.bf16 %v2591, %v2591
        %v2622 = vpack.c.bf16 %v2592, %v2592
        %v2623 = vpack.c.bf16 %v2593, %v2593
        %v2624 = vpack.c.bf16 %v2594, %v2594
        %v2625 = vpack.c.bf16 %v2595, %v2595
        %v2626 = vpack.c.bf16 %v2596, %v2596
        %v2635 = vunpack.c.l.b16 %v2619
        %v2636 = vunpack.c.l.b16 %v2620
        %v2637 = vunpack.c.l.b16 %v2621
        %v2638 = vunpack.c.l.b16 %v2622
        %v2639 = vunpack.c.l.b16 %v2623
        %v2640 = vunpack.c.l.b16 %v2624
        %v2641 = vunpack.c.l.b16 %v2625
        %v2642 = vunpack.c.l.b16 %v2626
        %v2643 = vpack.c.b16 %v2635, %v2635
        %v2644 = vpack.c.b16 %v2636, %v2636
        %v2645 = vpack.c.b16 %v2637, %v2637
        %v2646 = vpack.c.b16 %v2638, %v2638
        %v2647 = vpack.c.b16 %v2639, %v2639
        %v2648 = vpack.c.b16 %v2640, %v2640
        %v2649 = vpack.c.b16 %v2641, %v2641
        %v2650 = vpack.c.b16 %v2642, %v2642
        %v2652 = vshrl.u32 %v2643, 16
        %v2654 = vrot.slane %v2652, 7
        %v2655 = vshll.u32 %v2643, 16
        %v2657 = vor.u32 %v2654, %v2655
        %v2658 = vrot.slane %v2654, 4
        %v2660 = vshrl.u32 %v2644, 16
        %v2662 = vrot.slane %v2660, 7
        %v2663 = vshll.u32 %v2644, 16
        %v2665 = vor.u32 %v2662, %v2663
        %v2666 = vrot.slane %v2662, 4
        %v2668 = vshrl.u32 %v2645, 16
        %v2670 = vrot.slane %v2668, 7
        %v2671 = vshll.u32 %v2645, 16
        %v2673 = vor.u32 %v2670, %v2671
        %v2674 = vrot.slane %v2670, 4
        %v2676 = vshrl.u32 %v2646, 16
        %v2678 = vrot.slane %v2676, 7
        %v2679 = vshll.u32 %v2646, 16
        %v2681 = vor.u32 %v2678, %v2679
        %v2682 = vrot.slane %v2678, 4
        %v2684 = vshrl.u32 %v2647, 16
        %v2686 = vrot.slane %v2684, 7
        %v2687 = vshll.u32 %v2647, 16
        %v2689 = vor.u32 %v2686, %v2687
        %v2690 = vrot.slane %v2686, 4
        %v2692 = vshrl.u32 %v2648, 16
        %v2694 = vrot.slane %v2692, 7
        %v2695 = vshll.u32 %v2648, 16
        %v2697 = vor.u32 %v2694, %v2695
        %v2698 = vrot.slane %v2694, 4
        %v2700 = vshrl.u32 %v2649, 16
        %v2702 = vrot.slane %v2700, 7
        %v2703 = vshll.u32 %v2649, 16
        %v2705 = vor.u32 %v2702, %v2703
        %v2706 = vrot.slane %v2702, 4
        %v2708 = vshrl.u32 %v2650, 16
        %v2710 = vrot.slane %v2708, 7
        %v2711 = vshll.u32 %v2650, 16
        %v2713 = vor.u32 %v2710, %v2711
        %v2714 = vrot.slane %v2710, 4
        %s2731 = scalar_lea.vmem [#allocation4], 8
        %vm2732 = vcmask 125952
        %vm2733 = vmand %vm2732, %vm925
        %v2734 = vld [vmem:[%s2731] sm:$0xf]
        %v2735 = vsel %vm2733, %v2657, %v2734
        %2736 = vst [vmem:[%s2731] sm:$0xf] %v2735
        %vm2737 = vcmask 122880
        %vm2738 = vmand %vm2737, %vm690
        %v2739 = vld [vmem:[%s2731 + $0x4] sm:$0x1]
        %v2740 = vsel %vm2738, %v2658, %v2739
        %2741 = vst [vmem:[%s2731 + $0x4] sm:$0x1] %v2740
        %v2742 = vld [vmem:[%s2731 + $0x8] sm:$0xf]
        %v2743 = vsel %vm2733, %v2665, %v2742
        %2744 = vst [vmem:[%s2731 + $0x8] sm:$0xf] %v2743
        %v2745 = vld [vmem:[%s2731 + $0xc] sm:$0x1]
        %v2746 = vsel %vm2738, %v2666, %v2745
        %2747 = vst [vmem:[%s2731 + $0xc] sm:$0x1] %v2746
        %v2748 = vld [vmem:[%s2731 + $0x10] sm:$0xf]
        %v2749 = vsel %vm2733, %v2673, %v2748
        %2750 = vst [vmem:[%s2731 + $0x10] sm:$0xf] %v2749
        %v2751 = vld [vmem:[%s2731 + $0x14] sm:$0x1]
        %v2752 = vsel %vm2738, %v2674, %v2751
        %2753 = vst [vmem:[%s2731 + $0x14] sm:$0x1] %v2752
        %v2754 = vld [vmem:[%s2731 + $0x18] sm:$0xf]
        %v2755 = vsel %vm2733, %v2681, %v2754
        %2756 = vst [vmem:[%s2731 + $0x18] sm:$0xf] %v2755
        %v2757 = vld [vmem:[%s2731 + $0x1c] sm:$0x1]
        %v2758 = vsel %vm2738, %v2682, %v2757
        %2759 = vst [vmem:[%s2731 + $0x1c] sm:$0x1] %v2758
        %v2760 = vld [vmem:[%s2731 + $0x20] sm:$0xf]
        %v2761 = vsel %vm2733, %v2689, %v2760
        %2762 = vst [vmem:[%s2731 + $0x20] sm:$0xf] %v2761
        %v2763 = vld [vmem:[%s2731 + $0x24] sm:$0x1]
        %v2764 = vsel %vm2738, %v2690, %v2763
        %2765 = vst [vmem:[%s2731 + $0x24] sm:$0x1] %v2764
        %v2766 = vld [vmem:[%s2731 + $0x28] sm:$0xf]
        %v2767 = vsel %vm2733, %v2697, %v2766
        %2768 = vst [vmem:[%s2731 + $0x28] sm:$0xf] %v2767
        %v2769 = vld [vmem:[%s2731 + $0x2c] sm:$0x1]
        %v2770 = vsel %vm2738, %v2698, %v2769
        %2771 = vst [vmem:[%s2731 + $0x2c] sm:$0x1] %v2770
        %v2772 = vld [vmem:[%s2731 + $0x30] sm:$0xf]
        %v2773 = vsel %vm2733, %v2705, %v2772
        %2774 = vst [vmem:[%s2731 + $0x30] sm:$0xf] %v2773
        %v2775 = vld [vmem:[%s2731 + $0x34] sm:$0x1]
        %v2776 = vsel %vm2738, %v2706, %v2775
        %2777 = vst [vmem:[%s2731 + $0x34] sm:$0x1] %v2776
        %v2778 = vld [vmem:[%s2731 + $0x38] sm:$0xf]
        %v2779 = vsel %vm2733, %v2713, %v2778
        %2780 = vst [vmem:[%s2731 + $0x38] sm:$0xf] %v2779
        %v2781 = vld [vmem:[%s2731 + $0x3c] sm:$0x1]
        %v2782 = vsel %vm2738, %v2714, %v2781
        %2783 = vst [vmem:[%s2731 + $0x3c] sm:$0x1] %v2782
        %v2784 = vld [vmem:[#allocation4] sm:$0xf]
        %v2785 = vld [vmem:[#allocation4 + $0x8] sm:$0xf]
        %v2786 = vld [vmem:[#allocation4 + $0x10] sm:$0xf]
        %v2787 = vld [vmem:[#allocation4 + $0x18] sm:$0xf]
        %v2788 = vld [vmem:[#allocation4 + $0x20] sm:$0xf]
        %v2789 = vld [vmem:[#allocation4 + $0x28] sm:$0xf]
        %v2790 = vld [vmem:[#allocation4 + $0x30] sm:$0xf]
        %v2791 = vld [vmem:[#allocation4 + $0x38] sm:$0xf]
        %v2800 = vunpack.c.l.b16 %v2784
        %v2801 = vunpack.c.l.b16 %v2785
        %v2802 = vunpack.c.l.b16 %v2786
        %v2803 = vunpack.c.l.b16 %v2787
        %v2804 = vunpack.c.l.b16 %v2788
        %v2805 = vunpack.c.l.b16 %v2789
        %v2806 = vunpack.c.l.b16 %v2790
        %v2807 = vunpack.c.l.b16 %v2791
        %v2808 = vpack.c.b16 %v2801, %v2800
        %v2809 = vpack.c.b16 %v2803, %v2802
        %v2810 = vpack.c.b16 %v2805, %v2804
        %v2811 = vpack.c.b16 %v2807, %v2806
        %vm2816 = vcmask 130048
        %2817 = vst.msk [vmem:[#allocation5] sm:$0xff] %vm2816, %v2808
        %2818 = vst.msk [vmem:[#allocation5 + $0x10] sm:$0xff] %vm2816, %v2809
        %2819 = vst.msk [vmem:[#allocation5 + $0x20] sm:$0xff] %vm2816, %v2810
        %2820 = vst.msk [vmem:[#allocation5 + $0x30] sm:$0xff] %vm2816, %v2811
        %v2821 = vld [vmem:[#allocation4] sm:$0xf]
        %v2822 = vld [vmem:[#allocation4 + $0x4] sm:$0x1]
        %v2823 = vld [vmem:[#allocation4 + $0x8] sm:$0xf]
        %v2824 = vld [vmem:[#allocation4 + $0xc] sm:$0x1]
        %v2825 = vld [vmem:[#allocation4 + $0x10] sm:$0xf]
        %v2826 = vld [vmem:[#allocation4 + $0x14] sm:$0x1]
        %v2827 = vld [vmem:[#allocation4 + $0x18] sm:$0xf]
        %v2828 = vld [vmem:[#allocation4 + $0x1c] sm:$0x1]
        %v2829 = vld [vmem:[#allocation4 + $0x20] sm:$0xf]
        %v2830 = vld [vmem:[#allocation4 + $0x24] sm:$0x1]
        %v2831 = vld [vmem:[#allocation4 + $0x28] sm:$0xf]
        %v2832 = vld [vmem:[#allocation4 + $0x2c] sm:$0x1]
        %v2833 = vld [vmem:[#allocation4 + $0x30] sm:$0xf]
        %v2834 = vld [vmem:[#allocation4 + $0x34] sm:$0x1]
        %v2835 = vld [vmem:[#allocation4 + $0x38] sm:$0xf]
        %v2836 = vld [vmem:[#allocation4 + $0x3c] sm:$0x1]
        %v2838 = vshrl.u32 %v2821, 16
        %v2840 = vrot.slane %v2838, 4
        %v2841 = vshll.u32 %v2821, 16
        %v2843 = vrot.slane %v2841, 5
        %v2844 = vor.u32 %v2840, %v2843
        %v2845 = vrot.slane %v2844, 4
        %v2847 = vshll.u32 %v2822, 16
        %v2849 = vrot.slane %v2847, 5
        %v2850 = vsel %vm1443, %v2845, %v2849
        %v2852 = vshrl.u32 %v2823, 16
        %v2854 = vrot.slane %v2852, 4
        %v2855 = vshll.u32 %v2823, 16
        %v2857 = vrot.slane %v2855, 5
        %v2858 = vor.u32 %v2854, %v2857
        %v2859 = vrot.slane %v2858, 4
        %v2861 = vshll.u32 %v2824, 16
        %v2863 = vrot.slane %v2861, 5
        %v2864 = vsel %vm1443, %v2859, %v2863
        %v2866 = vshrl.u32 %v2825, 16
        %v2868 = vrot.slane %v2866, 4
        %v2869 = vshll.u32 %v2825, 16
        %v2871 = vrot.slane %v2869, 5
        %v2872 = vor.u32 %v2868, %v2871
        %v2873 = vrot.slane %v2872, 4
        %v2875 = vshll.u32 %v2826, 16
        %v2877 = vrot.slane %v2875, 5
        %v2878 = vsel %vm1443, %v2873, %v2877
        %v2880 = vshrl.u32 %v2827, 16
        %v2882 = vrot.slane %v2880, 4
        %v2883 = vshll.u32 %v2827, 16
        %v2885 = vrot.slane %v2883, 5
        %v2886 = vor.u32 %v2882, %v2885
        %v2887 = vrot.slane %v2886, 4
        %v2889 = vshll.u32 %v2828, 16
        %v2891 = vrot.slane %v2889, 5
        %v2892 = vsel %vm1443, %v2887, %v2891
        %v2894 = vshrl.u32 %v2829, 16
        %v2896 = vrot.slane %v2894, 4
        %v2897 = vshll.u32 %v2829, 16
        %v2899 = vrot.slane %v2897, 5
        %v2900 = vor.u32 %v2896, %v2899
        %v2901 = vrot.slane %v2900, 4
        %v2903 = vshll.u32 %v2830, 16
        %v2905 = vrot.slane %v2903, 5
        %v2906 = vsel %vm1443, %v2901, %v2905
        %v2908 = vshrl.u32 %v2831, 16
        %v2910 = vrot.slane %v2908, 4
        %v2911 = vshll.u32 %v2831, 16
        %v2913 = vrot.slane %v2911, 5
        %v2914 = vor.u32 %v2910, %v2913
        %v2915 = vrot.slane %v2914, 4
        %v2917 = vshll.u32 %v2832, 16
        %v2919 = vrot.slane %v2917, 5
        %v2920 = vsel %vm1443, %v2915, %v2919
        %v2922 = vshrl.u32 %v2833, 16
        %v2924 = vrot.slane %v2922, 4
        %v2925 = vshll.u32 %v2833, 16
        %v2927 = vrot.slane %v2925, 5
        %v2928 = vor.u32 %v2924, %v2927
        %v2929 = vrot.slane %v2928, 4
        %v2931 = vshll.u32 %v2834, 16
        %v2933 = vrot.slane %v2931, 5
        %v2934 = vsel %vm1443, %v2929, %v2933
        %v2936 = vshrl.u32 %v2835, 16
        %v2938 = vrot.slane %v2936, 4
        %v2939 = vshll.u32 %v2835, 16
        %v2941 = vrot.slane %v2939, 5
        %v2942 = vor.u32 %v2938, %v2941
        %v2943 = vrot.slane %v2942, 4
        %v2945 = vshll.u32 %v2836, 16
        %v2947 = vrot.slane %v2945, 5
        %v2948 = vsel %vm1443, %v2943, %v2947
        %v2949 = vunpack.c.l.b16 %v2850
        %v2950 = vunpack.c.l.b16 %v2864
        %v2951 = vunpack.c.l.b16 %v2878
        %v2952 = vunpack.c.l.b16 %v2892
        %v2953 = vunpack.c.l.b16 %v2906
        %v2954 = vunpack.c.l.b16 %v2920
        %v2955 = vunpack.c.l.b16 %v2934
        %v2956 = vunpack.c.l.b16 %v2948
        %v2957 = vpack.c.b16 %v2950, %v2949
        %v2958 = vpack.c.b16 %v2952, %v2951
        %v2959 = vpack.c.b16 %v2954, %v2953
        %v2960 = vpack.c.b16 %v2956, %v2955
        %2961 = vrot.lane.b32.xlu0 %v2957, 16
        %v2962 = vpop.permute.xlu0 %2961
        %2963 = vrot.lane.b32.xlu0 %v2958, 16
        %v2964 = vpop.permute.xlu0 %2963
        %2965 = vrot.lane.b32.xlu0 %v2959, 16
        %v2966 = vpop.permute.xlu0 %2965
        %2967 = vrot.lane.b32.xlu0 %v2960, 16
        %v2968 = vpop.permute.xlu0 %2967
        %vm2973 = vcmask 261248
        %2974 = vst.msk [vmem:[#allocation5] sm:$0xff] %vm2973, %v2962
        %2975 = vst.msk [vmem:[#allocation5 + $0x10] sm:$0xff] %vm2973, %v2964
        %2976 = vst.msk [vmem:[#allocation5 + $0x20] sm:$0xff] %vm2973, %v2966
        %2977 = vst.msk [vmem:[#allocation5 + $0x30] sm:$0xff] %vm2973, %v2968
        %v2978 = vld [vmem:[#allocation4] sm:$0xe]
        %v2979 = vld [vmem:[#allocation4 + $0x4] sm:$0x1]
        %v2980 = vld [vmem:[#allocation4 + $0x8] sm:$0xe]
        %v2981 = vld [vmem:[#allocation4 + $0xc] sm:$0x1]
        %v2982 = vld [vmem:[#allocation4 + $0x10] sm:$0xe]
        %v2983 = vld [vmem:[#allocation4 + $0x14] sm:$0x1]
        %v2984 = vld [vmem:[#allocation4 + $0x18] sm:$0xe]
        %v2985 = vld [vmem:[#allocation4 + $0x1c] sm:$0x1]
        %v2986 = vld [vmem:[#allocation4 + $0x20] sm:$0xe]
        %v2987 = vld [vmem:[#allocation4 + $0x24] sm:$0x1]
        %v2988 = vld [vmem:[#allocation4 + $0x28] sm:$0xe]
        %v2989 = vld [vmem:[#allocation4 + $0x2c] sm:$0x1]
        %v2990 = vld [vmem:[#allocation4 + $0x30] sm:$0xe]
        %v2991 = vld [vmem:[#allocation4 + $0x34] sm:$0x1]
        %v2992 = vld [vmem:[#allocation4 + $0x38] sm:$0xe]
        %v2993 = vld [vmem:[#allocation4 + $0x3c] sm:$0x1]
        %vm3010 = vcmask 1042432
        %vm3011 = vcmask 1046532
        %vm3012 = vmor %vm3010, %vm3011
        %v3013 = vrot.slane %v2978, 5
        %v3014 = vrot.slane %v3013, 4
        %v3015 = vrot.slane %v2979, 5
        %v3016 = vsel %vm3012, %v3014, %v3015
        %v3017 = vrot.slane %v2980, 5
        %v3018 = vrot.slane %v3017, 4
        %v3019 = vrot.slane %v2981, 5
        %v3020 = vsel %vm3012, %v3018, %v3019
        %v3021 = vrot.slane %v2982, 5
        %v3022 = vrot.slane %v3021, 4
        %v3023 = vrot.slane %v2983, 5
        %v3024 = vsel %vm3012, %v3022, %v3023
        %v3025 = vrot.slane %v2984, 5
        %v3026 = vrot.slane %v3025, 4
        %v3027 = vrot.slane %v2985, 5
        %v3028 = vsel %vm3012, %v3026, %v3027
        %v3029 = vrot.slane %v2986, 5
        %v3030 = vrot.slane %v3029, 4
        %v3031 = vrot.slane %v2987, 5
        %v3032 = vsel %vm3012, %v3030, %v3031
        %v3033 = vrot.slane %v2988, 5
        %v3034 = vrot.slane %v3033, 4
        %v3035 = vrot.slane %v2989, 5
        %v3036 = vsel %vm3012, %v3034, %v3035
        %v3037 = vrot.slane %v2990, 5
        %v3038 = vrot.slane %v3037, 4
        %v3039 = vrot.slane %v2991, 5
        %v3040 = vsel %vm3012, %v3038, %v3039
        %v3041 = vrot.slane %v2992, 5
        %v3042 = vrot.slane %v3041, 4
        %v3043 = vrot.slane %v2993, 5
        %v3044 = vsel %vm3012, %v3042, %v3043
        %v3045 = vunpack.c.l.b16 %v3016
        %v3046 = vunpack.c.l.b16 %v3020
        %v3047 = vunpack.c.l.b16 %v3024
        %v3048 = vunpack.c.l.b16 %v3028
        %v3049 = vunpack.c.l.b16 %v3032
        %v3050 = vunpack.c.l.b16 %v3036
        %v3051 = vunpack.c.l.b16 %v3040
        %v3052 = vunpack.c.l.b16 %v3044
        %v3053 = vpack.c.b16 %v3046, %v3045
        %v3054 = vpack.c.b16 %v3048, %v3047
        %v3055 = vpack.c.b16 %v3050, %v3049
        %v3056 = vpack.c.b16 %v3052, %v3051
        %3057 = vrot.lane.b32.xlu0 %v3053, 32
        %v3058 = vpop.permute.xlu0 %3057
        %3059 = vrot.lane.b32.xlu0 %v3054, 32
        %v3060 = vpop.permute.xlu0 %3059
        %3061 = vrot.lane.b32.xlu0 %v3055, 32
        %v3062 = vpop.permute.xlu0 %3061
        %3063 = vrot.lane.b32.xlu0 %v3056, 32
        %v3064 = vpop.permute.xlu0 %3063
        %vm3069 = vcmask 392448
        %3070 = vst.msk [vmem:[#allocation5] sm:$0xff] %vm3069, %v3058
        %3071 = vst.msk [vmem:[#allocation5 + $0x10] sm:$0xff] %vm3069, %v3060
        %3072 = vst.msk [vmem:[#allocation5 + $0x20] sm:$0xff] %vm3069, %v3062
        %3073 = vst.msk [vmem:[#allocation5 + $0x30] sm:$0xff] %vm3069, %v3064
        %v3074 = vld [vmem:[%s2731] sm:$0xf]
        %v3075 = vld [vmem:[%s2731 + $0x8] sm:$0xf]
        %v3076 = vld [vmem:[%s2731 + $0x10] sm:$0xf]
        %v3077 = vld [vmem:[%s2731 + $0x18] sm:$0xf]
        %v3078 = vld [vmem:[%s2731 + $0x20] sm:$0xf]
        %v3079 = vld [vmem:[%s2731 + $0x28] sm:$0xf]
        %v3080 = vld [vmem:[%s2731 + $0x30] sm:$0xf]
        %v3081 = vld [vmem:[%s2731 + $0x38] sm:$0xf]
        %v3090 = vunpack.c.l.b16 %v3074
        %v3091 = vunpack.c.l.b16 %v3075
        %v3092 = vunpack.c.l.b16 %v3076
        %v3093 = vunpack.c.l.b16 %v3077
        %v3094 = vunpack.c.l.b16 %v3078
        %v3095 = vunpack.c.l.b16 %v3079
        %v3096 = vunpack.c.l.b16 %v3080
        %v3097 = vunpack.c.l.b16 %v3081
        %v3098 = vpack.c.b16 %v3091, %v3090
        %v3099 = vpack.c.b16 %v3093, %v3092
        %v3100 = vpack.c.b16 %v3095, %v3094
        %v3101 = vpack.c.b16 %v3097, %v3096
        %3102 = vrot.lane.b32.xlu0 %v3098, 48
        %v3103 = vpop.permute.xlu0 %3102
        %3104 = vrot.lane.b32.xlu0 %v3099, 48
        %v3105 = vpop.permute.xlu0 %3104
        %3106 = vrot.lane.b32.xlu0 %v3100, 48
        %v3107 = vpop.permute.xlu0 %3106
        %3108 = vrot.lane.b32.xlu0 %v3101, 48
        %v3109 = vpop.permute.xlu0 %3108
        %vm3114 = vcmask 523648
        %3115 = vst.msk [vmem:[#allocation5] sm:$0xff] %vm3114, %v3103
        %3116 = vst.msk [vmem:[#allocation5 + $0x10] sm:$0xff] %vm3114, %v3105
        %3117 = vst.msk [vmem:[#allocation5 + $0x20] sm:$0xff] %vm3114, %v3107
        %3118 = vst.msk [vmem:[#allocation5 + $0x30] sm:$0xff] %vm3114, %v3109
        %v3119 = vld [vmem:[%s2731] sm:$0xf]
        %v3120 = vld [vmem:[%s2731 + $0x4] sm:$0x1]
        %v3121 = vld [vmem:[%s2731 + $0x8] sm:$0xf]
        %v3122 = vld [vmem:[%s2731 + $0xc] sm:$0x1]
        %v3123 = vld [vmem:[%s2731 + $0x10] sm:$0xf]
        %v3124 = vld [vmem:[%s2731 + $0x14] sm:$0x1]
        %v3125 = vld [vmem:[%s2731 + $0x18] sm:$0xf]
        %v3126 = vld [vmem:[%s2731 + $0x1c] sm:$0x1]
        %v3127 = vld [vmem:[%s2731 + $0x20] sm:$0xf]
        %v3128 = vld [vmem:[%s2731 + $0x24] sm:$0x1]
        %v3129 = vld [vmem:[%s2731 + $0x28] sm:$0xf]
        %v3130 = vld [vmem:[%s2731 + $0x2c] sm:$0x1]
        %v3131 = vld [vmem:[%s2731 + $0x30] sm:$0xf]
        %v3132 = vld [vmem:[%s2731 + $0x34] sm:$0x1]
        %v3133 = vld [vmem:[%s2731 + $0x38] sm:$0xf]
        %v3134 = vld [vmem:[%s2731 + $0x3c] sm:$0x1]
        %v3136 = vshrl.u32 %v3119, 16
        %v3138 = vrot.slane %v3136, 4
        %v3139 = vshll.u32 %v3119, 16
        %v3141 = vrot.slane %v3139, 5
        %v3142 = vor.u32 %v3138, %v3141
        %v3143 = vrot.slane %v3142, 4
        %v3145 = vshll.u32 %v3120, 16
        %v3147 = vrot.slane %v3145, 5
        %v3148 = vsel %vm1443, %v3143, %v3147
        %v3150 = vshrl.u32 %v3121, 16
        %v3152 = vrot.slane %v3150, 4
        %v3153 = vshll.u32 %v3121, 16
        %v3155 = vrot.slane %v3153, 5
        %v3156 = vor.u32 %v3152, %v3155
        %v3157 = vrot.slane %v3156, 4
        %v3159 = vshll.u32 %v3122, 16
        %v3161 = vrot.slane %v3159, 5
        %v3162 = vsel %vm1443, %v3157, %v3161
        %v3164 = vshrl.u32 %v3123, 16
        %v3166 = vrot.slane %v3164, 4
        %v3167 = vshll.u32 %v3123, 16
        %v3169 = vrot.slane %v3167, 5
        %v3170 = vor.u32 %v3166, %v3169
        %v3171 = vrot.slane %v3170, 4
        %v3173 = vshll.u32 %v3124, 16
        %v3175 = vrot.slane %v3173, 5
        %v3176 = vsel %vm1443, %v3171, %v3175
        %v3178 = vshrl.u32 %v3125, 16
        %v3180 = vrot.slane %v3178, 4
        %v3181 = vshll.u32 %v3125, 16
        %v3183 = vrot.slane %v3181, 5
        %v3184 = vor.u32 %v3180, %v3183
        %v3185 = vrot.slane %v3184, 4
        %v3187 = vshll.u32 %v3126, 16
        %v3189 = vrot.slane %v3187, 5
        %v3190 = vsel %vm1443, %v3185, %v3189
        %v3192 = vshrl.u32 %v3127, 16
        %v3194 = vrot.slane %v3192, 4
        %v3195 = vshll.u32 %v3127, 16
        %v3197 = vrot.slane %v3195, 5
        %v3198 = vor.u32 %v3194, %v3197
        %v3199 = vrot.slane %v3198, 4
        %v3201 = vshll.u32 %v3128, 16
        %v3203 = vrot.slane %v3201, 5
        %v3204 = vsel %vm1443, %v3199, %v3203
        %v3206 = vshrl.u32 %v3129, 16
        %v3208 = vrot.slane %v3206, 4
        %v3209 = vshll.u32 %v3129, 16
        %v3211 = vrot.slane %v3209, 5
        %v3212 = vor.u32 %v3208, %v3211
        %v3213 = vrot.slane %v3212, 4
        %v3215 = vshll.u32 %v3130, 16
        %v3217 = vrot.slane %v3215, 5
        %v3218 = vsel %vm1443, %v3213, %v3217
        %v3220 = vshrl.u32 %v3131, 16
        %v3222 = vrot.slane %v3220, 4
        %v3223 = vshll.u32 %v3131, 16
        %v3225 = vrot.slane %v3223, 5
        %v3226 = vor.u32 %v3222, %v3225
        %v3227 = vrot.slane %v3226, 4
        %v3229 = vshll.u32 %v3132, 16
        %v3231 = vrot.slane %v3229, 5
        %v3232 = vsel %vm1443, %v3227, %v3231
        %v3234 = vshrl.u32 %v3133, 16
        %v3236 = vrot.slane %v3234, 4
        %v3237 = vshll.u32 %v3133, 16
        %v3239 = vrot.slane %v3237, 5
        %v3240 = vor.u32 %v3236, %v3239
        %v3241 = vrot.slane %v3240, 4
        %v3243 = vshll.u32 %v3134, 16
        %v3245 = vrot.slane %v3243, 5
        %v3246 = vsel %vm1443, %v3241, %v3245
        %v3247 = vunpack.c.l.b16 %v3148
        %v3248 = vunpack.c.l.b16 %v3162
        %v3249 = vunpack.c.l.b16 %v3176
        %v3250 = vunpack.c.l.b16 %v3190
        %v3251 = vunpack.c.l.b16 %v3204
        %v3252 = vunpack.c.l.b16 %v3218
        %v3253 = vunpack.c.l.b16 %v3232
        %v3254 = vunpack.c.l.b16 %v3246
        %v3255 = vpack.c.b16 %v3248, %v3247
        %v3256 = vpack.c.b16 %v3250, %v3249
        %v3257 = vpack.c.b16 %v3252, %v3251
        %v3258 = vpack.c.b16 %v3254, %v3253
        %3259 = vrot.lane.b32.xlu0 %v3255, 64
        %v3260 = vpop.permute.xlu0 %3259
        %3261 = vrot.lane.b32.xlu0 %v3256, 64
        %v3262 = vpop.permute.xlu0 %3261
        %3263 = vrot.lane.b32.xlu0 %v3257, 64
        %v3264 = vpop.permute.xlu0 %3263
        %3265 = vrot.lane.b32.xlu0 %v3258, 64
        %v3266 = vpop.permute.xlu0 %3265
        %vm3271 = vcmask 654848
        %3272 = vst.msk [vmem:[#allocation5] sm:$0xff] %vm3271, %v3260
        %3273 = vst.msk [vmem:[#allocation5 + $0x10] sm:$0xff] %vm3271, %v3262
        %3274 = vst.msk [vmem:[#allocation5 + $0x20] sm:$0xff] %vm3271, %v3264
        %3275 = vst.msk [vmem:[#allocation5 + $0x30] sm:$0xff] %vm3271, %v3266
        %v3276 = vld [vmem:[%s2731] sm:$0xe]
        %v3277 = vld [vmem:[%s2731 + $0x4] sm:$0x1]
        %v3278 = vld [vmem:[%s2731 + $0x8] sm:$0xe]
        %v3279 = vld [vmem:[%s2731 + $0xc] sm:$0x1]
        %v3280 = vld [vmem:[%s2731 + $0x10] sm:$0xe]
        %v3281 = vld [vmem:[%s2731 + $0x14] sm:$0x1]
        %v3282 = vld [vmem:[%s2731 + $0x18] sm:$0xe]
        %v3283 = vld [vmem:[%s2731 + $0x1c] sm:$0x1]
        %v3284 = vld [vmem:[%s2731 + $0x20] sm:$0xe]
        %v3285 = vld [vmem:[%s2731 + $0x24] sm:$0x1]
        %v3286 = vld [vmem:[%s2731 + $0x28] sm:$0xe]
        %v3287 = vld [vmem:[%s2731 + $0x2c] sm:$0x1]
        %v3288 = vld [vmem:[%s2731 + $0x30] sm:$0xe]
        %v3289 = vld [vmem:[%s2731 + $0x34] sm:$0x1]
        %v3290 = vld [vmem:[%s2731 + $0x38] sm:$0xe]
        %v3291 = vld [vmem:[%s2731 + $0x3c] sm:$0x1]
        %v3308 = vrot.slane %v3276, 5
        %v3309 = vrot.slane %v3308, 4
        %v3310 = vrot.slane %v3277, 5
        %v3311 = vsel %vm3012, %v3309, %v3310
        %v3312 = vrot.slane %v3278, 5
        %v3313 = vrot.slane %v3312, 4
        %v3314 = vrot.slane %v3279, 5
        %v3315 = vsel %vm3012, %v3313, %v3314
        %v3316 = vrot.slane %v3280, 5
        %v3317 = vrot.slane %v3316, 4
        %v3318 = vrot.slane %v3281, 5
        %v3319 = vsel %vm3012, %v3317, %v3318
        %v3320 = vrot.slane %v3282, 5
        %v3321 = vrot.slane %v3320, 4
        %v3322 = vrot.slane %v3283, 5
        %v3323 = vsel %vm3012, %v3321, %v3322
        %v3324 = vrot.slane %v3284, 5
        %v3325 = vrot.slane %v3324, 4
        %v3326 = vrot.slane %v3285, 5
        %v3327 = vsel %vm3012, %v3325, %v3326
        %v3328 = vrot.slane %v3286, 5
        %v3329 = vrot.slane %v3328, 4
        %v3330 = vrot.slane %v3287, 5
        %v3331 = vsel %vm3012, %v3329, %v3330
        %v3332 = vrot.slane %v3288, 5
        %v3333 = vrot.slane %v3332, 4
        %v3334 = vrot.slane %v3289, 5
        %v3335 = vsel %vm3012, %v3333, %v3334
        %v3336 = vrot.slane %v3290, 5
        %v3337 = vrot.slane %v3336, 4
        %v3338 = vrot.slane %v3291, 5
        %v3339 = vsel %vm3012, %v3337, %v3338
        %v3340 = vunpack.c.l.b16 %v3311
        %v3341 = vunpack.c.l.b16 %v3315
        %v3342 = vunpack.c.l.b16 %v3319
        %v3343 = vunpack.c.l.b16 %v3323
        %v3344 = vunpack.c.l.b16 %v3327
        %v3345 = vunpack.c.l.b16 %v3331
        %v3346 = vunpack.c.l.b16 %v3335
        %v3347 = vunpack.c.l.b16 %v3339
        %v3348 = vpack.c.b16 %v3341, %v3340
        %v3349 = vpack.c.b16 %v3343, %v3342
        %v3350 = vpack.c.b16 %v3345, %v3344
        %v3351 = vpack.c.b16 %v3347, %v3346
        %3352 = vrot.lane.b32.xlu0 %v3348, 80
        %v3353 = vpop.permute.xlu0 %3352
        %3354 = vrot.lane.b32.xlu0 %v3349, 80
        %v3355 = vpop.permute.xlu0 %3354
        %3356 = vrot.lane.b32.xlu0 %v3350, 80
        %v3357 = vpop.permute.xlu0 %3356
        %3358 = vrot.lane.b32.xlu0 %v3351, 80
        %v3359 = vpop.permute.xlu0 %3358
        %vm3364 = vcmask 786048
        %3365 = vst.msk [vmem:[#allocation5] sm:$0xff] %vm3364, %v3353
        %3366 = vst.msk [vmem:[#allocation5 + $0x10] sm:$0xff] %vm3364, %v3355
        %3367 = vst.msk [vmem:[#allocation5 + $0x20] sm:$0xff] %vm3364, %v3357
        %3368 = vst.msk [vmem:[#allocation5 + $0x30] sm:$0xff] %vm3364, %v3359
        %s3369 = scalar_lea.vmem [#allocation4], 16
        %v3370 = vld [vmem:[%s3369] sm:$0xf]
        %v3371 = vld [vmem:[%s3369 + $0x8] sm:$0xf]
        %v3372 = vld [vmem:[%s3369 + $0x10] sm:$0xf]
        %v3373 = vld [vmem:[%s3369 + $0x18] sm:$0xf]
        %v3374 = vld [vmem:[%s3369 + $0x20] sm:$0xf]
        %v3375 = vld [vmem:[%s3369 + $0x28] sm:$0xf]
        %v3376 = vld [vmem:[%s3369 + $0x30] sm:$0xf]
        %v3377 = vld [vmem:[%s3369 + $0x38] sm:$0xf]
        %v3386 = vunpack.c.l.b16 %v3370
        %v3387 = vunpack.c.l.b16 %v3371
        %v3388 = vunpack.c.l.b16 %v3372
        %v3389 = vunpack.c.l.b16 %v3373
        %v3390 = vunpack.c.l.b16 %v3374
        %v3391 = vunpack.c.l.b16 %v3375
        %v3392 = vunpack.c.l.b16 %v3376
        %v3393 = vunpack.c.l.b16 %v3377
        %v3394 = vpack.c.b16 %v3387, %v3386
        %v3395 = vpack.c.b16 %v3389, %v3388
        %v3396 = vpack.c.b16 %v3391, %v3390
        %v3397 = vpack.c.b16 %v3393, %v3392
        %3398 = vrot.lane.b32.xlu0 %v3394, 96
        %v3399 = vpop.permute.xlu0 %3398
        %3400 = vrot.lane.b32.xlu0 %v3395, 96
        %v3401 = vpop.permute.xlu0 %3400
        %3402 = vrot.lane.b32.xlu0 %v3396, 96
        %v3403 = vpop.permute.xlu0 %3402
        %3404 = vrot.lane.b32.xlu0 %v3397, 96
        %v3405 = vpop.permute.xlu0 %3404
        %vm3410 = vcmask 917248
        %3411 = vst.msk [vmem:[#allocation5] sm:$0xff] %vm3410, %v3399
        %3412 = vst.msk [vmem:[#allocation5 + $0x10] sm:$0xff] %vm3410, %v3401
        %3413 = vst.msk [vmem:[#allocation5 + $0x20] sm:$0xff] %vm3410, %v3403
        %3414 = vst.msk [vmem:[#allocation5 + $0x30] sm:$0xff] %vm3410, %v3405
        %v3415 = vld [vmem:[%s3369] sm:$0xf]
        %v3416 = vld [vmem:[%s3369 + $0x4] sm:$0x1]
        %v3417 = vld [vmem:[%s3369 + $0x8] sm:$0xf]
        %v3418 = vld [vmem:[%s3369 + $0xc] sm:$0x1]
        %v3419 = vld [vmem:[%s3369 + $0x10] sm:$0xf]
        %v3420 = vld [vmem:[%s3369 + $0x14] sm:$0x1]
        %v3421 = vld [vmem:[%s3369 + $0x18] sm:$0xf]
        %v3422 = vld [vmem:[%s3369 + $0x1c] sm:$0x1]
        %v3423 = vld [vmem:[%s3369 + $0x20] sm:$0xf]
        %v3424 = vld [vmem:[%s3369 + $0x24] sm:$0x1]
        %v3425 = vld [vmem:[%s3369 + $0x28] sm:$0xf]
        %v3426 = vld [vmem:[%s3369 + $0x2c] sm:$0x1]
        %v3427 = vld [vmem:[%s3369 + $0x30] sm:$0xf]
        %v3428 = vld [vmem:[%s3369 + $0x34] sm:$0x1]
        %v3429 = vld [vmem:[%s3369 + $0x38] sm:$0xf]
        %v3430 = vld [vmem:[%s3369 + $0x3c] sm:$0x1]
        %v3432 = vshrl.u32 %v3415, 16
        %v3434 = vrot.slane %v3432, 4
        %v3435 = vshll.u32 %v3415, 16
        %v3437 = vrot.slane %v3435, 5
        %v3438 = vor.u32 %v3434, %v3437
        %v3439 = vrot.slane %v3438, 4
        %v3441 = vshll.u32 %v3416, 16
        %v3443 = vrot.slane %v3441, 5
        %v3444 = vsel %vm1443, %v3439, %v3443
        %v3446 = vshrl.u32 %v3417, 16
        %v3448 = vrot.slane %v3446, 4
        %v3449 = vshll.u32 %v3417, 16
        %v3451 = vrot.slane %v3449, 5
        %v3452 = vor.u32 %v3448, %v3451
        %v3453 = vrot.slane %v3452, 4
        %v3455 = vshll.u32 %v3418, 16
        %v3457 = vrot.slane %v3455, 5
        %v3458 = vsel %vm1443, %v3453, %v3457
        %v3460 = vshrl.u32 %v3419, 16
        %v3462 = vrot.slane %v3460, 4
        %v3463 = vshll.u32 %v3419, 16
        %v3465 = vrot.slane %v3463, 5
        %v3466 = vor.u32 %v3462, %v3465
        %v3467 = vrot.slane %v3466, 4
        %v3469 = vshll.u32 %v3420, 16
        %v3471 = vrot.slane %v3469, 5
        %v3472 = vsel %vm1443, %v3467, %v3471
        %v3474 = vshrl.u32 %v3421, 16
        %v3476 = vrot.slane %v3474, 4
        %v3477 = vshll.u32 %v3421, 16
        %v3479 = vrot.slane %v3477, 5
        %v3480 = vor.u32 %v3476, %v3479
        %v3481 = vrot.slane %v3480, 4
        %v3483 = vshll.u32 %v3422, 16
        %v3485 = vrot.slane %v3483, 5
        %v3486 = vsel %vm1443, %v3481, %v3485
        %v3488 = vshrl.u32 %v3423, 16
        %v3490 = vrot.slane %v3488, 4
        %v3491 = vshll.u32 %v3423, 16
        %v3493 = vrot.slane %v3491, 5
        %v3494 = vor.u32 %v3490, %v3493
        %v3495 = vrot.slane %v3494, 4
        %v3497 = vshll.u32 %v3424, 16
        %v3499 = vrot.slane %v3497, 5
        %v3500 = vsel %vm1443, %v3495, %v3499
        %v3502 = vshrl.u32 %v3425, 16
        %v3504 = vrot.slane %v3502, 4
        %v3505 = vshll.u32 %v3425, 16
        %v3507 = vrot.slane %v3505, 5
        %v3508 = vor.u32 %v3504, %v3507
        %v3509 = vrot.slane %v3508, 4
        %v3511 = vshll.u32 %v3426, 16
        %v3513 = vrot.slane %v3511, 5
        %v3514 = vsel %vm1443, %v3509, %v3513
        %v3516 = vshrl.u32 %v3427, 16
        %v3518 = vrot.slane %v3516, 4
        %v3519 = vshll.u32 %v3427, 16
        %v3521 = vrot.slane %v3519, 5
        %v3522 = vor.u32 %v3518, %v3521
        %v3523 = vrot.slane %v3522, 4
        %v3525 = vshll.u32 %v3428, 16
        %v3527 = vrot.slane %v3525, 5
        %v3528 = vsel %vm1443, %v3523, %v3527
        %v3530 = vshrl.u32 %v3429, 16
        %v3532 = vrot.slane %v3530, 4
        %v3533 = vshll.u32 %v3429, 16
        %v3535 = vrot.slane %v3533, 5
        %v3536 = vor.u32 %v3532, %v3535
        %v3537 = vrot.slane %v3536, 4
        %v3539 = vshll.u32 %v3430, 16
        %v3541 = vrot.slane %v3539, 5
        %v3542 = vsel %vm1443, %v3537, %v3541
        %v3543 = vunpack.c.l.b16 %v3444
        %v3544 = vunpack.c.l.b16 %v3458
        %v3545 = vunpack.c.l.b16 %v3472
        %v3546 = vunpack.c.l.b16 %v3486
        %v3547 = vunpack.c.l.b16 %v3500
        %v3548 = vunpack.c.l.b16 %v3514
        %v3549 = vunpack.c.l.b16 %v3528
        %v3550 = vunpack.c.l.b16 %v3542
        %v3551 = vpack.c.b16 %v3544, %v3543
        %v3552 = vpack.c.b16 %v3546, %v3545
        %v3553 = vpack.c.b16 %v3548, %v3547
        %v3554 = vpack.c.b16 %v3550, %v3549
        %3555 = vrot.lane.b32.xlu0 %v3551, 112
        %v3556 = vpop.permute.xlu0 %3555
        %3557 = vrot.lane.b32.xlu0 %v3552, 112
        %v3558 = vpop.permute.xlu0 %3557
        %3559 = vrot.lane.b32.xlu0 %v3553, 112
        %v3560 = vpop.permute.xlu0 %3559
        %3561 = vrot.lane.b32.xlu0 %v3554, 112
        %v3562 = vpop.permute.xlu0 %3561
        %vm3567 = vcmask 1048448
        %3568 = vst.msk [vmem:[#allocation5] sm:$0xff] %vm3567, %v3556
        %3569 = vst.msk [vmem:[#allocation5 + $0x10] sm:$0xff] %vm3567, %v3558
        %3570 = vst.msk [vmem:[#allocation5 + $0x20] sm:$0xff] %vm3567, %v3560
        %3571 = vst.msk [vmem:[#allocation5 + $0x30] sm:$0xff] %vm3567, %v3562
        %v3572 = vld [vmem:[%s3369] sm:$0xe]
        %v3573 = vld [vmem:[%s3369 + $0x4] sm:$0x1]
        %v3574 = vld [vmem:[%s3369 + $0x8] sm:$0xe]
        %v3575 = vld [vmem:[%s3369 + $0xc] sm:$0x1]
        %v3576 = vld [vmem:[%s3369 + $0x10] sm:$0xe]
        %v3577 = vld [vmem:[%s3369 + $0x14] sm:$0x1]
        %v3578 = vld [vmem:[%s3369 + $0x18] sm:$0xe]
        %v3579 = vld [vmem:[%s3369 + $0x1c] sm:$0x1]
        %v3580 = vld [vmem:[%s3369 + $0x20] sm:$0xe]
        %v3581 = vld [vmem:[%s3369 + $0x24] sm:$0x1]
        %v3582 = vld [vmem:[%s3369 + $0x28] sm:$0xe]
        %v3583 = vld [vmem:[%s3369 + $0x2c] sm:$0x1]
        %v3584 = vld [vmem:[%s3369 + $0x30] sm:$0xe]
        %v3585 = vld [vmem:[%s3369 + $0x34] sm:$0x1]
        %v3586 = vld [vmem:[%s3369 + $0x38] sm:$0xe]
        %v3587 = vld [vmem:[%s3369 + $0x3c] sm:$0x1]
        %v3604 = vrot.slane %v3572, 5
        %v3605 = vrot.slane %v3604, 4
        %v3606 = vrot.slane %v3573, 5
        %v3607 = vsel %vm3012, %v3605, %v3606
        %v3608 = vrot.slane %v3574, 5
        %v3609 = vrot.slane %v3608, 4
        %v3610 = vrot.slane %v3575, 5
        %v3611 = vsel %vm3012, %v3609, %v3610
        %v3612 = vrot.slane %v3576, 5
        %v3613 = vrot.slane %v3612, 4
        %v3614 = vrot.slane %v3577, 5
        %v3615 = vsel %vm3012, %v3613, %v3614
        %v3616 = vrot.slane %v3578, 5
        %v3617 = vrot.slane %v3616, 4
        %v3618 = vrot.slane %v3579, 5
        %v3619 = vsel %vm3012, %v3617, %v3618
        %v3620 = vrot.slane %v3580, 5
        %v3621 = vrot.slane %v3620, 4
        %v3622 = vrot.slane %v3581, 5
        %v3623 = vsel %vm3012, %v3621, %v3622
        %v3624 = vrot.slane %v3582, 5
        %v3625 = vrot.slane %v3624, 4
        %v3626 = vrot.slane %v3583, 5
        %v3627 = vsel %vm3012, %v3625, %v3626
        %v3628 = vrot.slane %v3584, 5
        %v3629 = vrot.slane %v3628, 4
        %v3630 = vrot.slane %v3585, 5
        %v3631 = vsel %vm3012, %v3629, %v3630
        %v3632 = vrot.slane %v3586, 5
        %v3633 = vrot.slane %v3632, 4
        %v3634 = vrot.slane %v3587, 5
        %v3635 = vsel %vm3012, %v3633, %v3634
        %v3636 = vunpack.c.l.b16 %v3607
        %v3637 = vunpack.c.l.b16 %v3611
        %v3638 = vunpack.c.l.b16 %v3615
        %v3639 = vunpack.c.l.b16 %v3619
        %v3640 = vunpack.c.l.b16 %v3623
        %v3641 = vunpack.c.l.b16 %v3627
        %v3642 = vunpack.c.l.b16 %v3631
        %v3643 = vunpack.c.l.b16 %v3635
        %v3644 = vpack.c.b16 %v3637, %v3636
        %v3645 = vpack.c.b16 %v3639, %v3638
        %v3646 = vpack.c.b16 %v3641, %v3640
        %v3647 = vpack.c.b16 %v3643, %v3642
        %3652 = vst.msk [vmem:[#allocation5 + $0x8] sm:$0xff] %vm2816, %v3644
        %3653 = vst.msk [vmem:[#allocation5 + $0x18] sm:$0xff] %vm2816, %v3645
        %3654 = vst.msk [vmem:[#allocation5 + $0x28] sm:$0xff] %vm2816, %v3646
        %3655 = vst.msk [vmem:[#allocation5 + $0x38] sm:$0xff] %vm2816, %v3647
        %v3656 = vld [vmem:[#allocation5] sm:$0xff]
        %v3657 = vld [vmem:[#allocation5 + $0x8] sm:$0xff]
        %v3658 = vld [vmem:[#allocation5 + $0x10] sm:$0xff]
        %v3659 = vld [vmem:[#allocation5 + $0x18] sm:$0xff]
        %v3660 = vld [vmem:[#allocation5 + $0x20] sm:$0xff]
        %v3661 = vld [vmem:[#allocation5 + $0x28] sm:$0xff]
        %v3662 = vld [vmem:[#allocation5 + $0x30] sm:$0xff]
        %v3663 = vld [vmem:[#allocation5 + $0x38] sm:$0xff]
        %v3664 = vld [vmem:[%s6] sm:$0xf]
        %v3665 = vld [vmem:[%s6 + $0x4] sm:$0xf]
        %v3666 = vld [vmem:[%s6 + $0x8] sm:$0xf]
        %v3667 = vld [vmem:[%s6 + $0xc] sm:$0xf]
        %v3668 = vld [vmem:[%s6 + $0x10] sm:$0xf]
        %v3669 = vld [vmem:[%s6 + $0x14] sm:$0xf]
        %v3670 = vld [vmem:[%s6 + $0x18] sm:$0xf]
        %v3671 = vld [vmem:[%s6 + $0x1c] sm:$0xf]
        %v3672 = vld [vmem:[%s6 + $0x20] sm:$0xf]
        %v3673 = vld [vmem:[%s6 + $0x24] sm:$0xf]
        %v3674 = vld [vmem:[%s6 + $0x28] sm:$0xf]
        %v3675 = vld [vmem:[%s6 + $0x2c] sm:$0xf]
        %v3676 = vld [vmem:[%s6 + $0x30] sm:$0xf]
        %v3677 = vld [vmem:[%s6 + $0x34] sm:$0xf]
        %v3678 = vld [vmem:[%s6 + $0x38] sm:$0xf]
        %v3679 = vld [vmem:[%s6 + $0x3c] sm:$0xf]
        %v3680 = vld [vmem:[%s6 + $0x40] sm:$0xf]
        %v3681 = vld [vmem:[%s6 + $0x44] sm:$0xf]
        %v3682 = vld [vmem:[%s7] sm:$0x1]
        %v3684 = vlaneseq
        %v3685 = vshrl.u32 %v3684, 7
        %v3686 = vsub.s32 0, %v3685
        %v3687 = vrot.slane %v3682, %v3686
        %v3707 = vunpack.c.l.b16 %v3664
        %v3708 = vunpack.c.l.b16 %v3665
        %v3709 = vunpack.c.l.b16 %v3666
        %v3710 = vunpack.c.l.b16 %v3667
        %v3711 = vunpack.c.l.b16 %v3668
        %v3712 = vunpack.c.l.b16 %v3669
        %v3713 = vunpack.c.l.b16 %v3670
        %v3714 = vunpack.c.l.b16 %v3671
        %v3715 = vunpack.c.l.b16 %v3672
        %v3716 = vunpack.c.l.b16 %v3673
        %v3717 = vunpack.c.l.b16 %v3674
        %v3718 = vunpack.c.l.b16 %v3675
        %v3719 = vunpack.c.l.b16 %v3676
        %v3720 = vunpack.c.l.b16 %v3677
        %v3721 = vunpack.c.l.b16 %v3678
        %v3722 = vunpack.c.l.b16 %v3679
        %v3723 = vunpack.c.l.b16 %v3680
        %v3724 = vunpack.c.l.b16 %v3681
        %v3725 = vpack.c.b16 %v3708, %v3707
        %v3726 = vpack.c.b16 %v3710, %v3709
        %v3727 = vpack.c.b16 %v3712, %v3711
        %v3728 = vpack.c.b16 %v3714, %v3713
        %v3729 = vpack.c.b16 %v3716, %v3715
        %v3730 = vpack.c.b16 %v3718, %v3717
        %v3731 = vpack.c.b16 %v3720, %v3719
        %v3732 = vpack.c.b16 %v3722, %v3721
        %v3733 = vpack.c.b16 %v3724, %v3723
        %v3744 = vsel %vm2816, %v3657, 0
        %v3747 = vsel %vm2816, %v3659, 0
        %v3750 = vsel %vm2816, %v3661, 0
        %v3753 = vsel %vm2816, %v3663, 0
        %3755 = vmatprep.subr.bf16.mxu0 0
        %3756 = vmatpush1.bf16.msra.mxu0 %v3725
        %3757 = vmatprep.subr.bf16.mxu0 0
        %3758 = vmatpush1.bf16.msra.mxu0 %v3726
        %3759 = vmatprep.subr.bf16.mxu0 0
        %3760 = vmatpush1.bf16.msra.mxu0 %v3727
        %3761 = vmatprep.subr.bf16.mxu0 0
        %3762 = vmatpush1.bf16.msra.mxu0 %v3728
        %3763 = vmatprep.subr.bf16.mxu0 0
        %3764 = vmatpush1.bf16.msra.mxu0 %v3729
        %3765 = vmatprep.subr.bf16.mxu0 0
        %3766 = vmatpush1.bf16.msra.mxu0 %v3730
        %3767 = vmatprep.subr.bf16.mxu0 0
        %3768 = vmatpush1.bf16.msra.mxu0 %v3731
        %3769 = vmatprep.subr.bf16.mxu0 0
        %3770 = vmatpush1.bf16.msra.mxu0 %v3732
        %3771 = vmatprep.subr.bf16.mxu0 0
        %3772 = vmatpush1.bf16.msra.mxu0 %v3733
        %3773 = vmatprep.subr.bf16.mxu0 0
        %3774 = vmatpush1.bf16.msra.mxu0 0
        %3775 = vmatprep.subr.bf16.mxu0 0
        %3776 = vmatpush1.bf16.msra.mxu0 0
        %3777 = vmatprep.subr.bf16.mxu0 0
        %3778 = vmatpush1.bf16.msra.mxu0 0
        %3779 = vmatprep.subr.bf16.mxu0 0
        %3780 = vmatpush1.bf16.msra.mxu0 0
        %3781 = vmatprep.subr.bf16.mxu0 0
        %3782 = vmatpush1.bf16.msra.mxu0 0
        %3783 = vmatprep.subr.bf16.mxu0 0
        %3784 = vmatpush1.bf16.msra.mxu0 0
        %3785 = vmatprep.subr.bf16.mxu0 0
        %3786 = vmatpush1.bf16.msra.mxu0 0
        %3787 = vmatprep.mubr.bf16.mxu0 %v3744
        %3788 = vmatmul.mubr.bf16.gmra.mrb[0].mxu0 %v3656
        %v3789 = vpop.f32.mrb[0].mxu0
        %v3790 = vadd.f32 %v3687, %v3789
        %v3791 = vpop.f32.mrb[0].mxu0
        %v3792 = vpop.f32.mrb[0].mxu0
        %v3793 = vadd.f32 %v3687, %v3792
        %v3794 = vpop.f32.mrb[0].mxu0
        %3795 = vmatprep.mubr.bf16.mxu0 %v3747
        %3796 = vmatmul.mubr.bf16.gmra.mrb[0].mxu0 %v3658
        %v3797 = vpop.f32.mrb[0].mxu0
        %v3798 = vadd.f32 %v3687, %v3797
        %v3799 = vpop.f32.mrb[0].mxu0
        %v3800 = vpop.f32.mrb[0].mxu0
        %v3801 = vadd.f32 %v3687, %v3800
        %v3802 = vpop.f32.mrb[0].mxu0
        %3803 = vmatprep.mubr.bf16.mxu0 %v3750
        %3804 = vmatmul.mubr.bf16.gmra.mrb[0].mxu0 %v3660
        %v3805 = vpop.f32.mrb[0].mxu0
        %v3806 = vadd.f32 %v3687, %v3805
        %v3807 = vpop.f32.mrb[0].mxu0
        %v3808 = vpop.f32.mrb[0].mxu0
        %v3809 = vadd.f32 %v3687, %v3808
        %v3810 = vpop.f32.mrb[0].mxu0
        %3811 = vmatprep.mubr.bf16.mxu0 %v3753
        %3812 = vmatmul.mubr.bf16.gmra.mrb[0].mxu0 %v3662
        %v3813 = vpop.f32.mrb[0].mxu0
        %v3814 = vadd.f32 %v3687, %v3813
        %v3815 = vpop.f32.mrb[0].mxu0
        %v3816 = vpop.f32.mrb[0].mxu0
        %v3817 = vadd.f32 %v3687, %v3816
        %v3818 = vpop.f32.mrb[0].mxu0
        %3819 = vdwg.mxu0
        %v3820 = vsel %vm2816, %v3790, 0.0
        %v3821 = vsel %vm2816, %v3793, 0.0
        %v3822 = vadd.f32 %v3820, %v3821
        %v3823 = vsel %vm2816, %v3798, 0.0
        %v3824 = vadd.f32 %v3822, %v3823
        %v3825 = vsel %vm2816, %v3801, 0.0
        %v3826 = vadd.f32 %v3824, %v3825
        %v3827 = vsel %vm2816, %v3806, 0.0
        %v3828 = vadd.f32 %v3826, %v3827
        %v3829 = vsel %vm2816, %v3809, 0.0
        %v3830 = vadd.f32 %v3828, %v3829
        %v3831 = vsel %vm2816, %v3814, 0.0
        %v3832 = vadd.f32 %v3830, %v3831
        %v3833 = vsel %vm2816, %v3817, 0.0
        %v3834 = vadd.f32 %v3832, %v3833
        %v3835 = vrot.slane %v3834, 4
        %v3836 = vadd.f32 %v3834, %v3835
        %v3837 = vrot.slane %v3836, 2
        %v3838 = vadd.f32 %v3836, %v3837
        %v3839 = vrot.slane %v3838, 1
        %v3840 = vadd.f32 %v3838, %v3839
        %v3841 = vrcp.pop 64.0
        %v3842 = vmul.f32 %v3840, %v3841
        %v3843 = vsel %vm2816, %v3790, -inf
        %v3844 = vsel %vm2816, %v3793, -inf
        %v3845 = vsel %vm2816, %v3798, -inf
        %v3846 = vsel %vm2816, %v3801, -inf
        %v3847 = vsel %vm2816, %v3806, -inf
        %v3848 = vmax.f32 %v3843, %v3847
        %v3849 = vsel %vm2816, %v3809, -inf
        %v3850 = vmax.f32 %v3844, %v3849
        %v3851 = vsel %vm2816, %v3814, -inf
        %v3852 = vmax.f32 %v3845, %v3851
        %v3853 = vsel %vm2816, %v3817, -inf
        %v3854 = vmax.f32 %v3846, %v3853
        %v3855 = vmax.f32 %v3848, %v3850
        %v3856 = vmax.f32 %v3852, %v3854
        %v3857 = vmax.f32 %v3855, %v3856
        %v3858 = vrot.slane %v3857, 4
        %v3859 = vmax.f32 %v3857, %v3858
        %v3860 = vrot.slane %v3859, 2
        %v3861 = vmax.f32 %v3859, %v3860
        %v3862 = vrot.slane %v3861, 1
        %v3863 = vmax.f32 %v3861, %v3862
        %v3864 = vld [vmem:[%s10] sm:$0xff]
        %v3865 = vld [vmem:[%s10 + $0x8] sm:$0xff]
        %v3867 = vsel %vm2816, %v3842, 0
        %3869 = vmatprep.subr.mxu0 0.0
        %3870 = vmatpush1.msra.mxu0 %v3864
        %3871 = vmatprep.subr.mxu0 0.0
        %3872 = vmatpush1.msra.mxu0 %v3865
        %3873 = vmatprep.subr.mxu0 0.0
        %3874 = vmatpush1.msra.mxu0 0.0
        %3875 = vmatprep.subr.mxu0 0.0
        %3876 = vmatpush1.msra.mxu0 0.0
        %3877 = vmatprep.subr.mxu0 0.0
        %3878 = vmatpush1.msra.mxu0 0.0
        %3879 = vmatprep.subr.mxu0 0.0
        %3880 = vmatpush1.msra.mxu0 0.0
        %3881 = vmatprep.subr.mxu0 0.0
        %3882 = vmatpush1.msra.mxu0 0.0
        %3883 = vmatprep.subr.mxu0 0.0
        %3884 = vmatpush1.msra.mxu0 0.0
        %3885 = vmatprep.subr.mxu0 0.0
        %3886 = vmatpush1.msra.mxu0 0.0
        %3887 = vmatprep.subr.mxu0 0.0
        %3888 = vmatpush1.msra.mxu0 0.0
        %3889 = vmatprep.subr.mxu0 0.0
        %3890 = vmatpush1.msra.mxu0 0.0
        %3891 = vmatprep.subr.mxu0 0.0
        %3892 = vmatpush1.msra.mxu0 0.0
        %3893 = vmatprep.subr.mxu0 0.0
        %3894 = vmatpush1.msra.mxu0 0.0
        %3895 = vmatprep.subr.mxu0 0.0
        %3896 = vmatpush1.msra.mxu0 0.0
        %3897 = vmatprep.subr.mxu0 0.0
        %3898 = vmatpush1.msra.mxu0 0.0
        %3899 = vmatprep.subr.mxu0 0.0
        %3900 = vmatpush1.msra.mxu0 0.0
        %3901 = vmatprep.subr.mxu0 0.0
        %3902 = vmatpush1.msra.mxu0 0.0
        %3903 = vmatprep.subr.mxu0 0.0
        %3904 = vmatpush1.msra.mxu0 0.0
        %3905 = vmatprep.subr.mxu0 0.0
        %3906 = vmatpush1.msra.mxu0 0.0
        %3907 = vmatprep.subr.mxu0 0.0
        %3908 = vmatpush1.msra.mxu0 0.0
        %3909 = vmatprep.subr.mxu0 0.0
        %3910 = vmatpush1.msra.mxu0 0.0
        %3911 = vmatprep.subr.mxu0 0.0
        %3912 = vmatpush1.msra.mxu0 0.0
        %3913 = vmatprep.subr.mxu0 0.0
        %3914 = vmatpush1.msra.mxu0 0.0
        %3915 = vmatprep.subr.mxu0 0.0
        %3916 = vmatpush1.msra.mxu0 0.0
        %3917 = vmatprep.subr.mxu0 0.0
        %3918 = vmatpush1.msra.mxu0 0.0
        %3919 = vmatprep.subr.mxu0 0.0
        %3920 = vmatpush1.msra.mxu0 0.0
        %3921 = vmatprep.subr.mxu0 0.0
        %3922 = vmatpush1.msra.mxu0 0.0
        %3923 = vmatprep.subr.mxu0 0.0
        %3924 = vmatpush1.msra.mxu0 0.0
        %3925 = vmatprep.subr.mxu0 0.0
        %3926 = vmatpush1.msra.mxu0 0.0
        %3927 = vmatprep.subr.mxu0 0.0
        %3928 = vmatpush1.msra.mxu0 0.0
        %3929 = vmatprep.subr.mxu0 0.0
        %3930 = vmatpush1.msra.mxu0 0.0
        %3931 = vmatprep.subr.mxu0 0.0
        %3932 = vmatpush1.msra.mxu0 0.0
        %3933 = vmatprep.mubr.f32.mxu0 0.0
        %3934 = vmatmul.mubr.f32.gmra.mrb[0].mxu0 %v3867
        %v3935 = vpop.f32.mrb[0].mxu0
        %v3936 = vadd.f32 0.0, %v3935
        %v3937 = vpop.f32.mrb[0].mxu0
        %3938 = vdwg.mxu0
        %v3939 = vmax.f32 %v3936, 0.0
        %v3940 = vld [vmem:[%s11] sm:$0xf]
        %v3942 = vsel %vm2816, %v3863, 0
        %3944 = vmatprep.subr.mxu0 0.0
        %3945 = vmatpush1.msra.mxu0 %v3864
        %3946 = vmatprep.subr.mxu0 0.0
        %3947 = vmatpush1.msra.mxu0 %v3865
        %3948 = vmatprep.subr.mxu0 0.0
        %3949 = vmatpush1.msra.mxu0 0.0
        %3950 = vmatprep.subr.mxu0 0.0
        %3951 = vmatpush1.msra.mxu0 0.0
        %3952 = vmatprep.subr.mxu0 0.0
        %3953 = vmatpush1.msra.mxu0 0.0
        %3954 = vmatprep.subr.mxu0 0.0
        %3955 = vmatpush1.msra.mxu0 0.0
        %3956 = vmatprep.subr.mxu0 0.0
        %3957 = vmatpush1.msra.mxu0 0.0
        %3958 = vmatprep.subr.mxu0 0.0
        %3959 = vmatpush1.msra.mxu0 0.0
        %3960 = vmatprep.subr.mxu0 0.0
        %3961 = vmatpush1.msra.mxu0 0.0
        %3962 = vmatprep.subr.mxu0 0.0
        %3963 = vmatpush1.msra.mxu0 0.0
        %3964 = vmatprep.subr.mxu0 0.0
        %3965 = vmatpush1.msra.mxu0 0.0
        %3966 = vmatprep.subr.mxu0 0.0
        %3967 = vmatpush1.msra.mxu0 0.0
        %3968 = vmatprep.subr.mxu0 0.0
        %3969 = vmatpush1.msra.mxu0 0.0
        %3970 = vmatprep.subr.mxu0 0.0
        %3971 = vmatpush1.msra.mxu0 0.0
        %3972 = vmatprep.subr.mxu0 0.0
        %3973 = vmatpush1.msra.mxu0 0.0
        %3974 = vmatprep.subr.mxu0 0.0
        %3975 = vmatpush1.msra.mxu0 0.0
        %3976 = vmatprep.subr.mxu0 0.0
        %3977 = vmatpush1.msra.mxu0 0.0
        %3978 = vmatprep.subr.mxu0 0.0
        %3979 = vmatpush1.msra.mxu0 0.0
        %3980 = vmatprep.subr.mxu0 0.0
        %3981 = vmatpush1.msra.mxu0 0.0
        %3982 = vmatprep.subr.mxu0 0.0
        %3983 = vmatpush1.msra.mxu0 0.0
        %3984 = vmatprep.subr.mxu0 0.0
        %3985 = vmatpush1.msra.mxu0 0.0
        %3986 = vmatprep.subr.mxu0 0.0
        %3987 = vmatpush1.msra.mxu0 0.0
        %3988 = vmatprep.subr.mxu0 0.0
        %3989 = vmatpush1.msra.mxu0 0.0
        %3990 = vmatprep.subr.mxu0 0.0
        %3991 = vmatpush1.msra.mxu0 0.0
        %3992 = vmatprep.subr.mxu0 0.0
        %3993 = vmatpush1.msra.mxu0 0.0
        %3994 = vmatprep.subr.mxu0 0.0
        %3995 = vmatpush1.msra.mxu0 0.0
        %3996 = vmatprep.subr.mxu0 0.0
        %3997 = vmatpush1.msra.mxu0 0.0
        %3998 = vmatprep.subr.mxu0 0.0
        %3999 = vmatpush1.msra.mxu0 0.0
        %4000 = vmatprep.subr.mxu0 0.0
        %4001 = vmatpush1.msra.mxu0 0.0
        %4002 = vmatprep.subr.mxu0 0.0
        %4003 = vmatpush1.msra.mxu0 0.0
        %4004 = vmatprep.subr.mxu0 0.0
        %4005 = vmatpush1.msra.mxu0 0.0
        %4006 = vmatprep.subr.mxu0 0.0
        %4007 = vmatpush1.msra.mxu0 0.0
        %4008 = vmatprep.mubr.f32.mxu0 0.0
        %4009 = vmatmul.mubr.f32.gmra.mrb[0].mxu0 %v3942
        %v4010 = vpop.f32.mrb[0].mxu0
        %v4011 = vadd.f32 0.0, %v4010
        %v4012 = vpop.f32.mrb[0].mxu0
        %4013 = vdwg.mxu0
        %v4014 = vmax.f32 %v4011, 0.0
        %vm4015 = vcmask 31744
        %v4017 = vsel %vm4015, %v4014, 0
        %v4020 = vsel %vm2520, %v3940, 0
        %4022 = vmatprep.subr.mxu0 0.0
        %4023 = vmatpush1.msra.mxu0 %v4020
        %4024 = vmatprep.subr.mxu0 0.0
        %4025 = vmatpush1.msra.mxu0 0.0
        %4026 = vmatprep.subr.mxu0 0.0
        %4027 = vmatpush1.msra.mxu0 0.0
        %4028 = vmatprep.subr.mxu0 0.0
        %4029 = vmatpush1.msra.mxu0 0.0
        %4030 = vmatprep.subr.mxu0 0.0
        %4031 = vmatpush1.msra.mxu0 0.0
        %4032 = vmatprep.subr.mxu0 0.0
        %4033 = vmatpush1.msra.mxu0 0.0
        %4034 = vmatprep.subr.mxu0 0.0
        %4035 = vmatpush1.msra.mxu0 0.0
        %4036 = vmatprep.subr.mxu0 0.0
        %4037 = vmatpush1.msra.mxu0 0.0
        %4038 = vmatprep.subr.mxu0 0.0
        %4039 = vmatpush1.msra.mxu0 0.0
        %4040 = vmatprep.subr.mxu0 0.0
        %4041 = vmatpush1.msra.mxu0 0.0
        %4042 = vmatprep.subr.mxu0 0.0
        %4043 = vmatpush1.msra.mxu0 0.0
        %4044 = vmatprep.subr.mxu0 0.0
        %4045 = vmatpush1.msra.mxu0 0.0
        %4046 = vmatprep.subr.mxu0 0.0
        %4047 = vmatpush1.msra.mxu0 0.0
        %4048 = vmatprep.subr.mxu0 0.0
        %4049 = vmatpush1.msra.mxu0 0.0
        %4050 = vmatprep.subr.mxu0 0.0
        %4051 = vmatpush1.msra.mxu0 0.0
        %4052 = vmatprep.subr.mxu0 0.0
        %4053 = vmatpush1.msra.mxu0 0.0
        %4054 = vmatprep.subr.mxu0 0.0
        %4055 = vmatpush1.msra.mxu0 0.0
        %4056 = vmatprep.subr.mxu0 0.0
        %4057 = vmatpush1.msra.mxu0 0.0
        %4058 = vmatprep.subr.mxu0 0.0
        %4059 = vmatpush1.msra.mxu0 0.0
        %4060 = vmatprep.subr.mxu0 0.0
        %4061 = vmatpush1.msra.mxu0 0.0
        %4062 = vmatprep.subr.mxu0 0.0
        %4063 = vmatpush1.msra.mxu0 0.0
        %4064 = vmatprep.subr.mxu0 0.0
        %4065 = vmatpush1.msra.mxu0 0.0
        %4066 = vmatprep.subr.mxu0 0.0
        %4067 = vmatpush1.msra.mxu0 0.0
        %4068 = vmatprep.subr.mxu0 0.0
        %4069 = vmatpush1.msra.mxu0 0.0
        %4070 = vmatprep.subr.mxu0 0.0
        %4071 = vmatpush1.msra.mxu0 0.0
        %4072 = vmatprep.subr.mxu0 0.0
        %4073 = vmatpush1.msra.mxu0 0.0
        %4074 = vmatprep.subr.mxu0 0.0
        %4075 = vmatpush1.msra.mxu0 0.0
        %4076 = vmatprep.subr.mxu0 0.0
        %4077 = vmatpush1.msra.mxu0 0.0
        %4078 = vmatprep.subr.mxu0 0.0
        %4079 = vmatpush1.msra.mxu0 0.0
        %4080 = vmatprep.subr.mxu0 0.0
        %4081 = vmatpush1.msra.mxu0 0.0
        %4082 = vmatprep.subr.mxu0 0.0
        %4083 = vmatpush1.msra.mxu0 0.0
        %4084 = vmatprep.subr.mxu0 0.0
        %4085 = vmatpush1.msra.mxu0 0.0
        %4086 = vmatprep.mubr.f32.mxu0 0.0
        %4087 = vmatmul.mubr.f32.gmra.mrb[0].mxu0 %v4017
        %v4088 = vpop.f32.mrb[0].mxu0
        %v4089 = vadd.f32 0.0, %v4088
        %v4090 = vpop.f32.mrb[0].mxu0
        %4091 = vdwg.mxu0
        %v4093 = vsel %vm4015, %v3939, 0
        %4095 = vmatprep.subr.mxu0 0.0
        %4096 = vmatpush1.msra.mxu0 %v4020
        %4097 = vmatprep.subr.mxu0 0.0
        %4098 = vmatpush1.msra.mxu0 0.0
        %4099 = vmatprep.subr.mxu0 0.0
        %4100 = vmatpush1.msra.mxu0 0.0
        %4101 = vmatprep.subr.mxu0 0.0
        %4102 = vmatpush1.msra.mxu0 0.0
        %4103 = vmatprep.subr.mxu0 0.0
        %4104 = vmatpush1.msra.mxu0 0.0
        %4105 = vmatprep.subr.mxu0 0.0
        %4106 = vmatpush1.msra.mxu0 0.0
        %4107 = vmatprep.subr.mxu0 0.0
        %4108 = vmatpush1.msra.mxu0 0.0
        %4109 = vmatprep.subr.mxu0 0.0
        %4110 = vmatpush1.msra.mxu0 0.0
        %4111 = vmatprep.subr.mxu0 0.0
        %4112 = vmatpush1.msra.mxu0 0.0
        %4113 = vmatprep.subr.mxu0 0.0
        %4114 = vmatpush1.msra.mxu0 0.0
        %4115 = vmatprep.subr.mxu0 0.0
        %4116 = vmatpush1.msra.mxu0 0.0
        %4117 = vmatprep.subr.mxu0 0.0
        %4118 = vmatpush1.msra.mxu0 0.0
        %4119 = vmatprep.subr.mxu0 0.0
        %4120 = vmatpush1.msra.mxu0 0.0
        %4121 = vmatprep.subr.mxu0 0.0
        %4122 = vmatpush1.msra.mxu0 0.0
        %4123 = vmatprep.subr.mxu0 0.0
        %4124 = vmatpush1.msra.mxu0 0.0
        %4125 = vmatprep.subr.mxu0 0.0
        %4126 = vmatpush1.msra.mxu0 0.0
        %4127 = vmatprep.subr.mxu0 0.0
        %4128 = vmatpush1.msra.mxu0 0.0
        %4129 = vmatprep.subr.mxu0 0.0
        %4130 = vmatpush1.msra.mxu0 0.0
        %4131 = vmatprep.subr.mxu0 0.0
        %4132 = vmatpush1.msra.mxu0 0.0
        %4133 = vmatprep.subr.mxu0 0.0
        %4134 = vmatpush1.msra.mxu0 0.0
        %4135 = vmatprep.subr.mxu0 0.0
        %4136 = vmatpush1.msra.mxu0 0.0
        %4137 = vmatprep.subr.mxu0 0.0
        %4138 = vmatpush1.msra.mxu0 0.0
        %4139 = vmatprep.subr.mxu0 0.0
        %4140 = vmatpush1.msra.mxu0 0.0
        %4141 = vmatprep.subr.mxu0 0.0
        %4142 = vmatpush1.msra.mxu0 0.0
        %4143 = vmatprep.subr.mxu0 0.0
        %4144 = vmatpush1.msra.mxu0 0.0
        %4145 = vmatprep.subr.mxu0 0.0
        %4146 = vmatpush1.msra.mxu0 0.0
        %4147 = vmatprep.subr.mxu0 0.0
        %4148 = vmatpush1.msra.mxu0 0.0
        %4149 = vmatprep.subr.mxu0 0.0
        %4150 = vmatpush1.msra.mxu0 0.0
        %4151 = vmatprep.subr.mxu0 0.0
        %4152 = vmatpush1.msra.mxu0 0.0
        %4153 = vmatprep.subr.mxu0 0.0
        %4154 = vmatpush1.msra.mxu0 0.0
        %4155 = vmatprep.subr.mxu0 0.0
        %4156 = vmatpush1.msra.mxu0 0.0
        %4157 = vmatprep.subr.mxu0 0.0
        %4158 = vmatpush1.msra.mxu0 0.0
        %4159 = vmatprep.mubr.f32.mxu0 0.0
        %4160 = vmatmul.mubr.f32.gmra.mrb[0].mxu0 %v4093
        %v4161 = vpop.f32.mrb[0].mxu0
        %v4162 = vadd.f32 %v4089, %v4161
        %v4163 = vpop.f32.mrb[0].mxu0
        %4164 = vdwg.mxu0
        %v4165 = vxor.u32 %v4162, 2147483648
        %v4166 = vmul.f32 %v4165, 1.442695
        %v4167 = vpow.pop %v4166
        %v4168 = vadd.f32 %v4167, 1.0
        %v4169 = vrcp.pop %v4168
        %v4170 = vmul.f32 1.0, %v4169
        %4171 = vadd.xlane.f32.xlu0 %v3820
        %v4172 = vpop.xlane.xlu0 %4171
        %4173 = vadd.xlane.f32.xlu0 %v3821
        %v4174 = vpop.xlane.xlu0 %4173
        %4175 = vadd.xlane.f32.xlu0 %v3823
        %v4176 = vpop.xlane.xlu0 %4175
        %4177 = vadd.xlane.f32.xlu0 %v3825
        %v4178 = vpop.xlane.xlu0 %4177
        %4179 = vadd.xlane.f32.xlu0 %v3827
        %v4180 = vpop.xlane.xlu0 %4179
        %4181 = vadd.xlane.f32.xlu0 %v3829
        %v4182 = vpop.xlane.xlu0 %4181
        %4183 = vadd.xlane.f32.xlu0 %v3831
        %v4184 = vpop.xlane.xlu0 %4183
        %4185 = vadd.xlane.f32.xlu0 %v3833
        %v4186 = vpop.xlane.xlu0 %4185
        %v4187 = vrcp.pop 16.0
        %v4188 = vmul.f32 %v4172, %v4187
        %v4189 = vmul.f32 %v4174, %v4187
        %v4190 = vmul.f32 %v4176, %v4187
        %v4191 = vmul.f32 %v4178, %v4187
        %v4192 = vmul.f32 %v4180, %v4187
        %v4193 = vmul.f32 %v4182, %v4187
        %v4194 = vmul.f32 %v4184, %v4187
        %v4195 = vmul.f32 %v4186, %v4187
        %4196 = vmax.xlane.f32.xlu0 %v3843
        %v4197 = vpop.xlane.xlu0 %4196
        %4198 = vmax.xlane.f32.xlu0 %v3844
        %v4199 = vpop.xlane.xlu0 %4198
        %4200 = vmax.xlane.f32.xlu0 %v3845
        %v4201 = vpop.xlane.xlu0 %4200
        %4202 = vmax.xlane.f32.xlu0 %v3846
        %v4203 = vpop.xlane.xlu0 %4202
        %4204 = vmax.xlane.f32.xlu0 %v3847
        %v4205 = vpop.xlane.xlu0 %4204
        %4206 = vmax.xlane.f32.xlu0 %v3849
        %v4207 = vpop.xlane.xlu0 %4206
        %4208 = vmax.xlane.f32.xlu0 %v3851
        %v4209 = vpop.xlane.xlu0 %4208
        %4210 = vmax.xlane.f32.xlu0 %v3853
        %v4211 = vpop.xlane.xlu0 %4210
        %vm4212 = vcmask 113664
        %4213 = vst.msk [vmem:[#allocation6] sm:$0xff] %vm4212, 0.0
        %vm4214 = vcmask 111616
        %4215 = vst.msk [vmem:[#allocation6 + $0x8] sm:$0x3f] %vm4214, 0.0
        %4216 = vst.msk [vmem:[#allocation6 + $0x10] sm:$0xff] %vm4212, 0.0
        %4217 = vst.msk [vmem:[#allocation6 + $0x18] sm:$0x3f] %vm4214, 0.0
        %v4226 = vlaneseq
        %v4227 = vand.u32 %v4226, 127
        %v4228 = vadd.s32 %v4227, 4294967293
        %v4229 = vlaneseq
        %v4230 = vshrl.u32 %v4229, 7
        %v4231 = vsub.s32 %v4228, %v4230
        %v4232 = vrot.slane %v4188, %v4231
        %v4233 = vlaneseq
        %v4234 = vshrl.u32 %v4233, 7
        %v4235 = vsub.s32 %v4228, %v4234
        %v4236 = vrot.slane %v4189, %v4235
        %v4237 = vlaneseq
        %v4238 = vshrl.u32 %v4237, 7
        %v4239 = vsub.s32 %v4228, %v4238
        %v4240 = vrot.slane %v4190, %v4239
        %v4241 = vlaneseq
        %v4242 = vshrl.u32 %v4241, 7
        %v4243 = vsub.s32 %v4228, %v4242
        %v4244 = vrot.slane %v4191, %v4243
        %v4245 = vlaneseq
        %v4246 = vshrl.u32 %v4245, 7
        %v4247 = vsub.s32 %v4228, %v4246
        %v4248 = vrot.slane %v4192, %v4247
        %v4249 = vlaneseq
        %v4250 = vshrl.u32 %v4249, 7
        %v4251 = vsub.s32 %v4228, %v4250
        %v4252 = vrot.slane %v4193, %v4251
        %v4253 = vlaneseq
        %v4254 = vshrl.u32 %v4253, 7
        %v4255 = vsub.s32 %v4228, %v4254
        %v4256 = vrot.slane %v4194, %v4255
        %v4257 = vlaneseq
        %v4258 = vshrl.u32 %v4257, 7
        %v4259 = vsub.s32 %v4228, %v4258
        %v4260 = vrot.slane %v4195, %v4259
        %vm4261 = vcmask 1041409
        %v4262 = vsel %vm4261, %v4236, %v4232
        %vm4263 = vcmask 1042434
        %v4264 = vsel %vm4263, %v4240, %v4262
        %vm4265 = vcmask 1043459
        %v4266 = vsel %vm4265, %v4244, %v4264
        %vm4267 = vcmask 1044484
        %v4268 = vsel %vm4267, %v4248, %v4266
        %vm4269 = vcmask 1045509
        %v4270 = vsel %vm4269, %v4252, %v4268
        %vm4271 = vcmask 1046534
        %v4272 = vsel %vm4271, %v4256, %v4270
        %vm4273 = vcmask 1047559
        %v4274 = vsel %vm4273, %v4260, %v4272
        %vm4276 = vcmask 89112
        %4277 = vst.msk [vmem:[#allocation6 + $0x3] sm:$0xff] %vm4276, %v4274
        %v4286 = vlaneseq
        %v4287 = vshrl.u32 %v4286, 7
        %v4288 = vsub.s32 %v4228, %v4287
        %v4289 = vrot.slane %v4197, %v4288
        %v4290 = vlaneseq
        %v4291 = vshrl.u32 %v4290, 7
        %v4292 = vsub.s32 %v4228, %v4291
        %v4293 = vrot.slane %v4199, %v4292
        %v4294 = vlaneseq
        %v4295 = vshrl.u32 %v4294, 7
        %v4296 = vsub.s32 %v4228, %v4295
        %v4297 = vrot.slane %v4201, %v4296
        %v4298 = vlaneseq
        %v4299 = vshrl.u32 %v4298, 7
        %v4300 = vsub.s32 %v4228, %v4299
        %v4301 = vrot.slane %v4203, %v4300
        %v4302 = vlaneseq
        %v4303 = vshrl.u32 %v4302, 7
        %v4304 = vsub.s32 %v4228, %v4303
        %v4305 = vrot.slane %v4205, %v4304
        %v4306 = vlaneseq
        %v4307 = vshrl.u32 %v4306, 7
        %v4308 = vsub.s32 %v4228, %v4307
        %v4309 = vrot.slane %v4207, %v4308
        %v4310 = vlaneseq
        %v4311 = vshrl.u32 %v4310, 7
        %v4312 = vsub.s32 %v4228, %v4311
        %v4313 = vrot.slane %v4209, %v4312
        %v4314 = vlaneseq
        %v4315 = vshrl.u32 %v4314, 7
        %v4316 = vsub.s32 %v4228, %v4315
        %v4317 = vrot.slane %v4211, %v4316
        %v4318 = vsel %vm4261, %v4293, %v4289
        %v4319 = vsel %vm4263, %v4297, %v4318
        %v4320 = vsel %vm4265, %v4301, %v4319
        %v4321 = vsel %vm4267, %v4305, %v4320
        %v4322 = vsel %vm4269, %v4309, %v4321
        %v4323 = vsel %vm4271, %v4313, %v4322
        %v4324 = vsel %vm4273, %v4317, %v4323
        %s4326 = scalar_lea.vmem [#allocation6], 16
        %4327 = vst.msk [vmem:[%s4326 + $0x3] sm:$0xff] %vm4276, %v4324
        %s4328 = sld [smem:[#allocation7]]
        %v4329 = vld [vmem:[#allocation6] sm:$0xff]
        %v4330 = vstv %s4328
        %v4331 = vmul.f32 %v4330, %v4329
        %s4332 = sld [smem:[#allocation7 + $0x80]]
        %v4333 = vld [vmem:[%s4326] sm:$0xff]
        %v4334 = vstv %s4332
        %v4335 = vmul.f32 %v4334, %v4333
        %v4336 = vadd.f32 %v4331, %v4335
        %v4337 = vadd.f32 %v4336, 0.0
        %s4338 = sld [smem:[#allocation7 + $0x1]]
        %v4339 = vstv %s4338
        %v4340 = vmul.f32 %v4339, %v4329
        %s4341 = sld [smem:[#allocation7 + $0x81]]
        %v4342 = vstv %s4341
        %v4343 = vmul.f32 %v4342, %v4333
        %v4344 = vadd.f32 %v4340, %v4343
        %4346 = vrot.lane.b32.xlu0 %v4344, 127
        %v4347 = vpop.permute.xlu0 %4346
        %v4349 = vadd.f32 %v4337, %v4347
        %s4350 = sld [smem:[#allocation7 + $0x2]]
        %v4351 = vstv %s4350
        %v4352 = vmul.f32 %v4351, %v4329
        %s4353 = sld [smem:[#allocation7 + $0x82]]
        %v4354 = vstv %s4353
        %v4355 = vmul.f32 %v4354, %v4333
        %v4356 = vadd.f32 %v4352, %v4355
        %4358 = vrot.lane.b32.xlu0 %v4356, 126
        %v4359 = vpop.permute.xlu0 %4358
        %v4361 = vadd.f32 %v4349, %v4359
        %s4362 = sld [smem:[#allocation7 + $0x3]]
        %v4363 = vstv %s4362
        %v4364 = vmul.f32 %v4363, %v4329
        %s4365 = sld [smem:[#allocation7 + $0x83]]
        %v4366 = vstv %s4365
        %v4367 = vmul.f32 %v4366, %v4333
        %v4368 = vadd.f32 %v4364, %v4367
        %4370 = vrot.lane.b32.xlu0 %v4368, 125
        %v4371 = vpop.permute.xlu0 %4370
        %v4373 = vadd.f32 %v4361, %v4371
        %s4374 = sld [smem:[#allocation7 + $0x4]]
        %v4375 = vstv %s4374
        %v4376 = vmul.f32 %v4375, %v4329
        %s4377 = sld [smem:[#allocation7 + $0x84]]
        %v4378 = vstv %s4377
        %v4379 = vmul.f32 %v4378, %v4333
        %v4380 = vadd.f32 %v4376, %v4379
        %4382 = vrot.lane.b32.xlu0 %v4380, 124
        %v4383 = vpop.permute.xlu0 %4382
        %v4385 = vadd.f32 %v4373, %v4383
        %s4386 = sld [smem:[#allocation7 + $0x5]]
        %v4387 = vstv %s4386
        %v4388 = vmul.f32 %v4387, %v4329
        %s4389 = sld [smem:[#allocation7 + $0x85]]
        %v4390 = vstv %s4389
        %v4391 = vmul.f32 %v4390, %v4333
        %v4392 = vadd.f32 %v4388, %v4391
        %4394 = vrot.lane.b32.xlu0 %v4392, 123
        %v4395 = vpop.permute.xlu0 %4394
        %v4397 = vadd.f32 %v4385, %v4395
        %s4398 = sld [smem:[#allocation7 + $0x6]]
        %v4399 = vstv %s4398
        %v4400 = vmul.f32 %v4399, %v4329
        %s4401 = sld [smem:[#allocation7 + $0x86]]
        %v4402 = vstv %s4401
        %v4403 = vmul.f32 %v4402, %v4333
        %v4404 = vadd.f32 %v4400, %v4403
        %4406 = vrot.lane.b32.xlu0 %v4404, 122
        %v4407 = vpop.permute.xlu0 %4406
        %v4409 = vadd.f32 %v4397, %v4407
        %s4410 = sld [smem:[#allocation7 + $0x7]]
        %v4411 = vld [vmem:[#allocation6 + $0x1] sm:$0xff]
        %v4412 = vstv %s4410
        %v4413 = vmul.f32 %v4412, %v4411
        %s4414 = sld [smem:[#allocation7 + $0x87]]
        %v4415 = vld [vmem:[%s4326 + $0x1] sm:$0xff]
        %v4416 = vstv %s4414
        %v4417 = vmul.f32 %v4416, %v4415
        %v4418 = vadd.f32 %v4413, %v4417
        %v4419 = vadd.f32 %v4409, %v4418
        %s4420 = sld [smem:[#allocation7 + $0x8]]
        %v4421 = vstv %s4420
        %v4422 = vmul.f32 %v4421, %v4411
        %s4423 = sld [smem:[#allocation7 + $0x88]]
        %v4424 = vstv %s4423
        %v4425 = vmul.f32 %v4424, %v4415
        %v4426 = vadd.f32 %v4422, %v4425
        %4428 = vrot.lane.b32.xlu0 %v4426, 127
        %v4429 = vpop.permute.xlu0 %4428
        %v4431 = vadd.f32 %v4419, %v4429
        %s4432 = sld [smem:[#allocation7 + $0x9]]
        %v4433 = vstv %s4432
        %v4434 = vmul.f32 %v4433, %v4411
        %s4435 = sld [smem:[#allocation7 + $0x89]]
        %v4436 = vstv %s4435
        %v4437 = vmul.f32 %v4436, %v4415
        %v4438 = vadd.f32 %v4434, %v4437
        %4440 = vrot.lane.b32.xlu0 %v4438, 126
        %v4441 = vpop.permute.xlu0 %4440
        %v4443 = vadd.f32 %v4431, %v4441
        %s4444 = sld [smem:[#allocation7 + $0xa]]
        %v4445 = vstv %s4444
        %v4446 = vmul.f32 %v4445, %v4411
        %s4447 = sld [smem:[#allocation7 + $0x8a]]
        %v4448 = vstv %s4447
        %v4449 = vmul.f32 %v4448, %v4415
        %v4450 = vadd.f32 %v4446, %v4449
        %4452 = vrot.lane.b32.xlu0 %v4450, 125
        %v4453 = vpop.permute.xlu0 %4452
        %v4455 = vadd.f32 %v4443, %v4453
        %s4456 = sld [smem:[#allocation7 + $0xb]]
        %v4457 = vstv %s4456
        %v4458 = vmul.f32 %v4457, %v4411
        %s4459 = sld [smem:[#allocation7 + $0x8b]]
        %v4460 = vstv %s4459
        %v4461 = vmul.f32 %v4460, %v4415
        %v4462 = vadd.f32 %v4458, %v4461
        %4464 = vrot.lane.b32.xlu0 %v4462, 124
        %v4465 = vpop.permute.xlu0 %4464
        %v4467 = vadd.f32 %v4455, %v4465
        %s4468 = sld [smem:[#allocation7 + $0xc]]
        %v4469 = vstv %s4468
        %v4470 = vmul.f32 %v4469, %v4411
        %s4471 = sld [smem:[#allocation7 + $0x8c]]
        %v4472 = vstv %s4471
        %v4473 = vmul.f32 %v4472, %v4415
        %v4474 = vadd.f32 %v4470, %v4473
        %4476 = vrot.lane.b32.xlu0 %v4474, 123
        %v4477 = vpop.permute.xlu0 %4476
        %v4479 = vadd.f32 %v4467, %v4477
        %s4480 = sld [smem:[#allocation7 + $0xd]]
        %v4481 = vstv %s4480
        %v4482 = vmul.f32 %v4481, %v4411
        %s4483 = sld [smem:[#allocation7 + $0x8d]]
        %v4484 = vstv %s4483
        %v4485 = vmul.f32 %v4484, %v4415
        %v4486 = vadd.f32 %v4482, %v4485
        %4488 = vrot.lane.b32.xlu0 %v4486, 122
        %v4489 = vpop.permute.xlu0 %4488
        %v4491 = vadd.f32 %v4479, %v4489
        %s4492 = sld [smem:[#allocation7 + $0xe]]
        %v4493 = vld [vmem:[#allocation6 + $0x2] sm:$0xff]
        %v4494 = vstv %s4492
        %v4495 = vmul.f32 %v4494, %v4493
        %s4496 = sld [smem:[#allocation7 + $0x8e]]
        %v4497 = vld [vmem:[%s4326 + $0x2] sm:$0xff]
        %v4498 = vstv %s4496
        %v4499 = vmul.f32 %v4498, %v4497
        %v4500 = vadd.f32 %v4495, %v4499
        %v4501 = vadd.f32 %v4491, %v4500
        %s4502 = sld [smem:[#allocation7 + $0xf]]
        %v4503 = vstv %s4502
        %v4504 = vmul.f32 %v4503, %v4493
        %s4505 = sld [smem:[#allocation7 + $0x8f]]
        %v4506 = vstv %s4505
        %v4507 = vmul.f32 %v4506, %v4497
        %v4508 = vadd.f32 %v4504, %v4507
        %4510 = vrot.lane.b32.xlu0 %v4508, 127
        %v4511 = vpop.permute.xlu0 %4510
        %v4513 = vadd.f32 %v4501, %v4511
        %s4514 = sld [smem:[#allocation7 + $0x10]]
        %v4515 = vstv %s4514
        %v4516 = vmul.f32 %v4515, %v4493
        %s4517 = sld [smem:[#allocation7 + $0x90]]
        %v4518 = vstv %s4517
        %v4519 = vmul.f32 %v4518, %v4497
        %v4520 = vadd.f32 %v4516, %v4519
        %4522 = vrot.lane.b32.xlu0 %v4520, 126
        %v4523 = vpop.permute.xlu0 %4522
        %v4525 = vadd.f32 %v4513, %v4523
        %s4526 = sld [smem:[#allocation7 + $0x11]]
        %v4527 = vstv %s4526
        %v4528 = vmul.f32 %v4527, %v4493
        %s4529 = sld [smem:[#allocation7 + $0x91]]
        %v4530 = vstv %s4529
        %v4531 = vmul.f32 %v4530, %v4497
        %v4532 = vadd.f32 %v4528, %v4531
        %4534 = vrot.lane.b32.xlu0 %v4532, 125
        %v4535 = vpop.permute.xlu0 %4534
        %v4537 = vadd.f32 %v4525, %v4535
        %s4538 = sld [smem:[#allocation7 + $0x12]]
        %v4539 = vstv %s4538
        %v4540 = vmul.f32 %v4539, %v4493
        %s4541 = sld [smem:[#allocation7 + $0x92]]
        %v4542 = vstv %s4541
        %v4543 = vmul.f32 %v4542, %v4497
        %v4544 = vadd.f32 %v4540, %v4543
        %4546 = vrot.lane.b32.xlu0 %v4544, 124
        %v4547 = vpop.permute.xlu0 %4546
        %v4549 = vadd.f32 %v4537, %v4547
        %s4550 = sld [smem:[#allocation7 + $0x13]]
        %v4551 = vstv %s4550
        %v4552 = vmul.f32 %v4551, %v4493
        %s4553 = sld [smem:[#allocation7 + $0x93]]
        %v4554 = vstv %s4553
        %v4555 = vmul.f32 %v4554, %v4497
        %v4556 = vadd.f32 %v4552, %v4555
        %4558 = vrot.lane.b32.xlu0 %v4556, 123
        %v4559 = vpop.permute.xlu0 %4558
        %v4561 = vadd.f32 %v4549, %v4559
        %s4562 = sld [smem:[#allocation7 + $0x14]]
        %v4563 = vstv %s4562
        %v4564 = vmul.f32 %v4563, %v4493
        %s4565 = sld [smem:[#allocation7 + $0x94]]
        %v4566 = vstv %s4565
        %v4567 = vmul.f32 %v4566, %v4497
        %v4568 = vadd.f32 %v4564, %v4567
        %4570 = vrot.lane.b32.xlu0 %v4568, 122
        %v4571 = vpop.permute.xlu0 %4570
        %v4573 = vadd.f32 %v4561, %v4571
        %s4574 = sld [smem:[#allocation7 + $0x15]]
        %v4575 = vld [vmem:[#allocation6 + $0x3] sm:$0xff]
        %v4576 = vstv %s4574
        %v4577 = vmul.f32 %v4576, %v4575
        %s4578 = sld [smem:[#allocation7 + $0x95]]
        %v4579 = vld [vmem:[%s4326 + $0x3] sm:$0xff]
        %v4580 = vstv %s4578
        %v4581 = vmul.f32 %v4580, %v4579
        %v4582 = vadd.f32 %v4577, %v4581
        %v4583 = vadd.f32 %v4573, %v4582
        %s4584 = sld [smem:[#allocation7 + $0x16]]
        %v4585 = vstv %s4584
        %v4586 = vmul.f32 %v4585, %v4575
        %s4587 = sld [smem:[#allocation7 + $0x96]]
        %v4588 = vstv %s4587
        %v4589 = vmul.f32 %v4588, %v4579
        %v4590 = vadd.f32 %v4586, %v4589
        %4592 = vrot.lane.b32.xlu0 %v4590, 127
        %v4593 = vpop.permute.xlu0 %4592
        %v4595 = vadd.f32 %v4583, %v4593
        %s4596 = sld [smem:[#allocation7 + $0x17]]
        %v4597 = vstv %s4596
        %v4598 = vmul.f32 %v4597, %v4575
        %s4599 = sld [smem:[#allocation7 + $0x97]]
        %v4600 = vstv %s4599
        %v4601 = vmul.f32 %v4600, %v4579
        %v4602 = vadd.f32 %v4598, %v4601
        %4604 = vrot.lane.b32.xlu0 %v4602, 126
        %v4605 = vpop.permute.xlu0 %4604
        %v4607 = vadd.f32 %v4595, %v4605
        %s4608 = sld [smem:[#allocation7 + $0x18]]
        %v4609 = vstv %s4608
        %v4610 = vmul.f32 %v4609, %v4575
        %s4611 = sld [smem:[#allocation7 + $0x98]]
        %v4612 = vstv %s4611
        %v4613 = vmul.f32 %v4612, %v4579
        %v4614 = vadd.f32 %v4610, %v4613
        %4616 = vrot.lane.b32.xlu0 %v4614, 125
        %v4617 = vpop.permute.xlu0 %4616
        %v4619 = vadd.f32 %v4607, %v4617
        %s4620 = sld [smem:[#allocation7 + $0x19]]
        %v4621 = vstv %s4620
        %v4622 = vmul.f32 %v4621, %v4575
        %s4623 = sld [smem:[#allocation7 + $0x99]]
        %v4624 = vstv %s4623
        %v4625 = vmul.f32 %v4624, %v4579
        %v4626 = vadd.f32 %v4622, %v4625
        %4628 = vrot.lane.b32.xlu0 %v4626, 124
        %v4629 = vpop.permute.xlu0 %4628
        %v4631 = vadd.f32 %v4619, %v4629
        %s4632 = sld [smem:[#allocation7 + $0x1a]]
        %v4633 = vstv %s4632
        %v4634 = vmul.f32 %v4633, %v4575
        %s4635 = sld [smem:[#allocation7 + $0x9a]]
        %v4636 = vstv %s4635
        %v4637 = vmul.f32 %v4636, %v4579
        %v4638 = vadd.f32 %v4634, %v4637
        %4640 = vrot.lane.b32.xlu0 %v4638, 123
        %v4641 = vpop.permute.xlu0 %4640
        %v4643 = vadd.f32 %v4631, %v4641
        %s4644 = sld [smem:[#allocation7 + $0x1b]]
        %v4645 = vstv %s4644
        %v4646 = vmul.f32 %v4645, %v4575
        %s4647 = sld [smem:[#allocation7 + $0x9b]]
        %v4648 = vstv %s4647
        %v4649 = vmul.f32 %v4648, %v4579
        %v4650 = vadd.f32 %v4646, %v4649
        %4652 = vrot.lane.b32.xlu0 %v4650, 122
        %v4653 = vpop.permute.xlu0 %4652
        %v4655 = vadd.f32 %v4643, %v4653
        %s4656 = sld [smem:[#allocation7 + $0x1c]]
        %v4657 = vld [vmem:[#allocation6 + $0x4] sm:$0xff]
        %v4658 = vstv %s4656
        %v4659 = vmul.f32 %v4658, %v4657
        %s4660 = sld [smem:[#allocation7 + $0x9c]]
        %v4661 = vld [vmem:[%s4326 + $0x4] sm:$0xff]
        %v4662 = vstv %s4660
        %v4663 = vmul.f32 %v4662, %v4661
        %v4664 = vadd.f32 %v4659, %v4663
        %v4665 = vadd.f32 %v4655, %v4664
        %s4666 = sld [smem:[#allocation7 + $0x1d]]
        %v4667 = vstv %s4666
        %v4668 = vmul.f32 %v4667, %v4657
        %s4669 = sld [smem:[#allocation7 + $0x9d]]
        %v4670 = vstv %s4669
        %v4671 = vmul.f32 %v4670, %v4661
        %v4672 = vadd.f32 %v4668, %v4671
        %4674 = vrot.lane.b32.xlu0 %v4672, 127
        %v4675 = vpop.permute.xlu0 %4674
        %v4677 = vadd.f32 %v4665, %v4675
        %s4678 = sld [smem:[#allocation7 + $0x1e]]
        %v4679 = vstv %s4678
        %v4680 = vmul.f32 %v4679, %v4657
        %s4681 = sld [smem:[#allocation7 + $0x9e]]
        %v4682 = vstv %s4681
        %v4683 = vmul.f32 %v4682, %v4661
        %v4684 = vadd.f32 %v4680, %v4683
        %4686 = vrot.lane.b32.xlu0 %v4684, 126
        %v4687 = vpop.permute.xlu0 %4686
        %v4689 = vadd.f32 %v4677, %v4687
        %s4690 = sld [smem:[#allocation7 + $0x1f]]
        %v4691 = vstv %s4690
        %v4692 = vmul.f32 %v4691, %v4657
        %s4693 = sld [smem:[#allocation7 + $0x9f]]
        %v4694 = vstv %s4693
        %v4695 = vmul.f32 %v4694, %v4661
        %v4696 = vadd.f32 %v4692, %v4695
        %4698 = vrot.lane.b32.xlu0 %v4696, 125
        %v4699 = vpop.permute.xlu0 %4698
        %v4701 = vadd.f32 %v4689, %v4699
        %s4702 = sld [smem:[#allocation7 + $0x20]]
        %v4703 = vstv %s4702
        %v4704 = vmul.f32 %v4703, %v4657
        %s4705 = sld [smem:[#allocation7 + $0xa0]]
        %v4706 = vstv %s4705
        %v4707 = vmul.f32 %v4706, %v4661
        %v4708 = vadd.f32 %v4704, %v4707
        %4710 = vrot.lane.b32.xlu0 %v4708, 124
        %v4711 = vpop.permute.xlu0 %4710
        %v4713 = vadd.f32 %v4701, %v4711
        %s4714 = sld [smem:[#allocation7 + $0x21]]
        %v4715 = vstv %s4714
        %v4716 = vmul.f32 %v4715, %v4657
        %s4717 = sld [smem:[#allocation7 + $0xa1]]
        %v4718 = vstv %s4717
        %v4719 = vmul.f32 %v4718, %v4661
        %v4720 = vadd.f32 %v4716, %v4719
        %4722 = vrot.lane.b32.xlu0 %v4720, 123
        %v4723 = vpop.permute.xlu0 %4722
        %v4725 = vadd.f32 %v4713, %v4723
        %s4726 = sld [smem:[#allocation7 + $0x22]]
        %v4727 = vstv %s4726
        %v4728 = vmul.f32 %v4727, %v4657
        %s4729 = sld [smem:[#allocation7 + $0xa2]]
        %v4730 = vstv %s4729
        %v4731 = vmul.f32 %v4730, %v4661
        %v4732 = vadd.f32 %v4728, %v4731
        %4734 = vrot.lane.b32.xlu0 %v4732, 122
        %v4735 = vpop.permute.xlu0 %4734
        %v4737 = vadd.f32 %v4725, %v4735
        %s4738 = sld [smem:[#allocation7 + $0x23]]
        %v4739 = vld [vmem:[#allocation6 + $0x5] sm:$0xff]
        %v4740 = vstv %s4738
        %v4741 = vmul.f32 %v4740, %v4739
        %s4742 = sld [smem:[#allocation7 + $0xa3]]
        %v4743 = vld [vmem:[%s4326 + $0x5] sm:$0xff]
        %v4744 = vstv %s4742
        %v4745 = vmul.f32 %v4744, %v4743
        %v4746 = vadd.f32 %v4741, %v4745
        %v4747 = vadd.f32 %v4737, %v4746
        %s4748 = sld [smem:[#allocation7 + $0x24]]
        %v4749 = vstv %s4748
        %v4750 = vmul.f32 %v4749, %v4739
        %s4751 = sld [smem:[#allocation7 + $0xa4]]
        %v4752 = vstv %s4751
        %v4753 = vmul.f32 %v4752, %v4743
        %v4754 = vadd.f32 %v4750, %v4753
        %4756 = vrot.lane.b32.xlu0 %v4754, 127
        %v4757 = vpop.permute.xlu0 %4756
        %v4759 = vadd.f32 %v4747, %v4757
        %s4760 = sld [smem:[#allocation7 + $0x25]]
        %v4761 = vstv %s4760
        %v4762 = vmul.f32 %v4761, %v4739
        %s4763 = sld [smem:[#allocation7 + $0xa5]]
        %v4764 = vstv %s4763
        %v4765 = vmul.f32 %v4764, %v4743
        %v4766 = vadd.f32 %v4762, %v4765
        %4768 = vrot.lane.b32.xlu0 %v4766, 126
        %v4769 = vpop.permute.xlu0 %4768
        %v4771 = vadd.f32 %v4759, %v4769
        %s4772 = sld [smem:[#allocation7 + $0x26]]
        %v4773 = vstv %s4772
        %v4774 = vmul.f32 %v4773, %v4739
        %s4775 = sld [smem:[#allocation7 + $0xa6]]
        %v4776 = vstv %s4775
        %v4777 = vmul.f32 %v4776, %v4743
        %v4778 = vadd.f32 %v4774, %v4777
        %4780 = vrot.lane.b32.xlu0 %v4778, 125
        %v4781 = vpop.permute.xlu0 %4780
        %v4783 = vadd.f32 %v4771, %v4781
        %s4784 = sld [smem:[#allocation7 + $0x27]]
        %v4785 = vstv %s4784
        %v4786 = vmul.f32 %v4785, %v4739
        %s4787 = sld [smem:[#allocation7 + $0xa7]]
        %v4788 = vstv %s4787
        %v4789 = vmul.f32 %v4788, %v4743
        %v4790 = vadd.f32 %v4786, %v4789
        %4792 = vrot.lane.b32.xlu0 %v4790, 124
        %v4793 = vpop.permute.xlu0 %4792
        %v4795 = vadd.f32 %v4783, %v4793
        %s4796 = sld [smem:[#allocation7 + $0x28]]
        %v4797 = vstv %s4796
        %v4798 = vmul.f32 %v4797, %v4739
        %s4799 = sld [smem:[#allocation7 + $0xa8]]
        %v4800 = vstv %s4799
        %v4801 = vmul.f32 %v4800, %v4743
        %v4802 = vadd.f32 %v4798, %v4801
        %4804 = vrot.lane.b32.xlu0 %v4802, 123
        %v4805 = vpop.permute.xlu0 %4804
        %v4807 = vadd.f32 %v4795, %v4805
        %s4808 = sld [smem:[#allocation7 + $0x29]]
        %v4809 = vstv %s4808
        %v4810 = vmul.f32 %v4809, %v4739
        %s4811 = sld [smem:[#allocation7 + $0xa9]]
        %v4812 = vstv %s4811
        %v4813 = vmul.f32 %v4812, %v4743
        %v4814 = vadd.f32 %v4810, %v4813
        %4816 = vrot.lane.b32.xlu0 %v4814, 122
        %v4817 = vpop.permute.xlu0 %4816
        %v4819 = vadd.f32 %v4807, %v4817
        %s4820 = sld [smem:[#allocation7 + $0x2a]]
        %v4821 = vld [vmem:[#allocation6 + $0x6] sm:$0xff]
        %v4822 = vstv %s4820
        %v4823 = vmul.f32 %v4822, %v4821
        %s4824 = sld [smem:[#allocation7 + $0xaa]]
        %v4825 = vld [vmem:[%s4326 + $0x6] sm:$0xff]
        %v4826 = vstv %s4824
        %v4827 = vmul.f32 %v4826, %v4825
        %v4828 = vadd.f32 %v4823, %v4827
        %v4829 = vadd.f32 %v4819, %v4828
        %s4830 = sld [smem:[#allocation7 + $0x2b]]
        %v4831 = vstv %s4830
        %v4832 = vmul.f32 %v4831, %v4821
        %s4833 = sld [smem:[#allocation7 + $0xab]]
        %v4834 = vstv %s4833
        %v4835 = vmul.f32 %v4834, %v4825
        %v4836 = vadd.f32 %v4832, %v4835
        %4838 = vrot.lane.b32.xlu0 %v4836, 127
        %v4839 = vpop.permute.xlu0 %4838
        %v4841 = vadd.f32 %v4829, %v4839
        %s4842 = sld [smem:[#allocation7 + $0x2c]]
        %v4843 = vstv %s4842
        %v4844 = vmul.f32 %v4843, %v4821
        %s4845 = sld [smem:[#allocation7 + $0xac]]
        %v4846 = vstv %s4845
        %v4847 = vmul.f32 %v4846, %v4825
        %v4848 = vadd.f32 %v4844, %v4847
        %4850 = vrot.lane.b32.xlu0 %v4848, 126
        %v4851 = vpop.permute.xlu0 %4850
        %v4853 = vadd.f32 %v4841, %v4851
        %s4854 = sld [smem:[#allocation7 + $0x2d]]
        %v4855 = vstv %s4854
        %v4856 = vmul.f32 %v4855, %v4821
        %s4857 = sld [smem:[#allocation7 + $0xad]]
        %v4858 = vstv %s4857
        %v4859 = vmul.f32 %v4858, %v4825
        %v4860 = vadd.f32 %v4856, %v4859
        %4862 = vrot.lane.b32.xlu0 %v4860, 125
        %v4863 = vpop.permute.xlu0 %4862
        %v4865 = vadd.f32 %v4853, %v4863
        %s4866 = sld [smem:[#allocation7 + $0x2e]]
        %v4867 = vstv %s4866
        %v4868 = vmul.f32 %v4867, %v4821
        %s4869 = sld [smem:[#allocation7 + $0xae]]
        %v4870 = vstv %s4869
        %v4871 = vmul.f32 %v4870, %v4825
        %v4872 = vadd.f32 %v4868, %v4871
        %4874 = vrot.lane.b32.xlu0 %v4872, 124
        %v4875 = vpop.permute.xlu0 %4874
        %v4877 = vadd.f32 %v4865, %v4875
        %s4878 = sld [smem:[#allocation7 + $0x2f]]
        %v4879 = vstv %s4878
        %v4880 = vmul.f32 %v4879, %v4821
        %s4881 = sld [smem:[#allocation7 + $0xaf]]
        %v4882 = vstv %s4881
        %v4883 = vmul.f32 %v4882, %v4825
        %v4884 = vadd.f32 %v4880, %v4883
        %4886 = vrot.lane.b32.xlu0 %v4884, 123
        %v4887 = vpop.permute.xlu0 %4886
        %v4889 = vadd.f32 %v4877, %v4887
        %s4890 = sld [smem:[#allocation7 + $0x30]]
        %v4891 = vstv %s4890
        %v4892 = vmul.f32 %v4891, %v4821
        %s4893 = sld [smem:[#allocation7 + $0xb0]]
        %v4894 = vstv %s4893
        %v4895 = vmul.f32 %v4894, %v4825
        %v4896 = vadd.f32 %v4892, %v4895
        %4898 = vrot.lane.b32.xlu0 %v4896, 122
        %v4899 = vpop.permute.xlu0 %4898
        %v4901 = vadd.f32 %v4889, %v4899
        %v4902 = vxor.u32 %v4901, 2147483648
        %v4903 = vmul.f32 %v4902, 1.442695
        %v4904 = vpow.pop %v4903
        %v4905 = vadd.f32 %v4904, 1.0
        %v4906 = vrcp.pop %v4905
        %v4907 = vmul.f32 1.0, %v4906
        %v4908 = vlaneseq
        %v4909 = vshrl.u32 %v4908, 7
        %v4910 = vsub.s32 0, %v4909
        %v4911 = vrot.slane %v4907, %v4910
        %4913 = vbcast.lane.b32.xlu0 %v4911, 256
        %v4914 = vpop.permute.xlu0 %4913
        %v4915 = vlaneseq
        %v4916 = vshrl.u32 %v4915, 7
        %v4917 = vsub.s32 1, %v4916
        %v4918 = vrot.slane %v4907, %v4917
        %4920 = vbcast.lane.b32.xlu0 %v4918, 256
        %v4921 = vpop.permute.xlu0 %4920
        %v4922 = vlaneseq
        %v4923 = vshrl.u32 %v4922, 7
        %v4924 = vsub.s32 2, %v4923
        %v4925 = vrot.slane %v4907, %v4924
        %4927 = vbcast.lane.b32.xlu0 %v4925, 256
        %v4928 = vpop.permute.xlu0 %4927
        %v4929 = vlaneseq
        %v4930 = vshrl.u32 %v4929, 7
        %v4931 = vsub.s32 3, %v4930
        %v4932 = vrot.slane %v4907, %v4931
        %4934 = vbcast.lane.b32.xlu0 %v4932, 256
        %v4935 = vpop.permute.xlu0 %4934
        %v4936 = vlaneseq
        %v4937 = vshrl.u32 %v4936, 7
        %v4938 = vsub.s32 4, %v4937
        %v4939 = vrot.slane %v4907, %v4938
        %4941 = vbcast.lane.b32.xlu0 %v4939, 256
        %v4942 = vpop.permute.xlu0 %4941
        %v4943 = vlaneseq
        %v4944 = vshrl.u32 %v4943, 7
        %v4945 = vsub.s32 5, %v4944
        %v4946 = vrot.slane %v4907, %v4945
        %4948 = vbcast.lane.b32.xlu0 %v4946, 256
        %v4949 = vpop.permute.xlu0 %4948
        %v4950 = vlaneseq
        %v4951 = vshrl.u32 %v4950, 7
        %v4952 = vsub.s32 6, %v4951
        %v4953 = vrot.slane %v4907, %v4952
        %4955 = vbcast.lane.b32.xlu0 %v4953, 256
        %v4956 = vpop.permute.xlu0 %4955
        %v4957 = vlaneseq
        %v4958 = vshrl.u32 %v4957, 7
        %v4959 = vsub.s32 7, %v4958
        %v4960 = vrot.slane %v4907, %v4959
        %4962 = vbcast.lane.b32.xlu0 %v4960, 256
        %v4963 = vpop.permute.xlu0 %4962
        %s4964 = sld [smem:[#allocation12]]
        %s4965 = sld [smem:[#allocation12 + $0x1]]
        %v4966 = vstv %s4965
        %v4967 = vmul.f32 %v4966, %v4170
        %v4968 = vstv %s4964
        %v4969 = vadd.f32 %v4968, %v4967
        %s4970 = sld [smem:[#allocation12 + $0x2]]
        %v4971 = vstv %s4970
        %v4972 = vmul.f32 %v4971, %v4914
        %v4973 = vmul.f32 %v4971, %v4921
        %v4974 = vmul.f32 %v4971, %v4928
        %v4975 = vmul.f32 %v4971, %v4935
        %v4976 = vmul.f32 %v4971, %v4942
        %v4977 = vmul.f32 %v4971, %v4949
        %v4978 = vmul.f32 %v4971, %v4956
        %v4979 = vmul.f32 %v4971, %v4963
        %v4980 = vlaneseq
        %v4981 = vshrl.u32 %v4980, 7
        %v4982 = vsub.s32 0, %v4981
        %v4983 = vrot.slane %v4969, %v4982
        %v4984 = vadd.f32 %v4983, %v4972
        %v4985 = vadd.f32 %v4983, %v4973
        %v4986 = vadd.f32 %v4983, %v4974
        %v4987 = vadd.f32 %v4983, %v4975
        %v4988 = vadd.f32 %v4983, %v4976
        %v4989 = vadd.f32 %v4983, %v4977
        %v4990 = vadd.f32 %v4983, %v4978
        %v4991 = vadd.f32 %v4983, %v4979
        %v4992 = vmul.f32 %v3790, %v4984
        %v4993 = vmul.f32 %v3793, %v4985
        %v4994 = vmul.f32 %v3798, %v4986
        %v4995 = vmul.f32 %v3801, %v4987
        %v4996 = vmul.f32 %v3806, %v4988
        %v4997 = vmul.f32 %v3809, %v4989
        %v4998 = vmul.f32 %v3814, %v4990
        %v4999 = vmul.f32 %v3817, %v4991
        %v5000 = vsel %vm2816, %v4992, 0.0
        %v5001 = vsel %vm2816, %v4993, 0.0
        %v5002 = vadd.f32 %v5000, %v5001
        %v5003 = vsel %vm2816, %v4994, 0.0
        %v5004 = vadd.f32 %v5002, %v5003
        %v5005 = vsel %vm2816, %v4995, 0.0
        %v5006 = vadd.f32 %v5004, %v5005
        %v5007 = vsel %vm2816, %v4996, 0.0
        %v5008 = vadd.f32 %v5006, %v5007
        %v5009 = vsel %vm2816, %v4997, 0.0
        %v5010 = vadd.f32 %v5008, %v5009
        %v5011 = vsel %vm2816, %v4998, 0.0
        %v5012 = vadd.f32 %v5010, %v5011
        %v5013 = vsel %vm2816, %v4999, 0.0
        %v5014 = vadd.f32 %v5012, %v5013
        %v5015 = vrot.slane %v5014, 4
        %v5016 = vadd.f32 %v5014, %v5015
        %v5017 = vrot.slane %v5016, 2
        %v5018 = vadd.f32 %v5016, %v5017
        %v5019 = vrot.slane %v5018, 1
        %v5020 = vadd.f32 %v5018, %v5019
        %v5021 = vmul.f32 %v5020, %v3841
        %v5022 = vsel %vm2816, %v4992, -inf
        %v5023 = vsel %vm2816, %v4993, -inf
        %v5024 = vsel %vm2816, %v4994, -inf
        %v5025 = vsel %vm2816, %v4995, -inf
        %v5026 = vsel %vm2816, %v4996, -inf
        %v5027 = vmax.f32 %v5022, %v5026
        %v5028 = vsel %vm2816, %v4997, -inf
        %v5029 = vmax.f32 %v5023, %v5028
        %v5030 = vsel %vm2816, %v4998, -inf
        %v5031 = vmax.f32 %v5024, %v5030
        %v5032 = vsel %vm2816, %v4999, -inf
        %v5033 = vmax.f32 %v5025, %v5032
        %v5034 = vmax.f32 %v5027, %v5029
        %v5035 = vmax.f32 %v5031, %v5033
        %v5036 = vmax.f32 %v5034, %v5035
        %v5037 = vrot.slane %v5036, 4
        %v5038 = vmax.f32 %v5036, %v5037
        %v5039 = vrot.slane %v5038, 2
        %v5040 = vmax.f32 %v5038, %v5039
        %v5041 = vrot.slane %v5040, 1
        %v5042 = vmax.f32 %v5040, %v5041
        %v5043 = vld [vmem:[%s12] sm:$0xff]
        %v5044 = vld [vmem:[%s12 + $0x8] sm:$0xff]
        %v5046 = vsel %vm2816, %v5021, 0
        %5048 = vmatprep.subr.mxu0 0.0
        %5049 = vmatpush1.msra.mxu0 %v5043
        %5050 = vmatprep.subr.mxu0 0.0
        %5051 = vmatpush1.msra.mxu0 %v5044
        %5052 = vmatprep.subr.mxu0 0.0
        %5053 = vmatpush1.msra.mxu0 0.0
        %5054 = vmatprep.subr.mxu0 0.0
        %5055 = vmatpush1.msra.mxu0 0.0
        %5056 = vmatprep.subr.mxu0 0.0
        %5057 = vmatpush1.msra.mxu0 0.0
        %5058 = vmatprep.subr.mxu0 0.0
        %5059 = vmatpush1.msra.mxu0 0.0
        %5060 = vmatprep.subr.mxu0 0.0
        %5061 = vmatpush1.msra.mxu0 0.0
        %5062 = vmatprep.subr.mxu0 0.0
        %5063 = vmatpush1.msra.mxu0 0.0
        %5064 = vmatprep.subr.mxu0 0.0
        %5065 = vmatpush1.msra.mxu0 0.0
        %5066 = vmatprep.subr.mxu0 0.0
        %5067 = vmatpush1.msra.mxu0 0.0
        %5068 = vmatprep.subr.mxu0 0.0
        %5069 = vmatpush1.msra.mxu0 0.0
        %5070 = vmatprep.subr.mxu0 0.0
        %5071 = vmatpush1.msra.mxu0 0.0
        %5072 = vmatprep.subr.mxu0 0.0
        %5073 = vmatpush1.msra.mxu0 0.0
        %5074 = vmatprep.subr.mxu0 0.0
        %5075 = vmatpush1.msra.mxu0 0.0
        %5076 = vmatprep.subr.mxu0 0.0
        %5077 = vmatpush1.msra.mxu0 0.0
        %5078 = vmatprep.subr.mxu0 0.0
        %5079 = vmatpush1.msra.mxu0 0.0
        %5080 = vmatprep.subr.mxu0 0.0
        %5081 = vmatpush1.msra.mxu0 0.0
        %5082 = vmatprep.subr.mxu0 0.0
        %5083 = vmatpush1.msra.mxu0 0.0
        %5084 = vmatprep.subr.mxu0 0.0
        %5085 = vmatpush1.msra.mxu0 0.0
        %5086 = vmatprep.subr.mxu0 0.0
        %5087 = vmatpush1.msra.mxu0 0.0
        %5088 = vmatprep.subr.mxu0 0.0
        %5089 = vmatpush1.msra.mxu0 0.0
        %5090 = vmatprep.subr.mxu0 0.0
        %5091 = vmatpush1.msra.mxu0 0.0
        %5092 = vmatprep.subr.mxu0 0.0
        %5093 = vmatpush1.msra.mxu0 0.0
        %5094 = vmatprep.subr.mxu0 0.0
        %5095 = vmatpush1.msra.mxu0 0.0
        %5096 = vmatprep.subr.mxu0 0.0
        %5097 = vmatpush1.msra.mxu0 0.0
        %5098 = vmatprep.subr.mxu0 0.0
        %5099 = vmatpush1.msra.mxu0 0.0
        %5100 = vmatprep.subr.mxu0 0.0
        %5101 = vmatpush1.msra.mxu0 0.0
        %5102 = vmatprep.subr.mxu0 0.0
        %5103 = vmatpush1.msra.mxu0 0.0
        %5104 = vmatprep.subr.mxu0 0.0
        %5105 = vmatpush1.msra.mxu0 0.0
        %5106 = vmatprep.subr.mxu0 0.0
        %5107 = vmatpush1.msra.mxu0 0.0
        %5108 = vmatprep.subr.mxu0 0.0
        %5109 = vmatpush1.msra.mxu0 0.0
        %5110 = vmatprep.subr.mxu0 0.0
        %5111 = vmatpush1.msra.mxu0 0.0
        %5112 = vmatprep.mubr.f32.mxu0 0.0
        %5113 = vmatmul.mubr.f32.gmra.mrb[0].mxu0 %v5046
        %v5114 = vpop.f32.mrb[0].mxu0
        %v5115 = vadd.f32 0.0, %v5114
        %v5116 = vpop.f32.mrb[0].mxu0
        %5117 = vdwg.mxu0
        %v5118 = vmax.f32 %v5115, 0.0
        %v5119 = vld [vmem:[%s13] sm:$0xf]
        %v5121 = vsel %vm2816, %v5042, 0
        %5123 = vmatprep.subr.mxu0 0.0
        %5124 = vmatpush1.msra.mxu0 %v5043
        %5125 = vmatprep.subr.mxu0 0.0
        %5126 = vmatpush1.msra.mxu0 %v5044
        %5127 = vmatprep.subr.mxu0 0.0
        %5128 = vmatpush1.msra.mxu0 0.0
        %5129 = vmatprep.subr.mxu0 0.0
        %5130 = vmatpush1.msra.mxu0 0.0
        %5131 = vmatprep.subr.mxu0 0.0
        %5132 = vmatpush1.msra.mxu0 0.0
        %5133 = vmatprep.subr.mxu0 0.0
        %5134 = vmatpush1.msra.mxu0 0.0
        %5135 = vmatprep.subr.mxu0 0.0
        %5136 = vmatpush1.msra.mxu0 0.0
        %5137 = vmatprep.subr.mxu0 0.0
        %5138 = vmatpush1.msra.mxu0 0.0
        %5139 = vmatprep.subr.mxu0 0.0
        %5140 = vmatpush1.msra.mxu0 0.0
        %5141 = vmatprep.subr.mxu0 0.0
        %5142 = vmatpush1.msra.mxu0 0.0
        %5143 = vmatprep.subr.mxu0 0.0
        %5144 = vmatpush1.msra.mxu0 0.0
        %5145 = vmatprep.subr.mxu0 0.0
        %5146 = vmatpush1.msra.mxu0 0.0
        %5147 = vmatprep.subr.mxu0 0.0
        %5148 = vmatpush1.msra.mxu0 0.0
        %5149 = vmatprep.subr.mxu0 0.0
        %5150 = vmatpush1.msra.mxu0 0.0
        %5151 = vmatprep.subr.mxu0 0.0
        %5152 = vmatpush1.msra.mxu0 0.0
        %5153 = vmatprep.subr.mxu0 0.0
        %5154 = vmatpush1.msra.mxu0 0.0
        %5155 = vmatprep.subr.mxu0 0.0
        %5156 = vmatpush1.msra.mxu0 0.0
        %5157 = vmatprep.subr.mxu0 0.0
        %5158 = vmatpush1.msra.mxu0 0.0
        %5159 = vmatprep.subr.mxu0 0.0
        %5160 = vmatpush1.msra.mxu0 0.0
        %5161 = vmatprep.subr.mxu0 0.0
        %5162 = vmatpush1.msra.mxu0 0.0
        %5163 = vmatprep.subr.mxu0 0.0
        %5164 = vmatpush1.msra.mxu0 0.0
        %5165 = vmatprep.subr.mxu0 0.0
        %5166 = vmatpush1.msra.mxu0 0.0
        %5167 = vmatprep.subr.mxu0 0.0
        %5168 = vmatpush1.msra.mxu0 0.0
        %5169 = vmatprep.subr.mxu0 0.0
        %5170 = vmatpush1.msra.mxu0 0.0
        %5171 = vmatprep.subr.mxu0 0.0
        %5172 = vmatpush1.msra.mxu0 0.0
        %5173 = vmatprep.subr.mxu0 0.0
        %5174 = vmatpush1.msra.mxu0 0.0
        %5175 = vmatprep.subr.mxu0 0.0
        %5176 = vmatpush1.msra.mxu0 0.0
        %5177 = vmatprep.subr.mxu0 0.0
        %5178 = vmatpush1.msra.mxu0 0.0
        %5179 = vmatprep.subr.mxu0 0.0
        %5180 = vmatpush1.msra.mxu0 0.0
        %5181 = vmatprep.subr.mxu0 0.0
        %5182 = vmatpush1.msra.mxu0 0.0
        %5183 = vmatprep.subr.mxu0 0.0
        %5184 = vmatpush1.msra.mxu0 0.0
        %5185 = vmatprep.subr.mxu0 0.0
        %5186 = vmatpush1.msra.mxu0 0.0
        %5187 = vmatprep.mubr.f32.mxu0 0.0
        %5188 = vmatmul.mubr.f32.gmra.mrb[0].mxu0 %v5121
        %v5189 = vpop.f32.mrb[0].mxu0
        %v5190 = vadd.f32 0.0, %v5189
        %v5191 = vpop.f32.mrb[0].mxu0
        %5192 = vdwg.mxu0
        %v5193 = vmax.f32 %v5190, 0.0
        %v5195 = vsel %vm4015, %v5193, 0
        %v5198 = vsel %vm2520, %v5119, 0
        %5200 = vmatprep.subr.mxu0 0.0
        %5201 = vmatpush1.msra.mxu0 %v5198
        %5202 = vmatprep.subr.mxu0 0.0
        %5203 = vmatpush1.msra.mxu0 0.0
        %5204 = vmatprep.subr.mxu0 0.0
        %5205 = vmatpush1.msra.mxu0 0.0
        %5206 = vmatprep.subr.mxu0 0.0
        %5207 = vmatpush1.msra.mxu0 0.0
        %5208 = vmatprep.subr.mxu0 0.0
        %5209 = vmatpush1.msra.mxu0 0.0
        %5210 = vmatprep.subr.mxu0 0.0
        %5211 = vmatpush1.msra.mxu0 0.0
        %5212 = vmatprep.subr.mxu0 0.0
        %5213 = vmatpush1.msra.mxu0 0.0
        %5214 = vmatprep.subr.mxu0 0.0
        %5215 = vmatpush1.msra.mxu0 0.0
        %5216 = vmatprep.subr.mxu0 0.0
        %5217 = vmatpush1.msra.mxu0 0.0
        %5218 = vmatprep.subr.mxu0 0.0
        %5219 = vmatpush1.msra.mxu0 0.0
        %5220 = vmatprep.subr.mxu0 0.0
        %5221 = vmatpush1.msra.mxu0 0.0
        %5222 = vmatprep.subr.mxu0 0.0
        %5223 = vmatpush1.msra.mxu0 0.0
        %5224 = vmatprep.subr.mxu0 0.0
        %5225 = vmatpush1.msra.mxu0 0.0
        %5226 = vmatprep.subr.mxu0 0.0
        %5227 = vmatpush1.msra.mxu0 0.0
        %5228 = vmatprep.subr.mxu0 0.0
        %5229 = vmatpush1.msra.mxu0 0.0
        %5230 = vmatprep.subr.mxu0 0.0
        %5231 = vmatpush1.msra.mxu0 0.0
        %5232 = vmatprep.subr.mxu0 0.0
        %5233 = vmatpush1.msra.mxu0 0.0
        %5234 = vmatprep.subr.mxu0 0.0
        %5235 = vmatpush1.msra.mxu0 0.0
        %5236 = vmatprep.subr.mxu0 0.0
        %5237 = vmatpush1.msra.mxu0 0.0
        %5238 = vmatprep.subr.mxu0 0.0
        %5239 = vmatpush1.msra.mxu0 0.0
        %5240 = vmatprep.subr.mxu0 0.0
        %5241 = vmatpush1.msra.mxu0 0.0
        %5242 = vmatprep.subr.mxu0 0.0
        %5243 = vmatpush1.msra.mxu0 0.0
        %5244 = vmatprep.subr.mxu0 0.0
        %5245 = vmatpush1.msra.mxu0 0.0
        %5246 = vmatprep.subr.mxu0 0.0
        %5247 = vmatpush1.msra.mxu0 0.0
        %5248 = vmatprep.subr.mxu0 0.0
        %5249 = vmatpush1.msra.mxu0 0.0
        %5250 = vmatprep.subr.mxu0 0.0
        %5251 = vmatpush1.msra.mxu0 0.0
        %5252 = vmatprep.subr.mxu0 0.0
        %5253 = vmatpush1.msra.mxu0 0.0
        %5254 = vmatprep.subr.mxu0 0.0
        %5255 = vmatpush1.msra.mxu0 0.0
        %5256 = vmatprep.subr.mxu0 0.0
        %5257 = vmatpush1.msra.mxu0 0.0
        %5258 = vmatprep.subr.mxu0 0.0
        %5259 = vmatpush1.msra.mxu0 0.0
        %5260 = vmatprep.subr.mxu0 0.0
        %5261 = vmatpush1.msra.mxu0 0.0
        %5262 = vmatprep.subr.mxu0 0.0
        %5263 = vmatpush1.msra.mxu0 0.0
        %5264 = vmatprep.mubr.f32.mxu0 0.0
        %5265 = vmatmul.mubr.f32.gmra.mrb[0].mxu0 %v5195
        %v5266 = vpop.f32.mrb[0].mxu0
        %v5267 = vadd.f32 0.0, %v5266
        %v5268 = vpop.f32.mrb[0].mxu0
        %5269 = vdwg.mxu0
        %v5271 = vsel %vm4015, %v5118, 0
        %5273 = vmatprep.subr.mxu0 0.0
        %5274 = vmatpush1.msra.mxu0 %v5198
        %5275 = vmatprep.subr.mxu0 0.0
        %5276 = vmatpush1.msra.mxu0 0.0
        %5277 = vmatprep.subr.mxu0 0.0
        %5278 = vmatpush1.msra.mxu0 0.0
        %5279 = vmatprep.subr.mxu0 0.0
        %5280 = vmatpush1.msra.mxu0 0.0
        %5281 = vmatprep.subr.mxu0 0.0
        %5282 = vmatpush1.msra.mxu0 0.0
        %5283 = vmatprep.subr.mxu0 0.0
        %5284 = vmatpush1.msra.mxu0 0.0
        %5285 = vmatprep.subr.mxu0 0.0
        %5286 = vmatpush1.msra.mxu0 0.0
        %5287 = vmatprep.subr.mxu0 0.0
        %5288 = vmatpush1.msra.mxu0 0.0
        %5289 = vmatprep.subr.mxu0 0.0
        %5290 = vmatpush1.msra.mxu0 0.0
        %5291 = vmatprep.subr.mxu0 0.0
        %5292 = vmatpush1.msra.mxu0 0.0
        %5293 = vmatprep.subr.mxu0 0.0
        %5294 = vmatpush1.msra.mxu0 0.0
        %5295 = vmatprep.subr.mxu0 0.0
        %5296 = vmatpush1.msra.mxu0 0.0
        %5297 = vmatprep.subr.mxu0 0.0
        %5298 = vmatpush1.msra.mxu0 0.0
        %5299 = vmatprep.subr.mxu0 0.0
        %5300 = vmatpush1.msra.mxu0 0.0
        %5301 = vmatprep.subr.mxu0 0.0
        %5302 = vmatpush1.msra.mxu0 0.0
        %5303 = vmatprep.subr.mxu0 0.0
        %5304 = vmatpush1.msra.mxu0 0.0
        %5305 = vmatprep.subr.mxu0 0.0
        %5306 = vmatpush1.msra.mxu0 0.0
        %5307 = vmatprep.subr.mxu0 0.0
        %5308 = vmatpush1.msra.mxu0 0.0
        %5309 = vmatprep.subr.mxu0 0.0
        %5310 = vmatpush1.msra.mxu0 0.0
        %5311 = vmatprep.subr.mxu0 0.0
        %5312 = vmatpush1.msra.mxu0 0.0
        %5313 = vmatprep.subr.mxu0 0.0
        %5314 = vmatpush1.msra.mxu0 0.0
        %5315 = vmatprep.subr.mxu0 0.0
        %5316 = vmatpush1.msra.mxu0 0.0
        %5317 = vmatprep.subr.mxu0 0.0
        %5318 = vmatpush1.msra.mxu0 0.0
        %5319 = vmatprep.subr.mxu0 0.0
        %5320 = vmatpush1.msra.mxu0 0.0
        %5321 = vmatprep.subr.mxu0 0.0
        %5322 = vmatpush1.msra.mxu0 0.0
        %5323 = vmatprep.subr.mxu0 0.0
        %5324 = vmatpush1.msra.mxu0 0.0
        %5325 = vmatprep.subr.mxu0 0.0
        %5326 = vmatpush1.msra.mxu0 0.0
        %5327 = vmatprep.subr.mxu0 0.0
        %5328 = vmatpush1.msra.mxu0 0.0
        %5329 = vmatprep.subr.mxu0 0.0
        %5330 = vmatpush1.msra.mxu0 0.0
        %5331 = vmatprep.subr.mxu0 0.0
        %5332 = vmatpush1.msra.mxu0 0.0
        %5333 = vmatprep.subr.mxu0 0.0
        %5334 = vmatpush1.msra.mxu0 0.0
        %5335 = vmatprep.subr.mxu0 0.0
        %5336 = vmatpush1.msra.mxu0 0.0
        %5337 = vmatprep.mubr.f32.mxu0 0.0
        %5338 = vmatmul.mubr.f32.gmra.mrb[0].mxu0 %v5271
        %v5339 = vpop.f32.mrb[0].mxu0
        %v5340 = vadd.f32 %v5267, %v5339
        %v5341 = vpop.f32.mrb[0].mxu0
        %5342 = vdwg.mxu0
        %v5343 = vxor.u32 %v5340, 2147483648
        %v5344 = vmul.f32 %v5343, 1.442695
        %v5345 = vpow.pop %v5344
        %v5346 = vadd.f32 %v5345, 1.0
        %v5347 = vrcp.pop %v5346
        %v5348 = vmul.f32 1.0, %v5347
        %5349 = vadd.xlane.f32.xlu0 %v5000
        %v5350 = vpop.xlane.xlu0 %5349
        %5351 = vadd.xlane.f32.xlu0 %v5001
        %v5352 = vpop.xlane.xlu0 %5351
        %5353 = vadd.xlane.f32.xlu0 %v5003
        %v5354 = vpop.xlane.xlu0 %5353
        %5355 = vadd.xlane.f32.xlu0 %v5005
        %v5356 = vpop.xlane.xlu0 %5355
        %5357 = vadd.xlane.f32.xlu0 %v5007
        %v5358 = vpop.xlane.xlu0 %5357
        %5359 = vadd.xlane.f32.xlu0 %v5009
        %v5360 = vpop.xlane.xlu0 %5359
        %5361 = vadd.xlane.f32.xlu0 %v5011
        %v5362 = vpop.xlane.xlu0 %5361
        %5363 = vadd.xlane.f32.xlu0 %v5013
        %v5364 = vpop.xlane.xlu0 %5363
        %v5365 = vmul.f32 %v5350, %v4187
        %v5366 = vmul.f32 %v5352, %v4187
        %v5367 = vmul.f32 %v5354, %v4187
        %v5368 = vmul.f32 %v5356, %v4187
        %v5369 = vmul.f32 %v5358, %v4187
        %v5370 = vmul.f32 %v5360, %v4187
        %v5371 = vmul.f32 %v5362, %v4187
        %v5372 = vmul.f32 %v5364, %v4187
        %5373 = vmax.xlane.f32.xlu0 %v5022
        %v5374 = vpop.xlane.xlu0 %5373
        %5375 = vmax.xlane.f32.xlu0 %v5023
        %v5376 = vpop.xlane.xlu0 %5375
        %5377 = vmax.xlane.f32.xlu0 %v5024
        %v5378 = vpop.xlane.xlu0 %5377
        %5379 = vmax.xlane.f32.xlu0 %v5025
        %v5380 = vpop.xlane.xlu0 %5379
        %5381 = vmax.xlane.f32.xlu0 %v5026
        %v5382 = vpop.xlane.xlu0 %5381
        %5383 = vmax.xlane.f32.xlu0 %v5028
        %v5384 = vpop.xlane.xlu0 %5383
        %5385 = vmax.xlane.f32.xlu0 %v5030
        %v5386 = vpop.xlane.xlu0 %5385
        %5387 = vmax.xlane.f32.xlu0 %v5032
        %v5388 = vpop.xlane.xlu0 %5387
        %5389 = vst.msk [vmem:[#allocation6] sm:$0xff] %vm4212, 0.0
        %5390 = vst.msk [vmem:[#allocation6 + $0x8] sm:$0x3f] %vm4214, 0.0
        %5391 = vst.msk [vmem:[#allocation6 + $0x10] sm:$0xff] %vm4212, 0.0
        %5392 = vst.msk [vmem:[#allocation6 + $0x18] sm:$0x3f] %vm4214, 0.0
        %v5401 = vlaneseq
        %v5402 = vshrl.u32 %v5401, 7
        %v5403 = vsub.s32 %v4228, %v5402
        %v5404 = vrot.slane %v5365, %v5403
        %v5405 = vlaneseq
        %v5406 = vshrl.u32 %v5405, 7
        %v5407 = vsub.s32 %v4228, %v5406
        %v5408 = vrot.slane %v5366, %v5407
        %v5409 = vlaneseq
        %v5410 = vshrl.u32 %v5409, 7
        %v5411 = vsub.s32 %v4228, %v5410
        %v5412 = vrot.slane %v5367, %v5411
        %v5413 = vlaneseq
        %v5414 = vshrl.u32 %v5413, 7
        %v5415 = vsub.s32 %v4228, %v5414
        %v5416 = vrot.slane %v5368, %v5415
        %v5417 = vlaneseq
        %v5418 = vshrl.u32 %v5417, 7
        %v5419 = vsub.s32 %v4228, %v5418
        %v5420 = vrot.slane %v5369, %v5419
        %v5421 = vlaneseq
        %v5422 = vshrl.u32 %v5421, 7
        %v5423 = vsub.s32 %v4228, %v5422
        %v5424 = vrot.slane %v5370, %v5423
        %v5425 = vlaneseq
        %v5426 = vshrl.u32 %v5425, 7
        %v5427 = vsub.s32 %v4228, %v5426
        %v5428 = vrot.slane %v5371, %v5427
        %v5429 = vlaneseq
        %v5430 = vshrl.u32 %v5429, 7
        %v5431 = vsub.s32 %v4228, %v5430
        %v5432 = vrot.slane %v5372, %v5431
        %v5433 = vsel %vm4261, %v5408, %v5404
        %v5434 = vsel %vm4263, %v5412, %v5433
        %v5435 = vsel %vm4265, %v5416, %v5434
        %v5436 = vsel %vm4267, %v5420, %v5435
        %v5437 = vsel %vm4269, %v5424, %v5436
        %v5438 = vsel %vm4271, %v5428, %v5437
        %v5439 = vsel %vm4273, %v5432, %v5438
        %5441 = vst.msk [vmem:[#allocation6 + $0x3] sm:$0xff] %vm4276, %v5439
        %v5450 = vlaneseq
        %v5451 = vshrl.u32 %v5450, 7
        %v5452 = vsub.s32 %v4228, %v5451
        %v5453 = vrot.slane %v5374, %v5452
        %v5454 = vlaneseq
        %v5455 = vshrl.u32 %v5454, 7
        %v5456 = vsub.s32 %v4228, %v5455
        %v5457 = vrot.slane %v5376, %v5456
        %v5458 = vlaneseq
        %v5459 = vshrl.u32 %v5458, 7
        %v5460 = vsub.s32 %v4228, %v5459
        %v5461 = vrot.slane %v5378, %v5460
        %v5462 = vlaneseq
        %v5463 = vshrl.u32 %v5462, 7
        %v5464 = vsub.s32 %v4228, %v5463
        %v5465 = vrot.slane %v5380, %v5464
        %v5466 = vlaneseq
        %v5467 = vshrl.u32 %v5466, 7
        %v5468 = vsub.s32 %v4228, %v5467
        %v5469 = vrot.slane %v5382, %v5468
        %v5470 = vlaneseq
        %v5471 = vshrl.u32 %v5470, 7
        %v5472 = vsub.s32 %v4228, %v5471
        %v5473 = vrot.slane %v5384, %v5472
        %v5474 = vlaneseq
        %v5475 = vshrl.u32 %v5474, 7
        %v5476 = vsub.s32 %v4228, %v5475
        %v5477 = vrot.slane %v5386, %v5476
        %v5478 = vlaneseq
        %v5479 = vshrl.u32 %v5478, 7
        %v5480 = vsub.s32 %v4228, %v5479
        %v5481 = vrot.slane %v5388, %v5480
        %v5482 = vsel %vm4261, %v5457, %v5453
        %v5483 = vsel %vm4263, %v5461, %v5482
        %v5484 = vsel %vm4265, %v5465, %v5483
        %v5485 = vsel %vm4267, %v5469, %v5484
        %v5486 = vsel %vm4269, %v5473, %v5485
        %v5487 = vsel %vm4271, %v5477, %v5486
        %v5488 = vsel %vm4273, %v5481, %v5487
        %5490 = vst.msk [vmem:[%s4326 + $0x3] sm:$0xff] %vm4276, %v5488
        %s5491 = sld [smem:[#allocation10]]
        %v5492 = vld [vmem:[#allocation6] sm:$0xff]
        %v5493 = vstv %s5491
        %v5494 = vmul.f32 %v5493, %v5492
        %s5495 = sld [smem:[#allocation10 + $0x80]]
        %v5496 = vld [vmem:[%s4326] sm:$0xff]
        %v5497 = vstv %s5495
        %v5498 = vmul.f32 %v5497, %v5496
        %v5499 = vadd.f32 %v5494, %v5498
        %v5500 = vadd.f32 %v5499, 0.0
        %s5501 = sld [smem:[#allocation10 + $0x1]]
        %v5502 = vstv %s5501
        %v5503 = vmul.f32 %v5502, %v5492
        %s5504 = sld [smem:[#allocation10 + $0x81]]
        %v5505 = vstv %s5504
        %v5506 = vmul.f32 %v5505, %v5496
        %v5507 = vadd.f32 %v5503, %v5506
        %5509 = vrot.lane.b32.xlu0 %v5507, 127
        %v5510 = vpop.permute.xlu0 %5509
        %v5512 = vadd.f32 %v5500, %v5510
        %s5513 = sld [smem:[#allocation10 + $0x2]]
        %v5514 = vstv %s5513
        %v5515 = vmul.f32 %v5514, %v5492
        %s5516 = sld [smem:[#allocation10 + $0x82]]
        %v5517 = vstv %s5516
        %v5518 = vmul.f32 %v5517, %v5496
        %v5519 = vadd.f32 %v5515, %v5518
        %5521 = vrot.lane.b32.xlu0 %v5519, 126
        %v5522 = vpop.permute.xlu0 %5521
        %v5524 = vadd.f32 %v5512, %v5522
        %s5525 = sld [smem:[#allocation10 + $0x3]]
        %v5526 = vstv %s5525
        %v5527 = vmul.f32 %v5526, %v5492
        %s5528 = sld [smem:[#allocation10 + $0x83]]
        %v5529 = vstv %s5528
        %v5530 = vmul.f32 %v5529, %v5496
        %v5531 = vadd.f32 %v5527, %v5530
        %5533 = vrot.lane.b32.xlu0 %v5531, 125
        %v5534 = vpop.permute.xlu0 %5533
        %v5536 = vadd.f32 %v5524, %v5534
        %s5537 = sld [smem:[#allocation10 + $0x4]]
        %v5538 = vstv %s5537
        %v5539 = vmul.f32 %v5538, %v5492
        %s5540 = sld [smem:[#allocation10 + $0x84]]
        %v5541 = vstv %s5540
        %v5542 = vmul.f32 %v5541, %v5496
        %v5543 = vadd.f32 %v5539, %v5542
        %5545 = vrot.lane.b32.xlu0 %v5543, 124
        %v5546 = vpop.permute.xlu0 %5545
        %v5548 = vadd.f32 %v5536, %v5546
        %s5549 = sld [smem:[#allocation10 + $0x5]]
        %v5550 = vstv %s5549
        %v5551 = vmul.f32 %v5550, %v5492
        %s5552 = sld [smem:[#allocation10 + $0x85]]
        %v5553 = vstv %s5552
        %v5554 = vmul.f32 %v5553, %v5496
        %v5555 = vadd.f32 %v5551, %v5554
        %5557 = vrot.lane.b32.xlu0 %v5555, 123
        %v5558 = vpop.permute.xlu0 %5557
        %v5560 = vadd.f32 %v5548, %v5558
        %s5561 = sld [smem:[#allocation10 + $0x6]]
        %v5562 = vstv %s5561
        %v5563 = vmul.f32 %v5562, %v5492
        %s5564 = sld [smem:[#allocation10 + $0x86]]
        %v5565 = vstv %s5564
        %v5566 = vmul.f32 %v5565, %v5496
        %v5567 = vadd.f32 %v5563, %v5566
        %5569 = vrot.lane.b32.xlu0 %v5567, 122
        %v5570 = vpop.permute.xlu0 %5569
        %v5572 = vadd.f32 %v5560, %v5570
        %s5573 = sld [smem:[#allocation10 + $0x7]]
        %v5574 = vld [vmem:[#allocation6 + $0x1] sm:$0xff]
        %v5575 = vstv %s5573
        %v5576 = vmul.f32 %v5575, %v5574
        %s5577 = sld [smem:[#allocation10 + $0x87]]
        %v5578 = vld [vmem:[%s4326 + $0x1] sm:$0xff]
        %v5579 = vstv %s5577
        %v5580 = vmul.f32 %v5579, %v5578
        %v5581 = vadd.f32 %v5576, %v5580
        %v5582 = vadd.f32 %v5572, %v5581
        %s5583 = sld [smem:[#allocation10 + $0x8]]
        %v5584 = vstv %s5583
        %v5585 = vmul.f32 %v5584, %v5574
        %s5586 = sld [smem:[#allocation10 + $0x88]]
        %v5587 = vstv %s5586
        %v5588 = vmul.f32 %v5587, %v5578
        %v5589 = vadd.f32 %v5585, %v5588
        %5591 = vrot.lane.b32.xlu0 %v5589, 127
        %v5592 = vpop.permute.xlu0 %5591
        %v5594 = vadd.f32 %v5582, %v5592
        %s5595 = sld [smem:[#allocation10 + $0x9]]
        %v5596 = vstv %s5595
        %v5597 = vmul.f32 %v5596, %v5574
        %s5598 = sld [smem:[#allocation10 + $0x89]]
        %v5599 = vstv %s5598
        %v5600 = vmul.f32 %v5599, %v5578
        %v5601 = vadd.f32 %v5597, %v5600
        %5603 = vrot.lane.b32.xlu0 %v5601, 126
        %v5604 = vpop.permute.xlu0 %5603
        %v5606 = vadd.f32 %v5594, %v5604
        %s5607 = sld [smem:[#allocation10 + $0xa]]
        %v5608 = vstv %s5607
        %v5609 = vmul.f32 %v5608, %v5574
        %s5610 = sld [smem:[#allocation10 + $0x8a]]
        %v5611 = vstv %s5610
        %v5612 = vmul.f32 %v5611, %v5578
        %v5613 = vadd.f32 %v5609, %v5612
        %5615 = vrot.lane.b32.xlu0 %v5613, 125
        %v5616 = vpop.permute.xlu0 %5615
        %v5618 = vadd.f32 %v5606, %v5616
        %s5619 = sld [smem:[#allocation10 + $0xb]]
        %v5620 = vstv %s5619
        %v5621 = vmul.f32 %v5620, %v5574
        %s5622 = sld [smem:[#allocation10 + $0x8b]]
        %v5623 = vstv %s5622
        %v5624 = vmul.f32 %v5623, %v5578
        %v5625 = vadd.f32 %v5621, %v5624
        %5627 = vrot.lane.b32.xlu0 %v5625, 124
        %v5628 = vpop.permute.xlu0 %5627
        %v5630 = vadd.f32 %v5618, %v5628
        %s5631 = sld [smem:[#allocation10 + $0xc]]
        %v5632 = vstv %s5631
        %v5633 = vmul.f32 %v5632, %v5574
        %s5634 = sld [smem:[#allocation10 + $0x8c]]
        %v5635 = vstv %s5634
        %v5636 = vmul.f32 %v5635, %v5578
        %v5637 = vadd.f32 %v5633, %v5636
        %5639 = vrot.lane.b32.xlu0 %v5637, 123
        %v5640 = vpop.permute.xlu0 %5639
        %v5642 = vadd.f32 %v5630, %v5640
        %s5643 = sld [smem:[#allocation10 + $0xd]]
        %v5644 = vstv %s5643
        %v5645 = vmul.f32 %v5644, %v5574
        %s5646 = sld [smem:[#allocation10 + $0x8d]]
        %v5647 = vstv %s5646
        %v5648 = vmul.f32 %v5647, %v5578
        %v5649 = vadd.f32 %v5645, %v5648
        %5651 = vrot.lane.b32.xlu0 %v5649, 122
        %v5652 = vpop.permute.xlu0 %5651
        %v5654 = vadd.f32 %v5642, %v5652
        %s5655 = sld [smem:[#allocation10 + $0xe]]
        %v5656 = vld [vmem:[#allocation6 + $0x2] sm:$0xff]
        %v5657 = vstv %s5655
        %v5658 = vmul.f32 %v5657, %v5656
        %s5659 = sld [smem:[#allocation10 + $0x8e]]
        %v5660 = vld [vmem:[%s4326 + $0x2] sm:$0xff]
        %v5661 = vstv %s5659
        %v5662 = vmul.f32 %v5661, %v5660
        %v5663 = vadd.f32 %v5658, %v5662
        %v5664 = vadd.f32 %v5654, %v5663
        %s5665 = sld [smem:[#allocation10 + $0xf]]
        %v5666 = vstv %s5665
        %v5667 = vmul.f32 %v5666, %v5656
        %s5668 = sld [smem:[#allocation10 + $0x8f]]
        %v5669 = vstv %s5668
        %v5670 = vmul.f32 %v5669, %v5660
        %v5671 = vadd.f32 %v5667, %v5670
        %5673 = vrot.lane.b32.xlu0 %v5671, 127
        %v5674 = vpop.permute.xlu0 %5673
        %v5676 = vadd.f32 %v5664, %v5674
        %s5677 = sld [smem:[#allocation10 + $0x10]]
        %v5678 = vstv %s5677
        %v5679 = vmul.f32 %v5678, %v5656
        %s5680 = sld [smem:[#allocation10 + $0x90]]
        %v5681 = vstv %s5680
        %v5682 = vmul.f32 %v5681, %v5660
        %v5683 = vadd.f32 %v5679, %v5682
        %5685 = vrot.lane.b32.xlu0 %v5683, 126
        %v5686 = vpop.permute.xlu0 %5685
        %v5688 = vadd.f32 %v5676, %v5686
        %s5689 = sld [smem:[#allocation10 + $0x11]]
        %v5690 = vstv %s5689
        %v5691 = vmul.f32 %v5690, %v5656
        %s5692 = sld [smem:[#allocation10 + $0x91]]
        %v5693 = vstv %s5692
        %v5694 = vmul.f32 %v5693, %v5660
        %v5695 = vadd.f32 %v5691, %v5694
        %5697 = vrot.lane.b32.xlu0 %v5695, 125
        %v5698 = vpop.permute.xlu0 %5697
        %v5700 = vadd.f32 %v5688, %v5698
        %s5701 = sld [smem:[#allocation10 + $0x12]]
        %v5702 = vstv %s5701
        %v5703 = vmul.f32 %v5702, %v5656
        %s5704 = sld [smem:[#allocation10 + $0x92]]
        %v5705 = vstv %s5704
        %v5706 = vmul.f32 %v5705, %v5660
        %v5707 = vadd.f32 %v5703, %v5706
        %5709 = vrot.lane.b32.xlu0 %v5707, 124
        %v5710 = vpop.permute.xlu0 %5709
        %v5712 = vadd.f32 %v5700, %v5710
        %s5713 = sld [smem:[#allocation10 + $0x13]]
        %v5714 = vstv %s5713
        %v5715 = vmul.f32 %v5714, %v5656
        %s5716 = sld [smem:[#allocation10 + $0x93]]
        %v5717 = vstv %s5716
        %v5718 = vmul.f32 %v5717, %v5660
        %v5719 = vadd.f32 %v5715, %v5718
        %5721 = vrot.lane.b32.xlu0 %v5719, 123
        %v5722 = vpop.permute.xlu0 %5721
        %v5724 = vadd.f32 %v5712, %v5722
        %s5725 = sld [smem:[#allocation10 + $0x14]]
        %v5726 = vstv %s5725
        %v5727 = vmul.f32 %v5726, %v5656
        %s5728 = sld [smem:[#allocation10 + $0x94]]
        %v5729 = vstv %s5728
        %v5730 = vmul.f32 %v5729, %v5660
        %v5731 = vadd.f32 %v5727, %v5730
        %5733 = vrot.lane.b32.xlu0 %v5731, 122
        %v5734 = vpop.permute.xlu0 %5733
        %v5736 = vadd.f32 %v5724, %v5734
        %s5737 = sld [smem:[#allocation10 + $0x15]]
        %v5738 = vld [vmem:[#allocation6 + $0x3] sm:$0xff]
        %v5739 = vstv %s5737
        %v5740 = vmul.f32 %v5739, %v5738
        %s5741 = sld [smem:[#allocation10 + $0x95]]
        %v5742 = vld [vmem:[%s4326 + $0x3] sm:$0xff]
        %v5743 = vstv %s5741
        %v5744 = vmul.f32 %v5743, %v5742
        %v5745 = vadd.f32 %v5740, %v5744
        %v5746 = vadd.f32 %v5736, %v5745
        %s5747 = sld [smem:[#allocation10 + $0x16]]
        %v5748 = vstv %s5747
        %v5749 = vmul.f32 %v5748, %v5738
        %s5750 = sld [smem:[#allocation10 + $0x96]]
        %v5751 = vstv %s5750
        %v5752 = vmul.f32 %v5751, %v5742
        %v5753 = vadd.f32 %v5749, %v5752
        %5755 = vrot.lane.b32.xlu0 %v5753, 127
        %v5756 = vpop.permute.xlu0 %5755
        %v5758 = vadd.f32 %v5746, %v5756
        %s5759 = sld [smem:[#allocation10 + $0x17]]
        %v5760 = vstv %s5759
        %v5761 = vmul.f32 %v5760, %v5738
        %s5762 = sld [smem:[#allocation10 + $0x97]]
        %v5763 = vstv %s5762
        %v5764 = vmul.f32 %v5763, %v5742
        %v5765 = vadd.f32 %v5761, %v5764
        %5767 = vrot.lane.b32.xlu0 %v5765, 126
        %v5768 = vpop.permute.xlu0 %5767
        %v5770 = vadd.f32 %v5758, %v5768
        %s5771 = sld [smem:[#allocation10 + $0x18]]
        %v5772 = vstv %s5771
        %v5773 = vmul.f32 %v5772, %v5738
        %s5774 = sld [smem:[#allocation10 + $0x98]]
        %v5775 = vstv %s5774
        %v5776 = vmul.f32 %v5775, %v5742
        %v5777 = vadd.f32 %v5773, %v5776
        %5779 = vrot.lane.b32.xlu0 %v5777, 125
        %v5780 = vpop.permute.xlu0 %5779
        %v5782 = vadd.f32 %v5770, %v5780
        %s5783 = sld [smem:[#allocation10 + $0x19]]
        %v5784 = vstv %s5783
        %v5785 = vmul.f32 %v5784, %v5738
        %s5786 = sld [smem:[#allocation10 + $0x99]]
        %v5787 = vstv %s5786
        %v5788 = vmul.f32 %v5787, %v5742
        %v5789 = vadd.f32 %v5785, %v5788
        %5791 = vrot.lane.b32.xlu0 %v5789, 124
        %v5792 = vpop.permute.xlu0 %5791
        %v5794 = vadd.f32 %v5782, %v5792
        %s5795 = sld [smem:[#allocation10 + $0x1a]]
        %v5796 = vstv %s5795
        %v5797 = vmul.f32 %v5796, %v5738
        %s5798 = sld [smem:[#allocation10 + $0x9a]]
        %v5799 = vstv %s5798
        %v5800 = vmul.f32 %v5799, %v5742
        %v5801 = vadd.f32 %v5797, %v5800
        %5803 = vrot.lane.b32.xlu0 %v5801, 123
        %v5804 = vpop.permute.xlu0 %5803
        %v5806 = vadd.f32 %v5794, %v5804
        %s5807 = sld [smem:[#allocation10 + $0x1b]]
        %v5808 = vstv %s5807
        %v5809 = vmul.f32 %v5808, %v5738
        %s5810 = sld [smem:[#allocation10 + $0x9b]]
        %v5811 = vstv %s5810
        %v5812 = vmul.f32 %v5811, %v5742
        %v5813 = vadd.f32 %v5809, %v5812
        %5815 = vrot.lane.b32.xlu0 %v5813, 122
        %v5816 = vpop.permute.xlu0 %5815
        %v5818 = vadd.f32 %v5806, %v5816
        %s5819 = sld [smem:[#allocation10 + $0x1c]]
        %v5820 = vld [vmem:[#allocation6 + $0x4] sm:$0xff]
        %v5821 = vstv %s5819
        %v5822 = vmul.f32 %v5821, %v5820
        %s5823 = sld [smem:[#allocation10 + $0x9c]]
        %v5824 = vld [vmem:[%s4326 + $0x4] sm:$0xff]
        %v5825 = vstv %s5823
        %v5826 = vmul.f32 %v5825, %v5824
        %v5827 = vadd.f32 %v5822, %v5826
        %v5828 = vadd.f32 %v5818, %v5827
        %s5829 = sld [smem:[#allocation10 + $0x1d]]
        %v5830 = vstv %s5829
        %v5831 = vmul.f32 %v5830, %v5820
        %s5832 = sld [smem:[#allocation10 + $0x9d]]
        %v5833 = vstv %s5832
        %v5834 = vmul.f32 %v5833, %v5824
        %v5835 = vadd.f32 %v5831, %v5834
        %5837 = vrot.lane.b32.xlu0 %v5835, 127
        %v5838 = vpop.permute.xlu0 %5837
        %v5840 = vadd.f32 %v5828, %v5838
        %s5841 = sld [smem:[#allocation10 + $0x1e]]
        %v5842 = vstv %s5841
        %v5843 = vmul.f32 %v5842, %v5820
        %s5844 = sld [smem:[#allocation10 + $0x9e]]
        %v5845 = vstv %s5844
        %v5846 = vmul.f32 %v5845, %v5824
        %v5847 = vadd.f32 %v5843, %v5846
        %5849 = vrot.lane.b32.xlu0 %v5847, 126
        %v5850 = vpop.permute.xlu0 %5849
        %v5852 = vadd.f32 %v5840, %v5850
        %s5853 = sld [smem:[#allocation10 + $0x1f]]
        %v5854 = vstv %s5853
        %v5855 = vmul.f32 %v5854, %v5820
        %s5856 = sld [smem:[#allocation10 + $0x9f]]
        %v5857 = vstv %s5856
        %v5858 = vmul.f32 %v5857, %v5824
        %v5859 = vadd.f32 %v5855, %v5858
        %5861 = vrot.lane.b32.xlu0 %v5859, 125
        %v5862 = vpop.permute.xlu0 %5861
        %v5864 = vadd.f32 %v5852, %v5862
        %s5865 = sld [smem:[#allocation10 + $0x20]]
        %v5866 = vstv %s5865
        %v5867 = vmul.f32 %v5866, %v5820
        %s5868 = sld [smem:[#allocation10 + $0xa0]]
        %v5869 = vstv %s5868
        %v5870 = vmul.f32 %v5869, %v5824
        %v5871 = vadd.f32 %v5867, %v5870
        %5873 = vrot.lane.b32.xlu0 %v5871, 124
        %v5874 = vpop.permute.xlu0 %5873
        %v5876 = vadd.f32 %v5864, %v5874
        %s5877 = sld [smem:[#allocation10 + $0x21]]
        %v5878 = vstv %s5877
        %v5879 = vmul.f32 %v5878, %v5820
        %s5880 = sld [smem:[#allocation10 + $0xa1]]
        %v5881 = vstv %s5880
        %v5882 = vmul.f32 %v5881, %v5824
        %v5883 = vadd.f32 %v5879, %v5882
        %5885 = vrot.lane.b32.xlu0 %v5883, 123
        %v5886 = vpop.permute.xlu0 %5885
        %v5888 = vadd.f32 %v5876, %v5886
        %s5889 = sld [smem:[#allocation10 + $0x22]]
        %v5890 = vstv %s5889
        %v5891 = vmul.f32 %v5890, %v5820
        %s5892 = sld [smem:[#allocation10 + $0xa2]]
        %v5893 = vstv %s5892
        %v5894 = vmul.f32 %v5893, %v5824
        %v5895 = vadd.f32 %v5891, %v5894
        %5897 = vrot.lane.b32.xlu0 %v5895, 122
        %v5898 = vpop.permute.xlu0 %5897
        %v5900 = vadd.f32 %v5888, %v5898
        %s5901 = sld [smem:[#allocation10 + $0x23]]
        %v5902 = vld [vmem:[#allocation6 + $0x5] sm:$0xff]
        %v5903 = vstv %s5901
        %v5904 = vmul.f32 %v5903, %v5902
        %s5905 = sld [smem:[#allocation10 + $0xa3]]
        %v5906 = vld [vmem:[%s4326 + $0x5] sm:$0xff]
        %v5907 = vstv %s5905
        %v5908 = vmul.f32 %v5907, %v5906
        %v5909 = vadd.f32 %v5904, %v5908
        %v5910 = vadd.f32 %v5900, %v5909
        %s5911 = sld [smem:[#allocation10 + $0x24]]
        %v5912 = vstv %s5911
        %v5913 = vmul.f32 %v5912, %v5902
        %s5914 = sld [smem:[#allocation10 + $0xa4]]
        %v5915 = vstv %s5914
        %v5916 = vmul.f32 %v5915, %v5906
        %v5917 = vadd.f32 %v5913, %v5916
        %5919 = vrot.lane.b32.xlu0 %v5917, 127
        %v5920 = vpop.permute.xlu0 %5919
        %v5922 = vadd.f32 %v5910, %v5920
        %s5923 = sld [smem:[#allocation10 + $0x25]]
        %v5924 = vstv %s5923
        %v5925 = vmul.f32 %v5924, %v5902
        %s5926 = sld [smem:[#allocation10 + $0xa5]]
        %v5927 = vstv %s5926
        %v5928 = vmul.f32 %v5927, %v5906
        %v5929 = vadd.f32 %v5925, %v5928
        %5931 = vrot.lane.b32.xlu0 %v5929, 126
        %v5932 = vpop.permute.xlu0 %5931
        %v5934 = vadd.f32 %v5922, %v5932
        %s5935 = sld [smem:[#allocation10 + $0x26]]
        %v5936 = vstv %s5935
        %v5937 = vmul.f32 %v5936, %v5902
        %s5938 = sld [smem:[#allocation10 + $0xa6]]
        %v5939 = vstv %s5938
        %v5940 = vmul.f32 %v5939, %v5906
        %v5941 = vadd.f32 %v5937, %v5940
        %5943 = vrot.lane.b32.xlu0 %v5941, 125
        %v5944 = vpop.permute.xlu0 %5943
        %v5946 = vadd.f32 %v5934, %v5944
        %s5947 = sld [smem:[#allocation10 + $0x27]]
        %v5948 = vstv %s5947
        %v5949 = vmul.f32 %v5948, %v5902
        %s5950 = sld [smem:[#allocation10 + $0xa7]]
        %v5951 = vstv %s5950
        %v5952 = vmul.f32 %v5951, %v5906
        %v5953 = vadd.f32 %v5949, %v5952
        %5955 = vrot.lane.b32.xlu0 %v5953, 124
        %v5956 = vpop.permute.xlu0 %5955
        %v5958 = vadd.f32 %v5946, %v5956
        %s5959 = sld [smem:[#allocation10 + $0x28]]
        %v5960 = vstv %s5959
        %v5961 = vmul.f32 %v5960, %v5902
        %s5962 = sld [smem:[#allocation10 + $0xa8]]
        %v5963 = vstv %s5962
        %v5964 = vmul.f32 %v5963, %v5906
        %v5965 = vadd.f32 %v5961, %v5964
        %5967 = vrot.lane.b32.xlu0 %v5965, 123
        %v5968 = vpop.permute.xlu0 %5967
        %v5970 = vadd.f32 %v5958, %v5968
        %s5971 = sld [smem:[#allocation10 + $0x29]]
        %v5972 = vstv %s5971
        %v5973 = vmul.f32 %v5972, %v5902
        %s5974 = sld [smem:[#allocation10 + $0xa9]]
        %v5975 = vstv %s5974
        %v5976 = vmul.f32 %v5975, %v5906
        %v5977 = vadd.f32 %v5973, %v5976
        %5979 = vrot.lane.b32.xlu0 %v5977, 122
        %v5980 = vpop.permute.xlu0 %5979
        %v5982 = vadd.f32 %v5970, %v5980
        %s5983 = sld [smem:[#allocation10 + $0x2a]]
        %v5984 = vld [vmem:[#allocation6 + $0x6] sm:$0xff]
        %v5985 = vstv %s5983
        %v5986 = vmul.f32 %v5985, %v5984
        %s5987 = sld [smem:[#allocation10 + $0xaa]]
        %v5988 = vld [vmem:[%s4326 + $0x6] sm:$0xff]
        %v5989 = vstv %s5987
        %v5990 = vmul.f32 %v5989, %v5988
        %v5991 = vadd.f32 %v5986, %v5990
        %v5992 = vadd.f32 %v5982, %v5991
        %s5993 = sld [smem:[#allocation10 + $0x2b]]
        %v5994 = vstv %s5993
        %v5995 = vmul.f32 %v5994, %v5984
        %s5996 = sld [smem:[#allocation10 + $0xab]]
        %v5997 = vstv %s5996
        %v5998 = vmul.f32 %v5997, %v5988
        %v5999 = vadd.f32 %v5995, %v5998
        %6001 = vrot.lane.b32.xlu0 %v5999, 127
        %v6002 = vpop.permute.xlu0 %6001
        %v6004 = vadd.f32 %v5992, %v6002
        %s6005 = sld [smem:[#allocation10 + $0x2c]]
        %v6006 = vstv %s6005
        %v6007 = vmul.f32 %v6006, %v5984
        %s6008 = sld [smem:[#allocation10 + $0xac]]
        %v6009 = vstv %s6008
        %v6010 = vmul.f32 %v6009, %v5988
        %v6011 = vadd.f32 %v6007, %v6010
        %6013 = vrot.lane.b32.xlu0 %v6011, 126
        %v6014 = vpop.permute.xlu0 %6013
        %v6016 = vadd.f32 %v6004, %v6014
        %s6017 = sld [smem:[#allocation10 + $0x2d]]
        %v6018 = vstv %s6017
        %v6019 = vmul.f32 %v6018, %v5984
        %s6020 = sld [smem:[#allocation10 + $0xad]]
        %v6021 = vstv %s6020
        %v6022 = vmul.f32 %v6021, %v5988
        %v6023 = vadd.f32 %v6019, %v6022
        %6025 = vrot.lane.b32.xlu0 %v6023, 125
        %v6026 = vpop.permute.xlu0 %6025
        %v6028 = vadd.f32 %v6016, %v6026
        %s6029 = sld [smem:[#allocation10 + $0x2e]]
        %v6030 = vstv %s6029
        %v6031 = vmul.f32 %v6030, %v5984
        %s6032 = sld [smem:[#allocation10 + $0xae]]
        %v6033 = vstv %s6032
        %v6034 = vmul.f32 %v6033, %v5988
        %v6035 = vadd.f32 %v6031, %v6034
        %6037 = vrot.lane.b32.xlu0 %v6035, 124
        %v6038 = vpop.permute.xlu0 %6037
        %v6040 = vadd.f32 %v6028, %v6038
        %s6041 = sld [smem:[#allocation10 + $0x2f]]
        %v6042 = vstv %s6041
        %v6043 = vmul.f32 %v6042, %v5984
        %s6044 = sld [smem:[#allocation10 + $0xaf]]
        %v6045 = vstv %s6044
        %v6046 = vmul.f32 %v6045, %v5988
        %v6047 = vadd.f32 %v6043, %v6046
        %6049 = vrot.lane.b32.xlu0 %v6047, 123
        %v6050 = vpop.permute.xlu0 %6049
        %v6052 = vadd.f32 %v6040, %v6050
        %s6053 = sld [smem:[#allocation10 + $0x30]]
        %v6054 = vstv %s6053
        %v6055 = vmul.f32 %v6054, %v5984
        %s6056 = sld [smem:[#allocation10 + $0xb0]]
        %v6057 = vstv %s6056
        %v6058 = vmul.f32 %v6057, %v5988
        %v6059 = vadd.f32 %v6055, %v6058
        %6061 = vrot.lane.b32.xlu0 %v6059, 122
        %v6062 = vpop.permute.xlu0 %6061
        %v6064 = vadd.f32 %v6052, %v6062
        %v6065 = vxor.u32 %v6064, 2147483648
        %v6066 = vmul.f32 %v6065, 1.442695
        %v6067 = vpow.pop %v6066
        %v6068 = vadd.f32 %v6067, 1.0
        %v6069 = vrcp.pop %v6068
        %v6070 = vmul.f32 1.0, %v6069
        %v6071 = vlaneseq
        %v6072 = vshrl.u32 %v6071, 7
        %v6073 = vsub.s32 0, %v6072
        %v6074 = vrot.slane %v6070, %v6073
        %6076 = vbcast.lane.b32.xlu0 %v6074, 256
        %v6077 = vpop.permute.xlu0 %6076
        %v6078 = vlaneseq
        %v6079 = vshrl.u32 %v6078, 7
        %v6080 = vsub.s32 1, %v6079
        %v6081 = vrot.slane %v6070, %v6080
        %6083 = vbcast.lane.b32.xlu0 %v6081, 256
        %v6084 = vpop.permute.xlu0 %6083
        %v6085 = vlaneseq
        %v6086 = vshrl.u32 %v6085, 7
        %v6087 = vsub.s32 2, %v6086
        %v6088 = vrot.slane %v6070, %v6087
        %6090 = vbcast.lane.b32.xlu0 %v6088, 256
        %v6091 = vpop.permute.xlu0 %6090
        %v6092 = vlaneseq
        %v6093 = vshrl.u32 %v6092, 7
        %v6094 = vsub.s32 3, %v6093
        %v6095 = vrot.slane %v6070, %v6094
        %6097 = vbcast.lane.b32.xlu0 %v6095, 256
        %v6098 = vpop.permute.xlu0 %6097
        %v6099 = vlaneseq
        %v6100 = vshrl.u32 %v6099, 7
        %v6101 = vsub.s32 4, %v6100
        %v6102 = vrot.slane %v6070, %v6101
        %6104 = vbcast.lane.b32.xlu0 %v6102, 256
        %v6105 = vpop.permute.xlu0 %6104
        %v6106 = vlaneseq
        %v6107 = vshrl.u32 %v6106, 7
        %v6108 = vsub.s32 5, %v6107
        %v6109 = vrot.slane %v6070, %v6108
        %6111 = vbcast.lane.b32.xlu0 %v6109, 256
        %v6112 = vpop.permute.xlu0 %6111
        %v6113 = vlaneseq
        %v6114 = vshrl.u32 %v6113, 7
        %v6115 = vsub.s32 6, %v6114
        %v6116 = vrot.slane %v6070, %v6115
        %6118 = vbcast.lane.b32.xlu0 %v6116, 256
        %v6119 = vpop.permute.xlu0 %6118
        %v6120 = vlaneseq
        %v6121 = vshrl.u32 %v6120, 7
        %v6122 = vsub.s32 7, %v6121
        %v6123 = vrot.slane %v6070, %v6122
        %6125 = vbcast.lane.b32.xlu0 %v6123, 256
        %v6126 = vpop.permute.xlu0 %6125
        %s6127 = sld [smem:[#allocation13]]
        %s6128 = sld [smem:[#allocation13 + $0x1]]
        %v6129 = vstv %s6128
        %v6130 = vmul.f32 %v6129, %v5348
        %v6131 = vstv %s6127
        %v6132 = vadd.f32 %v6131, %v6130
        %s6133 = sld [smem:[#allocation13 + $0x2]]
        %v6134 = vstv %s6133
        %v6135 = vmul.f32 %v6134, %v6077
        %v6136 = vmul.f32 %v6134, %v6084
        %v6137 = vmul.f32 %v6134, %v6091
        %v6138 = vmul.f32 %v6134, %v6098
        %v6139 = vmul.f32 %v6134, %v6105
        %v6140 = vmul.f32 %v6134, %v6112
        %v6141 = vmul.f32 %v6134, %v6119
        %v6142 = vmul.f32 %v6134, %v6126
        %v6143 = vlaneseq
        %v6144 = vshrl.u32 %v6143, 7
        %v6145 = vsub.s32 0, %v6144
        %v6146 = vrot.slane %v6132, %v6145
        %v6147 = vadd.f32 %v6146, %v6135
        %v6148 = vadd.f32 %v6146, %v6136
        %v6149 = vadd.f32 %v6146, %v6137
        %v6150 = vadd.f32 %v6146, %v6138
        %v6151 = vadd.f32 %v6146, %v6139
        %v6152 = vadd.f32 %v6146, %v6140
        %v6153 = vadd.f32 %v6146, %v6141
        %v6154 = vadd.f32 %v6146, %v6142
        %v6155 = vmul.f32 %v4992, %v6147
        %v6156 = vmul.f32 %v4993, %v6148
        %v6157 = vmul.f32 %v4994, %v6149
        %v6158 = vmul.f32 %v4995, %v6150
        %v6159 = vmul.f32 %v4996, %v6151
        %v6160 = vmul.f32 %v4997, %v6152
        %v6161 = vmul.f32 %v4998, %v6153
        %v6162 = vmul.f32 %v4999, %v6154
        %v6163 = vld [vmem:[%s670] sm:$0xf]
        %v6164 = vld [vmem:[%s670 + $0x4] sm:$0xf]
        %v6165 = vld [vmem:[%s670 + $0x8] sm:$0xf]
        %v6166 = vld [vmem:[%s670 + $0xc] sm:$0xf]
        %v6167 = vld [vmem:[%s670 + $0x10] sm:$0xf]
        %v6168 = vld [vmem:[%s670 + $0x14] sm:$0xf]
        %v6169 = vld [vmem:[%s670 + $0x18] sm:$0xf]
        %v6170 = vld [vmem:[%s670 + $0x1c] sm:$0xf]
        %v6171 = vld [vmem:[%s8] sm:$0xf]
        %v6172 = vld [vmem:[%s9] sm:$0x1]
        %v6174 = vlaneseq
        %v6175 = vshrl.u32 %v6174, 7
        %v6176 = vsub.s32 0, %v6175
        %v6177 = vrot.slane %v6172, %v6176
        %v6187 = vunpack.c.l.b16 %v6163
        %v6188 = vunpack.c.l.b16 %v6164
        %v6189 = vunpack.c.l.b16 %v6165
        %v6190 = vunpack.c.l.b16 %v6166
        %v6191 = vunpack.c.l.b16 %v6167
        %v6192 = vunpack.c.l.b16 %v6168
        %v6193 = vunpack.c.l.b16 %v6169
        %v6194 = vunpack.c.l.b16 %v6170
        %v6195 = vpack.c.b16 %v6188, %v6187
        %v6196 = vpack.c.b16 %v6190, %v6189
        %v6197 = vpack.c.b16 %v6192, %v6191
        %v6198 = vpack.c.b16 %v6194, %v6193
        %v6200 = vsel %vm1419, %v6195, 0
        %v6203 = vsel %vm1419, %v6196, 0
        %v6206 = vsel %vm1419, %v6197, 0
        %v6209 = vsel %vm1419, %v6198, 0
        %v6212 = vsel %vm2520, %v6171, 0
        %6214 = vmatprep.subr.bf16.mxu0 0
        %6215 = vmatpush1.bf16.msra.mxu0 %v6212
        %6216 = vmatprep.subr.bf16.mxu0 0
        %6217 = vmatpush1.bf16.msra.mxu0 0
        %6218 = vmatprep.subr.bf16.mxu0 0
        %6219 = vmatpush1.bf16.msra.mxu0 0
        %6220 = vmatprep.subr.bf16.mxu0 0
        %6221 = vmatpush1.bf16.msra.mxu0 0
        %6222 = vmatprep.subr.bf16.mxu0 0
        %6223 = vmatpush1.bf16.msra.mxu0 0
        %6224 = vmatprep.subr.bf16.mxu0 0
        %6225 = vmatpush1.bf16.msra.mxu0 0
        %6226 = vmatprep.subr.bf16.mxu0 0
        %6227 = vmatpush1.bf16.msra.mxu0 0
        %6228 = vmatprep.subr.bf16.mxu0 0
        %6229 = vmatpush1.bf16.msra.mxu0 0
        %6230 = vmatprep.subr.bf16.mxu0 0
        %6231 = vmatpush1.bf16.msra.mxu0 0
        %6232 = vmatprep.subr.bf16.mxu0 0
        %6233 = vmatpush1.bf16.msra.mxu0 0
        %6234 = vmatprep.subr.bf16.mxu0 0
        %6235 = vmatpush1.bf16.msra.mxu0 0
        %6236 = vmatprep.subr.bf16.mxu0 0
        %6237 = vmatpush1.bf16.msra.mxu0 0
        %6238 = vmatprep.subr.bf16.mxu0 0
        %6239 = vmatpush1.bf16.msra.mxu0 0
        %6240 = vmatprep.subr.bf16.mxu0 0
        %6241 = vmatpush1.bf16.msra.mxu0 0
        %6242 = vmatprep.subr.bf16.mxu0 0
        %6243 = vmatpush1.bf16.msra.mxu0 0
        %6244 = vmatprep.subr.bf16.mxu0 0
        %6245 = vmatpush1.bf16.msra.mxu0 0
        %6246 = vmatprep.mubr.bf16.mxu0 0
        %6247 = vmatmul.mubr.bf16.gmra.mrb[0].mxu0 %v6200
        %v6248 = vpop.f32.mrb[0].mxu0
        %v6249 = vadd.f32 %v6177, %v6248
        %v6250 = vpop.f32.mrb[0].mxu0
        %v6251 = vpop.f32.mrb[0].mxu0
        %v6252 = vadd.f32 %v6177, %v6251
        %v6253 = vpop.f32.mrb[0].mxu0
        %6254 = vmatprep.mubr.bf16.mxu0 0
        %6255 = vmatmul.mubr.bf16.gmra.mrb[0].mxu0 %v6203
        %v6256 = vpop.f32.mrb[0].mxu0
        %v6257 = vadd.f32 %v6177, %v6256
        %v6258 = vpop.f32.mrb[0].mxu0
        %v6259 = vpop.f32.mrb[0].mxu0
        %v6260 = vadd.f32 %v6177, %v6259
        %v6261 = vpop.f32.mrb[0].mxu0
        %6262 = vmatprep.mubr.bf16.mxu0 0
        %6263 = vmatmul.mubr.bf16.gmra.mrb[0].mxu0 %v6206
        %v6264 = vpop.f32.mrb[0].mxu0
        %v6265 = vadd.f32 %v6177, %v6264
        %v6266 = vpop.f32.mrb[0].mxu0
        %v6267 = vpop.f32.mrb[0].mxu0
        %v6268 = vadd.f32 %v6177, %v6267
        %v6269 = vpop.f32.mrb[0].mxu0
        %6270 = vmatprep.mubr.bf16.mxu0 0
        %6271 = vmatmul.mubr.bf16.gmra.mrb[0].mxu0 %v6209
        %v6272 = vpop.f32.mrb[0].mxu0
        %v6273 = vadd.f32 %v6177, %v6272
        %v6274 = vpop.f32.mrb[0].mxu0
        %v6275 = vpop.f32.mrb[0].mxu0
        %v6276 = vadd.f32 %v6177, %v6275
        %v6277 = vpop.f32.mrb[0].mxu0
        %6278 = vdwg.mxu0
        %v6279 = vadd.f32 %v6155, %v6249
        %v6280 = vadd.f32 %v6156, %v6252
        %v6281 = vadd.f32 %v6157, %v6257
        %v6282 = vadd.f32 %v6158, %v6260
        %v6283 = vadd.f32 %v6159, %v6265
        %v6284 = vadd.f32 %v6160, %v6268
        %v6285 = vadd.f32 %v6161, %v6273
        %v6286 = vadd.f32 %v6162, %v6276
        %v6287 = vmax.f32 %v6279, 0.0
        %v6288 = vmax.f32 %v6280, 0.0
        %v6289 = vmax.f32 %v6281, 0.0
        %v6290 = vmax.f32 %v6282, 0.0
        %v6291 = vmax.f32 %v6283, 0.0
        %v6292 = vmax.f32 %v6284, 0.0
        %v6293 = vmax.f32 %v6285, 0.0
        %v6294 = vmax.f32 %v6286, 0.0
        %6295 = vst.msk [vmem:[%s665] sm:$0xff] %vm2816, %v6287
        %6296 = vst.msk [vmem:[%s665 + $0x8] sm:$0xff] %vm2816, %v6288
        %6297 = vst.msk [vmem:[%s665 + $0x10] sm:$0xff] %vm2816, %v6289
        %6298 = vst.msk [vmem:[%s665 + $0x18] sm:$0xff] %vm2816, %v6290
        %6299 = vst.msk [vmem:[%s665 + $0x20] sm:$0xff] %vm2816, %v6291
        %6300 = vst.msk [vmem:[%s665 + $0x28] sm:$0xff] %vm2816, %v6292
        %6301 = vst.msk [vmem:[%s665 + $0x30] sm:$0xff] %vm2816, %v6293
        %6302 = vst.msk [vmem:[%s665 + $0x38] sm:$0xff] %vm2816, %v6294
        %s6303 = sand.u32 %s441, 1
        %s6304 = scalar_lea.sflag [#allocation8], %s6303
        %s6305 = sand.u32 %s441, 1
        %s6306 = smul.addr %s6305, 64
        %s6307 = scalar_lea.vmem [#allocation15], %s6306
        // Predicated region
        $region109: #{basic_block_forward.1} parent=91 // pred_check
          %p6308 = pneg %p451
        $region110: #{basic_block_forward.1} parent=91 // pred_check_branch
          %6310 = sbr.rel (%p6308) target = $region112
        $region111: #{basic_block_forward.1} parent=91 // pred_region
          %s6312 = ssub.s32 1024, 1024
          %6313 = vsyncadd %s6304, %s6312
          %s6314 = smul.addr %s35, 8
          %s6315 = smul.addr %s6314, 128
          %s6316 = scalar_lea.hbm %s18, %s6315
          %s6317 = sshll.u32 %s6307, 4
          %s6318 = int_to_ptr.vmem [resolvable:$true] %s6317
          %6323 = dma.vmem_to_hbm [thread:$0]  %s6318, 1024, %s6316, %s6304, 128, 128, 8
        $region112: #{basic_block_forward.1} parent=91 // pred_fallthru
          _
      $region92: #{basic_block_forward.1} parent=5 // pred_fallthru
        _
      %p6324 = scmp.le.s32.totalorder 2, %s30
      // Predicated region
      $region113: #{basic_block_forward.1} parent=5 // pred_check
        %p6325 = pneg %p6324
      $region114: #{basic_block_forward.1} parent=5 // pred_check_branch
        %6327 = sbr.rel (%p6325) target = $region116
      $region115: #{basic_block_forward.1} parent=5 // pred_region
        %s6328 = ssub.s32 %s30, 2
        // Predicated region
        $region117: #{basic_block_forward.1} parent=115 // pred_check
          %p6329 = pneg %p457
        $region118: #{basic_block_forward.1} parent=115 // pred_check_branch
          %6331 = sbr.rel (%p6329) target = $region120
        $region119: #{basic_block_forward.1} parent=115 // pred_region
          %s6332 = sand.u32 %s442, 1
          %s6333 = scalar_lea.sflag [#allocation8], %s6332
          %s6334 = sand.u32 %s442, 1
          %s6335 = smul.addr %s6334, 64
          %s6336 = scalar_lea.vmem [#allocation15], %s6335
          %6337 = dma.done %s6333, 1024
        $region120: #{basic_block_forward.1} parent=115 // pred_fallthru
          _
      $region116: #{basic_block_forward.1} parent=5 // pred_fallthru
        _
    $region6: #{basic_block_forward.1} parent=1 // loop_footer
      %s34 = sadd.s32 1, %s30
    $region7: #{basic_block_forward.1} parent=1 // loop_footer_branch
      %29 = sbr.rel target = $region3
    $region8: #{basic_block_forward.1} parent=1 // loop_exit
      _
    %6338 = vsyncpa [#allocation8], 1
    %s6339 = scalar_lea.sflag [#allocation8], 1
    %6340 = vsyncpa %s6339, 1
    %6341 = vsyncpa [#allocation9], 1
    %s6342 = scalar_lea.sflag [#allocation9], 1
    %6343 = vsyncpa %s6342, 1
    %6344 = vsyncpa [#allocation11], 1
    %6345 = vsyncpa [#allocation14], 1

</llo_original>
